<compile_context>
chip_gen: v7x
topology: tpu7x:2x2x1
jax: 0.10.0
libtpu: 0.0.40
codegen_flags: <defaults>
</compile_context>

<pallas_src>
import functools

import numpy as np
import jax
import jax.numpy as jnp
from jax.experimental import pallas as pl
from jax.experimental.pallas import tpu as pltpu  # noqa: F401  (kept for TPU-specific tuning hooks)

# ---------------------------------------------------------------------------
# Config (mirrors the PyTorch `configs` object used by TimesBlock.__init__)
# ---------------------------------------------------------------------------
SEQ_LEN = 16
PRED_LEN = 0
TOP_K = 2
LAYER_K = 1            # stored by the module, unused in forward
D_MODEL = 16           # N (channels)
D_FF = 32
NUM_KERNELS = 2        # Inception kernels of size 1 and 3
BATCH = 2

KMAX = 2 * (NUM_KERNELS - 1) + 1     # largest Inception kernel
PAD = (KMAX - 1) // 2
T_TOTAL = SEQ_LEN + PRED_LEN


def _round_up(v, m):
    return ((v + m - 1) // m) * m


def _period_geometry(T, period):
    if T % period != 0:
        length = (T // period + 1) * period
    else:
        length = T
    return length, length // period, period          # (length, H, W)


def _contrib_dys(H):
    """Kernel rows (dy) of the KxK conv that can ever touch valid data for a
    given image height H (taps with |pad - dy| >= H only read zero padding)."""
    return [dy for dy in range(KMAX) if abs(PAD - dy) < H]


def _shift_matrices(B, H, shifts):
    """0/1 matrices S_s with (S_s @ v)[r] = v[r - s] when row r-s lies in the
    same batch image as row r, else 0 — i.e. exact H-direction 'same' padding.
    Returned stacked (n_nonzero_shifts, B*H, B*H), or None if no shift needed."""
    BH = B * H
    mats = []
    for s in shifts:
        if s == 0:
            continue
        m = np.zeros((BH, BH), np.float32)
        for r in range(BH):
            c = r - s
            if 0 <= c < BH and (c // H) == (r // H):
                m[r, c] = 1.0
        mats.append(m)
    if not mats:
        return None
    return np.stack(mats, axis=0)


# ---------------------------------------------------------------------------
# Parameter setup — folds the Inception average into a single conv (exact)
# ---------------------------------------------------------------------------
def init_inception_params(key, cin, cout, num_kernels):
    """(w, b) of the single HWIO conv equivalent to Inception_Block_V1 (the mean
    of `num_kernels` same-padded convs == one conv with the mean of the
    centre-zero-padded kernels)."""
    kmax = 2 * (num_kernels - 1) + 1
    w_sum = np.zeros((kmax, kmax, cin, cout), np.float32)   # HWIO
    b_sum = np.zeros((cout,), np.float32)
    for i in range(num_kernels):
        ks = 2 * i + 1
        key, k1, k2 = jax.random.split(key, 3)
        fan_in = cin * ks * ks
        w = jax.random.normal(k1, (ks, ks, cin, cout), jnp.float32) * np.sqrt(2.0 / fan_in)
        b = jax.random.normal(k2, (cout,), jnp.float32) * 0.02
        p = (kmax - ks) // 2
        w_sum[p:p + ks, p:p + ks] += np.asarray(w)
        b_sum += np.asarray(b)
    return w_sum / num_kernels, b_sum / num_kernels


def build_branch_weights(w1, b1, w2, b2, H, W):
    """Setup-time (NumPy) per-period weights:
       t1 : (W*Cin,  Kc*CMID_P)  tap-stacked banded Toeplitz for conv1
       t2 : (CMID_P, Kc*COUT_P)  tap-stacked banded Toeplitz for conv2
       b1r/b2r : (1, CMID_P)/(1, COUT_P) bias rows (zero in the lane padding).
    Width 'same' zero-padding is baked into the bands; per-tap output blocks are
    padded to 128-lane multiples so in-kernel slices stay lane-aligned."""
    Cin, Cmid = w1.shape[2], w1.shape[3]
    Cout = w2.shape[3]
    dys = _contrib_dys(H)
    cmid_p = _round_up(W * Cmid, 128)
    cout_p = _round_up(W * Cout, 128)

    t1 = np.zeros((W * Cin, len(dys) * cmid_p), np.float32)
    t2 = np.zeros((cmid_p, len(dys) * cout_p), np.float32)
    for i, dy in enumerate(dys):
        for wo in range(W):
            for dx in range(KMAX):
                wi = wo + dx - PAD
                if 0 <= wi < W:
                    t1[wi * Cin:(wi + 1) * Cin,
                       i * cmid_p + wo * Cmid: i * cmid_p + (wo + 1) * Cmid] = w1[dy, dx]
                    t2[wi * Cmid:(wi + 1) * Cmid,
                       i * cout_p + wo * Cout: i * cout_p + (wo + 1) * Cout] = w2[dy, dx]

    b1r = np.zeros((1, cmid_p), np.float32)
    b1r[0, :W * Cmid] = np.tile(b1.astype(np.float32), W)
    b2r = np.zeros((1, cout_p), np.float32)
    b2r[0, :W * Cout] = np.tile(b2.astype(np.float32), W)
    return (jnp.asarray(t1), jnp.asarray(b1r), jnp.asarray(t2), jnp.asarray(b2r))


def build_timesblock_params(key):
    k1, k2 = jax.random.split(key)
    w1, b1 = init_inception_params(k1, D_MODEL, D_FF, NUM_KERNELS)
    w2, b2 = init_inception_params(k2, D_FF, D_MODEL, NUM_KERNELS)
    branch = {}
    # Pre-build weights for EVERY period FFT_for_Period can possibly select,
    # so the (jitted) forward does no host-side weight construction at all.
    for idx in range(1, T_TOTAL // 2 + 1):
        period = T_TOTAL // idx
        if period in branch:
            continue
        _, H, W = _period_geometry(T_TOTAL, period)
        branch[period] = build_branch_weights(w1, b1, w2, b2, H, W)
    return {"w1": w1, "b1": b1, "w2": w2, "b2": b2, "branch": branch}


# ---------------------------------------------------------------------------
# In-kernel exact-erf GELU (matches torch.nn.GELU()), built only from ops with
# guaranteed Mosaic lowerings (exp / abs / where / arithmetic).
# ---------------------------------------------------------------------------
_INV_SQRT2 = 0.7071067811865476


def _erf(v):
    # Abramowitz & Stegun 7.1.26, |error| <= 1.5e-7.
    a1, a2, a3, a4, a5 = (0.254829592, -0.284496736, 1.421413741,
                          -1.453152027, 1.061405429)
    p = 0.3275911
    sgn = jnp.where(v >= 0.0, 1.0, -1.0)
    a = jnp.abs(v)
    t = 1.0 / (1.0 + p * a)
    poly = ((((a5 * t + a4) * t + a3) * t + a2) * t + a1) * t
    return sgn * (1.0 - poly * jnp.exp(-(a * a)))


def _gelu(v):
    return 0.5 * v * (1.0 + _erf(v * _INV_SQRT2))


# ---------------------------------------------------------------------------
# Pallas kernel 1: Conv2d(same) -> GELU -> Conv2d(same), fused, whole batch in
# one gridless invocation (rows = B*H).  One MXU dot per conv against the
# tap-stacked banded Toeplitz, plus tiny 0/1 shift dots for the H padding.
# ---------------------------------------------------------------------------
def _make_conv_kernel(B, H, W, Cin, Cmid, Cout):
    dys = _contrib_dys(H)
    shifts = [PAD - dy for dy in dys]
    nz = [s for s in shifts if s != 0]
    cmid_p = _round_up(W * Cmid, 128)
    cout_p = _round_up(W * Cout, 128)

    def body(x, t1, b1, t2, b2, sel, o_ref):
        def shift_accumulate(u, width):
            acc = None
            for i, s in enumerate(shifts):
                blk = u[:, i * width:(i + 1) * width]        # 128-aligned static slice
                if s == 0:
                    term = blk
                else:
                    term = jnp.dot(sel[nz.index(s)], blk,
                                   preferred_element_type=jnp.float32)
                acc = term if acc is None else acc + term
            return acc

        # conv1: ONE MXU dot (output blocks per contributing tap), then the
        # cheap per-tap row-shift accumulate (exact H 'same' padding).
        y = jnp.dot(x, t1, preferred_element_type=jnp.float32)     # (BH, Kc*CMID_P)
        h1 = shift_accumulate(y, cmid_p) + b1
        h1 = _gelu(h1)                                             # exact-erf GELU
        # conv2: same structure.
        u = jnp.dot(h1, t2, preferred_element_type=jnp.float32)    # (BH, Kc*COUT_P)
        o_ref[...] = shift_accumulate(u, cout_p) + b2              # lane-dense store

    if nz:
        def kernel(x_ref, t1_ref, b1_ref, t2_ref, b2_ref, s_ref, o_ref):
            sel = [s_ref[j] for j in range(len(nz))]
            body(x_ref[...], t1_ref[...], b1_ref[...],
                 t2_ref[...], b2_ref[...], sel, o_ref)
    else:
        def kernel(x_ref, t1_ref, b1_ref, t2_ref, b2_ref, o_ref):
            body(x_ref[...], t1_ref[...], b1_ref[...],
                 t2_ref[...], b2_ref[...], None, o_ref)
    return kernel


@functools.lru_cache(maxsize=None)
def _get_conv_call(B, H, W, Cin, Cmid, Cout):
    kernel = _make_conv_kernel(B, H, W, Cin, Cmid, Cout)
    cout_p = _round_up(W * Cout, 128)
    return pl.pallas_call(
        kernel,
        out_shape=jax.ShapeDtypeStruct((B * H, cout_p), jnp.float32),
        # gridless: whole arrays auto-DMA'd to VMEM, single invocation per branch
    )


def _make_branch_fn(period, weights, B, T, N):
    """Branch for one static period: layout glue + one fused conv pallas_call.
    Used as a lax.switch branch so the whole forward stays jittable."""
    length, H, W = _period_geometry(T, period)
    t1, b1r, t2, b2r = weights
    dys = _contrib_dys(H)
    shifts = [PAD - dy for dy in dys]
    smats = _shift_matrices(B, H, shifts)
    conv = _get_conv_call(B, H, W, N, D_FF, N)

    def fn(xop):
        xt = xop.astype(jnp.float32)
        if length != T:
            xt = jnp.concatenate(
                [xt, jnp.zeros((B, length - T, N), jnp.float32)], axis=1)
        x_rows = xt.reshape(B * H, W * N)                  # contiguous -> free reshape
        if smats is None:
            out = conv(x_rows, t1, b1r, t2, b2r)
        else:
            out = conv(x_rows, t1, b1r, t2, b2r, jnp.asarray(smats))
        out = out[:, :W * N].reshape(B, length * N)[:, :T * N]
        return out                                         # (B, T*N) f32
    return fn


# ---------------------------------------------------------------------------
# Pallas kernel 2: softmax-weighted sum over the k period branches + residual
# (single invocation, full lane-dense (B, T*N) block, weights as (k, B, 1))
# ---------------------------------------------------------------------------
@functools.lru_cache(maxsize=None)
def _get_agg_call(k, B, TN):
    def kernel(pw_ref, res_ref, x_ref, o_ref):
        acc = x_ref[...]
        for i in range(k):
            acc = acc + pw_ref[i] * res_ref[i]
        o_ref[...] = acc

    return pl.pallas_call(
        kernel,
        out_shape=jax.ShapeDtypeStruct((B, TN), jnp.float32),
    )


# ---------------------------------------------------------------------------
# TimesBlock forward — fully jitted, no host sync (FFT/top-k stay as XLA ops;
# the data-dependent period only picks a lax.switch branch, never a shape).
# ---------------------------------------------------------------------------
def _forward_impl(x, branch_weights):
    B, T, N = x.shape
    xf = jnp.fft.rfft(x.astype(jnp.float32), axis=1)
    amp = jnp.abs(xf)                                   # (B, T//2+1, N)
    freq = amp.mean(axis=0).mean(axis=-1)               # (T//2+1,)
    freq = freq.at[0].set(0.0)
    _, top = jax.lax.top_k(freq, TOP_K)                 # (k,) traced indices
    # Guard degenerate spectra (index 0 -> period T//0 in torch would blow up);
    # minor documented divergence, never hit for non-trivial inputs.
    top = jnp.maximum(top, 1)
    period_weight = jnp.take(amp.mean(axis=-1), top, axis=1)    # (B, k)
    pw = jax.nn.softmax(period_weight, axis=1)

    # Static enumeration of every period T // idx can take.
    periods_all = [T] + [max(T // idx, 1) for idx in range(1, T // 2 + 1)]
    distinct = sorted(set(periods_all), reverse=True)
    bucket_table = jnp.asarray([distinct.index(p) for p in periods_all], jnp.int32)
    branch_fns = [_make_branch_fn(p, branch_weights[p], B, T, N) for p in distinct]

    res = []
    for i in range(TOP_K):
        bucket = bucket_table[top[i]]
        res.append(jax.lax.switch(bucket, branch_fns, x))        # (B, T*N)
    res_stack = jnp.stack(res, axis=0)                           # (k, B, T*N)
    pw_t = jnp.transpose(pw)[:, :, None].astype(jnp.float32)     # (k, B, 1)
    x_flat = x.astype(jnp.float32).reshape(B, T * N)

    agg = _get_agg_call(TOP_K, B, T * N)
    out = agg(pw_t, res_stack, x_flat)                           # (B, T*N)
    return out.reshape(B, T, N)


_forward_jit = jax.jit(_forward_impl)


def times_block_forward(x, params):
    assert x.shape[1] == T_TOTAL, "weights are prebuilt for T = seq_len + pred_len"
    return _forward_jit(x, params["branch"])


# ---------------------------------------------------------------------------
# Pure-JAX reference (lax.conv, HIGHEST precision) for correctness checking
# ---------------------------------------------------------------------------
def fft_for_period_host(x, k):
    xf = jnp.fft.rfft(x, axis=1)
    amp = jnp.abs(xf)
    freq = amp.mean(axis=0).mean(axis=-1)
    freq = freq.at[0].set(0.0)
    _, top = jax.lax.top_k(freq, k)
    top = np.maximum(np.asarray(jax.device_get(top)), 1)
    period = x.shape[1] // top
    period_weight = amp.mean(axis=-1)[:, top]
    return period, period_weight


def times_block_reference(x, params):
    w1 = jnp.asarray(params["w1"]); b1 = jnp.asarray(params["b1"])
    w2 = jnp.asarray(params["w2"]); b2 = jnp.asarray(params["b2"])
    B, T, N = x.shape
    period_list, period_weight = fft_for_period_host(x, TOP_K)
    res = []
    for i in range(TOP_K):
        period = int(period_list[i])
        length = T if T % period == 0 else (T // period + 1) * period
        xt = x if length == T else jnp.concatenate(
            [x, jnp.zeros((B, length - T, N), x.dtype)], axis=1)
        img = xt.reshape(B, length // period, period, N)
        h = jax.lax.conv_general_dilated(
            img, w1, (1, 1), "SAME",
            dimension_numbers=("NHWC", "HWIO", "NHWC"),
            precision=jax.lax.Precision.HIGHEST) + b1
        h = jax.nn.gelu(h, approximate=False)
        o = jax.lax.conv_general_dilated(
            h, w2, (1, 1), "SAME",
            dimension_numbers=("NHWC", "HWIO", "NHWC"),
            precision=jax.lax.Precision.HIGHEST) + b2
        res.append(o.reshape(B, length, N)[:, :T, :])
    res = jnp.stack(res, axis=-1)                                 # (B, T, N, k)
    pwr = jax.nn.softmax(period_weight, axis=1)                   # (B, k)
    return (res * pwr[:, None, None, :]).sum(-1) + x


# ---------------------------------------------------------------------------
if __name__ == "__main__":
    key = jax.random.PRNGKey(0)
    kx, kp = jax.random.split(key)
    x = jax.random.normal(kx, (BATCH, SEQ_LEN + PRED_LEN, D_MODEL), jnp.float32)

    params = build_timesblock_params(kp)

    out = jax.block_until_ready(times_block_forward(x, params))
    assert out.shape == x.shape and out.dtype == jnp.float32

    # Correctness vs pure-JAX reference (tolerance covers default MXU precision
    # of the in-kernel f32 matmuls vs the HIGHEST-precision lax.conv reference).
    ref = jax.block_until_ready(times_block_reference(x, params))
    np.testing.assert_allclose(np.asarray(out), np.asarray(ref),
                               rtol=5e-2, atol=5e-2)

    print("KERNEL_OK")
</pallas_src>

<mosaic_0001>
module attributes {stable_mosaic.version = 11 : i64} {
  func.func @kernel(%arg0: memref<4x128xf32, #tpu.memory_space<vmem>>, %arg1: memref<128x768xf32, #tpu.memory_space<vmem>>, %arg2: memref<1x256xf32, #tpu.memory_space<vmem>>, %arg3: memref<256x384xf32, #tpu.memory_space<vmem>>, %arg4: memref<1x128xf32, #tpu.memory_space<vmem>>, %arg5: memref<2x4x4xf32, #tpu.memory_space<vmem>>, %arg6: memref<4x128xf32, #tpu.memory_space<vmem>>) attributes {dimension_semantics = [], scalar_prefetch = 0 : i64, scratch_operands = 0 : i64, tpu.core_type = #tpu.core_type<tc>} {
    %c0 = arith.constant 0 : index
    %c0_0 = arith.constant 0 : index
    %c0_1 = arith.constant 0 : index
    %0 = vector.load %arg5[%c0, %c0_0, %c0_1] : memref<2x4x4xf32, #tpu.memory_space<vmem>>, vector<1x4x4xf32>
    %1 = vector.shape_cast %0 : vector<1x4x4xf32> to vector<4x4xf32>
    %c1 = arith.constant 1 : index
    %c0_2 = arith.constant 0 : index
    %c0_3 = arith.constant 0 : index
    %2 = vector.load %arg5[%c1, %c0_2, %c0_3] : memref<2x4x4xf32, #tpu.memory_space<vmem>>, vector<1x4x4xf32>
    %3 = vector.shape_cast %2 : vector<1x4x4xf32> to vector<4x4xf32>
    %c0_4 = arith.constant 0 : index
    %c0_5 = arith.constant 0 : index
    %4 = vector.load %arg0[%c0_4, %c0_5] : memref<4x128xf32, #tpu.memory_space<vmem>>, vector<4x128xf32>
    %c0_6 = arith.constant 0 : index
    %c0_7 = arith.constant 0 : index
    %5 = vector.load %arg1[%c0_6, %c0_7] : memref<128x768xf32, #tpu.memory_space<vmem>>, vector<128x768xf32>
    %c0_8 = arith.constant 0 : index
    %c0_9 = arith.constant 0 : index
    %6 = vector.load %arg2[%c0_8, %c0_9] : memref<1x256xf32, #tpu.memory_space<vmem>>, vector<1x256xf32>
    %c0_10 = arith.constant 0 : index
    %c0_11 = arith.constant 0 : index
    %7 = vector.load %arg3[%c0_10, %c0_11] : memref<256x384xf32, #tpu.memory_space<vmem>>, vector<256x384xf32>
    %c0_12 = arith.constant 0 : index
    %c0_13 = arith.constant 0 : index
    %8 = vector.load %arg4[%c0_12, %c0_13] : memref<1x128xf32, #tpu.memory_space<vmem>>, vector<1x128xf32>
    %cst = arith.constant dense<0.000000e+00> : vector<4x768xf32>
    %9 = tpu.matmul %4, %5, %cst {dimension_numbers = #tpu.dot_dimension_numbers<[1], [0], [0], [1], [0, 0, 1, 1], [], []>} : vector<4x128xf32>, vector<128x768xf32>, vector<4x768xf32> -> vector<4x768xf32>
    %10 = vector.extract_strided_slice %9 {offsets = [0, 0], sizes = [4, 256], strides = [1, 1]} : vector<4x768xf32> to vector<4x256xf32>
    %cst_14 = arith.constant dense<0.000000e+00> : vector<4x256xf32>
    %11 = tpu.matmul %1, %10, %cst_14 {dimension_numbers = #tpu.dot_dimension_numbers<[1], [0], [0], [1], [0, 0, 1, 1], [], []>} : vector<4x4xf32>, vector<4x256xf32>, vector<4x256xf32> -> vector<4x256xf32>
    %12 = vector.extract_strided_slice %9 {offsets = [0, 256], sizes = [4, 256], strides = [1, 1]} : vector<4x768xf32> to vector<4x256xf32>
    %13 = arith.addf %11, %12 : vector<4x256xf32>
    %14 = vector.extract_strided_slice %9 {offsets = [0, 512], sizes = [4, 256], strides = [1, 1]} : vector<4x768xf32> to vector<4x256xf32>
    %cst_15 = arith.constant dense<0.000000e+00> : vector<4x256xf32>
    %15 = tpu.matmul %3, %14, %cst_15 {dimension_numbers = #tpu.dot_dimension_numbers<[1], [0], [0], [1], [0, 0, 1, 1], [], []>} : vector<4x4xf32>, vector<4x256xf32>, vector<4x256xf32> -> vector<4x256xf32>
    %16 = arith.addf %13, %15 : vector<4x256xf32>
    %17 = vector.broadcast %6 : vector<1x256xf32> to vector<4x256xf32>
    %18 = arith.addf %16, %17 : vector<4x256xf32>
    %cst_16 = arith.constant 5.000000e-01 : f32
    %19 = vector.broadcast %cst_16 : f32 to vector<4x256xf32>
    %20 = arith.mulf %19, %18 : vector<4x256xf32>
    %cst_17 = arith.constant 0.707106769 : f32
    %21 = vector.broadcast %cst_17 : f32 to vector<4x256xf32>
    %22 = arith.mulf %18, %21 : vector<4x256xf32>
    %cst_18 = arith.constant 0.000000e+00 : f32
    %23 = vector.broadcast %cst_18 : f32 to vector<4x256xf32>
    %24 = arith.cmpf oge, %22, %23 : vector<4x256xf32>
    %cst_19 = arith.constant 1.000000e+00 : f32
    %cst_20 = arith.constant -1.000000e+00 : f32
    %25 = vector.broadcast %cst_19 : f32 to vector<4x256xf32>
    %26 = vector.broadcast %cst_20 : f32 to vector<4x256xf32>
    %27 = arith.select %24, %25, %26 : vector<4x256xi1>, vector<4x256xf32>
    %28 = math.absf %22 : vector<4x256xf32>
    %cst_21 = arith.constant 0.327591091 : f32
    %29 = vector.broadcast %cst_21 : f32 to vector<4x256xf32>
    %30 = arith.mulf %29, %28 : vector<4x256xf32>
    %cst_22 = arith.constant 1.000000e+00 : f32
    %31 = vector.broadcast %cst_22 : f32 to vector<4x256xf32>
    %32 = arith.addf %31, %30 : vector<4x256xf32>
    %cst_23 = arith.constant 1.000000e+00 : f32
    %33 = vector.broadcast %cst_23 : f32 to vector<4x256xf32>
    %34 = arith.divf %33, %32 : vector<4x256xf32>
    %cst_24 = arith.constant 1.06140542 : f32
    %35 = vector.broadcast %cst_24 : f32 to vector<4x256xf32>
    %36 = arith.mulf %35, %34 : vector<4x256xf32>
    %cst_25 = arith.constant -1.45315206 : f32
    %37 = vector.broadcast %cst_25 : f32 to vector<4x256xf32>
    %38 = arith.addf %36, %37 : vector<4x256xf32>
    %39 = arith.mulf %38, %34 : vector<4x256xf32>
    %cst_26 = arith.constant 1.42141378 : f32
    %40 = vector.broadcast %cst_26 : f32 to vector<4x256xf32>
    %41 = arith.addf %39, %40 : vector<4x256xf32>
    %42 = arith.mulf %41, %34 : vector<4x256xf32>
    %cst_27 = arith.constant -0.284496725 : f32
    %43 = vector.broadcast %cst_27 : f32 to vector<4x256xf32>
    %44 = arith.addf %42, %43 : vector<4x256xf32>
    %45 = arith.mulf %44, %34 : vector<4x256xf32>
    %cst_28 = arith.constant 0.254829586 : f32
    %46 = vector.broadcast %cst_28 : f32 to vector<4x256xf32>
    %47 = arith.addf %45, %46 : vector<4x256xf32>
    %48 = arith.mulf %47, %34 : vector<4x256xf32>
    %49 = arith.mulf %28, %28 : vector<4x256xf32>
    %cst_29 = arith.constant 0.000000e+00 : f32
    %50 = vector.broadcast %cst_29 : f32 to vector<4x256xf32>
    %51 = arith.subf %50, %49 : vector<4x256xf32>
    %52 = math.exp %51 : vector<4x256xf32>
    %53 = arith.mulf %48, %52 : vector<4x256xf32>
    %cst_30 = arith.constant 1.000000e+00 : f32
    %54 = vector.broadcast %cst_30 : f32 to vector<4x256xf32>
    %55 = arith.subf %54, %53 : vector<4x256xf32>
    %56 = arith.mulf %27, %55 : vector<4x256xf32>
    %cst_31 = arith.constant 1.000000e+00 : f32
    %57 = vector.broadcast %cst_31 : f32 to vector<4x256xf32>
    %58 = arith.addf %57, %56 : vector<4x256xf32>
    %59 = arith.mulf %20, %58 : vector<4x256xf32>
    %cst_32 = arith.constant dense<0.000000e+00> : vector<4x384xf32>
    %60 = tpu.matmul %59, %7, %cst_32 {dimension_numbers = #tpu.dot_dimension_numbers<[1], [0], [0], [1], [0, 0, 1, 1], [], []>} : vector<4x256xf32>, vector<256x384xf32>, vector<4x384xf32> -> vector<4x384xf32>
    %61 = vector.extract_strided_slice %60 {offsets = [0, 0], sizes = [4, 128], strides = [1, 1]} : vector<4x384xf32> to vector<4x128xf32>
    %cst_33 = arith.constant dense<0.000000e+00> : vector<4x128xf32>
    %62 = tpu.matmul %1, %61, %cst_33 {dimension_numbers = #tpu.dot_dimension_numbers<[1], [0], [0], [1], [0, 0, 1, 1], [], []>} : vector<4x4xf32>, vector<4x128xf32>, vector<4x128xf32> -> vector<4x128xf32>
    %63 = vector.extract_strided_slice %60 {offsets = [0, 128], sizes = [4, 128], strides = [1, 1]} : vector<4x384xf32> to vector<4x128xf32>
    %64 = arith.addf %62, %63 : vector<4x128xf32>
    %65 = vector.extract_strided_slice %60 {offsets = [0, 256], sizes = [4, 128], strides = [1, 1]} : vector<4x384xf32> to vector<4x128xf32>
    %cst_34 = arith.constant dense<0.000000e+00> : vector<4x128xf32>
    %66 = tpu.matmul %3, %65, %cst_34 {dimension_numbers = #tpu.dot_dimension_numbers<[1], [0], [0], [1], [0, 0, 1, 1], [], []>} : vector<4x4xf32>, vector<4x128xf32>, vector<4x128xf32> -> vector<4x128xf32>
    %67 = arith.addf %64, %66 : vector<4x128xf32>
    %68 = vector.broadcast %8 : vector<1x128xf32> to vector<4x128xf32>
    %69 = arith.addf %67, %68 : vector<4x128xf32>
    %c0_35 = arith.constant 0 : index
    %c0_36 = arith.constant 0 : index
    %70 = vector.load %arg6[%c0_35, %c0_36] : memref<4x128xf32, #tpu.memory_space<vmem>>, vector<4x128xf32>
    tpu.vector_store %arg6[%c0_35, %c0_36], %69 {strides = array<i32>} : memref<4x128xf32, #tpu.memory_space<vmem>>, vector<4x128xf32>,
    return
  }
}

module attributes {stable_mosaic.version = 11 : i64} {
  func.func @kernel(%arg0: memref<2x256xf32, #tpu.memory_space<vmem>>, %arg1: memref<256x512xf32, #tpu.memory_space<vmem>>, %arg2: memref<1x512xf32, #tpu.memory_space<vmem>>, %arg3: memref<512x256xf32, #tpu.memory_space<vmem>>, %arg4: memref<1x256xf32, #tpu.memory_space<vmem>>, %arg5: memref<2x256xf32, #tpu.memory_space<vmem>>) attributes {dimension_semantics = [], scalar_prefetch = 0 : i64, scratch_operands = 0 : i64, tpu.core_type = #tpu.core_type<tc>} {
    %c0 = arith.constant 0 : index
    %c0_0 = arith.constant 0 : index
    %0 = vector.load %arg0[%c0, %c0_0] : memref<2x256xf32, #tpu.memory_space<vmem>>, vector<2x256xf32>
    %c0_1 = arith.constant 0 : index
    %c0_2 = arith.constant 0 : index
    %1 = vector.load %arg1[%c0_1, %c0_2] : memref<256x512xf32, #tpu.memory_space<vmem>>, vector<256x512xf32>
    %c0_3 = arith.constant 0 : index
    %c0_4 = arith.constant 0 : index
    %2 = vector.load %arg2[%c0_3, %c0_4] : memref<1x512xf32, #tpu.memory_space<vmem>>, vector<1x512xf32>
    %c0_5 = arith.constant 0 : index
    %c0_6 = arith.constant 0 : index
    %3 = vector.load %arg3[%c0_5, %c0_6] : memref<512x256xf32, #tpu.memory_space<vmem>>, vector<512x256xf32>
    %c0_7 = arith.constant 0 : index
    %c0_8 = arith.constant 0 : index
    %4 = vector.load %arg4[%c0_7, %c0_8] : memref<1x256xf32, #tpu.memory_space<vmem>>, vector<1x256xf32>
    %cst = arith.constant dense<0.000000e+00> : vector<2x512xf32>
    %5 = tpu.matmul %0, %1, %cst {dimension_numbers = #tpu.dot_dimension_numbers<[1], [0], [0], [1], [0, 0, 1, 1], [], []>} : vector<2x256xf32>, vector<256x512xf32>, vector<2x512xf32> -> vector<2x512xf32>
    %6 = vector.broadcast %2 : vector<1x512xf32> to vector<2x512xf32>
    %7 = arith.addf %5, %6 : vector<2x512xf32>
    %cst_9 = arith.constant 5.000000e-01 : f32
    %8 = vector.broadcast %cst_9 : f32 to vector<2x512xf32>
    %9 = arith.mulf %8, %7 : vector<2x512xf32>
    %cst_10 = arith.constant 0.707106769 : f32
    %10 = vector.broadcast %cst_10 : f32 to vector<2x512xf32>
    %11 = arith.mulf %7, %10 : vector<2x512xf32>
    %cst_11 = arith.constant 0.000000e+00 : f32
    %12 = vector.broadcast %cst_11 : f32 to vector<2x512xf32>
    %13 = arith.cmpf oge, %11, %12 : vector<2x512xf32>
    %cst_12 = arith.constant 1.000000e+00 : f32
    %cst_13 = arith.constant -1.000000e+00 : f32
    %14 = vector.broadcast %cst_12 : f32 to vector<2x512xf32>
    %15 = vector.broadcast %cst_13 : f32 to vector<2x512xf32>
    %16 = arith.select %13, %14, %15 : vector<2x512xi1>, vector<2x512xf32>
    %17 = math.absf %11 : vector<2x512xf32>
    %cst_14 = arith.constant 0.327591091 : f32
    %18 = vector.broadcast %cst_14 : f32 to vector<2x512xf32>
    %19 = arith.mulf %18, %17 : vector<2x512xf32>
    %cst_15 = arith.constant 1.000000e+00 : f32
    %20 = vector.broadcast %cst_15 : f32 to vector<2x512xf32>
    %21 = arith.addf %20, %19 : vector<2x512xf32>
    %cst_16 = arith.constant 1.000000e+00 : f32
    %22 = vector.broadcast %cst_16 : f32 to vector<2x512xf32>
    %23 = arith.divf %22, %21 : vector<2x512xf32>
    %cst_17 = arith.constant 1.06140542 : f32
    %24 = vector.broadcast %cst_17 : f32 to vector<2x512xf32>
    %25 = arith.mulf %24, %23 : vector<2x512xf32>
    %cst_18 = arith.constant -1.45315206 : f32
    %26 = vector.broadcast %cst_18 : f32 to vector<2x512xf32>
    %27 = arith.addf %25, %26 : vector<2x512xf32>
    %28 = arith.mulf %27, %23 : vector<2x512xf32>
    %cst_19 = arith.constant 1.42141378 : f32
    %29 = vector.broadcast %cst_19 : f32 to vector<2x512xf32>
    %30 = arith.addf %28, %29 : vector<2x512xf32>
    %31 = arith.mulf %30, %23 : vector<2x512xf32>
    %cst_20 = arith.constant -0.284496725 : f32
    %32 = vector.broadcast %cst_20 : f32 to vector<2x512xf32>
    %33 = arith.addf %31, %32 : vector<2x512xf32>
    %34 = arith.mulf %33, %23 : vector<2x512xf32>
    %cst_21 = arith.constant 0.254829586 : f32
    %35 = vector.broadcast %cst_21 : f32 to vector<2x512xf32>
    %36 = arith.addf %34, %35 : vector<2x512xf32>
    %37 = arith.mulf %36, %23 : vector<2x512xf32>
    %38 = arith.mulf %17, %17 : vector<2x512xf32>
    %cst_22 = arith.constant 0.000000e+00 : f32
    %39 = vector.broadcast %cst_22 : f32 to vector<2x512xf32>
    %40 = arith.subf %39, %38 : vector<2x512xf32>
    %41 = math.exp %40 : vector<2x512xf32>
    %42 = arith.mulf %37, %41 : vector<2x512xf32>
    %cst_23 = arith.constant 1.000000e+00 : f32
    %43 = vector.broadcast %cst_23 : f32 to vector<2x512xf32>
    %44 = arith.subf %43, %42 : vector<2x512xf32>
    %45 = arith.mulf %16, %44 : vector<2x512xf32>
    %cst_24 = arith.constant 1.000000e+00 : f32
    %46 = vector.broadcast %cst_24 : f32 to vector<2x512xf32>
    %47 = arith.addf %46, %45 : vector<2x512xf32>
    %48 = arith.mulf %9, %47 : vector<2x512xf32>
    %cst_25 = arith.constant dense<0.000000e+00> : vector<2x256xf32>
    %49 = tpu.matmul %48, %3, %cst_25 {dimension_numbers = #tpu.dot_dimension_numbers<[1], [0], [0], [1], [0, 0, 1, 1], [], []>} : vector<2x512xf32>, vector<512x256xf32>, vector<2x256xf32> -> vector<2x256xf32>
    %50 = vector.broadcast %4 : vector<1x256xf32> to vector<2x256xf32>
    %51 = arith.addf %49, %50 : vector<2x256xf32>
    %c0_26 = arith.constant 0 : index
    %c0_27 = arith.constant 0 : index
    %52 = vector.load %arg5[%c0_26, %c0_27] : memref<2x256xf32, #tpu.memory_space<vmem>>, vector<2x256xf32>
    tpu.vector_store %arg5[%c0_26, %c0_27], %51 {strides = array<i32>} : memref<2x256xf32, #tpu.memory_space<vmem>>, vector<2x256xf32>,
    return
  }
}

module attributes {stable_mosaic.version = 11 : i64} {
  func.func @kernel(%arg0: memref<8x80xf32, #tpu.memory_space<vmem>>, %arg1: memref<80x768xf32, #tpu.memory_space<vmem>>, %arg2: memref<1x256xf32, #tpu.memory_space<vmem>>, %arg3: memref<256x384xf32, #tpu.memory_space<vmem>>, %arg4: memref<1x128xf32, #tpu.memory_space<vmem>>, %arg5: memref<2x8x8xf32, #tpu.memory_space<vmem>>, %arg6: memref<8x128xf32, #tpu.memory_space<vmem>>) attributes {dimension_semantics = [], scalar_prefetch = 0 : i64, scratch_operands = 0 : i64, tpu.core_type = #tpu.core_type<tc>} {
    %c0 = arith.constant 0 : index
    %c0_0 = arith.constant 0 : index
    %c0_1 = arith.constant 0 : index
    %0 = vector.load %arg5[%c0, %c0_0, %c0_1] : memref<2x8x8xf32, #tpu.memory_space<vmem>>, vector<1x8x8xf32>
    %1 = vector.shape_cast %0 : vector<1x8x8xf32> to vector<8x8xf32>
    %c1 = arith.constant 1 : index
    %c0_2 = arith.constant 0 : index
    %c0_3 = arith.constant 0 : index
    %2 = vector.load %arg5[%c1, %c0_2, %c0_3] : memref<2x8x8xf32, #tpu.memory_space<vmem>>, vector<1x8x8xf32>
    %3 = vector.shape_cast %2 : vector<1x8x8xf32> to vector<8x8xf32>
    %c0_4 = arith.constant 0 : index
    %c0_5 = arith.constant 0 : index
    %4 = vector.load %arg0[%c0_4, %c0_5] : memref<8x80xf32, #tpu.memory_space<vmem>>, vector<8x80xf32>
    %c0_6 = arith.constant 0 : index
    %c0_7 = arith.constant 0 : index
    %5 = vector.load %arg1[%c0_6, %c0_7] : memref<80x768xf32, #tpu.memory_space<vmem>>, vector<80x768xf32>
    %c0_8 = arith.constant 0 : index
    %c0_9 = arith.constant 0 : index
    %6 = vector.load %arg2[%c0_8, %c0_9] : memref<1x256xf32, #tpu.memory_space<vmem>>, vector<1x256xf32>
    %c0_10 = arith.constant 0 : index
    %c0_11 = arith.constant 0 : index
    %7 = vector.load %arg3[%c0_10, %c0_11] : memref<256x384xf32, #tpu.memory_space<vmem>>, vector<256x384xf32>
    %c0_12 = arith.constant 0 : index
    %c0_13 = arith.constant 0 : index
    %8 = vector.load %arg4[%c0_12, %c0_13] : memref<1x128xf32, #tpu.memory_space<vmem>>, vector<1x128xf32>
    %cst = arith.constant dense<0.000000e+00> : vector<8x768xf32>
    %9 = tpu.matmul %4, %5, %cst {dimension_numbers = #tpu.dot_dimension_numbers<[1], [0], [0], [1], [0, 0, 1, 1], [], []>} : vector<8x80xf32>, vector<80x768xf32>, vector<8x768xf32> -> vector<8x768xf32>
    %10 = vector.extract_strided_slice %9 {offsets = [0, 0], sizes = [8, 256], strides = [1, 1]} : vector<8x768xf32> to vector<8x256xf32>
    %cst_14 = arith.constant dense<0.000000e+00> : vector<8x256xf32>
    %11 = tpu.matmul %1, %10, %cst_14 {dimension_numbers = #tpu.dot_dimension_numbers<[1], [0], [0], [1], [0, 0, 1, 1], [], []>} : vector<8x8xf32>, vector<8x256xf32>, vector<8x256xf32> -> vector<8x256xf32>
    %12 = vector.extract_strided_slice %9 {offsets = [0, 256], sizes = [8, 256], strides = [1, 1]} : vector<8x768xf32> to vector<8x256xf32>
    %13 = arith.addf %11, %12 : vector<8x256xf32>
    %14 = vector.extract_strided_slice %9 {offsets = [0, 512], sizes = [8, 256], strides = [1, 1]} : vector<8x768xf32> to vector<8x256xf32>
    %cst_15 = arith.constant dense<0.000000e+00> : vector<8x256xf32>
    %15 = tpu.matmul %3, %14, %cst_15 {dimension_numbers = #tpu.dot_dimension_numbers<[1], [0], [0], [1], [0, 0, 1, 1], [], []>} : vector<8x8xf32>, vector<8x256xf32>, vector<8x256xf32> -> vector<8x256xf32>
    %16 = arith.addf %13, %15 : vector<8x256xf32>
    %17 = vector.broadcast %6 : vector<1x256xf32> to vector<8x256xf32>
    %18 = arith.addf %16, %17 : vector<8x256xf32>
    %cst_16 = arith.constant 5.000000e-01 : f32
    %19 = vector.broadcast %cst_16 : f32 to vector<8x256xf32>
    %20 = arith.mulf %19, %18 : vector<8x256xf32>
    %cst_17 = arith.constant 0.707106769 : f32
    %21 = vector.broadcast %cst_17 : f32 to vector<8x256xf32>
    %22 = arith.mulf %18, %21 : vector<8x256xf32>
    %cst_18 = arith.constant 0.000000e+00 : f32
    %23 = vector.broadcast %cst_18 : f32 to vector<8x256xf32>
    %24 = arith.cmpf oge, %22, %23 : vector<8x256xf32>
    %cst_19 = arith.constant 1.000000e+00 : f32
    %cst_20 = arith.constant -1.000000e+00 : f32
    %25 = vector.broadcast %cst_19 : f32 to vector<8x256xf32>
    %26 = vector.broadcast %cst_20 : f32 to vector<8x256xf32>
    %27 = arith.select %24, %25, %26 : vector<8x256xi1>, vector<8x256xf32>
    %28 = math.absf %22 : vector<8x256xf32>
    %cst_21 = arith.constant 0.327591091 : f32
    %29 = vector.broadcast %cst_21 : f32 to vector<8x256xf32>
    %30 = arith.mulf %29, %28 : vector<8x256xf32>
    %cst_22 = arith.constant 1.000000e+00 : f32
    %31 = vector.broadcast %cst_22 : f32 to vector<8x256xf32>
    %32 = arith.addf %31, %30 : vector<8x256xf32>
    %cst_23 = arith.constant 1.000000e+00 : f32
    %33 = vector.broadcast %cst_23 : f32 to vector<8x256xf32>
    %34 = arith.divf %33, %32 : vector<8x256xf32>
    %cst_24 = arith.constant 1.06140542 : f32
    %35 = vector.broadcast %cst_24 : f32 to vector<8x256xf32>
    %36 = arith.mulf %35, %34 : vector<8x256xf32>
    %cst_25 = arith.constant -1.45315206 : f32
    %37 = vector.broadcast %cst_25 : f32 to vector<8x256xf32>
    %38 = arith.addf %36, %37 : vector<8x256xf32>
    %39 = arith.mulf %38, %34 : vector<8x256xf32>
    %cst_26 = arith.constant 1.42141378 : f32
    %40 = vector.broadcast %cst_26 : f32 to vector<8x256xf32>
    %41 = arith.addf %39, %40 : vector<8x256xf32>
    %42 = arith.mulf %41, %34 : vector<8x256xf32>
    %cst_27 = arith.constant -0.284496725 : f32
    %43 = vector.broadcast %cst_27 : f32 to vector<8x256xf32>
    %44 = arith.addf %42, %43 : vector<8x256xf32>
    %45 = arith.mulf %44, %34 : vector<8x256xf32>
    %cst_28 = arith.constant 0.254829586 : f32
    %46 = vector.broadcast %cst_28 : f32 to vector<8x256xf32>
    %47 = arith.addf %45, %46 : vector<8x256xf32>
    %48 = arith.mulf %47, %34 : vector<8x256xf32>
    %49 = arith.mulf %28, %28 : vector<8x256xf32>
    %cst_29 = arith.constant 0.000000e+00 : f32
    %50 = vector.broadcast %cst_29 : f32 to vector<8x256xf32>
    %51 = arith.subf %50, %49 : vector<8x256xf32>
    %52 = math.exp %51 : vector<8x256xf32>
    %53 = arith.mulf %48, %52 : vector<8x256xf32>
    %cst_30 = arith.constant 1.000000e+00 : f32
    %54 = vector.broadcast %cst_30 : f32 to vector<8x256xf32>
    %55 = arith.subf %54, %53 : vector<8x256xf32>
    %56 = arith.mulf %27, %55 : vector<8x256xf32>
    %cst_31 = arith.constant 1.000000e+00 : f32
    %57 = vector.broadcast %cst_31 : f32 to vector<8x256xf32>
    %58 = arith.addf %57, %56 : vector<8x256xf32>
    %59 = arith.mulf %20, %58 : vector<8x256xf32>
    %cst_32 = arith.constant dense<0.000000e+00> : vector<8x384xf32>
    %60 = tpu.matmul %59, %7, %cst_32 {dimension_numbers = #tpu.dot_dimension_numbers<[1], [0], [0], [1], [0, 0, 1, 1], [], []>} : vector<8x256xf32>, vector<256x384xf32>, vector<8x384xf32> -> vector<8x384xf32>
    %61 = vector.extract_strided_slice %60 {offsets = [0, 0], sizes = [8, 128], strides = [1, 1]} : vector<8x384xf32> to vector<8x128xf32>
    %cst_33 = arith.constant dense<0.000000e+00> : vector<8x128xf32>
    %62 = tpu.matmul %1, %61, %cst_33 {dimension_numbers = #tpu.dot_dimension_numbers<[1], [0], [0], [1], [0, 0, 1, 1], [], []>} : vector<8x8xf32>, vector<8x128xf32>, vector<8x128xf32> -> vector<8x128xf32>
    %63 = vector.extract_strided_slice %60 {offsets = [0, 128], sizes = [8, 128], strides = [1, 1]} : vector<8x384xf32> to vector<8x128xf32>
    %64 = arith.addf %62, %63 : vector<8x128xf32>
    %65 = vector.extract_strided_slice %60 {offsets = [0, 256], sizes = [8, 128], strides = [1, 1]} : vector<8x384xf32> to vector<8x128xf32>
    %cst_34 = arith.constant dense<0.000000e+00> : vector<8x128xf32>
    %66 = tpu.matmul %3, %65, %cst_34 {dimension_numbers = #tpu.dot_dimension_numbers<[1], [0], [0], [1], [0, 0, 1, 1], [], []>} : vector<8x8xf32>, vector<8x128xf32>, vector<8x128xf32> -> vector<8x128xf32>
    %67 = arith.addf %64, %66 : vector<8x128xf32>
    %68 = vector.broadcast %8 : vector<1x128xf32> to vector<8x128xf32>
    %69 = arith.addf %67, %68 : vector<8x128xf32>
    %c0_35 = arith.constant 0 : index
    %c0_36 = arith.constant 0 : index
    %70 = vector.load %arg6[%c0_35, %c0_36] : memref<8x128xf32, #tpu.memory_space<vmem>>, vector<8x128xf32>
    tpu.vector_store %arg6[%c0_35, %c0_36], %69 {strides = array<i32>} : memref<8x128xf32, #tpu.memory_space<vmem>>, vector<8x128xf32>,
    return
  }
}

module attributes {stable_mosaic.version = 11 : i64} {
  func.func @kernel(%arg0: memref<8x64xf32, #tpu.memory_space<vmem>>, %arg1: memref<64x384xf32, #tpu.memory_space<vmem>>, %arg2: memref<1x128xf32, #tpu.memory_space<vmem>>, %arg3: memref<128x384xf32, #tpu.memory_space<vmem>>, %arg4: memref<1x128xf32, #tpu.memory_space<vmem>>, %arg5: memref<2x8x8xf32, #tpu.memory_space<vmem>>, %arg6: memref<8x128xf32, #tpu.memory_space<vmem>>) attributes {dimension_semantics = [], scalar_prefetch = 0 : i64, scratch_operands = 0 : i64, tpu.core_type = #tpu.core_type<tc>} {
    %c0 = arith.constant 0 : index
    %c0_0 = arith.constant 0 : index
    %c0_1 = arith.constant 0 : index
    %0 = vector.load %arg5[%c0, %c0_0, %c0_1] : memref<2x8x8xf32, #tpu.memory_space<vmem>>, vector<1x8x8xf32>
    %1 = vector.shape_cast %0 : vector<1x8x8xf32> to vector<8x8xf32>
    %c1 = arith.constant 1 : index
    %c0_2 = arith.constant 0 : index
    %c0_3 = arith.constant 0 : index
    %2 = vector.load %arg5[%c1, %c0_2, %c0_3] : memref<2x8x8xf32, #tpu.memory_space<vmem>>, vector<1x8x8xf32>
    %3 = vector.shape_cast %2 : vector<1x8x8xf32> to vector<8x8xf32>
    %c0_4 = arith.constant 0 : index
    %c0_5 = arith.constant 0 : index
    %4 = vector.load %arg0[%c0_4, %c0_5] : memref<8x64xf32, #tpu.memory_space<vmem>>, vector<8x64xf32>
    %c0_6 = arith.constant 0 : index
    %c0_7 = arith.constant 0 : index
    %5 = vector.load %arg1[%c0_6, %c0_7] : memref<64x384xf32, #tpu.memory_space<vmem>>, vector<64x384xf32>
    %c0_8 = arith.constant 0 : index
    %c0_9 = arith.constant 0 : index
    %6 = vector.load %arg2[%c0_8, %c0_9] : memref<1x128xf32, #tpu.memory_space<vmem>>, vector<1x128xf32>
    %c0_10 = arith.constant 0 : index
    %c0_11 = arith.constant 0 : index
    %7 = vector.load %arg3[%c0_10, %c0_11] : memref<128x384xf32, #tpu.memory_space<vmem>>, vector<128x384xf32>
    %c0_12 = arith.constant 0 : index
    %c0_13 = arith.constant 0 : index
    %8 = vector.load %arg4[%c0_12, %c0_13] : memref<1x128xf32, #tpu.memory_space<vmem>>, vector<1x128xf32>
    %cst = arith.constant dense<0.000000e+00> : vector<8x384xf32>
    %9 = tpu.matmul %4, %5, %cst {dimension_numbers = #tpu.dot_dimension_numbers<[1], [0], [0], [1], [0, 0, 1, 1], [], []>} : vector<8x64xf32>, vector<64x384xf32>, vector<8x384xf32> -> vector<8x384xf32>
    %10 = vector.extract_strided_slice %9 {offsets = [0, 0], sizes = [8, 128], strides = [1, 1]} : vector<8x384xf32> to vector<8x128xf32>
    %cst_14 = arith.constant dense<0.000000e+00> : vector<8x128xf32>
    %11 = tpu.matmul %1, %10, %cst_14 {dimension_numbers = #tpu.dot_dimension_numbers<[1], [0], [0], [1], [0, 0, 1, 1], [], []>} : vector<8x8xf32>, vector<8x128xf32>, vector<8x128xf32> -> vector<8x128xf32>
    %12 = vector.extract_strided_slice %9 {offsets = [0, 128], sizes = [8, 128], strides = [1, 1]} : vector<8x384xf32> to vector<8x128xf32>
    %13 = arith.addf %11, %12 : vector<8x128xf32>
    %14 = vector.extract_strided_slice %9 {offsets = [0, 256], sizes = [8, 128], strides = [1, 1]} : vector<8x384xf32> to vector<8x128xf32>
    %cst_15 = arith.constant dense<0.000000e+00> : vector<8x128xf32>
    %15 = tpu.matmul %3, %14, %cst_15 {dimension_numbers = #tpu.dot_dimension_numbers<[1], [0], [0], [1], [0, 0, 1, 1], [], []>} : vector<8x8xf32>, vector<8x128xf32>, vector<8x128xf32> -> vector<8x128xf32>
    %16 = arith.addf %13, %15 : vector<8x128xf32>
    %17 = vector.broadcast %6 : vector<1x128xf32> to vector<8x128xf32>
    %18 = arith.addf %16, %17 : vector<8x128xf32>
    %cst_16 = arith.constant 5.000000e-01 : f32
    %19 = vector.broadcast %cst_16 : f32 to vector<8x128xf32>
    %20 = arith.mulf %19, %18 : vector<8x128xf32>
    %cst_17 = arith.constant 0.707106769 : f32
    %21 = vector.broadcast %cst_17 : f32 to vector<8x128xf32>
    %22 = arith.mulf %18, %21 : vector<8x128xf32>
    %cst_18 = arith.constant 0.000000e+00 : f32
    %23 = vector.broadcast %cst_18 : f32 to vector<8x128xf32>
    %24 = arith.cmpf oge, %22, %23 : vector<8x128xf32>
    %cst_19 = arith.constant 1.000000e+00 : f32
    %cst_20 = arith.constant -1.000000e+00 : f32
    %25 = vector.broadcast %cst_19 : f32 to vector<8x128xf32>
    %26 = vector.broadcast %cst_20 : f32 to vector<8x128xf32>
    %27 = arith.select %24, %25, %26 : vector<8x128xi1>, vector<8x128xf32>
    %28 = math.absf %22 : vector<8x128xf32>
    %cst_21 = arith.constant 0.327591091 : f32
    %29 = vector.broadcast %cst_21 : f32 to vector<8x128xf32>
    %30 = arith.mulf %29, %28 : vector<8x128xf32>
    %cst_22 = arith.constant 1.000000e+00 : f32
    %31 = vector.broadcast %cst_22 : f32 to vector<8x128xf32>
    %32 = arith.addf %31, %30 : vector<8x128xf32>
    %cst_23 = arith.constant 1.000000e+00 : f32
    %33 = vector.broadcast %cst_23 : f32 to vector<8x128xf32>
    %34 = arith.divf %33, %32 : vector<8x128xf32>
    %cst_24 = arith.constant 1.06140542 : f32
    %35 = vector.broadcast %cst_24 : f32 to vector<8x128xf32>
    %36 = arith.mulf %35, %34 : vector<8x128xf32>
    %cst_25 = arith.constant -1.45315206 : f32
    %37 = vector.broadcast %cst_25 : f32 to vector<8x128xf32>
    %38 = arith.addf %36, %37 : vector<8x128xf32>
    %39 = arith.mulf %38, %34 : vector<8x128xf32>
    %cst_26 = arith.constant 1.42141378 : f32
    %40 = vector.broadcast %cst_26 : f32 to vector<8x128xf32>
    %41 = arith.addf %39, %40 : vector<8x128xf32>
    %42 = arith.mulf %41, %34 : vector<8x128xf32>
    %cst_27 = arith.constant -0.284496725 : f32
    %43 = vector.broadcast %cst_27 : f32 to vector<8x128xf32>
    %44 = arith.addf %42, %43 : vector<8x128xf32>
    %45 = arith.mulf %44, %34 : vector<8x128xf32>
    %cst_28 = arith.constant 0.254829586 : f32
    %46 = vector.broadcast %cst_28 : f32 to vector<8x128xf32>
    %47 = arith.addf %45, %46 : vector<8x128xf32>
    %48 = arith.mulf %47, %34 : vector<8x128xf32>
    %49 = arith.mulf %28, %28 : vector<8x128xf32>
    %cst_29 = arith.constant 0.000000e+00 : f32
    %50 = vector.broadcast %cst_29 : f32 to vector<8x128xf32>
    %51 = arith.subf %50, %49 : vector<8x128xf32>
    %52 = math.exp %51 : vector<8x128xf32>
    %53 = arith.mulf %48, %52 : vector<8x128xf32>
    %cst_30 = arith.constant 1.000000e+00 : f32
    %54 = vector.broadcast %cst_30 : f32 to vector<8x128xf32>
    %55 = arith.subf %54, %53 : vector<8x128xf32>
    %56 = arith.mulf %27, %55 : vector<8x128xf32>
    %cst_31 = arith.constant 1.000000e+00 : f32
    %57 = vector.broadcast %cst_31 : f32 to vector<8x128xf32>
    %58 = arith.addf %57, %56 : vector<8x128xf32>
    %59 = arith.mulf %20, %58 : vector<8x128xf32>
    %cst_32 = arith.constant dense<0.000000e+00> : vector<8x384xf32>
    %60 = tpu.matmul %59, %7, %cst_32 {dimension_numbers = #tpu.dot_dimension_numbers<[1], [0], [0], [1], [0, 0, 1, 1], [], []>} : vector<8x128xf32>, vector<128x384xf32>, vector<8x384xf32> -> vector<8x384xf32>
    %61 = vector.extract_strided_slice %60 {offsets = [0, 0], sizes = [8, 128], strides = [1, 1]} : vector<8x384xf32> to vector<8x128xf32>
    %cst_33 = arith.constant dense<0.000000e+00> : vector<8x128xf32>
    %62 = tpu.matmul %1, %61, %cst_33 {dimension_numbers = #tpu.dot_dimension_numbers<[1], [0], [0], [1], [0, 0, 1, 1], [], []>} : vector<8x8xf32>, vector<8x128xf32>, vector<8x128xf32> -> vector<8x128xf32>
    %63 = vector.extract_strided_slice %60 {offsets = [0, 128], sizes = [8, 128], strides = [1, 1]} : vector<8x384xf32> to vector<8x128xf32>
    %64 = arith.addf %62, %63 : vector<8x128xf32>
    %65 = vector.extract_strided_slice %60 {offsets = [0, 256], sizes = [8, 128], strides = [1, 1]} : vector<8x384xf32> to vector<8x128xf32>
    %cst_34 = arith.constant dense<0.000000e+00> : vector<8x128xf32>
    %66 = tpu.matmul %3, %65, %cst_34 {dimension_numbers = #tpu.dot_dimension_numbers<[1], [0], [0], [1], [0, 0, 1, 1], [], []>} : vector<8x8xf32>, vector<8x128xf32>, vector<8x128xf32> -> vector<8x128xf32>
    %67 = arith.addf %64, %66 : vector<8x128xf32>
    %68 = vector.broadcast %8 : vector<1x128xf32> to vector<8x128xf32>
    %69 = arith.addf %67, %68 : vector<8x128xf32>
    %c0_35 = arith.constant 0 : index
    %c0_36 = arith.constant 0 : index
    %70 = vector.load %arg6[%c0_35, %c0_36] : memref<8x128xf32, #tpu.memory_space<vmem>>, vector<8x128xf32>
    tpu.vector_store %arg6[%c0_35, %c0_36], %69 {strides = array<i32>} : memref<8x128xf32, #tpu.memory_space<vmem>>, vector<8x128xf32>,
    return
  }
}

module attributes {stable_mosaic.version = 11 : i64} {
  func.func @kernel(%arg0: memref<12x48xf32, #tpu.memory_space<vmem>>, %arg1: memref<48x384xf32, #tpu.memory_space<vmem>>, %arg2: memref<1x128xf32, #tpu.memory_space<vmem>>, %arg3: memref<128x384xf32, #tpu.memory_space<vmem>>, %arg4: memref<1x128xf32, #tpu.memory_space<vmem>>, %arg5: memref<2x12x12xf32, #tpu.memory_space<vmem>>, %arg6: memref<12x128xf32, #tpu.memory_space<vmem>>) attributes {dimension_semantics = [], scalar_prefetch = 0 : i64, scratch_operands = 0 : i64, tpu.core_type = #tpu.core_type<tc>} {
    %c0 = arith.constant 0 : index
    %c0_0 = arith.constant 0 : index
    %c0_1 = arith.constant 0 : index
    %0 = vector.load %arg5[%c0, %c0_0, %c0_1] : memref<2x12x12xf32, #tpu.memory_space<vmem>>, vector<1x12x12xf32>
    %1 = vector.shape_cast %0 : vector<1x12x12xf32> to vector<12x12xf32>
    %c1 = arith.constant 1 : index
    %c0_2 = arith.constant 0 : index
    %c0_3 = arith.constant 0 : index
    %2 = vector.load %arg5[%c1, %c0_2, %c0_3] : memref<2x12x12xf32, #tpu.memory_space<vmem>>, vector<1x12x12xf32>
    %3 = vector.shape_cast %2 : vector<1x12x12xf32> to vector<12x12xf32>
    %c0_4 = arith.constant 0 : index
    %c0_5 = arith.constant 0 : index
    %4 = vector.load %arg0[%c0_4, %c0_5] : memref<12x48xf32, #tpu.memory_space<vmem>>, vector<12x48xf32>
    %c0_6 = arith.constant 0 : index
    %c0_7 = arith.constant 0 : index
    %5 = vector.load %arg1[%c0_6, %c0_7] : memref<48x384xf32, #tpu.memory_space<vmem>>, vector<48x384xf32>
    %c0_8 = arith.constant 0 : index
    %c0_9 = arith.constant 0 : index
    %6 = vector.load %arg2[%c0_8, %c0_9] : memref<1x128xf32, #tpu.memory_space<vmem>>, vector<1x128xf32>
    %c0_10 = arith.constant 0 : index
    %c0_11 = arith.constant 0 : index
    %7 = vector.load %arg3[%c0_10, %c0_11] : memref<128x384xf32, #tpu.memory_space<vmem>>, vector<128x384xf32>
    %c0_12 = arith.constant 0 : index
    %c0_13 = arith.constant 0 : index
    %8 = vector.load %arg4[%c0_12, %c0_13] : memref<1x128xf32, #tpu.memory_space<vmem>>, vector<1x128xf32>
    %cst = arith.constant dense<0.000000e+00> : vector<12x384xf32>
    %9 = tpu.matmul %4, %5, %cst {dimension_numbers = #tpu.dot_dimension_numbers<[1], [0], [0], [1], [0, 0, 1, 1], [], []>} : vector<12x48xf32>, vector<48x384xf32>, vector<12x384xf32> -> vector<12x384xf32>
    %10 = vector.extract_strided_slice %9 {offsets = [0, 0], sizes = [12, 128], strides = [1, 1]} : vector<12x384xf32> to vector<12x128xf32>
    %cst_14 = arith.constant dense<0.000000e+00> : vector<12x128xf32>
    %11 = tpu.matmul %1, %10, %cst_14 {dimension_numbers = #tpu.dot_dimension_numbers<[1], [0], [0], [1], [0, 0, 1, 1], [], []>} : vector<12x12xf32>, vector<12x128xf32>, vector<12x128xf32> -> vector<12x128xf32>
    %12 = vector.extract_strided_slice %9 {offsets = [0, 128], sizes = [12, 128], strides = [1, 1]} : vector<12x384xf32> to vector<12x128xf32>
    %13 = arith.addf %11, %12 : vector<12x128xf32>
    %14 = vector.extract_strided_slice %9 {offsets = [0, 256], sizes = [12, 128], strides = [1, 1]} : vector<12x384xf32> to vector<12x128xf32>
    %cst_15 = arith.constant dense<0.000000e+00> : vector<12x128xf32>
    %15 = tpu.matmul %3, %14, %cst_15 {dimension_numbers = #tpu.dot_dimension_numbers<[1], [0], [0], [1], [0, 0, 1, 1], [], []>} : vector<12x12xf32>, vector<12x128xf32>, vector<12x128xf32> -> vector<12x128xf32>
    %16 = arith.addf %13, %15 : vector<12x128xf32>
    %17 = vector.broadcast %6 : vector<1x128xf32> to vector<12x128xf32>
    %18 = arith.addf %16, %17 : vector<12x128xf32>
    %cst_16 = arith.constant 5.000000e-01 : f32
    %19 = vector.broadcast %cst_16 : f32 to vector<12x128xf32>
    %20 = arith.mulf %19, %18 : vector<12x128xf32>
    %cst_17 = arith.constant 0.707106769 : f32
    %21 = vector.broadcast %cst_17 : f32 to vector<12x128xf32>
    %22 = arith.mulf %18, %21 : vector<12x128xf32>
    %cst_18 = arith.constant 0.000000e+00 : f32
    %23 = vector.broadcast %cst_18 : f32 to vector<12x128xf32>
    %24 = arith.cmpf oge, %22, %23 : vector<12x128xf32>
    %cst_19 = arith.constant 1.000000e+00 : f32
    %cst_20 = arith.constant -1.000000e+00 : f32
    %25 = vector.broadcast %cst_19 : f32 to vector<12x128xf32>
    %26 = vector.broadcast %cst_20 : f32 to vector<12x128xf32>
    %27 = arith.select %24, %25, %26 : vector<12x128xi1>, vector<12x128xf32>
    %28 = math.absf %22 : vector<12x128xf32>
    %cst_21 = arith.constant 0.327591091 : f32
    %29 = vector.broadcast %cst_21 : f32 to vector<12x128xf32>
    %30 = arith.mulf %29, %28 : vector<12x128xf32>
    %cst_22 = arith.constant 1.000000e+00 : f32
    %31 = vector.broadcast %cst_22 : f32 to vector<12x128xf32>
    %32 = arith.addf %31, %30 : vector<12x128xf32>
    %cst_23 = arith.constant 1.000000e+00 : f32
    %33 = vector.broadcast %cst_23 : f32 to vector<12x128xf32>
    %34 = arith.divf %33, %32 : vector<12x128xf32>
    %cst_24 = arith.constant 1.06140542 : f32
    %35 = vector.broadcast %cst_24 : f32 to vector<12x128xf32>
    %36 = arith.mulf %35, %34 : vector<12x128xf32>
    %cst_25 = arith.constant -1.45315206 : f32
    %37 = vector.broadcast %cst_25 : f32 to vector<12x128xf32>
    %38 = arith.addf %36, %37 : vector<12x128xf32>
    %39 = arith.mulf %38, %34 : vector<12x128xf32>
    %cst_26 = arith.constant 1.42141378 : f32
    %40 = vector.broadcast %cst_26 : f32 to vector<12x128xf32>
    %41 = arith.addf %39, %40 : vector<12x128xf32>
    %42 = arith.mulf %41, %34 : vector<12x128xf32>
    %cst_27 = arith.constant -0.284496725 : f32
    %43 = vector.broadcast %cst_27 : f32 to vector<12x128xf32>
    %44 = arith.addf %42, %43 : vector<12x128xf32>
    %45 = arith.mulf %44, %34 : vector<12x128xf32>
    %cst_28 = arith.constant 0.254829586 : f32
    %46 = vector.broadcast %cst_28 : f32 to vector<12x128xf32>
    %47 = arith.addf %45, %46 : vector<12x128xf32>
    %48 = arith.mulf %47, %34 : vector<12x128xf32>
    %49 = arith.mulf %28, %28 : vector<12x128xf32>
    %cst_29 = arith.constant 0.000000e+00 : f32
    %50 = vector.broadcast %cst_29 : f32 to vector<12x128xf32>
    %51 = arith.subf %50, %49 : vector<12x128xf32>
    %52 = math.exp %51 : vector<12x128xf32>
    %53 = arith.mulf %48, %52 : vector<12x128xf32>
    %cst_30 = arith.constant 1.000000e+00 : f32
    %54 = vector.broadcast %cst_30 : f32 to vector<12x128xf32>
    %55 = arith.subf %54, %53 : vector<12x128xf32>
    %56 = arith.mulf %27, %55 : vector<12x128xf32>
    %cst_31 = arith.constant 1.000000e+00 : f32
    %57 = vector.broadcast %cst_31 : f32 to vector<12x128xf32>
    %58 = arith.addf %57, %56 : vector<12x128xf32>
    %59 = arith.mulf %20, %58 : vector<12x128xf32>
    %cst_32 = arith.constant dense<0.000000e+00> : vector<12x384xf32>
    %60 = tpu.matmul %59, %7, %cst_32 {dimension_numbers = #tpu.dot_dimension_numbers<[1], [0], [0], [1], [0, 0, 1, 1], [], []>} : vector<12x128xf32>, vector<128x384xf32>, vector<12x384xf32> -> vector<12x384xf32>
    %61 = vector.extract_strided_slice %60 {offsets = [0, 0], sizes = [12, 128], strides = [1, 1]} : vector<12x384xf32> to vector<12x128xf32>
    %cst_33 = arith.constant dense<0.000000e+00> : vector<12x128xf32>
    %62 = tpu.matmul %1, %61, %cst_33 {dimension_numbers = #tpu.dot_dimension_numbers<[1], [0], [0], [1], [0, 0, 1, 1], [], []>} : vector<12x12xf32>, vector<12x128xf32>, vector<12x128xf32> -> vector<12x128xf32>
    %63 = vector.extract_strided_slice %60 {offsets = [0, 128], sizes = [12, 128], strides = [1, 1]} : vector<12x384xf32> to vector<12x128xf32>
    %64 = arith.addf %62, %63 : vector<12x128xf32>
    %65 = vector.extract_strided_slice %60 {offsets = [0, 256], sizes = [12, 128], strides = [1, 1]} : vector<12x384xf32> to vector<12x128xf32>
    %cst_34 = arith.constant dense<0.000000e+00> : vector<12x128xf32>
    %66 = tpu.matmul %3, %65, %cst_34 {dimension_numbers = #tpu.dot_dimension_numbers<[1], [0], [0], [1], [0, 0, 1, 1], [], []>} : vector<12x12xf32>, vector<12x128xf32>, vector<12x128xf32> -> vector<12x128xf32>
    %67 = arith.addf %64, %66 : vector<12x128xf32>
    %68 = vector.broadcast %8 : vector<1x128xf32> to vector<12x128xf32>
    %69 = arith.addf %67, %68 : vector<12x128xf32>
    %c0_35 = arith.constant 0 : index
    %c0_36 = arith.constant 0 : index
    %70 = vector.load %arg6[%c0_35, %c0_36] : memref<12x128xf32, #tpu.memory_space<vmem>>, vector<12x128xf32>
    tpu.vector_store %arg6[%c0_35, %c0_36], %69 {strides = array<i32>} : memref<12x128xf32, #tpu.memory_space<vmem>>, vector<12x128xf32>,
    return
  }
}

module attributes {stable_mosaic.version = 11 : i64} {
  func.func @kernel(%arg0: memref<16x32xf32, #tpu.memory_space<vmem>>, %arg1: memref<32x384xf32, #tpu.memory_space<vmem>>, %arg2: memref<1x128xf32, #tpu.memory_space<vmem>>, %arg3: memref<128x384xf32, #tpu.memory_space<vmem>>, %arg4: memref<1x128xf32, #tpu.memory_space<vmem>>, %arg5: memref<2x16x16xf32, #tpu.memory_space<vmem>>, %arg6: memref<16x128xf32, #tpu.memory_space<vmem>>) attributes {dimension_semantics = [], scalar_prefetch = 0 : i64, scratch_operands = 0 : i64, tpu.core_type = #tpu.core_type<tc>} {
    %c0 = arith.constant 0 : index
    %c0_0 = arith.constant 0 : index
    %c0_1 = arith.constant 0 : index
    %0 = vector.load %arg5[%c0, %c0_0, %c0_1] : memref<2x16x16xf32, #tpu.memory_space<vmem>>, vector<1x16x16xf32>
    %1 = vector.shape_cast %0 : vector<1x16x16xf32> to vector<16x16xf32>
    %c1 = arith.constant 1 : index
    %c0_2 = arith.constant 0 : index
    %c0_3 = arith.constant 0 : index
    %2 = vector.load %arg5[%c1, %c0_2, %c0_3] : memref<2x16x16xf32, #tpu.memory_space<vmem>>, vector<1x16x16xf32>
    %3 = vector.shape_cast %2 : vector<1x16x16xf32> to vector<16x16xf32>
    %c0_4 = arith.constant 0 : index
    %c0_5 = arith.constant 0 : index
    %4 = vector.load %arg0[%c0_4, %c0_5] : memref<16x32xf32, #tpu.memory_space<vmem>>, vector<16x32xf32>
    %c0_6 = arith.constant 0 : index
    %c0_7 = arith.constant 0 : index
    %5 = vector.load %arg1[%c0_6, %c0_7] : memref<32x384xf32, #tpu.memory_space<vmem>>, vector<32x384xf32>
    %c0_8 = arith.constant 0 : index
    %c0_9 = arith.constant 0 : index
    %6 = vector.load %arg2[%c0_8, %c0_9] : memref<1x128xf32, #tpu.memory_space<vmem>>, vector<1x128xf32>
    %c0_10 = arith.constant 0 : index
    %c0_11 = arith.constant 0 : index
    %7 = vector.load %arg3[%c0_10, %c0_11] : memref<128x384xf32, #tpu.memory_space<vmem>>, vector<128x384xf32>
    %c0_12 = arith.constant 0 : index
    %c0_13 = arith.constant 0 : index
    %8 = vector.load %arg4[%c0_12, %c0_13] : memref<1x128xf32, #tpu.memory_space<vmem>>, vector<1x128xf32>
    %cst = arith.constant dense<0.000000e+00> : vector<16x384xf32>
    %9 = tpu.matmul %4, %5, %cst {dimension_numbers = #tpu.dot_dimension_numbers<[1], [0], [0], [1], [0, 0, 1, 1], [], []>} : vector<16x32xf32>, vector<32x384xf32>, vector<16x384xf32> -> vector<16x384xf32>
    %10 = vector.extract_strided_slice %9 {offsets = [0, 0], sizes = [16, 128], strides = [1, 1]} : vector<16x384xf32> to vector<16x128xf32>
    %cst_14 = arith.constant dense<0.000000e+00> : vector<16x128xf32>
    %11 = tpu.matmul %1, %10, %cst_14 {dimension_numbers = #tpu.dot_dimension_numbers<[1], [0], [0], [1], [0, 0, 1, 1], [], []>} : vector<16x16xf32>, vector<16x128xf32>, vector<16x128xf32> -> vector<16x128xf32>
    %12 = vector.extract_strided_slice %9 {offsets = [0, 128], sizes = [16, 128], strides = [1, 1]} : vector<16x384xf32> to vector<16x128xf32>
    %13 = arith.addf %11, %12 : vector<16x128xf32>
    %14 = vector.extract_strided_slice %9 {offsets = [0, 256], sizes = [16, 128], strides = [1, 1]} : vector<16x384xf32> to vector<16x128xf32>
    %cst_15 = arith.constant dense<0.000000e+00> : vector<16x128xf32>
    %15 = tpu.matmul %3, %14, %cst_15 {dimension_numbers = #tpu.dot_dimension_numbers<[1], [0], [0], [1], [0, 0, 1, 1], [], []>} : vector<16x16xf32>, vector<16x128xf32>, vector<16x128xf32> -> vector<16x128xf32>
    %16 = arith.addf %13, %15 : vector<16x128xf32>
    %17 = vector.broadcast %6 : vector<1x128xf32> to vector<16x128xf32>
    %18 = arith.addf %16, %17 : vector<16x128xf32>
    %cst_16 = arith.constant 5.000000e-01 : f32
    %19 = vector.broadcast %cst_16 : f32 to vector<16x128xf32>
    %20 = arith.mulf %19, %18 : vector<16x128xf32>
    %cst_17 = arith.constant 0.707106769 : f32
    %21 = vector.broadcast %cst_17 : f32 to vector<16x128xf32>
    %22 = arith.mulf %18, %21 : vector<16x128xf32>
    %cst_18 = arith.constant 0.000000e+00 : f32
    %23 = vector.broadcast %cst_18 : f32 to vector<16x128xf32>
    %24 = arith.cmpf oge, %22, %23 : vector<16x128xf32>
    %cst_19 = arith.constant 1.000000e+00 : f32
    %cst_20 = arith.constant -1.000000e+00 : f32
    %25 = vector.broadcast %cst_19 : f32 to vector<16x128xf32>
    %26 = vector.broadcast %cst_20 : f32 to vector<16x128xf32>
    %27 = arith.select %24, %25, %26 : vector<16x128xi1>, vector<16x128xf32>
    %28 = math.absf %22 : vector<16x128xf32>
    %cst_21 = arith.constant 0.327591091 : f32
    %29 = vector.broadcast %cst_21 : f32 to vector<16x128xf32>
    %30 = arith.mulf %29, %28 : vector<16x128xf32>
    %cst_22 = arith.constant 1.000000e+00 : f32
    %31 = vector.broadcast %cst_22 : f32 to vector<16x128xf32>
    %32 = arith.addf %31, %30 : vector<16x128xf32>
    %cst_23 = arith.constant 1.000000e+00 : f32
    %33 = vector.broadcast %cst_23 : f32 to vector<16x128xf32>
    %34 = arith.divf %33, %32 : vector<16x128xf32>
    %cst_24 = arith.constant 1.06140542 : f32
    %35 = vector.broadcast %cst_24 : f32 to vector<16x128xf32>
    %36 = arith.mulf %35, %34 : vector<16x128xf32>
    %cst_25 = arith.constant -1.45315206 : f32
    %37 = vector.broadcast %cst_25 : f32 to vector<16x128xf32>
    %38 = arith.addf %36, %37 : vector<16x128xf32>
    %39 = arith.mulf %38, %34 : vector<16x128xf32>
    %cst_26 = arith.constant 1.42141378 : f32
    %40 = vector.broadcast %cst_26 : f32 to vector<16x128xf32>
    %41 = arith.addf %39, %40 : vector<16x128xf32>
    %42 = arith.mulf %41, %34 : vector<16x128xf32>
    %cst_27 = arith.constant -0.284496725 : f32
    %43 = vector.broadcast %cst_27 : f32 to vector<16x128xf32>
    %44 = arith.addf %42, %43 : vector<16x128xf32>
    %45 = arith.mulf %44, %34 : vector<16x128xf32>
    %cst_28 = arith.constant 0.254829586 : f32
    %46 = vector.broadcast %cst_28 : f32 to vector<16x128xf32>
    %47 = arith.addf %45, %46 : vector<16x128xf32>
    %48 = arith.mulf %47, %34 : vector<16x128xf32>
    %49 = arith.mulf %28, %28 : vector<16x128xf32>
    %cst_29 = arith.constant 0.000000e+00 : f32
    %50 = vector.broadcast %cst_29 : f32 to vector<16x128xf32>
    %51 = arith.subf %50, %49 : vector<16x128xf32>
    %52 = math.exp %51 : vector<16x128xf32>
    %53 = arith.mulf %48, %52 : vector<16x128xf32>
    %cst_30 = arith.constant 1.000000e+00 : f32
    %54 = vector.broadcast %cst_30 : f32 to vector<16x128xf32>
    %55 = arith.subf %54, %53 : vector<16x128xf32>
    %56 = arith.mulf %27, %55 : vector<16x128xf32>
    %cst_31 = arith.constant 1.000000e+00 : f32
    %57 = vector.broadcast %cst_31 : f32 to vector<16x128xf32>
    %58 = arith.addf %57, %56 : vector<16x128xf32>
    %59 = arith.mulf %20, %58 : vector<16x128xf32>
    %cst_32 = arith.constant dense<0.000000e+00> : vector<16x384xf32>
    %60 = tpu.matmul %59, %7, %cst_32 {dimension_numbers = #tpu.dot_dimension_numbers<[1], [0], [0], [1], [0, 0, 1, 1], [], []>} : vector<16x128xf32>, vector<128x384xf32>, vector<16x384xf32> -> vector<16x384xf32>
    %61 = vector.extract_strided_slice %60 {offsets = [0, 0], sizes = [16, 128], strides = [1, 1]} : vector<16x384xf32> to vector<16x128xf32>
    %cst_33 = arith.constant dense<0.000000e+00> : vector<16x128xf32>
    %62 = tpu.matmul %1, %61, %cst_33 {dimension_numbers = #tpu.dot_dimension_numbers<[1], [0], [0], [1], [0, 0, 1, 1], [], []>} : vector<16x16xf32>, vector<16x128xf32>, vector<16x128xf32> -> vector<16x128xf32>
    %63 = vector.extract_strided_slice %60 {offsets = [0, 128], sizes = [16, 128], strides = [1, 1]} : vector<16x384xf32> to vector<16x128xf32>
    %64 = arith.addf %62, %63 : vector<16x128xf32>
    %65 = vector.extract_strided_slice %60 {offsets = [0, 256], sizes = [16, 128], strides = [1, 1]} : vector<16x384xf32> to vector<16x128xf32>
    %cst_34 = arith.constant dense<0.000000e+00> : vector<16x128xf32>
    %66 = tpu.matmul %3, %65, %cst_34 {dimension_numbers = #tpu.dot_dimension_numbers<[1], [0], [0], [1], [0, 0, 1, 1], [], []>} : vector<16x16xf32>, vector<16x128xf32>, vector<16x128xf32> -> vector<16x128xf32>
    %67 = arith.addf %64, %66 : vector<16x128xf32>
    %68 = vector.broadcast %8 : vector<1x128xf32> to vector<16x128xf32>
    %69 = arith.addf %67, %68 : vector<16x128xf32>
    %c0_35 = arith.constant 0 : index
    %c0_36 = arith.constant 0 : index
    %70 = vector.load %arg6[%c0_35, %c0_36] : memref<16x128xf32, #tpu.memory_space<vmem>>, vector<16x128xf32>
    tpu.vector_store %arg6[%c0_35, %c0_36], %69 {strides = array<i32>} : memref<16x128xf32, #tpu.memory_space<vmem>>, vector<16x128xf32>,
    return
  }
}

module attributes {stable_mosaic.version = 11 : i64} {
  func.func @kernel(%arg0: memref<8x80xf32, #tpu.memory_space<vmem>>, %arg1: memref<80x768xf32, #tpu.memory_space<vmem>>, %arg2: memref<1x256xf32, #tpu.memory_space<vmem>>, %arg3: memref<256x384xf32, #tpu.memory_space<vmem>>, %arg4: memref<1x128xf32, #tpu.memory_space<vmem>>, %arg5: memref<2x8x8xf32, #tpu.memory_space<vmem>>, %arg6: memref<8x128xf32, #tpu.memory_space<vmem>>) attributes {dimension_semantics = [], scalar_prefetch = 0 : i64, scratch_operands = 0 : i64, tpu.core_type = #tpu.core_type<tc>} {
    %c0 = arith.constant 0 : index
    %c0_0 = arith.constant 0 : index
    %c0_1 = arith.constant 0 : index
    %0 = vector.load %arg5[%c0, %c0_0, %c0_1] : memref<2x8x8xf32, #tpu.memory_space<vmem>>, vector<1x8x8xf32>
    %1 = vector.shape_cast %0 : vector<1x8x8xf32> to vector<8x8xf32>
    %c1 = arith.constant 1 : index
    %c0_2 = arith.constant 0 : index
    %c0_3 = arith.constant 0 : index
    %2 = vector.load %arg5[%c1, %c0_2, %c0_3] : memref<2x8x8xf32, #tpu.memory_space<vmem>>, vector<1x8x8xf32>
    %3 = vector.shape_cast %2 : vector<1x8x8xf32> to vector<8x8xf32>
    %c0_4 = arith.constant 0 : index
    %c0_5 = arith.constant 0 : index
    %4 = vector.load %arg0[%c0_4, %c0_5] : memref<8x80xf32, #tpu.memory_space<vmem>>, vector<8x80xf32>
    %c0_6 = arith.constant 0 : index
    %c0_7 = arith.constant 0 : index
    %5 = vector.load %arg1[%c0_6, %c0_7] : memref<80x768xf32, #tpu.memory_space<vmem>>, vector<80x768xf32>
    %c0_8 = arith.constant 0 : index
    %c0_9 = arith.constant 0 : index
    %6 = vector.load %arg2[%c0_8, %c0_9] : memref<1x256xf32, #tpu.memory_space<vmem>>, vector<1x256xf32>
    %c0_10 = arith.constant 0 : index
    %c0_11 = arith.constant 0 : index
    %7 = vector.load %arg3[%c0_10, %c0_11] : memref<256x384xf32, #tpu.memory_space<vmem>>, vector<256x384xf32>
    %c0_12 = arith.constant 0 : index
    %c0_13 = arith.constant 0 : index
    %8 = vector.load %arg4[%c0_12, %c0_13] : memref<1x128xf32, #tpu.memory_space<vmem>>, vector<1x128xf32>
    %cst = arith.constant dense<0.000000e+00> : vector<8x768xf32>
    %9 = tpu.matmul %4, %5, %cst {dimension_numbers = #tpu.dot_dimension_numbers<[1], [0], [0], [1], [0, 0, 1, 1], [], []>} : vector<8x80xf32>, vector<80x768xf32>, vector<8x768xf32> -> vector<8x768xf32>
    %10 = vector.extract_strided_slice %9 {offsets = [0, 0], sizes = [8, 256], strides = [1, 1]} : vector<8x768xf32> to vector<8x256xf32>
    %cst_14 = arith.constant dense<0.000000e+00> : vector<8x256xf32>
    %11 = tpu.matmul %1, %10, %cst_14 {dimension_numbers = #tpu.dot_dimension_numbers<[1], [0], [0], [1], [0, 0, 1, 1], [], []>} : vector<8x8xf32>, vector<8x256xf32>, vector<8x256xf32> -> vector<8x256xf32>
    %12 = vector.extract_strided_slice %9 {offsets = [0, 256], sizes = [8, 256], strides = [1, 1]} : vector<8x768xf32> to vector<8x256xf32>
    %13 = arith.addf %11, %12 : vector<8x256xf32>
    %14 = vector.extract_strided_slice %9 {offsets = [0, 512], sizes = [8, 256], strides = [1, 1]} : vector<8x768xf32> to vector<8x256xf32>
    %cst_15 = arith.constant dense<0.000000e+00> : vector<8x256xf32>
    %15 = tpu.matmul %3, %14, %cst_15 {dimension_numbers = #tpu.dot_dimension_numbers<[1], [0], [0], [1], [0, 0, 1, 1], [], []>} : vector<8x8xf32>, vector<8x256xf32>, vector<8x256xf32> -> vector<8x256xf32>
    %16 = arith.addf %13, %15 : vector<8x256xf32>
    %17 = vector.broadcast %6 : vector<1x256xf32> to vector<8x256xf32>
    %18 = arith.addf %16, %17 : vector<8x256xf32>
    %cst_16 = arith.constant 5.000000e-01 : f32
    %19 = vector.broadcast %cst_16 : f32 to vector<8x256xf32>
    %20 = arith.mulf %19, %18 : vector<8x256xf32>
    %cst_17 = arith.constant 0.707106769 : f32
    %21 = vector.broadcast %cst_17 : f32 to vector<8x256xf32>
    %22 = arith.mulf %18, %21 : vector<8x256xf32>
    %cst_18 = arith.constant 0.000000e+00 : f32
    %23 = vector.broadcast %cst_18 : f32 to vector<8x256xf32>
    %24 = arith.cmpf oge, %22, %23 : vector<8x256xf32>
    %cst_19 = arith.constant 1.000000e+00 : f32
    %cst_20 = arith.constant -1.000000e+00 : f32
    %25 = vector.broadcast %cst_19 : f32 to vector<8x256xf32>
    %26 = vector.broadcast %cst_20 : f32 to vector<8x256xf32>
    %27 = arith.select %24, %25, %26 : vector<8x256xi1>, vector<8x256xf32>
    %28 = math.absf %22 : vector<8x256xf32>
    %cst_21 = arith.constant 0.327591091 : f32
    %29 = vector.broadcast %cst_21 : f32 to vector<8x256xf32>
    %30 = arith.mulf %29, %28 : vector<8x256xf32>
    %cst_22 = arith.constant 1.000000e+00 : f32
    %31 = vector.broadcast %cst_22 : f32 to vector<8x256xf32>
    %32 = arith.addf %31, %30 : vector<8x256xf32>
    %cst_23 = arith.constant 1.000000e+00 : f32
    %33 = vector.broadcast %cst_23 : f32 to vector<8x256xf32>
    %34 = arith.divf %33, %32 : vector<8x256xf32>
    %cst_24 = arith.constant 1.06140542 : f32
    %35 = vector.broadcast %cst_24 : f32 to vector<8x256xf32>
    %36 = arith.mulf %35, %34 : vector<8x256xf32>
    %cst_25 = arith.constant -1.45315206 : f32
    %37 = vector.broadcast %cst_25 : f32 to vector<8x256xf32>
    %38 = arith.addf %36, %37 : vector<8x256xf32>
    %39 = arith.mulf %38, %34 : vector<8x256xf32>
    %cst_26 = arith.constant 1.42141378 : f32
    %40 = vector.broadcast %cst_26 : f32 to vector<8x256xf32>
    %41 = arith.addf %39, %40 : vector<8x256xf32>
    %42 = arith.mulf %41, %34 : vector<8x256xf32>
    %cst_27 = arith.constant -0.284496725 : f32
    %43 = vector.broadcast %cst_27 : f32 to vector<8x256xf32>
    %44 = arith.addf %42, %43 : vector<8x256xf32>
    %45 = arith.mulf %44, %34 : vector<8x256xf32>
    %cst_28 = arith.constant 0.254829586 : f32
    %46 = vector.broadcast %cst_28 : f32 to vector<8x256xf32>
    %47 = arith.addf %45, %46 : vector<8x256xf32>
    %48 = arith.mulf %47, %34 : vector<8x256xf32>
    %49 = arith.mulf %28, %28 : vector<8x256xf32>
    %cst_29 = arith.constant 0.000000e+00 : f32
    %50 = vector.broadcast %cst_29 : f32 to vector<8x256xf32>
    %51 = arith.subf %50, %49 : vector<8x256xf32>
    %52 = math.exp %51 : vector<8x256xf32>
    %53 = arith.mulf %48, %52 : vector<8x256xf32>
    %cst_30 = arith.constant 1.000000e+00 : f32
    %54 = vector.broadcast %cst_30 : f32 to vector<8x256xf32>
    %55 = arith.subf %54, %53 : vector<8x256xf32>
    %56 = arith.mulf %27, %55 : vector<8x256xf32>
    %cst_31 = arith.constant 1.000000e+00 : f32
    %57 = vector.broadcast %cst_31 : f32 to vector<8x256xf32>
    %58 = arith.addf %57, %56 : vector<8x256xf32>
    %59 = arith.mulf %20, %58 : vector<8x256xf32>
    %cst_32 = arith.constant dense<0.000000e+00> : vector<8x384xf32>
    %60 = tpu.matmul %59, %7, %cst_32 {dimension_numbers = #tpu.dot_dimension_numbers<[1], [0], [0], [1], [0, 0, 1, 1], [], []>} : vector<8x256xf32>, vector<256x384xf32>, vector<8x384xf32> -> vector<8x384xf32>
    %61 = vector.extract_strided_slice %60 {offsets = [0, 0], sizes = [8, 128], strides = [1, 1]} : vector<8x384xf32> to vector<8x128xf32>
    %cst_33 = arith.constant dense<0.000000e+00> : vector<8x128xf32>
    %62 = tpu.matmul %1, %61, %cst_33 {dimension_numbers = #tpu.dot_dimension_numbers<[1], [0], [0], [1], [0, 0, 1, 1], [], []>} : vector<8x8xf32>, vector<8x128xf32>, vector<8x128xf32> -> vector<8x128xf32>
    %63 = vector.extract_strided_slice %60 {offsets = [0, 128], sizes = [8, 128], strides = [1, 1]} : vector<8x384xf32> to vector<8x128xf32>
    %64 = arith.addf %62, %63 : vector<8x128xf32>
    %65 = vector.extract_strided_slice %60 {offsets = [0, 256], sizes = [8, 128], strides = [1, 1]} : vector<8x384xf32> to vector<8x128xf32>
    %cst_34 = arith.constant dense<0.000000e+00> : vector<8x128xf32>
    %66 = tpu.matmul %3, %65, %cst_34 {dimension_numbers = #tpu.dot_dimension_numbers<[1], [0], [0], [1], [0, 0, 1, 1], [], []>} : vector<8x8xf32>, vector<8x128xf32>, vector<8x128xf32> -> vector<8x128xf32>
    %67 = arith.addf %64, %66 : vector<8x128xf32>
    %68 = vector.broadcast %8 : vector<1x128xf32> to vector<8x128xf32>
    %69 = arith.addf %67, %68 : vector<8x128xf32>
    %c0_35 = arith.constant 0 : index
    %c0_36 = arith.constant 0 : index
    %70 = vector.load %arg6[%c0_35, %c0_36] : memref<8x128xf32, #tpu.memory_space<vmem>>, vector<8x128xf32>
    tpu.vector_store %arg6[%c0_35, %c0_36], %69 {strides = array<i32>} : memref<8x128xf32, #tpu.memory_space<vmem>>, vector<8x128xf32>,
    return
  }
}

module attributes {stable_mosaic.version = 11 : i64} {
  func.func @kernel(%arg0: memref<2x2x1xf32, #tpu.memory_space<vmem>>, %arg1: memref<2x2x256xf32, #tpu.memory_space<vmem>>, %arg2: memref<2x256xf32, #tpu.memory_space<vmem>>, %arg3: memref<2x256xf32, #tpu.memory_space<vmem>>) attributes {dimension_semantics = [], scalar_prefetch = 0 : i64, scratch_operands = 0 : i64, tpu.core_type = #tpu.core_type<tc>} {
    %c0 = arith.constant 0 : index
    %c0_0 = arith.constant 0 : index
    %0 = vector.load %arg2[%c0, %c0_0] : memref<2x256xf32, #tpu.memory_space<vmem>>, vector<2x256xf32>
    %c0_1 = arith.constant 0 : index
    %c0_2 = arith.constant 0 : index
    %c0_3 = arith.constant 0 : index
    %1 = vector.load %arg0[%c0_1, %c0_2, %c0_3] : memref<2x2x1xf32, #tpu.memory_space<vmem>>, vector<1x2x1xf32>
    %2 = vector.shape_cast %1 : vector<1x2x1xf32> to vector<2x1xf32>
    %c0_4 = arith.constant 0 : index
    %c0_5 = arith.constant 0 : index
    %c0_6 = arith.constant 0 : index
    %3 = vector.load %arg1[%c0_4, %c0_5, %c0_6] : memref<2x2x256xf32, #tpu.memory_space<vmem>>, vector<1x2x256xf32>
    %4 = vector.shape_cast %3 : vector<1x2x256xf32> to vector<2x256xf32>
    %5 = vector.broadcast %2 : vector<2x1xf32> to vector<2x256xf32>
    %6 = arith.mulf %5, %4 : vector<2x256xf32>
    %7 = arith.addf %0, %6 : vector<2x256xf32>
    %c1 = arith.constant 1 : index
    %c0_7 = arith.constant 0 : index
    %c0_8 = arith.constant 0 : index
    %8 = vector.load %arg0[%c1, %c0_7, %c0_8] : memref<2x2x1xf32, #tpu.memory_space<vmem>>, vector<1x2x1xf32>
    %9 = vector.shape_cast %8 : vector<1x2x1xf32> to vector<2x1xf32>
    %c1_9 = arith.constant 1 : index
    %c0_10 = arith.constant 0 : index
    %c0_11 = arith.constant 0 : index
    %10 = vector.load %arg1[%c1_9, %c0_10, %c0_11] : memref<2x2x256xf32, #tpu.memory_space<vmem>>, vector<1x2x256xf32>
    %11 = vector.shape_cast %10 : vector<1x2x256xf32> to vector<2x256xf32>
    %12 = vector.broadcast %9 : vector<2x1xf32> to vector<2x256xf32>
    %13 = arith.mulf %12, %11 : vector<2x256xf32>
    %14 = arith.addf %7, %13 : vector<2x256xf32>
    %c0_12 = arith.constant 0 : index
    %c0_13 = arith.constant 0 : index
    %15 = vector.load %arg3[%c0_12, %c0_13] : memref<2x256xf32, #tpu.memory_space<vmem>>, vector<2x256xf32>
    tpu.vector_store %arg3[%c0_12, %c0_13], %14 {strides = array<i32>} : memref<2x256xf32, #tpu.memory_space<vmem>>, vector<2x256xf32>,
    return
  }
}

</mosaic_0001>

<llo_original>
// kernel: branch_2_fun.2
$region0: #{branch_2_fun.2}
  #allocation0 [shape = 'u32[]', space=smem, size = 0x4, offset = 0x4, fixed_abs, tag = 'smem constant byte address 0x4 - core index']
  #allocation1 [shape = 'u32[144,128]{1,0:T(1,128)}', space=vmem, size = 0x12000, scoped, tag = 'internal scratch']
  %s0 = inlined_call_operand.vmem [shape: f32[8,80], index: 0, kind: input, shape index: {}]
  %s1 = inlined_call_operand.vmem [shape: f32[80,768], index: 1, kind: input, shape index: {}]
  %s2 = inlined_call_operand.vmem [shape: f32[1,256], index: 2, kind: input, shape index: {}]
  %s3 = inlined_call_operand.hbm [shape: f32[256,384], index: 3, kind: input, shape index: {}]
  %s4 = inlined_call_operand.vmem [shape: f32[1,128], index: 4, kind: input, shape index: {}]
  %s5 = inlined_call_operand.vmem [shape: f32[2,8,8], index: 5, kind: input, shape index: {}]
  %s6 = inlined_call_operand.vmem [shape: f32[8,128], index: 6, kind: output, shape index: {}]
  %s7 = sld [smem:[#allocation0]]
  $region38: #{branch_2_fun.2} parent=0
    _
  %s9 = ssub.s32 1, %s7
  %s10 = scalar_select 0, %s9, %s7
  $region1: #{branch_2_fun.2} parent=0
    #allocation2 [shape = 'u8[393216]{0}', space=vmem, size = 0x60000, scoped, tag = 'input window, operand 3, single buffered']
    #allocation3 [shape = 's32[1]{0}', space=sflag, size = 0x4, scoped, tag = 'scoped memory for branch_2_fun.2']
    %11 = vsyncpa [#allocation3], 0
    // Predicated region
    $region2: #{branch_2_fun.2} parent=1 // pred_check
      _
    $region3: #{branch_2_fun.2} parent=1 // pred_check_branch
      %13 = sbr.rel (0) target = $region5
    $region4: #{branch_2_fun.2} parent=1 // pred_region
      _
    $region5: #{branch_2_fun.2} parent=1 // pred_fallthru
      _
    // Predicated region
    $region6: #{branch_2_fun.2} parent=1 // pred_check
      _
    $region7: #{branch_2_fun.2} parent=1 // pred_check_branch
      %15 = sbr.rel (0) target = $region9
    $region8: #{branch_2_fun.2} parent=1 // pred_region
      _
    $region9: #{branch_2_fun.2} parent=1 // pred_fallthru
      _
    // Predicated region
    $region10: #{branch_2_fun.2} parent=1 // pred_check
      _
    $region11: #{branch_2_fun.2} parent=1 // pred_check_branch
      %17 = sbr.rel (0) target = $region13
    $region12: #{branch_2_fun.2} parent=1 // pred_region
      _
    $region13: #{branch_2_fun.2} parent=1 // pred_fallthru
      _
    // Predicated region
    $region14: #{branch_2_fun.2} parent=1 // pred_check
      _
    $region15: #{branch_2_fun.2} parent=1 // pred_check_branch
      %19 = sbr.rel (0) target = $region17
    $region16: #{branch_2_fun.2} parent=1 // pred_region
      %s21 = ssub.s32 12288, 12288
      %22 = vsyncadd [#allocation3], %s21
      %s23 = sshll.u32 [#allocation2], 4
      %s24 = int_to_ptr.vmem [resolvable:$true] %s23
      %29 = dma.hbm_to_vmem [thread:$0]  %s3, 12288, %s24, [#allocation3], 384, 384, 24
    $region17: #{branch_2_fun.2} parent=1 // pred_fallthru
      _
    // Predicated region
    $region18: #{branch_2_fun.2} parent=1 // pred_check
      _
    $region19: #{branch_2_fun.2} parent=1 // pred_check_branch
      %31 = sbr.rel (0) target = $region21
    $region20: #{branch_2_fun.2} parent=1 // pred_region
      _
    $region21: #{branch_2_fun.2} parent=1 // pred_fallthru
      _
    // Predicated region
    $region22: #{branch_2_fun.2} parent=1 // pred_check
      _
    $region23: #{branch_2_fun.2} parent=1 // pred_check_branch
      %33 = sbr.rel (0) target = $region25
    $region24: #{branch_2_fun.2} parent=1 // pred_region
      _
    $region25: #{branch_2_fun.2} parent=1 // pred_fallthru
      _
    // Predicated region
    $region26: #{branch_2_fun.2} parent=1 // pred_check
      _
    $region27: #{branch_2_fun.2} parent=1 // pred_check_branch
      %35 = sbr.rel (0) target = $region29
    $region28: #{branch_2_fun.2} parent=1 // pred_region
      %36 = dma.done [#allocation3], 12288
    $region29: #{branch_2_fun.2} parent=1 // pred_fallthru
      _
    %v37 = vld [vmem:[%s5] sm:$0xff]
    %s38 = scalar_lea.vmem %s5, 8
    %v39 = vld [vmem:[%s38] sm:$0xff]
    %v40 = vld [vmem:[%s0] sm:$0xff]
    %v41 = vld [vmem:[%s1] sm:$0xff]
    %v42 = vld [vmem:[%s1 + $0x8] sm:$0xff]
    %v43 = vld [vmem:[%s1 + $0x10] sm:$0xff]
    %v44 = vld [vmem:[%s1 + $0x18] sm:$0xff]
    %v45 = vld [vmem:[%s1 + $0x20] sm:$0xff]
    %v46 = vld [vmem:[%s1 + $0x28] sm:$0xff]
    %v47 = vld [vmem:[%s1 + $0x30] sm:$0xff]
    %v48 = vld [vmem:[%s1 + $0x38] sm:$0xff]
    %v49 = vld [vmem:[%s1 + $0x40] sm:$0xff]
    %v50 = vld [vmem:[%s1 + $0x48] sm:$0xff]
    %v51 = vld [vmem:[%s1 + $0x50] sm:$0xff]
    %v52 = vld [vmem:[%s1 + $0x58] sm:$0xff]
    %v53 = vld [vmem:[%s1 + $0x60] sm:$0xff]
    %v54 = vld [vmem:[%s1 + $0x68] sm:$0xff]
    %v55 = vld [vmem:[%s1 + $0x70] sm:$0xff]
    %v56 = vld [vmem:[%s1 + $0x78] sm:$0xff]
    %v57 = vld [vmem:[%s1 + $0x80] sm:$0xff]
    %v58 = vld [vmem:[%s1 + $0x88] sm:$0xff]
    %v59 = vld [vmem:[%s1 + $0x90] sm:$0xff]
    %v60 = vld [vmem:[%s1 + $0x98] sm:$0xff]
    %v61 = vld [vmem:[%s1 + $0xa0] sm:$0xff]
    %v62 = vld [vmem:[%s1 + $0xa8] sm:$0xff]
    %v63 = vld [vmem:[%s1 + $0xb0] sm:$0xff]
    %v64 = vld [vmem:[%s1 + $0xb8] sm:$0xff]
    %v65 = vld [vmem:[%s1 + $0xc0] sm:$0xff]
    %v66 = vld [vmem:[%s1 + $0xc8] sm:$0xff]
    %v67 = vld [vmem:[%s1 + $0xd0] sm:$0xff]
    %v68 = vld [vmem:[%s1 + $0xd8] sm:$0xff]
    %v69 = vld [vmem:[%s1 + $0xe0] sm:$0xff]
    %v70 = vld [vmem:[%s1 + $0xe8] sm:$0xff]
    %v71 = vld [vmem:[%s1 + $0xf0] sm:$0xff]
    %v72 = vld [vmem:[%s1 + $0xf8] sm:$0xff]
    %v73 = vld [vmem:[%s1 + $0x100] sm:$0xff]
    %v74 = vld [vmem:[%s1 + $0x108] sm:$0xff]
    %v75 = vld [vmem:[%s1 + $0x110] sm:$0xff]
    %v76 = vld [vmem:[%s1 + $0x118] sm:$0xff]
    %v77 = vld [vmem:[%s1 + $0x120] sm:$0xff]
    %v78 = vld [vmem:[%s1 + $0x128] sm:$0xff]
    %v79 = vld [vmem:[%s1 + $0x130] sm:$0xff]
    %v80 = vld [vmem:[%s1 + $0x138] sm:$0xff]
    %v81 = vld [vmem:[%s1 + $0x140] sm:$0xff]
    %v82 = vld [vmem:[%s1 + $0x148] sm:$0xff]
    %v83 = vld [vmem:[%s1 + $0x150] sm:$0xff]
    %v84 = vld [vmem:[%s1 + $0x158] sm:$0xff]
    %v85 = vld [vmem:[%s1 + $0x160] sm:$0xff]
    %v86 = vld [vmem:[%s1 + $0x168] sm:$0xff]
    %v87 = vld [vmem:[%s1 + $0x170] sm:$0xff]
    %v88 = vld [vmem:[%s1 + $0x178] sm:$0xff]
    %v89 = vld [vmem:[%s1 + $0x180] sm:$0xff]
    %v90 = vld [vmem:[%s1 + $0x188] sm:$0xff]
    %v91 = vld [vmem:[%s1 + $0x190] sm:$0xff]
    %v92 = vld [vmem:[%s1 + $0x198] sm:$0xff]
    %v93 = vld [vmem:[%s1 + $0x1a0] sm:$0xff]
    %v94 = vld [vmem:[%s1 + $0x1a8] sm:$0xff]
    %v95 = vld [vmem:[%s1 + $0x1b0] sm:$0xff]
    %v96 = vld [vmem:[%s1 + $0x1b8] sm:$0xff]
    %v97 = vld [vmem:[%s1 + $0x1c0] sm:$0xff]
    %v98 = vld [vmem:[%s1 + $0x1c8] sm:$0xff]
    %v99 = vld [vmem:[%s1 + $0x1d0] sm:$0xff]
    %v100 = vld [vmem:[%s1 + $0x1d8] sm:$0xff]
    %v101 = vld [vmem:[%s2] sm:$0x3]
    %v102 = vld [vmem:[#allocation2] sm:$0xff]
    %v103 = vld [vmem:[#allocation2 + $0x8] sm:$0xff]
    %v104 = vld [vmem:[#allocation2 + $0x10] sm:$0xff]
    %v105 = vld [vmem:[#allocation2 + $0x18] sm:$0xff]
    %v106 = vld [vmem:[#allocation2 + $0x20] sm:$0xff]
    %v107 = vld [vmem:[#allocation2 + $0x28] sm:$0xff]
    %v108 = vld [vmem:[#allocation2 + $0x30] sm:$0xff]
    %v109 = vld [vmem:[#allocation2 + $0x38] sm:$0xff]
    %v110 = vld [vmem:[#allocation2 + $0x40] sm:$0xff]
    %v111 = vld [vmem:[#allocation2 + $0x48] sm:$0xff]
    %v112 = vld [vmem:[#allocation2 + $0x50] sm:$0xff]
    %v113 = vld [vmem:[#allocation2 + $0x58] sm:$0xff]
    %v114 = vld [vmem:[#allocation2 + $0x60] sm:$0xff]
    %v115 = vld [vmem:[#allocation2 + $0x68] sm:$0xff]
    %v116 = vld [vmem:[#allocation2 + $0x70] sm:$0xff]
    %v117 = vld [vmem:[#allocation2 + $0x78] sm:$0xff]
    %v118 = vld [vmem:[#allocation2 + $0x80] sm:$0xff]
    %v119 = vld [vmem:[#allocation2 + $0x88] sm:$0xff]
    %v120 = vld [vmem:[#allocation2 + $0x90] sm:$0xff]
    %v121 = vld [vmem:[#allocation2 + $0x98] sm:$0xff]
    %v122 = vld [vmem:[#allocation2 + $0xa0] sm:$0xff]
    %v123 = vld [vmem:[#allocation2 + $0xa8] sm:$0xff]
    %v124 = vld [vmem:[#allocation2 + $0xb0] sm:$0xff]
    %v125 = vld [vmem:[#allocation2 + $0xb8] sm:$0xff]
    %v126 = vld [vmem:[#allocation2 + $0xc0] sm:$0xff]
    %v127 = vld [vmem:[#allocation2 + $0xc8] sm:$0xff]
    %v128 = vld [vmem:[#allocation2 + $0xd0] sm:$0xff]
    %v129 = vld [vmem:[#allocation2 + $0xd8] sm:$0xff]
    %v130 = vld [vmem:[#allocation2 + $0xe0] sm:$0xff]
    %v131 = vld [vmem:[#allocation2 + $0xe8] sm:$0xff]
    %v132 = vld [vmem:[#allocation2 + $0xf0] sm:$0xff]
    %v133 = vld [vmem:[#allocation2 + $0xf8] sm:$0xff]
    %v134 = vld [vmem:[#allocation2 + $0x100] sm:$0xff]
    %v135 = vld [vmem:[#allocation2 + $0x108] sm:$0xff]
    %v136 = vld [vmem:[#allocation2 + $0x110] sm:$0xff]
    %v137 = vld [vmem:[#allocation2 + $0x118] sm:$0xff]
    %v138 = vld [vmem:[#allocation2 + $0x120] sm:$0xff]
    %v139 = vld [vmem:[#allocation2 + $0x128] sm:$0xff]
    %v140 = vld [vmem:[#allocation2 + $0x130] sm:$0xff]
    %v141 = vld [vmem:[#allocation2 + $0x138] sm:$0xff]
    %v142 = vld [vmem:[#allocation2 + $0x140] sm:$0xff]
    %v143 = vld [vmem:[#allocation2 + $0x148] sm:$0xff]
    %v144 = vld [vmem:[#allocation2 + $0x150] sm:$0xff]
    %v145 = vld [vmem:[#allocation2 + $0x158] sm:$0xff]
    %v146 = vld [vmem:[#allocation2 + $0x160] sm:$0xff]
    %v147 = vld [vmem:[#allocation2 + $0x168] sm:$0xff]
    %v148 = vld [vmem:[#allocation2 + $0x170] sm:$0xff]
    %v149 = vld [vmem:[#allocation2 + $0x178] sm:$0xff]
    %v150 = vld [vmem:[#allocation2 + $0x180] sm:$0xff]
    %v151 = vld [vmem:[#allocation2 + $0x188] sm:$0xff]
    %v152 = vld [vmem:[#allocation2 + $0x190] sm:$0xff]
    %v153 = vld [vmem:[#allocation2 + $0x198] sm:$0xff]
    %v154 = vld [vmem:[#allocation2 + $0x1a0] sm:$0xff]
    %v155 = vld [vmem:[#allocation2 + $0x1a8] sm:$0xff]
    %v156 = vld [vmem:[#allocation2 + $0x1b0] sm:$0xff]
    %v157 = vld [vmem:[#allocation2 + $0x1b8] sm:$0xff]
    %v158 = vld [vmem:[#allocation2 + $0x1c0] sm:$0xff]
    %v159 = vld [vmem:[#allocation2 + $0x1c8] sm:$0xff]
    %v160 = vld [vmem:[#allocation2 + $0x1d0] sm:$0xff]
    %v161 = vld [vmem:[#allocation2 + $0x1d8] sm:$0xff]
    %v162 = vld [vmem:[#allocation2 + $0x1e0] sm:$0xff]
    %v163 = vld [vmem:[#allocation2 + $0x1e8] sm:$0xff]
    %v164 = vld [vmem:[#allocation2 + $0x1f0] sm:$0xff]
    %v165 = vld [vmem:[#allocation2 + $0x1f8] sm:$0xff]
    %v166 = vld [vmem:[#allocation2 + $0x200] sm:$0xff]
    %v167 = vld [vmem:[#allocation2 + $0x208] sm:$0xff]
    %v168 = vld [vmem:[#allocation2 + $0x210] sm:$0xff]
    %v169 = vld [vmem:[#allocation2 + $0x218] sm:$0xff]
    %v170 = vld [vmem:[#allocation2 + $0x220] sm:$0xff]
    %v171 = vld [vmem:[#allocation2 + $0x228] sm:$0xff]
    %v172 = vld [vmem:[#allocation2 + $0x230] sm:$0xff]
    %v173 = vld [vmem:[#allocation2 + $0x238] sm:$0xff]
    %v174 = vld [vmem:[#allocation2 + $0x240] sm:$0xff]
    %v175 = vld [vmem:[#allocation2 + $0x248] sm:$0xff]
    %v176 = vld [vmem:[#allocation2 + $0x250] sm:$0xff]
    %v177 = vld [vmem:[#allocation2 + $0x258] sm:$0xff]
    %v178 = vld [vmem:[#allocation2 + $0x260] sm:$0xff]
    %v179 = vld [vmem:[#allocation2 + $0x268] sm:$0xff]
    %v180 = vld [vmem:[#allocation2 + $0x270] sm:$0xff]
    %v181 = vld [vmem:[#allocation2 + $0x278] sm:$0xff]
    %v182 = vld [vmem:[#allocation2 + $0x280] sm:$0xff]
    %v183 = vld [vmem:[#allocation2 + $0x288] sm:$0xff]
    %v184 = vld [vmem:[#allocation2 + $0x290] sm:$0xff]
    %v185 = vld [vmem:[#allocation2 + $0x298] sm:$0xff]
    %v186 = vld [vmem:[#allocation2 + $0x2a0] sm:$0xff]
    %v187 = vld [vmem:[#allocation2 + $0x2a8] sm:$0xff]
    %v188 = vld [vmem:[#allocation2 + $0x2b0] sm:$0xff]
    %v189 = vld [vmem:[#allocation2 + $0x2b8] sm:$0xff]
    %v190 = vld [vmem:[#allocation2 + $0x2c0] sm:$0xff]
    %v191 = vld [vmem:[#allocation2 + $0x2c8] sm:$0xff]
    %v192 = vld [vmem:[#allocation2 + $0x2d0] sm:$0xff]
    %v193 = vld [vmem:[#allocation2 + $0x2d8] sm:$0xff]
    %v194 = vld [vmem:[#allocation2 + $0x2e0] sm:$0xff]
    %v195 = vld [vmem:[#allocation2 + $0x2e8] sm:$0xff]
    %v196 = vld [vmem:[#allocation2 + $0x2f0] sm:$0xff]
    %v197 = vld [vmem:[#allocation2 + $0x2f8] sm:$0xff]
    %v198 = vld [vmem:[%s4] sm:$0x1]
    %vm199 = vcmask 654336
    %v201 = vsel %vm199, %v40, 0
    %203 = vmatprep.subr.mxu0 %v42
    %204 = vmatpush1.msra.mxu0 %v41
    %205 = vmatprep.subr.mxu0 %v48
    %206 = vmatpush1.msra.mxu0 %v47
    %207 = vmatprep.subr.mxu0 %v54
    %208 = vmatpush1.msra.mxu0 %v53
    %209 = vmatprep.subr.mxu0 %v60
    %210 = vmatpush1.msra.mxu0 %v59
    %211 = vmatprep.subr.mxu0 %v66
    %212 = vmatpush1.msra.mxu0 %v65
    %213 = vmatprep.subr.mxu0 %v72
    %214 = vmatpush1.msra.mxu0 %v71
    %215 = vmatprep.subr.mxu0 %v78
    %216 = vmatpush1.msra.mxu0 %v77
    %217 = vmatprep.subr.mxu0 %v84
    %218 = vmatpush1.msra.mxu0 %v83
    %219 = vmatprep.subr.mxu0 %v90
    %220 = vmatpush1.msra.mxu0 %v89
    %221 = vmatprep.subr.mxu0 %v96
    %222 = vmatpush1.msra.mxu0 %v95
    %223 = vmatprep.subr.mxu0 0.0
    %224 = vmatpush1.msra.mxu0 0.0
    %225 = vmatprep.subr.mxu0 0.0
    %226 = vmatpush1.msra.mxu0 0.0
    %227 = vmatprep.subr.mxu0 0.0
    %228 = vmatpush1.msra.mxu0 0.0
    %229 = vmatprep.subr.mxu0 0.0
    %230 = vmatpush1.msra.mxu0 0.0
    %231 = vmatprep.subr.mxu0 0.0
    %232 = vmatpush1.msra.mxu0 0.0
    %233 = vmatprep.subr.mxu0 0.0
    %234 = vmatpush1.msra.mxu0 0.0
    %235 = vmatprep.subr.mxu0 0.0
    %236 = vmatpush1.msra.mxu0 0.0
    %237 = vmatprep.subr.mxu0 0.0
    %238 = vmatpush1.msra.mxu0 0.0
    %239 = vmatprep.subr.mxu0 0.0
    %240 = vmatpush1.msra.mxu0 0.0
    %241 = vmatprep.subr.mxu0 0.0
    %242 = vmatpush1.msra.mxu0 0.0
    %243 = vmatprep.subr.mxu0 0.0
    %244 = vmatpush1.msra.mxu0 0.0
    %245 = vmatprep.subr.mxu0 0.0
    %246 = vmatpush1.msra.mxu0 0.0
    %247 = vmatprep.subr.mxu0 0.0
    %248 = vmatpush1.msra.mxu0 0.0
    %249 = vmatprep.subr.mxu0 0.0
    %250 = vmatpush1.msra.mxu0 0.0
    %251 = vmatprep.subr.mxu0 0.0
    %252 = vmatpush1.msra.mxu0 0.0
    %253 = vmatprep.subr.mxu0 0.0
    %254 = vmatpush1.msra.mxu0 0.0
    %255 = vmatprep.subr.mxu0 0.0
    %256 = vmatpush1.msra.mxu0 0.0
    %257 = vmatprep.subr.mxu0 0.0
    %258 = vmatpush1.msra.mxu0 0.0
    %259 = vmatprep.subr.mxu0 0.0
    %260 = vmatpush1.msra.mxu0 0.0
    %261 = vmatprep.subr.mxu0 0.0
    %262 = vmatpush1.msra.mxu0 0.0
    %263 = vmatprep.subr.mxu0 0.0
    %264 = vmatpush1.msra.mxu0 0.0
    %265 = vmatprep.subr.mxu0 0.0
    %266 = vmatpush1.msra.mxu0 0.0
    %267 = vmatprep.mubr.f32.mxu0 0.0
    %268 = vmatmul.mubr.f32.gmra.mrb[0].mxu0 %v201
    %v269 = vpop.f32.mrb[0].mxu0
    %v270 = vadd.f32 0.0, %v269
    %v271 = vpop.f32.mrb[0].mxu0
    %v272 = vadd.f32 0.0, %v271
    %273 = vdwg.mxu0
    %274 = vmatprep.subr.mxu0 %v44
    %275 = vmatpush1.msra.mxu0 %v43
    %276 = vmatprep.subr.mxu0 %v50
    %277 = vmatpush1.msra.mxu0 %v49
    %278 = vmatprep.subr.mxu0 %v56
    %279 = vmatpush1.msra.mxu0 %v55
    %280 = vmatprep.subr.mxu0 %v62
    %281 = vmatpush1.msra.mxu0 %v61
    %282 = vmatprep.subr.mxu0 %v68
    %283 = vmatpush1.msra.mxu0 %v67
    %284 = vmatprep.subr.mxu0 %v74
    %285 = vmatpush1.msra.mxu0 %v73
    %286 = vmatprep.subr.mxu0 %v80
    %287 = vmatpush1.msra.mxu0 %v79
    %288 = vmatprep.subr.mxu0 %v86
    %289 = vmatpush1.msra.mxu0 %v85
    %290 = vmatprep.subr.mxu0 %v92
    %291 = vmatpush1.msra.mxu0 %v91
    %292 = vmatprep.subr.mxu0 %v98
    %293 = vmatpush1.msra.mxu0 %v97
    %294 = vmatprep.subr.mxu0 0.0
    %295 = vmatpush1.msra.mxu0 0.0
    %296 = vmatprep.subr.mxu0 0.0
    %297 = vmatpush1.msra.mxu0 0.0
    %298 = vmatprep.subr.mxu0 0.0
    %299 = vmatpush1.msra.mxu0 0.0
    %300 = vmatprep.subr.mxu0 0.0
    %301 = vmatpush1.msra.mxu0 0.0
    %302 = vmatprep.subr.mxu0 0.0
    %303 = vmatpush1.msra.mxu0 0.0
    %304 = vmatprep.subr.mxu0 0.0
    %305 = vmatpush1.msra.mxu0 0.0
    %306 = vmatprep.subr.mxu0 0.0
    %307 = vmatpush1.msra.mxu0 0.0
    %308 = vmatprep.subr.mxu0 0.0
    %309 = vmatpush1.msra.mxu0 0.0
    %310 = vmatprep.subr.mxu0 0.0
    %311 = vmatpush1.msra.mxu0 0.0
    %312 = vmatprep.subr.mxu0 0.0
    %313 = vmatpush1.msra.mxu0 0.0
    %314 = vmatprep.subr.mxu0 0.0
    %315 = vmatpush1.msra.mxu0 0.0
    %316 = vmatprep.subr.mxu0 0.0
    %317 = vmatpush1.msra.mxu0 0.0
    %318 = vmatprep.subr.mxu0 0.0
    %319 = vmatpush1.msra.mxu0 0.0
    %320 = vmatprep.subr.mxu0 0.0
    %321 = vmatpush1.msra.mxu0 0.0
    %322 = vmatprep.subr.mxu0 0.0
    %323 = vmatpush1.msra.mxu0 0.0
    %324 = vmatprep.subr.mxu0 0.0
    %325 = vmatpush1.msra.mxu0 0.0
    %326 = vmatprep.subr.mxu0 0.0
    %327 = vmatpush1.msra.mxu0 0.0
    %328 = vmatprep.subr.mxu0 0.0
    %329 = vmatpush1.msra.mxu0 0.0
    %330 = vmatprep.subr.mxu0 0.0
    %331 = vmatpush1.msra.mxu0 0.0
    %332 = vmatprep.subr.mxu0 0.0
    %333 = vmatpush1.msra.mxu0 0.0
    %334 = vmatprep.subr.mxu0 0.0
    %335 = vmatpush1.msra.mxu0 0.0
    %336 = vmatprep.subr.mxu0 0.0
    %337 = vmatpush1.msra.mxu0 0.0
    %338 = vmatprep.mubr.f32.mxu0 0.0
    %339 = vmatmul.mubr.f32.gmra.mrb[0].mxu0 %v201
    %v340 = vpop.f32.mrb[0].mxu0
    %v341 = vadd.f32 0.0, %v340
    %v342 = vpop.f32.mrb[0].mxu0
    %v343 = vadd.f32 0.0, %v342
    %344 = vdwg.mxu0
    %345 = vmatprep.subr.mxu0 %v46
    %346 = vmatpush1.msra.mxu0 %v45
    %347 = vmatprep.subr.mxu0 %v52
    %348 = vmatpush1.msra.mxu0 %v51
    %349 = vmatprep.subr.mxu0 %v58
    %350 = vmatpush1.msra.mxu0 %v57
    %351 = vmatprep.subr.mxu0 %v64
    %352 = vmatpush1.msra.mxu0 %v63
    %353 = vmatprep.subr.mxu0 %v70
    %354 = vmatpush1.msra.mxu0 %v69
    %355 = vmatprep.subr.mxu0 %v76
    %356 = vmatpush1.msra.mxu0 %v75
    %357 = vmatprep.subr.mxu0 %v82
    %358 = vmatpush1.msra.mxu0 %v81
    %359 = vmatprep.subr.mxu0 %v88
    %360 = vmatpush1.msra.mxu0 %v87
    %361 = vmatprep.subr.mxu0 %v94
    %362 = vmatpush1.msra.mxu0 %v93
    %363 = vmatprep.subr.mxu0 %v100
    %364 = vmatpush1.msra.mxu0 %v99
    %365 = vmatprep.subr.mxu0 0.0
    %366 = vmatpush1.msra.mxu0 0.0
    %367 = vmatprep.subr.mxu0 0.0
    %368 = vmatpush1.msra.mxu0 0.0
    %369 = vmatprep.subr.mxu0 0.0
    %370 = vmatpush1.msra.mxu0 0.0
    %371 = vmatprep.subr.mxu0 0.0
    %372 = vmatpush1.msra.mxu0 0.0
    %373 = vmatprep.subr.mxu0 0.0
    %374 = vmatpush1.msra.mxu0 0.0
    %375 = vmatprep.subr.mxu0 0.0
    %376 = vmatpush1.msra.mxu0 0.0
    %377 = vmatprep.subr.mxu0 0.0
    %378 = vmatpush1.msra.mxu0 0.0
    %379 = vmatprep.subr.mxu0 0.0
    %380 = vmatpush1.msra.mxu0 0.0
    %381 = vmatprep.subr.mxu0 0.0
    %382 = vmatpush1.msra.mxu0 0.0
    %383 = vmatprep.subr.mxu0 0.0
    %384 = vmatpush1.msra.mxu0 0.0
    %385 = vmatprep.subr.mxu0 0.0
    %386 = vmatpush1.msra.mxu0 0.0
    %387 = vmatprep.subr.mxu0 0.0
    %388 = vmatpush1.msra.mxu0 0.0
    %389 = vmatprep.subr.mxu0 0.0
    %390 = vmatpush1.msra.mxu0 0.0
    %391 = vmatprep.subr.mxu0 0.0
    %392 = vmatpush1.msra.mxu0 0.0
    %393 = vmatprep.subr.mxu0 0.0
    %394 = vmatpush1.msra.mxu0 0.0
    %395 = vmatprep.subr.mxu0 0.0
    %396 = vmatpush1.msra.mxu0 0.0
    %397 = vmatprep.subr.mxu0 0.0
    %398 = vmatpush1.msra.mxu0 0.0
    %399 = vmatprep.subr.mxu0 0.0
    %400 = vmatpush1.msra.mxu0 0.0
    %401 = vmatprep.subr.mxu0 0.0
    %402 = vmatpush1.msra.mxu0 0.0
    %403 = vmatprep.subr.mxu0 0.0
    %404 = vmatpush1.msra.mxu0 0.0
    %405 = vmatprep.subr.mxu0 0.0
    %406 = vmatpush1.msra.mxu0 0.0
    %407 = vmatprep.subr.mxu0 0.0
    %408 = vmatpush1.msra.mxu0 0.0
    %409 = vmatprep.mubr.f32.mxu0 0.0
    %410 = vmatmul.mubr.f32.gmra.mrb[0].mxu0 %v201
    %v411 = vpop.f32.mrb[0].mxu0
    %v412 = vadd.f32 0.0, %v411
    %v413 = vpop.f32.mrb[0].mxu0
    %v414 = vadd.f32 0.0, %v413
    %415 = vdwg.mxu0
    %vm416 = vcmask 64512
    %v418 = vsel %vm416, %v37, 0
    %420 = vmatprep.subr.mxu0 %v272
    %421 = vmatpush1.msra.mxu0 %v270
    %422 = vmatprep.subr.mxu0 0.0
    %423 = vmatpush1.msra.mxu0 0.0
    %424 = vmatprep.subr.mxu0 0.0
    %425 = vmatpush1.msra.mxu0 0.0
    %426 = vmatprep.subr.mxu0 0.0
    %427 = vmatpush1.msra.mxu0 0.0
    %428 = vmatprep.subr.mxu0 0.0
    %429 = vmatpush1.msra.mxu0 0.0
    %430 = vmatprep.subr.mxu0 0.0
    %431 = vmatpush1.msra.mxu0 0.0
    %432 = vmatprep.subr.mxu0 0.0
    %433 = vmatpush1.msra.mxu0 0.0
    %434 = vmatprep.subr.mxu0 0.0
    %435 = vmatpush1.msra.mxu0 0.0
    %436 = vmatprep.subr.mxu0 0.0
    %437 = vmatpush1.msra.mxu0 0.0
    %438 = vmatprep.subr.mxu0 0.0
    %439 = vmatpush1.msra.mxu0 0.0
    %440 = vmatprep.subr.mxu0 0.0
    %441 = vmatpush1.msra.mxu0 0.0
    %442 = vmatprep.subr.mxu0 0.0
    %443 = vmatpush1.msra.mxu0 0.0
    %444 = vmatprep.subr.mxu0 0.0
    %445 = vmatpush1.msra.mxu0 0.0
    %446 = vmatprep.subr.mxu0 0.0
    %447 = vmatpush1.msra.mxu0 0.0
    %448 = vmatprep.subr.mxu0 0.0
    %449 = vmatpush1.msra.mxu0 0.0
    %450 = vmatprep.subr.mxu0 0.0
    %451 = vmatpush1.msra.mxu0 0.0
    %452 = vmatprep.subr.mxu0 0.0
    %453 = vmatpush1.msra.mxu0 0.0
    %454 = vmatprep.subr.mxu0 0.0
    %455 = vmatpush1.msra.mxu0 0.0
    %456 = vmatprep.subr.mxu0 0.0
    %457 = vmatpush1.msra.mxu0 0.0
    %458 = vmatprep.subr.mxu0 0.0
    %459 = vmatpush1.msra.mxu0 0.0
    %460 = vmatprep.subr.mxu0 0.0
    %461 = vmatpush1.msra.mxu0 0.0
    %462 = vmatprep.subr.mxu0 0.0
    %463 = vmatpush1.msra.mxu0 0.0
    %464 = vmatprep.subr.mxu0 0.0
    %465 = vmatpush1.msra.mxu0 0.0
    %466 = vmatprep.subr.mxu0 0.0
    %467 = vmatpush1.msra.mxu0 0.0
    %468 = vmatprep.subr.mxu0 0.0
    %469 = vmatpush1.msra.mxu0 0.0
    %470 = vmatprep.subr.mxu0 0.0
    %471 = vmatpush1.msra.mxu0 0.0
    %472 = vmatprep.subr.mxu0 0.0
    %473 = vmatpush1.msra.mxu0 0.0
    %474 = vmatprep.subr.mxu0 0.0
    %475 = vmatpush1.msra.mxu0 0.0
    %476 = vmatprep.subr.mxu0 0.0
    %477 = vmatpush1.msra.mxu0 0.0
    %478 = vmatprep.subr.mxu0 0.0
    %479 = vmatpush1.msra.mxu0 0.0
    %480 = vmatprep.subr.mxu0 0.0
    %481 = vmatpush1.msra.mxu0 0.0
    %482 = vmatprep.subr.mxu0 0.0
    %483 = vmatpush1.msra.mxu0 0.0
    %484 = vmatprep.mubr.f32.mxu0 0.0
    %485 = vmatmul.mubr.f32.gmra.mrb[0].mxu0 %v418
    %v486 = vpop.f32.mrb[0].mxu0
    %v487 = vadd.f32 %v341, %v486
    %v488 = vpop.f32.mrb[0].mxu0
    %v489 = vadd.f32 %v343, %v488
    %490 = vdwg.mxu0
    %v492 = vsel %vm416, %v39, 0
    %494 = vmatprep.subr.mxu0 %v414
    %495 = vmatpush1.msra.mxu0 %v412
    %496 = vmatprep.subr.mxu0 0.0
    %497 = vmatpush1.msra.mxu0 0.0
    %498 = vmatprep.subr.mxu0 0.0
    %499 = vmatpush1.msra.mxu0 0.0
    %500 = vmatprep.subr.mxu0 0.0
    %501 = vmatpush1.msra.mxu0 0.0
    %502 = vmatprep.subr.mxu0 0.0
    %503 = vmatpush1.msra.mxu0 0.0
    %504 = vmatprep.subr.mxu0 0.0
    %505 = vmatpush1.msra.mxu0 0.0
    %506 = vmatprep.subr.mxu0 0.0
    %507 = vmatpush1.msra.mxu0 0.0
    %508 = vmatprep.subr.mxu0 0.0
    %509 = vmatpush1.msra.mxu0 0.0
    %510 = vmatprep.subr.mxu0 0.0
    %511 = vmatpush1.msra.mxu0 0.0
    %512 = vmatprep.subr.mxu0 0.0
    %513 = vmatpush1.msra.mxu0 0.0
    %514 = vmatprep.subr.mxu0 0.0
    %515 = vmatpush1.msra.mxu0 0.0
    %516 = vmatprep.subr.mxu0 0.0
    %517 = vmatpush1.msra.mxu0 0.0
    %518 = vmatprep.subr.mxu0 0.0
    %519 = vmatpush1.msra.mxu0 0.0
    %520 = vmatprep.subr.mxu0 0.0
    %521 = vmatpush1.msra.mxu0 0.0
    %522 = vmatprep.subr.mxu0 0.0
    %523 = vmatpush1.msra.mxu0 0.0
    %524 = vmatprep.subr.mxu0 0.0
    %525 = vmatpush1.msra.mxu0 0.0
    %526 = vmatprep.subr.mxu0 0.0
    %527 = vmatpush1.msra.mxu0 0.0
    %528 = vmatprep.subr.mxu0 0.0
    %529 = vmatpush1.msra.mxu0 0.0
    %530 = vmatprep.subr.mxu0 0.0
    %531 = vmatpush1.msra.mxu0 0.0
    %532 = vmatprep.subr.mxu0 0.0
    %533 = vmatpush1.msra.mxu0 0.0
    %534 = vmatprep.subr.mxu0 0.0
    %535 = vmatpush1.msra.mxu0 0.0
    %536 = vmatprep.subr.mxu0 0.0
    %537 = vmatpush1.msra.mxu0 0.0
    %538 = vmatprep.subr.mxu0 0.0
    %539 = vmatpush1.msra.mxu0 0.0
    %540 = vmatprep.subr.mxu0 0.0
    %541 = vmatpush1.msra.mxu0 0.0
    %542 = vmatprep.subr.mxu0 0.0
    %543 = vmatpush1.msra.mxu0 0.0
    %544 = vmatprep.subr.mxu0 0.0
    %545 = vmatpush1.msra.mxu0 0.0
    %546 = vmatprep.subr.mxu0 0.0
    %547 = vmatpush1.msra.mxu0 0.0
    %548 = vmatprep.subr.mxu0 0.0
    %549 = vmatpush1.msra.mxu0 0.0
    %550 = vmatprep.subr.mxu0 0.0
    %551 = vmatpush1.msra.mxu0 0.0
    %552 = vmatprep.subr.mxu0 0.0
    %553 = vmatpush1.msra.mxu0 0.0
    %554 = vmatprep.subr.mxu0 0.0
    %555 = vmatpush1.msra.mxu0 0.0
    %556 = vmatprep.subr.mxu0 0.0
    %557 = vmatpush1.msra.mxu0 0.0
    %558 = vmatprep.mubr.f32.mxu0 0.0
    %559 = vmatmul.mubr.f32.gmra.mrb[0].mxu0 %v492
    %v560 = vpop.f32.mrb[0].mxu0
    %v561 = vadd.f32 0.0, %v560
    %v562 = vpop.f32.mrb[0].mxu0
    %v563 = vadd.f32 0.0, %v562
    %564 = vdwg.mxu0
    %v565 = vadd.f32 %v487, %v561
    %v566 = vadd.f32 %v489, %v563
    %v568 = vlaneseq
    %v569 = vshrl.u32 %v568, 7
    %v570 = vsub.s32 0, %v569
    %v571 = vrot.slane %v101, %v570
    %v572 = vlaneseq
    %v573 = vshrl.u32 %v572, 7
    %v574 = vsub.s32 1, %v573
    %v575 = vrot.slane %v101, %v574
    %v578 = vadd.f32 %v565, %v571
    %v579 = vadd.f32 %v566, %v575
    %v580 = vmul.f32 %v578, 0.5
    %v581 = vmul.f32 %v579, 0.5
    %v582 = vmul.f32 %v578, 0.70710677
    %v583 = vmul.f32 %v579, 0.70710677
    %vm584 = vcmp.ge.f32.partialorder %v582, 0.0
    %vm585 = vcmp.ge.f32.partialorder %v583, 0.0
    %v586 = vsel %vm584, 1.0, -1.0
    %v587 = vsel %vm585, 1.0, -1.0
    %v588 = vand.u32 2147483647, %v582
    %v589 = vand.u32 2147483647, %v583
    %v590 = vmul.f32 %v588, 0.3275911
    %v591 = vmul.f32 %v589, 0.3275911
    %v592 = vadd.f32 %v590, 1.0
    %v593 = vadd.f32 %v591, 1.0
    %v594 = vrcp.pop %v592
    %v595 = vmul.f32 1.0, %v594
    %v596 = vrcp.pop %v593
    %v597 = vmul.f32 1.0, %v596
    %v598 = vmul.f32 %v595, 1.0614054
    %v599 = vmul.f32 %v597, 1.0614054
    %v600 = vadd.f32 %v598, -1.4531521
    %v601 = vadd.f32 %v599, -1.4531521
    %v602 = vmul.f32 %v600, %v595
    %v603 = vmul.f32 %v601, %v597
    %v604 = vadd.f32 %v602, 1.4214138
    %v605 = vadd.f32 %v603, 1.4214138
    %v606 = vmul.f32 %v604, %v595
    %v607 = vmul.f32 %v605, %v597
    %v608 = vadd.f32 %v606, -0.28449672
    %v609 = vadd.f32 %v607, -0.28449672
    %v610 = vmul.f32 %v608, %v595
    %v611 = vmul.f32 %v609, %v597
    %v612 = vadd.f32 %v610, 0.2548296
    %v613 = vadd.f32 %v611, 0.2548296
    %v614 = vmul.f32 %v612, %v595
    %v615 = vmul.f32 %v613, %v597
    %v616 = vmul.f32 %v588, %v588
    %v617 = vmul.f32 %v589, %v589
    %v618 = vsub.f32 0.0, %v616
    %v619 = vsub.f32 0.0, %v617
    %v620 = vmul.f32 %v618, 1.442695
    %v621 = vpow.pop %v620
    %v622 = vmul.f32 %v619, 1.442695
    %v623 = vpow.pop %v622
    %v624 = vmul.f32 %v614, %v621
    %v625 = vmul.f32 %v615, %v623
    %v626 = vsub.f32 1.0, %v624
    %v627 = vsub.f32 1.0, %v625
    %v628 = vmul.f32 %v586, %v626
    %v629 = vmul.f32 %v587, %v627
    %v630 = vadd.f32 %v628, 1.0
    %v631 = vadd.f32 %v629, 1.0
    %v632 = vmul.f32 %v580, %v630
    %v633 = vmul.f32 %v581, %v631
    %634 = vmatprep.subr.mxu0 %v103
    %635 = vmatpush1.msra.mxu0 %v102
    %636 = vmatprep.subr.mxu0 %v106
    %637 = vmatpush1.msra.mxu0 %v105
    %638 = vmatprep.subr.mxu0 %v109
    %639 = vmatpush1.msra.mxu0 %v108
    %640 = vmatprep.subr.mxu0 %v112
    %641 = vmatpush1.msra.mxu0 %v111
    %642 = vmatprep.subr.mxu0 %v115
    %643 = vmatpush1.msra.mxu0 %v114
    %644 = vmatprep.subr.mxu0 %v118
    %645 = vmatpush1.msra.mxu0 %v117
    %646 = vmatprep.subr.mxu0 %v121
    %647 = vmatpush1.msra.mxu0 %v120
    %648 = vmatprep.subr.mxu0 %v124
    %649 = vmatpush1.msra.mxu0 %v123
    %650 = vmatprep.subr.mxu0 %v127
    %651 = vmatpush1.msra.mxu0 %v126
    %652 = vmatprep.subr.mxu0 %v130
    %653 = vmatpush1.msra.mxu0 %v129
    %654 = vmatprep.subr.mxu0 %v133
    %655 = vmatpush1.msra.mxu0 %v132
    %656 = vmatprep.subr.mxu0 %v136
    %657 = vmatpush1.msra.mxu0 %v135
    %658 = vmatprep.subr.mxu0 %v139
    %659 = vmatpush1.msra.mxu0 %v138
    %660 = vmatprep.subr.mxu0 %v142
    %661 = vmatpush1.msra.mxu0 %v141
    %662 = vmatprep.subr.mxu0 %v145
    %663 = vmatpush1.msra.mxu0 %v144
    %664 = vmatprep.subr.mxu0 %v148
    %665 = vmatpush1.msra.mxu0 %v147
    %666 = vmatprep.subr.mxu0 %v151
    %667 = vmatpush1.msra.mxu0 %v150
    %668 = vmatprep.subr.mxu0 %v154
    %669 = vmatpush1.msra.mxu0 %v153
    %670 = vmatprep.subr.mxu0 %v157
    %671 = vmatpush1.msra.mxu0 %v156
    %672 = vmatprep.subr.mxu0 %v160
    %673 = vmatpush1.msra.mxu0 %v159
    %674 = vmatprep.subr.mxu0 %v163
    %675 = vmatpush1.msra.mxu0 %v162
    %676 = vmatprep.subr.mxu0 %v166
    %677 = vmatpush1.msra.mxu0 %v165
    %678 = vmatprep.subr.mxu0 %v169
    %679 = vmatpush1.msra.mxu0 %v168
    %680 = vmatprep.subr.mxu0 %v172
    %681 = vmatpush1.msra.mxu0 %v171
    %682 = vmatprep.subr.mxu0 %v175
    %683 = vmatpush1.msra.mxu0 %v174
    %684 = vmatprep.subr.mxu0 %v178
    %685 = vmatpush1.msra.mxu0 %v177
    %686 = vmatprep.subr.mxu0 %v181
    %687 = vmatpush1.msra.mxu0 %v180
    %688 = vmatprep.subr.mxu0 %v184
    %689 = vmatpush1.msra.mxu0 %v183
    %690 = vmatprep.subr.mxu0 %v187
    %691 = vmatpush1.msra.mxu0 %v186
    %692 = vmatprep.subr.mxu0 %v190
    %693 = vmatpush1.msra.mxu0 %v189
    %694 = vmatprep.subr.mxu0 %v193
    %695 = vmatpush1.msra.mxu0 %v192
    %696 = vmatprep.subr.mxu0 %v196
    %697 = vmatpush1.msra.mxu0 %v195
    %698 = vmatprep.mubr.f32.mxu0 %v633
    %699 = vmatmul.mubr.f32.gmra.mrb[0].mxu0 %v632
    %v700 = vpop.f32.mrb[0].mxu0
    %v701 = vadd.f32 0.0, %v700
    %v702 = vpop.f32.mrb[0].mxu0
    %v703 = vadd.f32 0.0, %v702
    %704 = vdwg.mxu0
    %705 = vmatprep.subr.mxu0 0.0
    %706 = vmatpush1.msra.mxu0 %v104
    %707 = vmatprep.subr.mxu0 0.0
    %708 = vmatpush1.msra.mxu0 %v107
    %709 = vmatprep.subr.mxu0 0.0
    %710 = vmatpush1.msra.mxu0 %v110
    %711 = vmatprep.subr.mxu0 0.0
    %712 = vmatpush1.msra.mxu0 %v113
    %713 = vmatprep.subr.mxu0 0.0
    %714 = vmatpush1.msra.mxu0 %v116
    %715 = vmatprep.subr.mxu0 0.0
    %716 = vmatpush1.msra.mxu0 %v119
    %717 = vmatprep.subr.mxu0 0.0
    %718 = vmatpush1.msra.mxu0 %v122
    %719 = vmatprep.subr.mxu0 0.0
    %720 = vmatpush1.msra.mxu0 %v125
    %721 = vmatprep.subr.mxu0 0.0
    %722 = vmatpush1.msra.mxu0 %v128
    %723 = vmatprep.subr.mxu0 0.0
    %724 = vmatpush1.msra.mxu0 %v131
    %725 = vmatprep.subr.mxu0 0.0
    %726 = vmatpush1.msra.mxu0 %v134
    %727 = vmatprep.subr.mxu0 0.0
    %728 = vmatpush1.msra.mxu0 %v137
    %729 = vmatprep.subr.mxu0 0.0
    %730 = vmatpush1.msra.mxu0 %v140
    %731 = vmatprep.subr.mxu0 0.0
    %732 = vmatpush1.msra.mxu0 %v143
    %733 = vmatprep.subr.mxu0 0.0
    %734 = vmatpush1.msra.mxu0 %v146
    %735 = vmatprep.subr.mxu0 0.0
    %736 = vmatpush1.msra.mxu0 %v149
    %737 = vmatprep.subr.mxu0 0.0
    %738 = vmatpush1.msra.mxu0 %v152
    %739 = vmatprep.subr.mxu0 0.0
    %740 = vmatpush1.msra.mxu0 %v155
    %741 = vmatprep.subr.mxu0 0.0
    %742 = vmatpush1.msra.mxu0 %v158
    %743 = vmatprep.subr.mxu0 0.0
    %744 = vmatpush1.msra.mxu0 %v161
    %745 = vmatprep.subr.mxu0 0.0
    %746 = vmatpush1.msra.mxu0 %v164
    %747 = vmatprep.subr.mxu0 0.0
    %748 = vmatpush1.msra.mxu0 %v167
    %749 = vmatprep.subr.mxu0 0.0
    %750 = vmatpush1.msra.mxu0 %v170
    %751 = vmatprep.subr.mxu0 0.0
    %752 = vmatpush1.msra.mxu0 %v173
    %753 = vmatprep.subr.mxu0 0.0
    %754 = vmatpush1.msra.mxu0 %v176
    %755 = vmatprep.subr.mxu0 0.0
    %756 = vmatpush1.msra.mxu0 %v179
    %757 = vmatprep.subr.mxu0 0.0
    %758 = vmatpush1.msra.mxu0 %v182
    %759 = vmatprep.subr.mxu0 0.0
    %760 = vmatpush1.msra.mxu0 %v185
    %761 = vmatprep.subr.mxu0 0.0
    %762 = vmatpush1.msra.mxu0 %v188
    %763 = vmatprep.subr.mxu0 0.0
    %764 = vmatpush1.msra.mxu0 %v191
    %765 = vmatprep.subr.mxu0 0.0
    %766 = vmatpush1.msra.mxu0 %v194
    %767 = vmatprep.subr.mxu0 0.0
    %768 = vmatpush1.msra.mxu0 %v197
    %769 = vmatprep.mubr.f32.mxu0 %v633
    %770 = vmatmul.mubr.f32.gmra.mrb[0].mxu0 %v632
    %v771 = vpop.f32.mrb[0].mxu0
    %v772 = vadd.f32 0.0, %v771
    %v773 = vpop.f32.mrb[0].mxu0
    %774 = vdwg.mxu0
    %775 = vmatprep.subr.mxu0 0.0
    %776 = vmatpush1.msra.mxu0 %v701
    %777 = vmatprep.subr.mxu0 0.0
    %778 = vmatpush1.msra.mxu0 0.0
    %779 = vmatprep.subr.mxu0 0.0
    %780 = vmatpush1.msra.mxu0 0.0
    %781 = vmatprep.subr.mxu0 0.0
    %782 = vmatpush1.msra.mxu0 0.0
    %783 = vmatprep.subr.mxu0 0.0
    %784 = vmatpush1.msra.mxu0 0.0
    %785 = vmatprep.subr.mxu0 0.0
    %786 = vmatpush1.msra.mxu0 0.0
    %787 = vmatprep.subr.mxu0 0.0
    %788 = vmatpush1.msra.mxu0 0.0
    %789 = vmatprep.subr.mxu0 0.0
    %790 = vmatpush1.msra.mxu0 0.0
    %791 = vmatprep.subr.mxu0 0.0
    %792 = vmatpush1.msra.mxu0 0.0
    %793 = vmatprep.subr.mxu0 0.0
    %794 = vmatpush1.msra.mxu0 0.0
    %795 = vmatprep.subr.mxu0 0.0
    %796 = vmatpush1.msra.mxu0 0.0
    %797 = vmatprep.subr.mxu0 0.0
    %798 = vmatpush1.msra.mxu0 0.0
    %799 = vmatprep.subr.mxu0 0.0
    %800 = vmatpush1.msra.mxu0 0.0
    %801 = vmatprep.subr.mxu0 0.0
    %802 = vmatpush1.msra.mxu0 0.0
    %803 = vmatprep.subr.mxu0 0.0
    %804 = vmatpush1.msra.mxu0 0.0
    %805 = vmatprep.subr.mxu0 0.0
    %806 = vmatpush1.msra.mxu0 0.0
    %807 = vmatprep.subr.mxu0 0.0
    %808 = vmatpush1.msra.mxu0 0.0
    %809 = vmatprep.subr.mxu0 0.0
    %810 = vmatpush1.msra.mxu0 0.0
    %811 = vmatprep.subr.mxu0 0.0
    %812 = vmatpush1.msra.mxu0 0.0
    %813 = vmatprep.subr.mxu0 0.0
    %814 = vmatpush1.msra.mxu0 0.0
    %815 = vmatprep.subr.mxu0 0.0
    %816 = vmatpush1.msra.mxu0 0.0
    %817 = vmatprep.subr.mxu0 0.0
    %818 = vmatpush1.msra.mxu0 0.0
    %819 = vmatprep.subr.mxu0 0.0
    %820 = vmatpush1.msra.mxu0 0.0
    %821 = vmatprep.subr.mxu0 0.0
    %822 = vmatpush1.msra.mxu0 0.0
    %823 = vmatprep.subr.mxu0 0.0
    %824 = vmatpush1.msra.mxu0 0.0
    %825 = vmatprep.subr.mxu0 0.0
    %826 = vmatpush1.msra.mxu0 0.0
    %827 = vmatprep.subr.mxu0 0.0
    %828 = vmatpush1.msra.mxu0 0.0
    %829 = vmatprep.subr.mxu0 0.0
    %830 = vmatpush1.msra.mxu0 0.0
    %831 = vmatprep.subr.mxu0 0.0
    %832 = vmatpush1.msra.mxu0 0.0
    %833 = vmatprep.subr.mxu0 0.0
    %834 = vmatpush1.msra.mxu0 0.0
    %835 = vmatprep.subr.mxu0 0.0
    %836 = vmatpush1.msra.mxu0 0.0
    %837 = vmatprep.subr.mxu0 0.0
    %838 = vmatpush1.msra.mxu0 0.0
    %839 = vmatprep.mubr.f32.mxu0 0.0
    %840 = vmatmul.mubr.f32.gmra.mrb[0].mxu0 %v418
    %v841 = vpop.f32.mrb[0].mxu0
    %v842 = vadd.f32 %v703, %v841
    %v843 = vpop.f32.mrb[0].mxu0
    %844 = vdwg.mxu0
    %845 = vmatprep.subr.mxu0 0.0
    %846 = vmatpush1.msra.mxu0 %v772
    %847 = vmatprep.subr.mxu0 0.0
    %848 = vmatpush1.msra.mxu0 0.0
    %849 = vmatprep.subr.mxu0 0.0
    %850 = vmatpush1.msra.mxu0 0.0
    %851 = vmatprep.subr.mxu0 0.0
    %852 = vmatpush1.msra.mxu0 0.0
    %853 = vmatprep.subr.mxu0 0.0
    %854 = vmatpush1.msra.mxu0 0.0
    %855 = vmatprep.subr.mxu0 0.0
    %856 = vmatpush1.msra.mxu0 0.0
    %857 = vmatprep.subr.mxu0 0.0
    %858 = vmatpush1.msra.mxu0 0.0
    %859 = vmatprep.subr.mxu0 0.0
    %860 = vmatpush1.msra.mxu0 0.0
    %861 = vmatprep.subr.mxu0 0.0
    %862 = vmatpush1.msra.mxu0 0.0
    %863 = vmatprep.subr.mxu0 0.0
    %864 = vmatpush1.msra.mxu0 0.0
    %865 = vmatprep.subr.mxu0 0.0
    %866 = vmatpush1.msra.mxu0 0.0
    %867 = vmatprep.subr.mxu0 0.0
    %868 = vmatpush1.msra.mxu0 0.0
    %869 = vmatprep.subr.mxu0 0.0
    %870 = vmatpush1.msra.mxu0 0.0
    %871 = vmatprep.subr.mxu0 0.0
    %872 = vmatpush1.msra.mxu0 0.0
    %873 = vmatprep.subr.mxu0 0.0
    %874 = vmatpush1.msra.mxu0 0.0
    %875 = vmatprep.subr.mxu0 0.0
    %876 = vmatpush1.msra.mxu0 0.0
    %877 = vmatprep.subr.mxu0 0.0
    %878 = vmatpush1.msra.mxu0 0.0
    %879 = vmatprep.subr.mxu0 0.0
    %880 = vmatpush1.msra.mxu0 0.0
    %881 = vmatprep.subr.mxu0 0.0
    %882 = vmatpush1.msra.mxu0 0.0
    %883 = vmatprep.subr.mxu0 0.0
    %884 = vmatpush1.msra.mxu0 0.0
    %885 = vmatprep.subr.mxu0 0.0
    %886 = vmatpush1.msra.mxu0 0.0
    %887 = vmatprep.subr.mxu0 0.0
    %888 = vmatpush1.msra.mxu0 0.0
    %889 = vmatprep.subr.mxu0 0.0
    %890 = vmatpush1.msra.mxu0 0.0
    %891 = vmatprep.subr.mxu0 0.0
    %892 = vmatpush1.msra.mxu0 0.0
    %893 = vmatprep.subr.mxu0 0.0
    %894 = vmatpush1.msra.mxu0 0.0
    %895 = vmatprep.subr.mxu0 0.0
    %896 = vmatpush1.msra.mxu0 0.0
    %897 = vmatprep.subr.mxu0 0.0
    %898 = vmatpush1.msra.mxu0 0.0
    %899 = vmatprep.subr.mxu0 0.0
    %900 = vmatpush1.msra.mxu0 0.0
    %901 = vmatprep.subr.mxu0 0.0
    %902 = vmatpush1.msra.mxu0 0.0
    %903 = vmatprep.subr.mxu0 0.0
    %904 = vmatpush1.msra.mxu0 0.0
    %905 = vmatprep.subr.mxu0 0.0
    %906 = vmatpush1.msra.mxu0 0.0
    %907 = vmatprep.subr.mxu0 0.0
    %908 = vmatpush1.msra.mxu0 0.0
    %909 = vmatprep.mubr.f32.mxu0 0.0
    %910 = vmatmul.mubr.f32.gmra.mrb[0].mxu0 %v492
    %v911 = vpop.f32.mrb[0].mxu0
    %v912 = vadd.f32 0.0, %v911
    %v913 = vpop.f32.mrb[0].mxu0
    %914 = vdwg.mxu0
    %v915 = vadd.f32 %v842, %v912
    %v917 = vlaneseq
    %v918 = vshrl.u32 %v917, 7
    %v919 = vsub.s32 0, %v918
    %v920 = vrot.slane %v198, %v919
    %v922 = vadd.f32 %v915, %v920
    %923 = vst [vmem:[%s6] sm:$0xff] %v922
    // Predicated region
    $region30: #{branch_2_fun.2} parent=1 // pred_check
      _
    $region31: #{branch_2_fun.2} parent=1 // pred_check_branch
      %925 = sbr.rel (0) target = $region33
    $region32: #{branch_2_fun.2} parent=1 // pred_region
      _
    $region33: #{branch_2_fun.2} parent=1 // pred_fallthru
      _
    // Predicated region
    $region34: #{branch_2_fun.2} parent=1 // pred_check
      _
    $region35: #{branch_2_fun.2} parent=1 // pred_check_branch
      %927 = sbr.rel (0) target = $region37
    $region36: #{branch_2_fun.2} parent=1 // pred_region
      _
    $region37: #{branch_2_fun.2} parent=1 // pred_fallthru
      _
    %928 = vsyncpa [#allocation3], 1

// kernel: branch_0_fun.2
$region0: #{branch_0_fun.2}
  #allocation0 [shape = 'u32[]', space=smem, size = 0x4, offset = 0x4, fixed_abs, tag = 'smem constant byte address 0x4 - core index']
  #allocation1 [shape = 'u32[144,128]{1,0:T(1,128)}', space=vmem, size = 0x12000, scoped, tag = 'internal scratch']
  %s0 = inlined_call_operand.vmem [shape: f32[2,256], index: 0, kind: input, shape index: {}]
  %s1 = inlined_call_operand.hbm [shape: f32[256,512], index: 1, kind: input, shape index: {}]
  %s2 = inlined_call_operand.vmem [shape: f32[1,512], index: 2, kind: input, shape index: {}]
  %s3 = inlined_call_operand.hbm [shape: f32[512,256], index: 3, kind: input, shape index: {}]
  %s4 = inlined_call_operand.vmem [shape: f32[1,256], index: 4, kind: input, shape index: {}]
  %s5 = inlined_call_operand.hbm [shape: f32[2,256], index: 5, kind: output, shape index: {}]
  %s6 = sld [smem:[#allocation0]]
  $region38: #{branch_0_fun.2} parent=0
    _
  %s8 = ssub.s32 1, %s6
  %s9 = scalar_select 0, %s8, %s6
  $region1: #{branch_0_fun.2} parent=0
    #allocation2 [shape = 'u8[524288]{0}', space=vmem, size = 0x80000, scoped, tag = 'input window, operand 1, single buffered']
    #allocation3 [shape = 's32[1]{0}', space=sflag, size = 0x4, scoped, tag = 'scoped memory for branch_0_fun.2']
    #allocation4 [shape = 's32[1]{0}', space=sflag, size = 0x4, scoped, tag = 'scoped memory for branch_0_fun.2']
    #allocation5 [shape = 'u8[524288]{0}', space=vmem, size = 0x80000, scoped, tag = 'input window, operand 3, single buffered']
    #allocation6 [shape = 's32[1]{0}', space=sflag, size = 0x4, scoped, tag = 'scoped memory for branch_0_fun.2']
    #allocation7 [shape = 'u8[2048]{0}', space=vmem, size = 0x800, scoped, tag = 'output window, operand 0, single buffered']
    %10 = vsyncpa [#allocation3], 0
    %11 = vsyncpa [#allocation6], 0
    %12 = vsyncpa [#allocation4], 0
    // Predicated region
    $region2: #{branch_0_fun.2} parent=1 // pred_check
      _
    $region3: #{branch_0_fun.2} parent=1 // pred_check_branch
      %14 = sbr.rel (0) target = $region5
    $region4: #{branch_0_fun.2} parent=1 // pred_region
      _
    $region5: #{branch_0_fun.2} parent=1 // pred_fallthru
      _
    // Predicated region
    $region6: #{branch_0_fun.2} parent=1 // pred_check
      _
    $region7: #{branch_0_fun.2} parent=1 // pred_check_branch
      %16 = sbr.rel (0) target = $region9
    $region8: #{branch_0_fun.2} parent=1 // pred_region
      %s18 = ssub.s32 16384, 16384
      %19 = vsyncadd [#allocation3], %s18
      %s20 = sshll.u32 [#allocation2], 4
      %s21 = int_to_ptr.vmem [resolvable:$true] %s20
      %26 = dma.hbm_to_vmem [thread:$0]  %s1, 16384, %s21, [#allocation3], 512, 512, 32
    $region9: #{branch_0_fun.2} parent=1 // pred_fallthru
      _
    // Predicated region
    $region10: #{branch_0_fun.2} parent=1 // pred_check
      _
    $region11: #{branch_0_fun.2} parent=1 // pred_check_branch
      %28 = sbr.rel (0) target = $region13
    $region12: #{branch_0_fun.2} parent=1 // pred_region
      _
    $region13: #{branch_0_fun.2} parent=1 // pred_fallthru
      _
    // Predicated region
    $region14: #{branch_0_fun.2} parent=1 // pred_check
      _
    $region15: #{branch_0_fun.2} parent=1 // pred_check_branch
      %30 = sbr.rel (0) target = $region17
    $region16: #{branch_0_fun.2} parent=1 // pred_region
      %s32 = ssub.s32 16384, 16384
      %33 = vsyncadd [#allocation6], %s32
      %s34 = sshll.u32 [#allocation5], 4
      %s35 = int_to_ptr.vmem [resolvable:$true] %s34
      %40 = dma.hbm_to_vmem [thread:$0]  %s3, 16384, %s35, [#allocation6], 256, 256, 16
    $region17: #{branch_0_fun.2} parent=1 // pred_fallthru
      _
    // Predicated region
    $region18: #{branch_0_fun.2} parent=1 // pred_check
      _
    $region19: #{branch_0_fun.2} parent=1 // pred_check_branch
      %42 = sbr.rel (0) target = $region21
    $region20: #{branch_0_fun.2} parent=1 // pred_region
      _
    $region21: #{branch_0_fun.2} parent=1 // pred_fallthru
      _
    // Predicated region
    $region22: #{branch_0_fun.2} parent=1 // pred_check
      _
    $region23: #{branch_0_fun.2} parent=1 // pred_check_branch
      %44 = sbr.rel (0) target = $region25
    $region24: #{branch_0_fun.2} parent=1 // pred_region
      %45 = dma.done [#allocation3], 16384
    $region25: #{branch_0_fun.2} parent=1 // pred_fallthru
      _
    // Predicated region
    $region26: #{branch_0_fun.2} parent=1 // pred_check
      _
    $region27: #{branch_0_fun.2} parent=1 // pred_check_branch
      %47 = sbr.rel (0) target = $region29
    $region28: #{branch_0_fun.2} parent=1 // pred_region
      %48 = dma.done [#allocation6], 16384
    $region29: #{branch_0_fun.2} parent=1 // pred_fallthru
      _
    %v49 = vld [vmem:[%s0] sm:$0xf]
    %v50 = vld [vmem:[#allocation2] sm:$0xff]
    %v51 = vld [vmem:[#allocation2 + $0x8] sm:$0xff]
    %v52 = vld [vmem:[#allocation2 + $0x10] sm:$0xff]
    %v53 = vld [vmem:[#allocation2 + $0x18] sm:$0xff]
    %v54 = vld [vmem:[#allocation2 + $0x20] sm:$0xff]
    %v55 = vld [vmem:[#allocation2 + $0x28] sm:$0xff]
    %v56 = vld [vmem:[#allocation2 + $0x30] sm:$0xff]
    %v57 = vld [vmem:[#allocation2 + $0x38] sm:$0xff]
    %v58 = vld [vmem:[#allocation2 + $0x40] sm:$0xff]
    %v59 = vld [vmem:[#allocation2 + $0x48] sm:$0xff]
    %v60 = vld [vmem:[#allocation2 + $0x50] sm:$0xff]
    %v61 = vld [vmem:[#allocation2 + $0x58] sm:$0xff]
    %v62 = vld [vmem:[#allocation2 + $0x60] sm:$0xff]
    %v63 = vld [vmem:[#allocation2 + $0x68] sm:$0xff]
    %v64 = vld [vmem:[#allocation2 + $0x70] sm:$0xff]
    %v65 = vld [vmem:[#allocation2 + $0x78] sm:$0xff]
    %v66 = vld [vmem:[#allocation2 + $0x80] sm:$0xff]
    %v67 = vld [vmem:[#allocation2 + $0x88] sm:$0xff]
    %v68 = vld [vmem:[#allocation2 + $0x90] sm:$0xff]
    %v69 = vld [vmem:[#allocation2 + $0x98] sm:$0xff]
    %v70 = vld [vmem:[#allocation2 + $0xa0] sm:$0xff]
    %v71 = vld [vmem:[#allocation2 + $0xa8] sm:$0xff]
    %v72 = vld [vmem:[#allocation2 + $0xb0] sm:$0xff]
    %v73 = vld [vmem:[#allocation2 + $0xb8] sm:$0xff]
    %v74 = vld [vmem:[#allocation2 + $0xc0] sm:$0xff]
    %v75 = vld [vmem:[#allocation2 + $0xc8] sm:$0xff]
    %v76 = vld [vmem:[#allocation2 + $0xd0] sm:$0xff]
    %v77 = vld [vmem:[#allocation2 + $0xd8] sm:$0xff]
    %v78 = vld [vmem:[#allocation2 + $0xe0] sm:$0xff]
    %v79 = vld [vmem:[#allocation2 + $0xe8] sm:$0xff]
    %v80 = vld [vmem:[#allocation2 + $0xf0] sm:$0xff]
    %v81 = vld [vmem:[#allocation2 + $0xf8] sm:$0xff]
    %v82 = vld [vmem:[#allocation2 + $0x100] sm:$0xff]
    %v83 = vld [vmem:[#allocation2 + $0x108] sm:$0xff]
    %v84 = vld [vmem:[#allocation2 + $0x110] sm:$0xff]
    %v85 = vld [vmem:[#allocation2 + $0x118] sm:$0xff]
    %v86 = vld [vmem:[#allocation2 + $0x120] sm:$0xff]
    %v87 = vld [vmem:[#allocation2 + $0x128] sm:$0xff]
    %v88 = vld [vmem:[#allocation2 + $0x130] sm:$0xff]
    %v89 = vld [vmem:[#allocation2 + $0x138] sm:$0xff]
    %v90 = vld [vmem:[#allocation2 + $0x140] sm:$0xff]
    %v91 = vld [vmem:[#allocation2 + $0x148] sm:$0xff]
    %v92 = vld [vmem:[#allocation2 + $0x150] sm:$0xff]
    %v93 = vld [vmem:[#allocation2 + $0x158] sm:$0xff]
    %v94 = vld [vmem:[#allocation2 + $0x160] sm:$0xff]
    %v95 = vld [vmem:[#allocation2 + $0x168] sm:$0xff]
    %v96 = vld [vmem:[#allocation2 + $0x170] sm:$0xff]
    %v97 = vld [vmem:[#allocation2 + $0x178] sm:$0xff]
    %v98 = vld [vmem:[#allocation2 + $0x180] sm:$0xff]
    %v99 = vld [vmem:[#allocation2 + $0x188] sm:$0xff]
    %v100 = vld [vmem:[#allocation2 + $0x190] sm:$0xff]
    %v101 = vld [vmem:[#allocation2 + $0x198] sm:$0xff]
    %v102 = vld [vmem:[#allocation2 + $0x1a0] sm:$0xff]
    %v103 = vld [vmem:[#allocation2 + $0x1a8] sm:$0xff]
    %v104 = vld [vmem:[#allocation2 + $0x1b0] sm:$0xff]
    %v105 = vld [vmem:[#allocation2 + $0x1b8] sm:$0xff]
    %v106 = vld [vmem:[#allocation2 + $0x1c0] sm:$0xff]
    %v107 = vld [vmem:[#allocation2 + $0x1c8] sm:$0xff]
    %v108 = vld [vmem:[#allocation2 + $0x1d0] sm:$0xff]
    %v109 = vld [vmem:[#allocation2 + $0x1d8] sm:$0xff]
    %v110 = vld [vmem:[#allocation2 + $0x1e0] sm:$0xff]
    %v111 = vld [vmem:[#allocation2 + $0x1e8] sm:$0xff]
    %v112 = vld [vmem:[#allocation2 + $0x1f0] sm:$0xff]
    %v113 = vld [vmem:[#allocation2 + $0x1f8] sm:$0xff]
    %v114 = vld [vmem:[#allocation2 + $0x200] sm:$0xff]
    %v115 = vld [vmem:[#allocation2 + $0x208] sm:$0xff]
    %v116 = vld [vmem:[#allocation2 + $0x210] sm:$0xff]
    %v117 = vld [vmem:[#allocation2 + $0x218] sm:$0xff]
    %v118 = vld [vmem:[#allocation2 + $0x220] sm:$0xff]
    %v119 = vld [vmem:[#allocation2 + $0x228] sm:$0xff]
    %v120 = vld [vmem:[#allocation2 + $0x230] sm:$0xff]
    %v121 = vld [vmem:[#allocation2 + $0x238] sm:$0xff]
    %v122 = vld [vmem:[#allocation2 + $0x240] sm:$0xff]
    %v123 = vld [vmem:[#allocation2 + $0x248] sm:$0xff]
    %v124 = vld [vmem:[#allocation2 + $0x250] sm:$0xff]
    %v125 = vld [vmem:[#allocation2 + $0x258] sm:$0xff]
    %v126 = vld [vmem:[#allocation2 + $0x260] sm:$0xff]
    %v127 = vld [vmem:[#allocation2 + $0x268] sm:$0xff]
    %v128 = vld [vmem:[#allocation2 + $0x270] sm:$0xff]
    %v129 = vld [vmem:[#allocation2 + $0x278] sm:$0xff]
    %v130 = vld [vmem:[#allocation2 + $0x280] sm:$0xff]
    %v131 = vld [vmem:[#allocation2 + $0x288] sm:$0xff]
    %v132 = vld [vmem:[#allocation2 + $0x290] sm:$0xff]
    %v133 = vld [vmem:[#allocation2 + $0x298] sm:$0xff]
    %v134 = vld [vmem:[#allocation2 + $0x2a0] sm:$0xff]
    %v135 = vld [vmem:[#allocation2 + $0x2a8] sm:$0xff]
    %v136 = vld [vmem:[#allocation2 + $0x2b0] sm:$0xff]
    %v137 = vld [vmem:[#allocation2 + $0x2b8] sm:$0xff]
    %v138 = vld [vmem:[#allocation2 + $0x2c0] sm:$0xff]
    %v139 = vld [vmem:[#allocation2 + $0x2c8] sm:$0xff]
    %v140 = vld [vmem:[#allocation2 + $0x2d0] sm:$0xff]
    %v141 = vld [vmem:[#allocation2 + $0x2d8] sm:$0xff]
    %v142 = vld [vmem:[#allocation2 + $0x2e0] sm:$0xff]
    %v143 = vld [vmem:[#allocation2 + $0x2e8] sm:$0xff]
    %v144 = vld [vmem:[#allocation2 + $0x2f0] sm:$0xff]
    %v145 = vld [vmem:[#allocation2 + $0x2f8] sm:$0xff]
    %v146 = vld [vmem:[#allocation2 + $0x300] sm:$0xff]
    %v147 = vld [vmem:[#allocation2 + $0x308] sm:$0xff]
    %v148 = vld [vmem:[#allocation2 + $0x310] sm:$0xff]
    %v149 = vld [vmem:[#allocation2 + $0x318] sm:$0xff]
    %v150 = vld [vmem:[#allocation2 + $0x320] sm:$0xff]
    %v151 = vld [vmem:[#allocation2 + $0x328] sm:$0xff]
    %v152 = vld [vmem:[#allocation2 + $0x330] sm:$0xff]
    %v153 = vld [vmem:[#allocation2 + $0x338] sm:$0xff]
    %v154 = vld [vmem:[#allocation2 + $0x340] sm:$0xff]
    %v155 = vld [vmem:[#allocation2 + $0x348] sm:$0xff]
    %v156 = vld [vmem:[#allocation2 + $0x350] sm:$0xff]
    %v157 = vld [vmem:[#allocation2 + $0x358] sm:$0xff]
    %v158 = vld [vmem:[#allocation2 + $0x360] sm:$0xff]
    %v159 = vld [vmem:[#allocation2 + $0x368] sm:$0xff]
    %v160 = vld [vmem:[#allocation2 + $0x370] sm:$0xff]
    %v161 = vld [vmem:[#allocation2 + $0x378] sm:$0xff]
    %v162 = vld [vmem:[#allocation2 + $0x380] sm:$0xff]
    %v163 = vld [vmem:[#allocation2 + $0x388] sm:$0xff]
    %v164 = vld [vmem:[#allocation2 + $0x390] sm:$0xff]
    %v165 = vld [vmem:[#allocation2 + $0x398] sm:$0xff]
    %v166 = vld [vmem:[#allocation2 + $0x3a0] sm:$0xff]
    %v167 = vld [vmem:[#allocation2 + $0x3a8] sm:$0xff]
    %v168 = vld [vmem:[#allocation2 + $0x3b0] sm:$0xff]
    %v169 = vld [vmem:[#allocation2 + $0x3b8] sm:$0xff]
    %v170 = vld [vmem:[#allocation2 + $0x3c0] sm:$0xff]
    %v171 = vld [vmem:[#allocation2 + $0x3c8] sm:$0xff]
    %v172 = vld [vmem:[#allocation2 + $0x3d0] sm:$0xff]
    %v173 = vld [vmem:[#allocation2 + $0x3d8] sm:$0xff]
    %v174 = vld [vmem:[#allocation2 + $0x3e0] sm:$0xff]
    %v175 = vld [vmem:[#allocation2 + $0x3e8] sm:$0xff]
    %v176 = vld [vmem:[#allocation2 + $0x3f0] sm:$0xff]
    %v177 = vld [vmem:[#allocation2 + $0x3f8] sm:$0xff]
    %v178 = vld [vmem:[%s2] sm:$0xf]
    %v179 = vld [vmem:[#allocation5] sm:$0xff]
    %v180 = vld [vmem:[#allocation5 + $0x8] sm:$0xff]
    %v181 = vld [vmem:[#allocation5 + $0x10] sm:$0xff]
    %v182 = vld [vmem:[#allocation5 + $0x18] sm:$0xff]
    %v183 = vld [vmem:[#allocation5 + $0x20] sm:$0xff]
    %v184 = vld [vmem:[#allocation5 + $0x28] sm:$0xff]
    %v185 = vld [vmem:[#allocation5 + $0x30] sm:$0xff]
    %v186 = vld [vmem:[#allocation5 + $0x38] sm:$0xff]
    %v187 = vld [vmem:[#allocation5 + $0x40] sm:$0xff]
    %v188 = vld [vmem:[#allocation5 + $0x48] sm:$0xff]
    %v189 = vld [vmem:[#allocation5 + $0x50] sm:$0xff]
    %v190 = vld [vmem:[#allocation5 + $0x58] sm:$0xff]
    %v191 = vld [vmem:[#allocation5 + $0x60] sm:$0xff]
    %v192 = vld [vmem:[#allocation5 + $0x68] sm:$0xff]
    %v193 = vld [vmem:[#allocation5 + $0x70] sm:$0xff]
    %v194 = vld [vmem:[#allocation5 + $0x78] sm:$0xff]
    %v195 = vld [vmem:[#allocation5 + $0x80] sm:$0xff]
    %v196 = vld [vmem:[#allocation5 + $0x88] sm:$0xff]
    %v197 = vld [vmem:[#allocation5 + $0x90] sm:$0xff]
    %v198 = vld [vmem:[#allocation5 + $0x98] sm:$0xff]
    %v199 = vld [vmem:[#allocation5 + $0xa0] sm:$0xff]
    %v200 = vld [vmem:[#allocation5 + $0xa8] sm:$0xff]
    %v201 = vld [vmem:[#allocation5 + $0xb0] sm:$0xff]
    %v202 = vld [vmem:[#allocation5 + $0xb8] sm:$0xff]
    %v203 = vld [vmem:[#allocation5 + $0xc0] sm:$0xff]
    %v204 = vld [vmem:[#allocation5 + $0xc8] sm:$0xff]
    %v205 = vld [vmem:[#allocation5 + $0xd0] sm:$0xff]
    %v206 = vld [vmem:[#allocation5 + $0xd8] sm:$0xff]
    %v207 = vld [vmem:[#allocation5 + $0xe0] sm:$0xff]
    %v208 = vld [vmem:[#allocation5 + $0xe8] sm:$0xff]
    %v209 = vld [vmem:[#allocation5 + $0xf0] sm:$0xff]
    %v210 = vld [vmem:[#allocation5 + $0xf8] sm:$0xff]
    %v211 = vld [vmem:[#allocation5 + $0x100] sm:$0xff]
    %v212 = vld [vmem:[#allocation5 + $0x108] sm:$0xff]
    %v213 = vld [vmem:[#allocation5 + $0x110] sm:$0xff]
    %v214 = vld [vmem:[#allocation5 + $0x118] sm:$0xff]
    %v215 = vld [vmem:[#allocation5 + $0x120] sm:$0xff]
    %v216 = vld [vmem:[#allocation5 + $0x128] sm:$0xff]
    %v217 = vld [vmem:[#allocation5 + $0x130] sm:$0xff]
    %v218 = vld [vmem:[#allocation5 + $0x138] sm:$0xff]
    %v219 = vld [vmem:[#allocation5 + $0x140] sm:$0xff]
    %v220 = vld [vmem:[#allocation5 + $0x148] sm:$0xff]
    %v221 = vld [vmem:[#allocation5 + $0x150] sm:$0xff]
    %v222 = vld [vmem:[#allocation5 + $0x158] sm:$0xff]
    %v223 = vld [vmem:[#allocation5 + $0x160] sm:$0xff]
    %v224 = vld [vmem:[#allocation5 + $0x168] sm:$0xff]
    %v225 = vld [vmem:[#allocation5 + $0x170] sm:$0xff]
    %v226 = vld [vmem:[#allocation5 + $0x178] sm:$0xff]
    %v227 = vld [vmem:[#allocation5 + $0x180] sm:$0xff]
    %v228 = vld [vmem:[#allocation5 + $0x188] sm:$0xff]
    %v229 = vld [vmem:[#allocation5 + $0x190] sm:$0xff]
    %v230 = vld [vmem:[#allocation5 + $0x198] sm:$0xff]
    %v231 = vld [vmem:[#allocation5 + $0x1a0] sm:$0xff]
    %v232 = vld [vmem:[#allocation5 + $0x1a8] sm:$0xff]
    %v233 = vld [vmem:[#allocation5 + $0x1b0] sm:$0xff]
    %v234 = vld [vmem:[#allocation5 + $0x1b8] sm:$0xff]
    %v235 = vld [vmem:[#allocation5 + $0x1c0] sm:$0xff]
    %v236 = vld [vmem:[#allocation5 + $0x1c8] sm:$0xff]
    %v237 = vld [vmem:[#allocation5 + $0x1d0] sm:$0xff]
    %v238 = vld [vmem:[#allocation5 + $0x1d8] sm:$0xff]
    %v239 = vld [vmem:[#allocation5 + $0x1e0] sm:$0xff]
    %v240 = vld [vmem:[#allocation5 + $0x1e8] sm:$0xff]
    %v241 = vld [vmem:[#allocation5 + $0x1f0] sm:$0xff]
    %v242 = vld [vmem:[#allocation5 + $0x1f8] sm:$0xff]
    %v243 = vld [vmem:[#allocation5 + $0x200] sm:$0xff]
    %v244 = vld [vmem:[#allocation5 + $0x208] sm:$0xff]
    %v245 = vld [vmem:[#allocation5 + $0x210] sm:$0xff]
    %v246 = vld [vmem:[#allocation5 + $0x218] sm:$0xff]
    %v247 = vld [vmem:[#allocation5 + $0x220] sm:$0xff]
    %v248 = vld [vmem:[#allocation5 + $0x228] sm:$0xff]
    %v249 = vld [vmem:[#allocation5 + $0x230] sm:$0xff]
    %v250 = vld [vmem:[#allocation5 + $0x238] sm:$0xff]
    %v251 = vld [vmem:[#allocation5 + $0x240] sm:$0xff]
    %v252 = vld [vmem:[#allocation5 + $0x248] sm:$0xff]
    %v253 = vld [vmem:[#allocation5 + $0x250] sm:$0xff]
    %v254 = vld [vmem:[#allocation5 + $0x258] sm:$0xff]
    %v255 = vld [vmem:[#allocation5 + $0x260] sm:$0xff]
    %v256 = vld [vmem:[#allocation5 + $0x268] sm:$0xff]
    %v257 = vld [vmem:[#allocation5 + $0x270] sm:$0xff]
    %v258 = vld [vmem:[#allocation5 + $0x278] sm:$0xff]
    %v259 = vld [vmem:[#allocation5 + $0x280] sm:$0xff]
    %v260 = vld [vmem:[#allocation5 + $0x288] sm:$0xff]
    %v261 = vld [vmem:[#allocation5 + $0x290] sm:$0xff]
    %v262 = vld [vmem:[#allocation5 + $0x298] sm:$0xff]
    %v263 = vld [vmem:[#allocation5 + $0x2a0] sm:$0xff]
    %v264 = vld [vmem:[#allocation5 + $0x2a8] sm:$0xff]
    %v265 = vld [vmem:[#allocation5 + $0x2b0] sm:$0xff]
    %v266 = vld [vmem:[#allocation5 + $0x2b8] sm:$0xff]
    %v267 = vld [vmem:[#allocation5 + $0x2c0] sm:$0xff]
    %v268 = vld [vmem:[#allocation5 + $0x2c8] sm:$0xff]
    %v269 = vld [vmem:[#allocation5 + $0x2d0] sm:$0xff]
    %v270 = vld [vmem:[#allocation5 + $0x2d8] sm:$0xff]
    %v271 = vld [vmem:[#allocation5 + $0x2e0] sm:$0xff]
    %v272 = vld [vmem:[#allocation5 + $0x2e8] sm:$0xff]
    %v273 = vld [vmem:[#allocation5 + $0x2f0] sm:$0xff]
    %v274 = vld [vmem:[#allocation5 + $0x2f8] sm:$0xff]
    %v275 = vld [vmem:[#allocation5 + $0x300] sm:$0xff]
    %v276 = vld [vmem:[#allocation5 + $0x308] sm:$0xff]
    %v277 = vld [vmem:[#allocation5 + $0x310] sm:$0xff]
    %v278 = vld [vmem:[#allocation5 + $0x318] sm:$0xff]
    %v279 = vld [vmem:[#allocation5 + $0x320] sm:$0xff]
    %v280 = vld [vmem:[#allocation5 + $0x328] sm:$0xff]
    %v281 = vld [vmem:[#allocation5 + $0x330] sm:$0xff]
    %v282 = vld [vmem:[#allocation5 + $0x338] sm:$0xff]
    %v283 = vld [vmem:[#allocation5 + $0x340] sm:$0xff]
    %v284 = vld [vmem:[#allocation5 + $0x348] sm:$0xff]
    %v285 = vld [vmem:[#allocation5 + $0x350] sm:$0xff]
    %v286 = vld [vmem:[#allocation5 + $0x358] sm:$0xff]
    %v287 = vld [vmem:[#allocation5 + $0x360] sm:$0xff]
    %v288 = vld [vmem:[#allocation5 + $0x368] sm:$0xff]
    %v289 = vld [vmem:[#allocation5 + $0x370] sm:$0xff]
    %v290 = vld [vmem:[#allocation5 + $0x378] sm:$0xff]
    %v291 = vld [vmem:[#allocation5 + $0x380] sm:$0xff]
    %v292 = vld [vmem:[#allocation5 + $0x388] sm:$0xff]
    %v293 = vld [vmem:[#allocation5 + $0x390] sm:$0xff]
    %v294 = vld [vmem:[#allocation5 + $0x398] sm:$0xff]
    %v295 = vld [vmem:[#allocation5 + $0x3a0] sm:$0xff]
    %v296 = vld [vmem:[#allocation5 + $0x3a8] sm:$0xff]
    %v297 = vld [vmem:[#allocation5 + $0x3b0] sm:$0xff]
    %v298 = vld [vmem:[#allocation5 + $0x3b8] sm:$0xff]
    %v299 = vld [vmem:[#allocation5 + $0x3c0] sm:$0xff]
    %v300 = vld [vmem:[#allocation5 + $0x3c8] sm:$0xff]
    %v301 = vld [vmem:[#allocation5 + $0x3d0] sm:$0xff]
    %v302 = vld [vmem:[#allocation5 + $0x3d8] sm:$0xff]
    %v303 = vld [vmem:[#allocation5 + $0x3e0] sm:$0xff]
    %v304 = vld [vmem:[#allocation5 + $0x3e8] sm:$0xff]
    %v305 = vld [vmem:[#allocation5 + $0x3f0] sm:$0xff]
    %v306 = vld [vmem:[#allocation5 + $0x3f8] sm:$0xff]
    %v307 = vld [vmem:[%s4] sm:$0x3]
    %v309 = vlaneseq
    %v310 = vshrl.u32 %v309, 7
    %v311 = vsub.s32 0, %v310
    %v312 = vrot.slane %v178, %v311
    %v313 = vlaneseq
    %v314 = vshrl.u32 %v313, 7
    %v315 = vsub.s32 1, %v314
    %v316 = vrot.slane %v178, %v315
    %v317 = vlaneseq
    %v318 = vshrl.u32 %v317, 7
    %v319 = vsub.s32 2, %v318
    %v320 = vrot.slane %v178, %v319
    %v321 = vlaneseq
    %v322 = vshrl.u32 %v321, 7
    %v323 = vsub.s32 3, %v322
    %v324 = vrot.slane %v178, %v323
    %v331 = vunpack.c.l.s4 1983009808
    %v332 = vunpack.c.0.s8 %v331
    %v333 = vlaneseq
    %v334 = vshrl.u32 %v333, 7
    %v335 = vsub.s32 %v332, %v334
    %v336 = vrot.slane %v49, %v335
    %v337 = vcombine.high %v336, %v336
    %340 = vmatprep.subr.mxu0 %v51
    %341 = vmatpush1.msra.mxu0 %v50
    %342 = vmatprep.subr.mxu0 %v55
    %343 = vmatpush1.msra.mxu0 %v54
    %344 = vmatprep.subr.mxu0 %v59
    %345 = vmatpush1.msra.mxu0 %v58
    %346 = vmatprep.subr.mxu0 %v63
    %347 = vmatpush1.msra.mxu0 %v62
    %348 = vmatprep.subr.mxu0 %v67
    %349 = vmatpush1.msra.mxu0 %v66
    %350 = vmatprep.subr.mxu0 %v71
    %351 = vmatpush1.msra.mxu0 %v70
    %352 = vmatprep.subr.mxu0 %v75
    %353 = vmatpush1.msra.mxu0 %v74
    %354 = vmatprep.subr.mxu0 %v79
    %355 = vmatpush1.msra.mxu0 %v78
    %356 = vmatprep.subr.mxu0 %v83
    %357 = vmatpush1.msra.mxu0 %v82
    %358 = vmatprep.subr.mxu0 %v87
    %359 = vmatpush1.msra.mxu0 %v86
    %360 = vmatprep.subr.mxu0 %v91
    %361 = vmatpush1.msra.mxu0 %v90
    %362 = vmatprep.subr.mxu0 %v95
    %363 = vmatpush1.msra.mxu0 %v94
    %364 = vmatprep.subr.mxu0 %v99
    %365 = vmatpush1.msra.mxu0 %v98
    %366 = vmatprep.subr.mxu0 %v103
    %367 = vmatpush1.msra.mxu0 %v102
    %368 = vmatprep.subr.mxu0 %v107
    %369 = vmatpush1.msra.mxu0 %v106
    %370 = vmatprep.subr.mxu0 %v111
    %371 = vmatpush1.msra.mxu0 %v110
    %372 = vmatprep.subr.mxu0 %v115
    %373 = vmatpush1.msra.mxu0 %v114
    %374 = vmatprep.subr.mxu0 %v119
    %375 = vmatpush1.msra.mxu0 %v118
    %376 = vmatprep.subr.mxu0 %v123
    %377 = vmatpush1.msra.mxu0 %v122
    %378 = vmatprep.subr.mxu0 %v127
    %379 = vmatpush1.msra.mxu0 %v126
    %380 = vmatprep.subr.mxu0 %v131
    %381 = vmatpush1.msra.mxu0 %v130
    %382 = vmatprep.subr.mxu0 %v135
    %383 = vmatpush1.msra.mxu0 %v134
    %384 = vmatprep.subr.mxu0 %v139
    %385 = vmatpush1.msra.mxu0 %v138
    %386 = vmatprep.subr.mxu0 %v143
    %387 = vmatpush1.msra.mxu0 %v142
    %388 = vmatprep.subr.mxu0 %v147
    %389 = vmatpush1.msra.mxu0 %v146
    %390 = vmatprep.subr.mxu0 %v151
    %391 = vmatpush1.msra.mxu0 %v150
    %392 = vmatprep.subr.mxu0 %v155
    %393 = vmatpush1.msra.mxu0 %v154
    %394 = vmatprep.subr.mxu0 %v159
    %395 = vmatpush1.msra.mxu0 %v158
    %396 = vmatprep.subr.mxu0 %v163
    %397 = vmatpush1.msra.mxu0 %v162
    %398 = vmatprep.subr.mxu0 %v167
    %399 = vmatpush1.msra.mxu0 %v166
    %400 = vmatprep.subr.mxu0 %v171
    %401 = vmatpush1.msra.mxu0 %v170
    %402 = vmatprep.subr.mxu0 %v175
    %403 = vmatpush1.msra.mxu0 %v174
    %404 = vmatprep.mubr.f32.mxu0 %v337
    %405 = vmatmul.mubr.f32.gmra.mrb[0].mxu0 %v336
    %v406 = vpop.f32.mrb[0].mxu0
    %v407 = vadd.f32 %v312, %v406
    %v408 = vpop.f32.mrb[0].mxu0
    %v409 = vadd.f32 %v316, %v408
    %410 = vdwg.mxu0
    %411 = vmatprep.subr.mxu0 %v53
    %412 = vmatpush1.msra.mxu0 %v52
    %413 = vmatprep.subr.mxu0 %v57
    %414 = vmatpush1.msra.mxu0 %v56
    %415 = vmatprep.subr.mxu0 %v61
    %416 = vmatpush1.msra.mxu0 %v60
    %417 = vmatprep.subr.mxu0 %v65
    %418 = vmatpush1.msra.mxu0 %v64
    %419 = vmatprep.subr.mxu0 %v69
    %420 = vmatpush1.msra.mxu0 %v68
    %421 = vmatprep.subr.mxu0 %v73
    %422 = vmatpush1.msra.mxu0 %v72
    %423 = vmatprep.subr.mxu0 %v77
    %424 = vmatpush1.msra.mxu0 %v76
    %425 = vmatprep.subr.mxu0 %v81
    %426 = vmatpush1.msra.mxu0 %v80
    %427 = vmatprep.subr.mxu0 %v85
    %428 = vmatpush1.msra.mxu0 %v84
    %429 = vmatprep.subr.mxu0 %v89
    %430 = vmatpush1.msra.mxu0 %v88
    %431 = vmatprep.subr.mxu0 %v93
    %432 = vmatpush1.msra.mxu0 %v92
    %433 = vmatprep.subr.mxu0 %v97
    %434 = vmatpush1.msra.mxu0 %v96
    %435 = vmatprep.subr.mxu0 %v101
    %436 = vmatpush1.msra.mxu0 %v100
    %437 = vmatprep.subr.mxu0 %v105
    %438 = vmatpush1.msra.mxu0 %v104
    %439 = vmatprep.subr.mxu0 %v109
    %440 = vmatpush1.msra.mxu0 %v108
    %441 = vmatprep.subr.mxu0 %v113
    %442 = vmatpush1.msra.mxu0 %v112
    %443 = vmatprep.subr.mxu0 %v117
    %444 = vmatpush1.msra.mxu0 %v116
    %445 = vmatprep.subr.mxu0 %v121
    %446 = vmatpush1.msra.mxu0 %v120
    %447 = vmatprep.subr.mxu0 %v125
    %448 = vmatpush1.msra.mxu0 %v124
    %449 = vmatprep.subr.mxu0 %v129
    %450 = vmatpush1.msra.mxu0 %v128
    %451 = vmatprep.subr.mxu0 %v133
    %452 = vmatpush1.msra.mxu0 %v132
    %453 = vmatprep.subr.mxu0 %v137
    %454 = vmatpush1.msra.mxu0 %v136
    %455 = vmatprep.subr.mxu0 %v141
    %456 = vmatpush1.msra.mxu0 %v140
    %457 = vmatprep.subr.mxu0 %v145
    %458 = vmatpush1.msra.mxu0 %v144
    %459 = vmatprep.subr.mxu0 %v149
    %460 = vmatpush1.msra.mxu0 %v148
    %461 = vmatprep.subr.mxu0 %v153
    %462 = vmatpush1.msra.mxu0 %v152
    %463 = vmatprep.subr.mxu0 %v157
    %464 = vmatpush1.msra.mxu0 %v156
    %465 = vmatprep.subr.mxu0 %v161
    %466 = vmatpush1.msra.mxu0 %v160
    %467 = vmatprep.subr.mxu0 %v165
    %468 = vmatpush1.msra.mxu0 %v164
    %469 = vmatprep.subr.mxu0 %v169
    %470 = vmatpush1.msra.mxu0 %v168
    %471 = vmatprep.subr.mxu0 %v173
    %472 = vmatpush1.msra.mxu0 %v172
    %473 = vmatprep.subr.mxu0 %v177
    %474 = vmatpush1.msra.mxu0 %v176
    %475 = vmatprep.mubr.f32.mxu0 %v337
    %476 = vmatmul.mubr.f32.gmra.mrb[0].mxu0 %v336
    %v477 = vpop.f32.mrb[0].mxu0
    %v478 = vadd.f32 %v320, %v477
    %v479 = vpop.f32.mrb[0].mxu0
    %v480 = vadd.f32 %v324, %v479
    %481 = vdwg.mxu0
    %v482 = vmul.f32 %v407, 0.5
    %v483 = vmul.f32 %v409, 0.5
    %v484 = vmul.f32 %v478, 0.5
    %v485 = vmul.f32 %v480, 0.5
    %v486 = vmul.f32 %v407, 0.70710677
    %v487 = vmul.f32 %v409, 0.70710677
    %v488 = vmul.f32 %v478, 0.70710677
    %v489 = vmul.f32 %v480, 0.70710677
    %vm490 = vcmp.ge.f32.partialorder %v486, 0.0
    %vm491 = vcmp.ge.f32.partialorder %v487, 0.0
    %vm492 = vcmp.ge.f32.partialorder %v488, 0.0
    %vm493 = vcmp.ge.f32.partialorder %v489, 0.0
    %v494 = vsel %vm490, 1.0, -1.0
    %v495 = vsel %vm491, 1.0, -1.0
    %v496 = vsel %vm492, 1.0, -1.0
    %v497 = vsel %vm493, 1.0, -1.0
    %v498 = vand.u32 2147483647, %v486
    %v499 = vand.u32 2147483647, %v487
    %v500 = vand.u32 2147483647, %v488
    %v501 = vand.u32 2147483647, %v489
    %v502 = vmul.f32 %v498, 0.3275911
    %v503 = vmul.f32 %v499, 0.3275911
    %v504 = vmul.f32 %v500, 0.3275911
    %v505 = vmul.f32 %v501, 0.3275911
    %v506 = vadd.f32 %v502, 1.0
    %v507 = vadd.f32 %v503, 1.0
    %v508 = vadd.f32 %v504, 1.0
    %v509 = vadd.f32 %v505, 1.0
    %v510 = vrcp.pop %v506
    %v511 = vmul.f32 1.0, %v510
    %v512 = vrcp.pop %v507
    %v513 = vmul.f32 1.0, %v512
    %v514 = vrcp.pop %v508
    %v515 = vmul.f32 1.0, %v514
    %v516 = vrcp.pop %v509
    %v517 = vmul.f32 1.0, %v516
    %v518 = vmul.f32 %v511, 1.0614054
    %v519 = vmul.f32 %v513, 1.0614054
    %v520 = vmul.f32 %v515, 1.0614054
    %v521 = vmul.f32 %v517, 1.0614054
    %v522 = vadd.f32 %v518, -1.4531521
    %v523 = vadd.f32 %v519, -1.4531521
    %v524 = vadd.f32 %v520, -1.4531521
    %v525 = vadd.f32 %v521, -1.4531521
    %v526 = vmul.f32 %v522, %v511
    %v527 = vmul.f32 %v523, %v513
    %v528 = vmul.f32 %v524, %v515
    %v529 = vmul.f32 %v525, %v517
    %v530 = vadd.f32 %v526, 1.4214138
    %v531 = vadd.f32 %v527, 1.4214138
    %v532 = vadd.f32 %v528, 1.4214138
    %v533 = vadd.f32 %v529, 1.4214138
    %v534 = vmul.f32 %v530, %v511
    %v535 = vmul.f32 %v531, %v513
    %v536 = vmul.f32 %v532, %v515
    %v537 = vmul.f32 %v533, %v517
    %v538 = vadd.f32 %v534, -0.28449672
    %v539 = vadd.f32 %v535, -0.28449672
    %v540 = vadd.f32 %v536, -0.28449672
    %v541 = vadd.f32 %v537, -0.28449672
    %v542 = vmul.f32 %v538, %v511
    %v543 = vmul.f32 %v539, %v513
    %v544 = vmul.f32 %v540, %v515
    %v545 = vmul.f32 %v541, %v517
    %v546 = vadd.f32 %v542, 0.2548296
    %v547 = vadd.f32 %v543, 0.2548296
    %v548 = vadd.f32 %v544, 0.2548296
    %v549 = vadd.f32 %v545, 0.2548296
    %v550 = vmul.f32 %v546, %v511
    %v551 = vmul.f32 %v547, %v513
    %v552 = vmul.f32 %v548, %v515
    %v553 = vmul.f32 %v549, %v517
    %v554 = vmul.f32 %v498, %v498
    %v555 = vmul.f32 %v499, %v499
    %v556 = vmul.f32 %v500, %v500
    %v557 = vmul.f32 %v501, %v501
    %v558 = vsub.f32 0.0, %v554
    %v559 = vsub.f32 0.0, %v555
    %v560 = vsub.f32 0.0, %v556
    %v561 = vsub.f32 0.0, %v557
    %v562 = vmul.f32 %v558, 1.442695
    %v563 = vpow.pop %v562
    %v564 = vmul.f32 %v559, 1.442695
    %v565 = vpow.pop %v564
    %v566 = vmul.f32 %v560, 1.442695
    %v567 = vpow.pop %v566
    %v568 = vmul.f32 %v561, 1.442695
    %v569 = vpow.pop %v568
    %v570 = vmul.f32 %v550, %v563
    %v571 = vmul.f32 %v551, %v565
    %v572 = vmul.f32 %v552, %v567
    %v573 = vmul.f32 %v553, %v569
    %v574 = vsub.f32 1.0, %v570
    %v575 = vsub.f32 1.0, %v571
    %v576 = vsub.f32 1.0, %v572
    %v577 = vsub.f32 1.0, %v573
    %v578 = vmul.f32 %v494, %v574
    %v579 = vmul.f32 %v495, %v575
    %v580 = vmul.f32 %v496, %v576
    %v581 = vmul.f32 %v497, %v577
    %v582 = vadd.f32 %v578, 1.0
    %v583 = vadd.f32 %v579, 1.0
    %v584 = vadd.f32 %v580, 1.0
    %v585 = vadd.f32 %v581, 1.0
    %v586 = vmul.f32 %v482, %v582
    %v587 = vmul.f32 %v483, %v583
    %v588 = vmul.f32 %v484, %v584
    %v589 = vmul.f32 %v485, %v585
    %v591 = vlaneseq
    %v592 = vshrl.u32 %v591, 7
    %v593 = vsub.s32 0, %v592
    %v594 = vrot.slane %v307, %v593
    %v595 = vlaneseq
    %v596 = vshrl.u32 %v595, 7
    %v597 = vsub.s32 1, %v596
    %v598 = vrot.slane %v307, %v597
    %601 = vmatprep.subr.mxu0 %v180
    %602 = vmatpush1.msra.mxu0 %v179
    %603 = vmatprep.subr.mxu0 %v182
    %604 = vmatpush1.msra.mxu0 %v181
    %605 = vmatprep.subr.mxu0 %v184
    %606 = vmatpush1.msra.mxu0 %v183
    %607 = vmatprep.subr.mxu0 %v186
    %608 = vmatpush1.msra.mxu0 %v185
    %609 = vmatprep.subr.mxu0 %v188
    %610 = vmatpush1.msra.mxu0 %v187
    %611 = vmatprep.subr.mxu0 %v190
    %612 = vmatpush1.msra.mxu0 %v189
    %613 = vmatprep.subr.mxu0 %v192
    %614 = vmatpush1.msra.mxu0 %v191
    %615 = vmatprep.subr.mxu0 %v194
    %616 = vmatpush1.msra.mxu0 %v193
    %617 = vmatprep.subr.mxu0 %v196
    %618 = vmatpush1.msra.mxu0 %v195
    %619 = vmatprep.subr.mxu0 %v198
    %620 = vmatpush1.msra.mxu0 %v197
    %621 = vmatprep.subr.mxu0 %v200
    %622 = vmatpush1.msra.mxu0 %v199
    %623 = vmatprep.subr.mxu0 %v202
    %624 = vmatpush1.msra.mxu0 %v201
    %625 = vmatprep.subr.mxu0 %v204
    %626 = vmatpush1.msra.mxu0 %v203
    %627 = vmatprep.subr.mxu0 %v206
    %628 = vmatpush1.msra.mxu0 %v205
    %629 = vmatprep.subr.mxu0 %v208
    %630 = vmatpush1.msra.mxu0 %v207
    %631 = vmatprep.subr.mxu0 %v210
    %632 = vmatpush1.msra.mxu0 %v209
    %633 = vmatprep.subr.mxu0 %v212
    %634 = vmatpush1.msra.mxu0 %v211
    %635 = vmatprep.subr.mxu0 %v214
    %636 = vmatpush1.msra.mxu0 %v213
    %637 = vmatprep.subr.mxu0 %v216
    %638 = vmatpush1.msra.mxu0 %v215
    %639 = vmatprep.subr.mxu0 %v218
    %640 = vmatpush1.msra.mxu0 %v217
    %641 = vmatprep.subr.mxu0 %v220
    %642 = vmatpush1.msra.mxu0 %v219
    %643 = vmatprep.subr.mxu0 %v222
    %644 = vmatpush1.msra.mxu0 %v221
    %645 = vmatprep.subr.mxu0 %v224
    %646 = vmatpush1.msra.mxu0 %v223
    %647 = vmatprep.subr.mxu0 %v226
    %648 = vmatpush1.msra.mxu0 %v225
    %649 = vmatprep.subr.mxu0 %v228
    %650 = vmatpush1.msra.mxu0 %v227
    %651 = vmatprep.subr.mxu0 %v230
    %652 = vmatpush1.msra.mxu0 %v229
    %653 = vmatprep.subr.mxu0 %v232
    %654 = vmatpush1.msra.mxu0 %v231
    %655 = vmatprep.subr.mxu0 %v234
    %656 = vmatpush1.msra.mxu0 %v233
    %657 = vmatprep.subr.mxu0 %v236
    %658 = vmatpush1.msra.mxu0 %v235
    %659 = vmatprep.subr.mxu0 %v238
    %660 = vmatpush1.msra.mxu0 %v237
    %661 = vmatprep.subr.mxu0 %v240
    %662 = vmatpush1.msra.mxu0 %v239
    %663 = vmatprep.subr.mxu0 %v242
    %664 = vmatpush1.msra.mxu0 %v241
    %665 = vmatprep.mubr.f32.mxu0 %v587
    %666 = vmatmul.mubr.f32.gmra.mrb[0].mxu0 %v586
    %v667 = vpop.f32.mrb[0].mxu0
    %v668 = vadd.f32 %v594, %v667
    %v669 = vpop.f32.mrb[0].mxu0
    %v670 = vadd.f32 %v598, %v669
    %671 = vdwg.mxu0
    %672 = vmatprep.subr.mxu0 %v244
    %673 = vmatpush1.msra.mxu0 %v243
    %674 = vmatprep.subr.mxu0 %v246
    %675 = vmatpush1.msra.mxu0 %v245
    %676 = vmatprep.subr.mxu0 %v248
    %677 = vmatpush1.msra.mxu0 %v247
    %678 = vmatprep.subr.mxu0 %v250
    %679 = vmatpush1.msra.mxu0 %v249
    %680 = vmatprep.subr.mxu0 %v252
    %681 = vmatpush1.msra.mxu0 %v251
    %682 = vmatprep.subr.mxu0 %v254
    %683 = vmatpush1.msra.mxu0 %v253
    %684 = vmatprep.subr.mxu0 %v256
    %685 = vmatpush1.msra.mxu0 %v255
    %686 = vmatprep.subr.mxu0 %v258
    %687 = vmatpush1.msra.mxu0 %v257
    %688 = vmatprep.subr.mxu0 %v260
    %689 = vmatpush1.msra.mxu0 %v259
    %690 = vmatprep.subr.mxu0 %v262
    %691 = vmatpush1.msra.mxu0 %v261
    %692 = vmatprep.subr.mxu0 %v264
    %693 = vmatpush1.msra.mxu0 %v263
    %694 = vmatprep.subr.mxu0 %v266
    %695 = vmatpush1.msra.mxu0 %v265
    %696 = vmatprep.subr.mxu0 %v268
    %697 = vmatpush1.msra.mxu0 %v267
    %698 = vmatprep.subr.mxu0 %v270
    %699 = vmatpush1.msra.mxu0 %v269
    %700 = vmatprep.subr.mxu0 %v272
    %701 = vmatpush1.msra.mxu0 %v271
    %702 = vmatprep.subr.mxu0 %v274
    %703 = vmatpush1.msra.mxu0 %v273
    %704 = vmatprep.subr.mxu0 %v276
    %705 = vmatpush1.msra.mxu0 %v275
    %706 = vmatprep.subr.mxu0 %v278
    %707 = vmatpush1.msra.mxu0 %v277
    %708 = vmatprep.subr.mxu0 %v280
    %709 = vmatpush1.msra.mxu0 %v279
    %710 = vmatprep.subr.mxu0 %v282
    %711 = vmatpush1.msra.mxu0 %v281
    %712 = vmatprep.subr.mxu0 %v284
    %713 = vmatpush1.msra.mxu0 %v283
    %714 = vmatprep.subr.mxu0 %v286
    %715 = vmatpush1.msra.mxu0 %v285
    %716 = vmatprep.subr.mxu0 %v288
    %717 = vmatpush1.msra.mxu0 %v287
    %718 = vmatprep.subr.mxu0 %v290
    %719 = vmatpush1.msra.mxu0 %v289
    %720 = vmatprep.subr.mxu0 %v292
    %721 = vmatpush1.msra.mxu0 %v291
    %722 = vmatprep.subr.mxu0 %v294
    %723 = vmatpush1.msra.mxu0 %v293
    %724 = vmatprep.subr.mxu0 %v296
    %725 = vmatpush1.msra.mxu0 %v295
    %726 = vmatprep.subr.mxu0 %v298
    %727 = vmatpush1.msra.mxu0 %v297
    %728 = vmatprep.subr.mxu0 %v300
    %729 = vmatpush1.msra.mxu0 %v299
    %730 = vmatprep.subr.mxu0 %v302
    %731 = vmatpush1.msra.mxu0 %v301
    %732 = vmatprep.subr.mxu0 %v304
    %733 = vmatpush1.msra.mxu0 %v303
    %734 = vmatprep.subr.mxu0 %v306
    %735 = vmatpush1.msra.mxu0 %v305
    %736 = vmatprep.mubr.f32.mxu0 %v589
    %737 = vmatmul.mubr.f32.gmra.mrb[0].mxu0 %v588
    %v738 = vpop.f32.mrb[0].mxu0
    %v739 = vadd.f32 %v668, %v738
    %v740 = vpop.f32.mrb[0].mxu0
    %v741 = vadd.f32 %v670, %v740
    %742 = vdwg.mxu0
    %v745 = vcombine.low %v739, %v741
    %v747 = vunpack.c.l.s4 1983009808
    %v748 = vunpack.c.0.s8 %v747
    %v749 = vlaneseq
    %v750 = vshrl.u32 %v749, 7
    %v751 = vsub.s32 %v748, %v750
    %v752 = vrot.slane %v745, %v751
    %754 = vst [vmem:[#allocation7] sm:$0xf] %v752
    // Predicated region
    $region30: #{branch_0_fun.2} parent=1 // pred_check
      _
    $region31: #{branch_0_fun.2} parent=1 // pred_check_branch
      %756 = sbr.rel (0) target = $region33
    $region32: #{branch_0_fun.2} parent=1 // pred_region
      %s758 = ssub.s32 64, 64
      %759 = vsyncadd [#allocation4], %s758
      %s761 = sshll.u32 [#allocation7], 4
      %s762 = int_to_ptr.vmem [resolvable:$true] %s761
      %764 = dma.vmem_to_hbm [thread:$0]  %s762, 64, %s5, [#allocation4]
    $region33: #{branch_0_fun.2} parent=1 // pred_fallthru
      _
    // Predicated region
    $region34: #{branch_0_fun.2} parent=1 // pred_check
      _
    $region35: #{branch_0_fun.2} parent=1 // pred_check_branch
      %766 = sbr.rel (0) target = $region37
    $region36: #{branch_0_fun.2} parent=1 // pred_region
      %767 = dma.done [#allocation4], 64
    $region37: #{branch_0_fun.2} parent=1 // pred_fallthru
      _
    %768 = vsyncpa [#allocation3], 1
    %769 = vsyncpa [#allocation6], 1
    %770 = vsyncpa [#allocation4], 1

// kernel: branch_3_fun.2
$region0: #{branch_3_fun.2}
  #allocation0 [shape = 'u32[]', space=smem, size = 0x4, offset = 0x4, fixed_abs, tag = 'smem constant byte address 0x4 - core index']
  #allocation1 [shape = 'u32[144,128]{1,0:T(1,128)}', space=vmem, size = 0x12000, scoped, tag = 'internal scratch']
  %s0 = inlined_call_operand.vmem [shape: f32[8,64], index: 0, kind: input, shape index: {}]
  %s1 = inlined_call_operand.hbm [shape: f32[64,384], index: 1, kind: input, shape index: {}]
  %s2 = inlined_call_operand.vmem [shape: f32[1,128], index: 2, kind: input, shape index: {}]
  %s3 = inlined_call_operand.hbm [shape: f32[128,384], index: 3, kind: input, shape index: {}]
  %s4 = inlined_call_operand.vmem [shape: f32[1,128], index: 4, kind: input, shape index: {}]
  %s5 = inlined_call_operand.vmem [shape: f32[2,8,8], index: 5, kind: input, shape index: {}]
  %s6 = inlined_call_operand.vmem [shape: f32[8,128], index: 6, kind: output, shape index: {}]
  %s7 = sld [smem:[#allocation0]]
  $region42: #{branch_3_fun.2} parent=0
    _
  %s9 = ssub.s32 1, %s7
  %s10 = scalar_select 0, %s9, %s7
  $region1: #{branch_3_fun.2} parent=0
    #allocation2 [shape = 'u8[98304]{0}', space=vmem, size = 0x18000, scoped, tag = 'input window, operand 1, single buffered']
    #allocation3 [shape = 's32[1]{0}', space=sflag, size = 0x4, scoped, tag = 'scoped memory for branch_3_fun.2']
    #allocation4 [shape = 'u8[196608]{0}', space=vmem, size = 0x30000, scoped, tag = 'input window, operand 3, single buffered']
    #allocation5 [shape = 's32[1]{0}', space=sflag, size = 0x4, scoped, tag = 'scoped memory for branch_3_fun.2']
    %11 = vsyncpa [#allocation3], 0
    %12 = vsyncpa [#allocation5], 0
    // Predicated region
    $region2: #{branch_3_fun.2} parent=1 // pred_check
      _
    $region3: #{branch_3_fun.2} parent=1 // pred_check_branch
      %14 = sbr.rel (0) target = $region5
    $region4: #{branch_3_fun.2} parent=1 // pred_region
      _
    $region5: #{branch_3_fun.2} parent=1 // pred_fallthru
      _
    // Predicated region
    $region6: #{branch_3_fun.2} parent=1 // pred_check
      _
    $region7: #{branch_3_fun.2} parent=1 // pred_check_branch
      %16 = sbr.rel (0) target = $region9
    $region8: #{branch_3_fun.2} parent=1 // pred_region
      %s18 = ssub.s32 3072, 3072
      %19 = vsyncadd [#allocation3], %s18
      %s20 = sshll.u32 [#allocation2], 4
      %s21 = int_to_ptr.vmem [resolvable:$true] %s20
      %26 = dma.hbm_to_vmem [thread:$0]  %s1, 3072, %s21, [#allocation3], 384, 384, 24
    $region9: #{branch_3_fun.2} parent=1 // pred_fallthru
      _
    // Predicated region
    $region10: #{branch_3_fun.2} parent=1 // pred_check
      _
    $region11: #{branch_3_fun.2} parent=1 // pred_check_branch
      %28 = sbr.rel (0) target = $region13
    $region12: #{branch_3_fun.2} parent=1 // pred_region
      _
    $region13: #{branch_3_fun.2} parent=1 // pred_fallthru
      _
    // Predicated region
    $region14: #{branch_3_fun.2} parent=1 // pred_check
      _
    $region15: #{branch_3_fun.2} parent=1 // pred_check_branch
      %30 = sbr.rel (0) target = $region17
    $region16: #{branch_3_fun.2} parent=1 // pred_region
      %s32 = ssub.s32 6144, 6144
      %33 = vsyncadd [#allocation5], %s32
      %s34 = sshll.u32 [#allocation4], 4
      %s35 = int_to_ptr.vmem [resolvable:$true] %s34
      %40 = dma.hbm_to_vmem [thread:$0]  %s3, 6144, %s35, [#allocation5], 384, 384, 24
    $region17: #{branch_3_fun.2} parent=1 // pred_fallthru
      _
    // Predicated region
    $region18: #{branch_3_fun.2} parent=1 // pred_check
      _
    $region19: #{branch_3_fun.2} parent=1 // pred_check_branch
      %42 = sbr.rel (0) target = $region21
    $region20: #{branch_3_fun.2} parent=1 // pred_region
      _
    $region21: #{branch_3_fun.2} parent=1 // pred_fallthru
      _
    // Predicated region
    $region22: #{branch_3_fun.2} parent=1 // pred_check
      _
    $region23: #{branch_3_fun.2} parent=1 // pred_check_branch
      %44 = sbr.rel (0) target = $region25
    $region24: #{branch_3_fun.2} parent=1 // pred_region
      _
    $region25: #{branch_3_fun.2} parent=1 // pred_fallthru
      _
    // Predicated region
    $region26: #{branch_3_fun.2} parent=1 // pred_check
      _
    $region27: #{branch_3_fun.2} parent=1 // pred_check_branch
      %46 = sbr.rel (0) target = $region29
    $region28: #{branch_3_fun.2} parent=1 // pred_region
      %47 = dma.done [#allocation3], 3072
    $region29: #{branch_3_fun.2} parent=1 // pred_fallthru
      _
    // Predicated region
    $region30: #{branch_3_fun.2} parent=1 // pred_check
      _
    $region31: #{branch_3_fun.2} parent=1 // pred_check_branch
      %49 = sbr.rel (0) target = $region33
    $region32: #{branch_3_fun.2} parent=1 // pred_region
      %50 = dma.done [#allocation5], 6144
    $region33: #{branch_3_fun.2} parent=1 // pred_fallthru
      _
    %v51 = vld [vmem:[%s5] sm:$0xff]
    %s52 = scalar_lea.vmem %s5, 8
    %v53 = vld [vmem:[%s52] sm:$0xff]
    %v54 = vld [vmem:[%s0] sm:$0xff]
    %v55 = vld [vmem:[#allocation2] sm:$0xff]
    %v56 = vld [vmem:[#allocation2 + $0x8] sm:$0xff]
    %v57 = vld [vmem:[#allocation2 + $0x10] sm:$0xff]
    %v58 = vld [vmem:[#allocation2 + $0x18] sm:$0xff]
    %v59 = vld [vmem:[#allocation2 + $0x20] sm:$0xff]
    %v60 = vld [vmem:[#allocation2 + $0x28] sm:$0xff]
    %v61 = vld [vmem:[#allocation2 + $0x30] sm:$0xff]
    %v62 = vld [vmem:[#allocation2 + $0x38] sm:$0xff]
    %v63 = vld [vmem:[#allocation2 + $0x40] sm:$0xff]
    %v64 = vld [vmem:[#allocation2 + $0x48] sm:$0xff]
    %v65 = vld [vmem:[#allocation2 + $0x50] sm:$0xff]
    %v66 = vld [vmem:[#allocation2 + $0x58] sm:$0xff]
    %v67 = vld [vmem:[#allocation2 + $0x60] sm:$0xff]
    %v68 = vld [vmem:[#allocation2 + $0x68] sm:$0xff]
    %v69 = vld [vmem:[#allocation2 + $0x70] sm:$0xff]
    %v70 = vld [vmem:[#allocation2 + $0x78] sm:$0xff]
    %v71 = vld [vmem:[#allocation2 + $0x80] sm:$0xff]
    %v72 = vld [vmem:[#allocation2 + $0x88] sm:$0xff]
    %v73 = vld [vmem:[#allocation2 + $0x90] sm:$0xff]
    %v74 = vld [vmem:[#allocation2 + $0x98] sm:$0xff]
    %v75 = vld [vmem:[#allocation2 + $0xa0] sm:$0xff]
    %v76 = vld [vmem:[#allocation2 + $0xa8] sm:$0xff]
    %v77 = vld [vmem:[#allocation2 + $0xb0] sm:$0xff]
    %v78 = vld [vmem:[#allocation2 + $0xb8] sm:$0xff]
    %v79 = vld [vmem:[%s2] sm:$0x1]
    %v80 = vld [vmem:[#allocation4] sm:$0xff]
    %v81 = vld [vmem:[#allocation4 + $0x8] sm:$0xff]
    %v82 = vld [vmem:[#allocation4 + $0x10] sm:$0xff]
    %v83 = vld [vmem:[#allocation4 + $0x18] sm:$0xff]
    %v84 = vld [vmem:[#allocation4 + $0x20] sm:$0xff]
    %v85 = vld [vmem:[#allocation4 + $0x28] sm:$0xff]
    %v86 = vld [vmem:[#allocation4 + $0x30] sm:$0xff]
    %v87 = vld [vmem:[#allocation4 + $0x38] sm:$0xff]
    %v88 = vld [vmem:[#allocation4 + $0x40] sm:$0xff]
    %v89 = vld [vmem:[#allocation4 + $0x48] sm:$0xff]
    %v90 = vld [vmem:[#allocation4 + $0x50] sm:$0xff]
    %v91 = vld [vmem:[#allocation4 + $0x58] sm:$0xff]
    %v92 = vld [vmem:[#allocation4 + $0x60] sm:$0xff]
    %v93 = vld [vmem:[#allocation4 + $0x68] sm:$0xff]
    %v94 = vld [vmem:[#allocation4 + $0x70] sm:$0xff]
    %v95 = vld [vmem:[#allocation4 + $0x78] sm:$0xff]
    %v96 = vld [vmem:[#allocation4 + $0x80] sm:$0xff]
    %v97 = vld [vmem:[#allocation4 + $0x88] sm:$0xff]
    %v98 = vld [vmem:[#allocation4 + $0x90] sm:$0xff]
    %v99 = vld [vmem:[#allocation4 + $0x98] sm:$0xff]
    %v100 = vld [vmem:[#allocation4 + $0xa0] sm:$0xff]
    %v101 = vld [vmem:[#allocation4 + $0xa8] sm:$0xff]
    %v102 = vld [vmem:[#allocation4 + $0xb0] sm:$0xff]
    %v103 = vld [vmem:[#allocation4 + $0xb8] sm:$0xff]
    %v104 = vld [vmem:[#allocation4 + $0xc0] sm:$0xff]
    %v105 = vld [vmem:[#allocation4 + $0xc8] sm:$0xff]
    %v106 = vld [vmem:[#allocation4 + $0xd0] sm:$0xff]
    %v107 = vld [vmem:[#allocation4 + $0xd8] sm:$0xff]
    %v108 = vld [vmem:[#allocation4 + $0xe0] sm:$0xff]
    %v109 = vld [vmem:[#allocation4 + $0xe8] sm:$0xff]
    %v110 = vld [vmem:[#allocation4 + $0xf0] sm:$0xff]
    %v111 = vld [vmem:[#allocation4 + $0xf8] sm:$0xff]
    %v112 = vld [vmem:[#allocation4 + $0x100] sm:$0xff]
    %v113 = vld [vmem:[#allocation4 + $0x108] sm:$0xff]
    %v114 = vld [vmem:[#allocation4 + $0x110] sm:$0xff]
    %v115 = vld [vmem:[#allocation4 + $0x118] sm:$0xff]
    %v116 = vld [vmem:[#allocation4 + $0x120] sm:$0xff]
    %v117 = vld [vmem:[#allocation4 + $0x128] sm:$0xff]
    %v118 = vld [vmem:[#allocation4 + $0x130] sm:$0xff]
    %v119 = vld [vmem:[#allocation4 + $0x138] sm:$0xff]
    %v120 = vld [vmem:[#allocation4 + $0x140] sm:$0xff]
    %v121 = vld [vmem:[#allocation4 + $0x148] sm:$0xff]
    %v122 = vld [vmem:[#allocation4 + $0x150] sm:$0xff]
    %v123 = vld [vmem:[#allocation4 + $0x158] sm:$0xff]
    %v124 = vld [vmem:[#allocation4 + $0x160] sm:$0xff]
    %v125 = vld [vmem:[#allocation4 + $0x168] sm:$0xff]
    %v126 = vld [vmem:[#allocation4 + $0x170] sm:$0xff]
    %v127 = vld [vmem:[#allocation4 + $0x178] sm:$0xff]
    %v128 = vld [vmem:[%s4] sm:$0x1]
    %vm129 = vcmask 523264
    %v131 = vsel %vm129, %v54, 0
    %133 = vmatprep.subr.mxu0 %v56
    %134 = vmatpush1.msra.mxu0 %v55
    %135 = vmatprep.subr.mxu0 %v59
    %136 = vmatpush1.msra.mxu0 %v58
    %137 = vmatprep.subr.mxu0 %v62
    %138 = vmatpush1.msra.mxu0 %v61
    %139 = vmatprep.subr.mxu0 %v65
    %140 = vmatpush1.msra.mxu0 %v64
    %141 = vmatprep.subr.mxu0 %v68
    %142 = vmatpush1.msra.mxu0 %v67
    %143 = vmatprep.subr.mxu0 %v71
    %144 = vmatpush1.msra.mxu0 %v70
    %145 = vmatprep.subr.mxu0 %v74
    %146 = vmatpush1.msra.mxu0 %v73
    %147 = vmatprep.subr.mxu0 %v77
    %148 = vmatpush1.msra.mxu0 %v76
    %149 = vmatprep.subr.mxu0 0.0
    %150 = vmatpush1.msra.mxu0 0.0
    %151 = vmatprep.subr.mxu0 0.0
    %152 = vmatpush1.msra.mxu0 0.0
    %153 = vmatprep.subr.mxu0 0.0
    %154 = vmatpush1.msra.mxu0 0.0
    %155 = vmatprep.subr.mxu0 0.0
    %156 = vmatpush1.msra.mxu0 0.0
    %157 = vmatprep.subr.mxu0 0.0
    %158 = vmatpush1.msra.mxu0 0.0
    %159 = vmatprep.subr.mxu0 0.0
    %160 = vmatpush1.msra.mxu0 0.0
    %161 = vmatprep.subr.mxu0 0.0
    %162 = vmatpush1.msra.mxu0 0.0
    %163 = vmatprep.subr.mxu0 0.0
    %164 = vmatpush1.msra.mxu0 0.0
    %165 = vmatprep.subr.mxu0 0.0
    %166 = vmatpush1.msra.mxu0 0.0
    %167 = vmatprep.subr.mxu0 0.0
    %168 = vmatpush1.msra.mxu0 0.0
    %169 = vmatprep.subr.mxu0 0.0
    %170 = vmatpush1.msra.mxu0 0.0
    %171 = vmatprep.subr.mxu0 0.0
    %172 = vmatpush1.msra.mxu0 0.0
    %173 = vmatprep.subr.mxu0 0.0
    %174 = vmatpush1.msra.mxu0 0.0
    %175 = vmatprep.subr.mxu0 0.0
    %176 = vmatpush1.msra.mxu0 0.0
    %177 = vmatprep.subr.mxu0 0.0
    %178 = vmatpush1.msra.mxu0 0.0
    %179 = vmatprep.subr.mxu0 0.0
    %180 = vmatpush1.msra.mxu0 0.0
    %181 = vmatprep.subr.mxu0 0.0
    %182 = vmatpush1.msra.mxu0 0.0
    %183 = vmatprep.subr.mxu0 0.0
    %184 = vmatpush1.msra.mxu0 0.0
    %185 = vmatprep.subr.mxu0 0.0
    %186 = vmatpush1.msra.mxu0 0.0
    %187 = vmatprep.subr.mxu0 0.0
    %188 = vmatpush1.msra.mxu0 0.0
    %189 = vmatprep.subr.mxu0 0.0
    %190 = vmatpush1.msra.mxu0 0.0
    %191 = vmatprep.subr.mxu0 0.0
    %192 = vmatpush1.msra.mxu0 0.0
    %193 = vmatprep.subr.mxu0 0.0
    %194 = vmatpush1.msra.mxu0 0.0
    %195 = vmatprep.subr.mxu0 0.0
    %196 = vmatpush1.msra.mxu0 0.0
    %197 = vmatprep.mubr.f32.mxu0 0.0
    %198 = vmatmul.mubr.f32.gmra.mrb[0].mxu0 %v131
    %v199 = vpop.f32.mrb[0].mxu0
    %v200 = vadd.f32 0.0, %v199
    %v201 = vpop.f32.mrb[0].mxu0
    %v202 = vadd.f32 0.0, %v201
    %203 = vdwg.mxu0
    %204 = vmatprep.subr.mxu0 0.0
    %205 = vmatpush1.msra.mxu0 %v57
    %206 = vmatprep.subr.mxu0 0.0
    %207 = vmatpush1.msra.mxu0 %v60
    %208 = vmatprep.subr.mxu0 0.0
    %209 = vmatpush1.msra.mxu0 %v63
    %210 = vmatprep.subr.mxu0 0.0
    %211 = vmatpush1.msra.mxu0 %v66
    %212 = vmatprep.subr.mxu0 0.0
    %213 = vmatpush1.msra.mxu0 %v69
    %214 = vmatprep.subr.mxu0 0.0
    %215 = vmatpush1.msra.mxu0 %v72
    %216 = vmatprep.subr.mxu0 0.0
    %217 = vmatpush1.msra.mxu0 %v75
    %218 = vmatprep.subr.mxu0 0.0
    %219 = vmatpush1.msra.mxu0 %v78
    %220 = vmatprep.subr.mxu0 0.0
    %221 = vmatpush1.msra.mxu0 0.0
    %222 = vmatprep.subr.mxu0 0.0
    %223 = vmatpush1.msra.mxu0 0.0
    %224 = vmatprep.subr.mxu0 0.0
    %225 = vmatpush1.msra.mxu0 0.0
    %226 = vmatprep.subr.mxu0 0.0
    %227 = vmatpush1.msra.mxu0 0.0
    %228 = vmatprep.subr.mxu0 0.0
    %229 = vmatpush1.msra.mxu0 0.0
    %230 = vmatprep.subr.mxu0 0.0
    %231 = vmatpush1.msra.mxu0 0.0
    %232 = vmatprep.subr.mxu0 0.0
    %233 = vmatpush1.msra.mxu0 0.0
    %234 = vmatprep.subr.mxu0 0.0
    %235 = vmatpush1.msra.mxu0 0.0
    %236 = vmatprep.subr.mxu0 0.0
    %237 = vmatpush1.msra.mxu0 0.0
    %238 = vmatprep.subr.mxu0 0.0
    %239 = vmatpush1.msra.mxu0 0.0
    %240 = vmatprep.subr.mxu0 0.0
    %241 = vmatpush1.msra.mxu0 0.0
    %242 = vmatprep.subr.mxu0 0.0
    %243 = vmatpush1.msra.mxu0 0.0
    %244 = vmatprep.subr.mxu0 0.0
    %245 = vmatpush1.msra.mxu0 0.0
    %246 = vmatprep.subr.mxu0 0.0
    %247 = vmatpush1.msra.mxu0 0.0
    %248 = vmatprep.subr.mxu0 0.0
    %249 = vmatpush1.msra.mxu0 0.0
    %250 = vmatprep.subr.mxu0 0.0
    %251 = vmatpush1.msra.mxu0 0.0
    %252 = vmatprep.subr.mxu0 0.0
    %253 = vmatpush1.msra.mxu0 0.0
    %254 = vmatprep.subr.mxu0 0.0
    %255 = vmatpush1.msra.mxu0 0.0
    %256 = vmatprep.subr.mxu0 0.0
    %257 = vmatpush1.msra.mxu0 0.0
    %258 = vmatprep.subr.mxu0 0.0
    %259 = vmatpush1.msra.mxu0 0.0
    %260 = vmatprep.subr.mxu0 0.0
    %261 = vmatpush1.msra.mxu0 0.0
    %262 = vmatprep.subr.mxu0 0.0
    %263 = vmatpush1.msra.mxu0 0.0
    %264 = vmatprep.subr.mxu0 0.0
    %265 = vmatpush1.msra.mxu0 0.0
    %266 = vmatprep.subr.mxu0 0.0
    %267 = vmatpush1.msra.mxu0 0.0
    %268 = vmatprep.mubr.f32.mxu0 0.0
    %269 = vmatmul.mubr.f32.gmra.mrb[0].mxu0 %v131
    %v270 = vpop.f32.mrb[0].mxu0
    %v271 = vadd.f32 0.0, %v270
    %v272 = vpop.f32.mrb[0].mxu0
    %273 = vdwg.mxu0
    %vm274 = vcmask 64512
    %v276 = vsel %vm274, %v51, 0
    %278 = vmatprep.subr.mxu0 0.0
    %279 = vmatpush1.msra.mxu0 %v200
    %280 = vmatprep.subr.mxu0 0.0
    %281 = vmatpush1.msra.mxu0 0.0
    %282 = vmatprep.subr.mxu0 0.0
    %283 = vmatpush1.msra.mxu0 0.0
    %284 = vmatprep.subr.mxu0 0.0
    %285 = vmatpush1.msra.mxu0 0.0
    %286 = vmatprep.subr.mxu0 0.0
    %287 = vmatpush1.msra.mxu0 0.0
    %288 = vmatprep.subr.mxu0 0.0
    %289 = vmatpush1.msra.mxu0 0.0
    %290 = vmatprep.subr.mxu0 0.0
    %291 = vmatpush1.msra.mxu0 0.0
    %292 = vmatprep.subr.mxu0 0.0
    %293 = vmatpush1.msra.mxu0 0.0
    %294 = vmatprep.subr.mxu0 0.0
    %295 = vmatpush1.msra.mxu0 0.0
    %296 = vmatprep.subr.mxu0 0.0
    %297 = vmatpush1.msra.mxu0 0.0
    %298 = vmatprep.subr.mxu0 0.0
    %299 = vmatpush1.msra.mxu0 0.0
    %300 = vmatprep.subr.mxu0 0.0
    %301 = vmatpush1.msra.mxu0 0.0
    %302 = vmatprep.subr.mxu0 0.0
    %303 = vmatpush1.msra.mxu0 0.0
    %304 = vmatprep.subr.mxu0 0.0
    %305 = vmatpush1.msra.mxu0 0.0
    %306 = vmatprep.subr.mxu0 0.0
    %307 = vmatpush1.msra.mxu0 0.0
    %308 = vmatprep.subr.mxu0 0.0
    %309 = vmatpush1.msra.mxu0 0.0
    %310 = vmatprep.subr.mxu0 0.0
    %311 = vmatpush1.msra.mxu0 0.0
    %312 = vmatprep.subr.mxu0 0.0
    %313 = vmatpush1.msra.mxu0 0.0
    %314 = vmatprep.subr.mxu0 0.0
    %315 = vmatpush1.msra.mxu0 0.0
    %316 = vmatprep.subr.mxu0 0.0
    %317 = vmatpush1.msra.mxu0 0.0
    %318 = vmatprep.subr.mxu0 0.0
    %319 = vmatpush1.msra.mxu0 0.0
    %320 = vmatprep.subr.mxu0 0.0
    %321 = vmatpush1.msra.mxu0 0.0
    %322 = vmatprep.subr.mxu0 0.0
    %323 = vmatpush1.msra.mxu0 0.0
    %324 = vmatprep.subr.mxu0 0.0
    %325 = vmatpush1.msra.mxu0 0.0
    %326 = vmatprep.subr.mxu0 0.0
    %327 = vmatpush1.msra.mxu0 0.0
    %328 = vmatprep.subr.mxu0 0.0
    %329 = vmatpush1.msra.mxu0 0.0
    %330 = vmatprep.subr.mxu0 0.0
    %331 = vmatpush1.msra.mxu0 0.0
    %332 = vmatprep.subr.mxu0 0.0
    %333 = vmatpush1.msra.mxu0 0.0
    %334 = vmatprep.subr.mxu0 0.0
    %335 = vmatpush1.msra.mxu0 0.0
    %336 = vmatprep.subr.mxu0 0.0
    %337 = vmatpush1.msra.mxu0 0.0
    %338 = vmatprep.subr.mxu0 0.0
    %339 = vmatpush1.msra.mxu0 0.0
    %340 = vmatprep.subr.mxu0 0.0
    %341 = vmatpush1.msra.mxu0 0.0
    %342 = vmatprep.mubr.f32.mxu0 0.0
    %343 = vmatmul.mubr.f32.gmra.mrb[0].mxu0 %v276
    %v344 = vpop.f32.mrb[0].mxu0
    %v345 = vadd.f32 %v202, %v344
    %v346 = vpop.f32.mrb[0].mxu0
    %347 = vdwg.mxu0
    %v349 = vsel %vm274, %v53, 0
    %351 = vmatprep.subr.mxu0 0.0
    %352 = vmatpush1.msra.mxu0 %v271
    %353 = vmatprep.subr.mxu0 0.0
    %354 = vmatpush1.msra.mxu0 0.0
    %355 = vmatprep.subr.mxu0 0.0
    %356 = vmatpush1.msra.mxu0 0.0
    %357 = vmatprep.subr.mxu0 0.0
    %358 = vmatpush1.msra.mxu0 0.0
    %359 = vmatprep.subr.mxu0 0.0
    %360 = vmatpush1.msra.mxu0 0.0
    %361 = vmatprep.subr.mxu0 0.0
    %362 = vmatpush1.msra.mxu0 0.0
    %363 = vmatprep.subr.mxu0 0.0
    %364 = vmatpush1.msra.mxu0 0.0
    %365 = vmatprep.subr.mxu0 0.0
    %366 = vmatpush1.msra.mxu0 0.0
    %367 = vmatprep.subr.mxu0 0.0
    %368 = vmatpush1.msra.mxu0 0.0
    %369 = vmatprep.subr.mxu0 0.0
    %370 = vmatpush1.msra.mxu0 0.0
    %371 = vmatprep.subr.mxu0 0.0
    %372 = vmatpush1.msra.mxu0 0.0
    %373 = vmatprep.subr.mxu0 0.0
    %374 = vmatpush1.msra.mxu0 0.0
    %375 = vmatprep.subr.mxu0 0.0
    %376 = vmatpush1.msra.mxu0 0.0
    %377 = vmatprep.subr.mxu0 0.0
    %378 = vmatpush1.msra.mxu0 0.0
    %379 = vmatprep.subr.mxu0 0.0
    %380 = vmatpush1.msra.mxu0 0.0
    %381 = vmatprep.subr.mxu0 0.0
    %382 = vmatpush1.msra.mxu0 0.0
    %383 = vmatprep.subr.mxu0 0.0
    %384 = vmatpush1.msra.mxu0 0.0
    %385 = vmatprep.subr.mxu0 0.0
    %386 = vmatpush1.msra.mxu0 0.0
    %387 = vmatprep.subr.mxu0 0.0
    %388 = vmatpush1.msra.mxu0 0.0
    %389 = vmatprep.subr.mxu0 0.0
    %390 = vmatpush1.msra.mxu0 0.0
    %391 = vmatprep.subr.mxu0 0.0
    %392 = vmatpush1.msra.mxu0 0.0
    %393 = vmatprep.subr.mxu0 0.0
    %394 = vmatpush1.msra.mxu0 0.0
    %395 = vmatprep.subr.mxu0 0.0
    %396 = vmatpush1.msra.mxu0 0.0
    %397 = vmatprep.subr.mxu0 0.0
    %398 = vmatpush1.msra.mxu0 0.0
    %399 = vmatprep.subr.mxu0 0.0
    %400 = vmatpush1.msra.mxu0 0.0
    %401 = vmatprep.subr.mxu0 0.0
    %402 = vmatpush1.msra.mxu0 0.0
    %403 = vmatprep.subr.mxu0 0.0
    %404 = vmatpush1.msra.mxu0 0.0
    %405 = vmatprep.subr.mxu0 0.0
    %406 = vmatpush1.msra.mxu0 0.0
    %407 = vmatprep.subr.mxu0 0.0
    %408 = vmatpush1.msra.mxu0 0.0
    %409 = vmatprep.subr.mxu0 0.0
    %410 = vmatpush1.msra.mxu0 0.0
    %411 = vmatprep.subr.mxu0 0.0
    %412 = vmatpush1.msra.mxu0 0.0
    %413 = vmatprep.subr.mxu0 0.0
    %414 = vmatpush1.msra.mxu0 0.0
    %415 = vmatprep.mubr.f32.mxu0 0.0
    %416 = vmatmul.mubr.f32.gmra.mrb[0].mxu0 %v349
    %v417 = vpop.f32.mrb[0].mxu0
    %v418 = vadd.f32 0.0, %v417
    %v419 = vpop.f32.mrb[0].mxu0
    %420 = vdwg.mxu0
    %v421 = vadd.f32 %v345, %v418
    %v423 = vlaneseq
    %v424 = vshrl.u32 %v423, 7
    %v425 = vsub.s32 0, %v424
    %v426 = vrot.slane %v79, %v425
    %v428 = vadd.f32 %v421, %v426
    %v429 = vmul.f32 %v428, 0.5
    %v430 = vmul.f32 %v428, 0.70710677
    %vm431 = vcmp.ge.f32.partialorder %v430, 0.0
    %v432 = vsel %vm431, 1.0, -1.0
    %v433 = vand.u32 2147483647, %v430
    %v434 = vmul.f32 %v433, 0.3275911
    %v435 = vadd.f32 %v434, 1.0
    %v436 = vrcp.pop %v435
    %v437 = vmul.f32 1.0, %v436
    %v438 = vmul.f32 %v437, 1.0614054
    %v439 = vadd.f32 %v438, -1.4531521
    %v440 = vmul.f32 %v439, %v437
    %v441 = vadd.f32 %v440, 1.4214138
    %v442 = vmul.f32 %v441, %v437
    %v443 = vadd.f32 %v442, -0.28449672
    %v444 = vmul.f32 %v443, %v437
    %v445 = vadd.f32 %v444, 0.2548296
    %v446 = vmul.f32 %v445, %v437
    %v447 = vmul.f32 %v433, %v433
    %v448 = vsub.f32 0.0, %v447
    %v449 = vmul.f32 %v448, 1.442695
    %v450 = vpow.pop %v449
    %v451 = vmul.f32 %v446, %v450
    %v452 = vsub.f32 1.0, %v451
    %v453 = vmul.f32 %v432, %v452
    %v454 = vadd.f32 %v453, 1.0
    %v455 = vmul.f32 %v429, %v454
    %456 = vmatprep.subr.mxu0 %v81
    %457 = vmatpush1.msra.mxu0 %v80
    %458 = vmatprep.subr.mxu0 %v84
    %459 = vmatpush1.msra.mxu0 %v83
    %460 = vmatprep.subr.mxu0 %v87
    %461 = vmatpush1.msra.mxu0 %v86
    %462 = vmatprep.subr.mxu0 %v90
    %463 = vmatpush1.msra.mxu0 %v89
    %464 = vmatprep.subr.mxu0 %v93
    %465 = vmatpush1.msra.mxu0 %v92
    %466 = vmatprep.subr.mxu0 %v96
    %467 = vmatpush1.msra.mxu0 %v95
    %468 = vmatprep.subr.mxu0 %v99
    %469 = vmatpush1.msra.mxu0 %v98
    %470 = vmatprep.subr.mxu0 %v102
    %471 = vmatpush1.msra.mxu0 %v101
    %472 = vmatprep.subr.mxu0 %v105
    %473 = vmatpush1.msra.mxu0 %v104
    %474 = vmatprep.subr.mxu0 %v108
    %475 = vmatpush1.msra.mxu0 %v107
    %476 = vmatprep.subr.mxu0 %v111
    %477 = vmatpush1.msra.mxu0 %v110
    %478 = vmatprep.subr.mxu0 %v114
    %479 = vmatpush1.msra.mxu0 %v113
    %480 = vmatprep.subr.mxu0 %v117
    %481 = vmatpush1.msra.mxu0 %v116
    %482 = vmatprep.subr.mxu0 %v120
    %483 = vmatpush1.msra.mxu0 %v119
    %484 = vmatprep.subr.mxu0 %v123
    %485 = vmatpush1.msra.mxu0 %v122
    %486 = vmatprep.subr.mxu0 %v126
    %487 = vmatpush1.msra.mxu0 %v125
    %488 = vmatprep.subr.mxu0 0.0
    %489 = vmatpush1.msra.mxu0 0.0
    %490 = vmatprep.subr.mxu0 0.0
    %491 = vmatpush1.msra.mxu0 0.0
    %492 = vmatprep.subr.mxu0 0.0
    %493 = vmatpush1.msra.mxu0 0.0
    %494 = vmatprep.subr.mxu0 0.0
    %495 = vmatpush1.msra.mxu0 0.0
    %496 = vmatprep.subr.mxu0 0.0
    %497 = vmatpush1.msra.mxu0 0.0
    %498 = vmatprep.subr.mxu0 0.0
    %499 = vmatpush1.msra.mxu0 0.0
    %500 = vmatprep.subr.mxu0 0.0
    %501 = vmatpush1.msra.mxu0 0.0
    %502 = vmatprep.subr.mxu0 0.0
    %503 = vmatpush1.msra.mxu0 0.0
    %504 = vmatprep.subr.mxu0 0.0
    %505 = vmatpush1.msra.mxu0 0.0
    %506 = vmatprep.subr.mxu0 0.0
    %507 = vmatpush1.msra.mxu0 0.0
    %508 = vmatprep.subr.mxu0 0.0
    %509 = vmatpush1.msra.mxu0 0.0
    %510 = vmatprep.subr.mxu0 0.0
    %511 = vmatpush1.msra.mxu0 0.0
    %512 = vmatprep.subr.mxu0 0.0
    %513 = vmatpush1.msra.mxu0 0.0
    %514 = vmatprep.subr.mxu0 0.0
    %515 = vmatpush1.msra.mxu0 0.0
    %516 = vmatprep.subr.mxu0 0.0
    %517 = vmatpush1.msra.mxu0 0.0
    %518 = vmatprep.subr.mxu0 0.0
    %519 = vmatpush1.msra.mxu0 0.0
    %520 = vmatprep.mubr.f32.mxu0 0.0
    %521 = vmatmul.mubr.f32.gmra.mrb[0].mxu0 %v455
    %v522 = vpop.f32.mrb[0].mxu0
    %v523 = vadd.f32 0.0, %v522
    %v524 = vpop.f32.mrb[0].mxu0
    %v525 = vadd.f32 0.0, %v524
    %526 = vdwg.mxu0
    %527 = vmatprep.subr.mxu0 0.0
    %528 = vmatpush1.msra.mxu0 %v82
    %529 = vmatprep.subr.mxu0 0.0
    %530 = vmatpush1.msra.mxu0 %v85
    %531 = vmatprep.subr.mxu0 0.0
    %532 = vmatpush1.msra.mxu0 %v88
    %533 = vmatprep.subr.mxu0 0.0
    %534 = vmatpush1.msra.mxu0 %v91
    %535 = vmatprep.subr.mxu0 0.0
    %536 = vmatpush1.msra.mxu0 %v94
    %537 = vmatprep.subr.mxu0 0.0
    %538 = vmatpush1.msra.mxu0 %v97
    %539 = vmatprep.subr.mxu0 0.0
    %540 = vmatpush1.msra.mxu0 %v100
    %541 = vmatprep.subr.mxu0 0.0
    %542 = vmatpush1.msra.mxu0 %v103
    %543 = vmatprep.subr.mxu0 0.0
    %544 = vmatpush1.msra.mxu0 %v106
    %545 = vmatprep.subr.mxu0 0.0
    %546 = vmatpush1.msra.mxu0 %v109
    %547 = vmatprep.subr.mxu0 0.0
    %548 = vmatpush1.msra.mxu0 %v112
    %549 = vmatprep.subr.mxu0 0.0
    %550 = vmatpush1.msra.mxu0 %v115
    %551 = vmatprep.subr.mxu0 0.0
    %552 = vmatpush1.msra.mxu0 %v118
    %553 = vmatprep.subr.mxu0 0.0
    %554 = vmatpush1.msra.mxu0 %v121
    %555 = vmatprep.subr.mxu0 0.0
    %556 = vmatpush1.msra.mxu0 %v124
    %557 = vmatprep.subr.mxu0 0.0
    %558 = vmatpush1.msra.mxu0 %v127
    %559 = vmatprep.subr.mxu0 0.0
    %560 = vmatpush1.msra.mxu0 0.0
    %561 = vmatprep.subr.mxu0 0.0
    %562 = vmatpush1.msra.mxu0 0.0
    %563 = vmatprep.subr.mxu0 0.0
    %564 = vmatpush1.msra.mxu0 0.0
    %565 = vmatprep.subr.mxu0 0.0
    %566 = vmatpush1.msra.mxu0 0.0
    %567 = vmatprep.subr.mxu0 0.0
    %568 = vmatpush1.msra.mxu0 0.0
    %569 = vmatprep.subr.mxu0 0.0
    %570 = vmatpush1.msra.mxu0 0.0
    %571 = vmatprep.subr.mxu0 0.0
    %572 = vmatpush1.msra.mxu0 0.0
    %573 = vmatprep.subr.mxu0 0.0
    %574 = vmatpush1.msra.mxu0 0.0
    %575 = vmatprep.subr.mxu0 0.0
    %576 = vmatpush1.msra.mxu0 0.0
    %577 = vmatprep.subr.mxu0 0.0
    %578 = vmatpush1.msra.mxu0 0.0
    %579 = vmatprep.subr.mxu0 0.0
    %580 = vmatpush1.msra.mxu0 0.0
    %581 = vmatprep.subr.mxu0 0.0
    %582 = vmatpush1.msra.mxu0 0.0
    %583 = vmatprep.subr.mxu0 0.0
    %584 = vmatpush1.msra.mxu0 0.0
    %585 = vmatprep.subr.mxu0 0.0
    %586 = vmatpush1.msra.mxu0 0.0
    %587 = vmatprep.subr.mxu0 0.0
    %588 = vmatpush1.msra.mxu0 0.0
    %589 = vmatprep.subr.mxu0 0.0
    %590 = vmatpush1.msra.mxu0 0.0
    %591 = vmatprep.mubr.f32.mxu0 0.0
    %592 = vmatmul.mubr.f32.gmra.mrb[0].mxu0 %v455
    %v593 = vpop.f32.mrb[0].mxu0
    %v594 = vadd.f32 0.0, %v593
    %v595 = vpop.f32.mrb[0].mxu0
    %596 = vdwg.mxu0
    %597 = vmatprep.subr.mxu0 0.0
    %598 = vmatpush1.msra.mxu0 %v523
    %599 = vmatprep.subr.mxu0 0.0
    %600 = vmatpush1.msra.mxu0 0.0
    %601 = vmatprep.subr.mxu0 0.0
    %602 = vmatpush1.msra.mxu0 0.0
    %603 = vmatprep.subr.mxu0 0.0
    %604 = vmatpush1.msra.mxu0 0.0
    %605 = vmatprep.subr.mxu0 0.0
    %606 = vmatpush1.msra.mxu0 0.0
    %607 = vmatprep.subr.mxu0 0.0
    %608 = vmatpush1.msra.mxu0 0.0
    %609 = vmatprep.subr.mxu0 0.0
    %610 = vmatpush1.msra.mxu0 0.0
    %611 = vmatprep.subr.mxu0 0.0
    %612 = vmatpush1.msra.mxu0 0.0
    %613 = vmatprep.subr.mxu0 0.0
    %614 = vmatpush1.msra.mxu0 0.0
    %615 = vmatprep.subr.mxu0 0.0
    %616 = vmatpush1.msra.mxu0 0.0
    %617 = vmatprep.subr.mxu0 0.0
    %618 = vmatpush1.msra.mxu0 0.0
    %619 = vmatprep.subr.mxu0 0.0
    %620 = vmatpush1.msra.mxu0 0.0
    %621 = vmatprep.subr.mxu0 0.0
    %622 = vmatpush1.msra.mxu0 0.0
    %623 = vmatprep.subr.mxu0 0.0
    %624 = vmatpush1.msra.mxu0 0.0
    %625 = vmatprep.subr.mxu0 0.0
    %626 = vmatpush1.msra.mxu0 0.0
    %627 = vmatprep.subr.mxu0 0.0
    %628 = vmatpush1.msra.mxu0 0.0
    %629 = vmatprep.subr.mxu0 0.0
    %630 = vmatpush1.msra.mxu0 0.0
    %631 = vmatprep.subr.mxu0 0.0
    %632 = vmatpush1.msra.mxu0 0.0
    %633 = vmatprep.subr.mxu0 0.0
    %634 = vmatpush1.msra.mxu0 0.0
    %635 = vmatprep.subr.mxu0 0.0
    %636 = vmatpush1.msra.mxu0 0.0
    %637 = vmatprep.subr.mxu0 0.0
    %638 = vmatpush1.msra.mxu0 0.0
    %639 = vmatprep.subr.mxu0 0.0
    %640 = vmatpush1.msra.mxu0 0.0
    %641 = vmatprep.subr.mxu0 0.0
    %642 = vmatpush1.msra.mxu0 0.0
    %643 = vmatprep.subr.mxu0 0.0
    %644 = vmatpush1.msra.mxu0 0.0
    %645 = vmatprep.subr.mxu0 0.0
    %646 = vmatpush1.msra.mxu0 0.0
    %647 = vmatprep.subr.mxu0 0.0
    %648 = vmatpush1.msra.mxu0 0.0
    %649 = vmatprep.subr.mxu0 0.0
    %650 = vmatpush1.msra.mxu0 0.0
    %651 = vmatprep.subr.mxu0 0.0
    %652 = vmatpush1.msra.mxu0 0.0
    %653 = vmatprep.subr.mxu0 0.0
    %654 = vmatpush1.msra.mxu0 0.0
    %655 = vmatprep.subr.mxu0 0.0
    %656 = vmatpush1.msra.mxu0 0.0
    %657 = vmatprep.subr.mxu0 0.0
    %658 = vmatpush1.msra.mxu0 0.0
    %659 = vmatprep.subr.mxu0 0.0
    %660 = vmatpush1.msra.mxu0 0.0
    %661 = vmatprep.mubr.f32.mxu0 0.0
    %662 = vmatmul.mubr.f32.gmra.mrb[0].mxu0 %v276
    %v663 = vpop.f32.mrb[0].mxu0
    %v664 = vadd.f32 %v525, %v663
    %v665 = vpop.f32.mrb[0].mxu0
    %666 = vdwg.mxu0
    %667 = vmatprep.subr.mxu0 0.0
    %668 = vmatpush1.msra.mxu0 %v594
    %669 = vmatprep.subr.mxu0 0.0
    %670 = vmatpush1.msra.mxu0 0.0
    %671 = vmatprep.subr.mxu0 0.0
    %672 = vmatpush1.msra.mxu0 0.0
    %673 = vmatprep.subr.mxu0 0.0
    %674 = vmatpush1.msra.mxu0 0.0
    %675 = vmatprep.subr.mxu0 0.0
    %676 = vmatpush1.msra.mxu0 0.0
    %677 = vmatprep.subr.mxu0 0.0
    %678 = vmatpush1.msra.mxu0 0.0
    %679 = vmatprep.subr.mxu0 0.0
    %680 = vmatpush1.msra.mxu0 0.0
    %681 = vmatprep.subr.mxu0 0.0
    %682 = vmatpush1.msra.mxu0 0.0
    %683 = vmatprep.subr.mxu0 0.0
    %684 = vmatpush1.msra.mxu0 0.0
    %685 = vmatprep.subr.mxu0 0.0
    %686 = vmatpush1.msra.mxu0 0.0
    %687 = vmatprep.subr.mxu0 0.0
    %688 = vmatpush1.msra.mxu0 0.0
    %689 = vmatprep.subr.mxu0 0.0
    %690 = vmatpush1.msra.mxu0 0.0
    %691 = vmatprep.subr.mxu0 0.0
    %692 = vmatpush1.msra.mxu0 0.0
    %693 = vmatprep.subr.mxu0 0.0
    %694 = vmatpush1.msra.mxu0 0.0
    %695 = vmatprep.subr.mxu0 0.0
    %696 = vmatpush1.msra.mxu0 0.0
    %697 = vmatprep.subr.mxu0 0.0
    %698 = vmatpush1.msra.mxu0 0.0
    %699 = vmatprep.subr.mxu0 0.0
    %700 = vmatpush1.msra.mxu0 0.0
    %701 = vmatprep.subr.mxu0 0.0
    %702 = vmatpush1.msra.mxu0 0.0
    %703 = vmatprep.subr.mxu0 0.0
    %704 = vmatpush1.msra.mxu0 0.0
    %705 = vmatprep.subr.mxu0 0.0
    %706 = vmatpush1.msra.mxu0 0.0
    %707 = vmatprep.subr.mxu0 0.0
    %708 = vmatpush1.msra.mxu0 0.0
    %709 = vmatprep.subr.mxu0 0.0
    %710 = vmatpush1.msra.mxu0 0.0
    %711 = vmatprep.subr.mxu0 0.0
    %712 = vmatpush1.msra.mxu0 0.0
    %713 = vmatprep.subr.mxu0 0.0
    %714 = vmatpush1.msra.mxu0 0.0
    %715 = vmatprep.subr.mxu0 0.0
    %716 = vmatpush1.msra.mxu0 0.0
    %717 = vmatprep.subr.mxu0 0.0
    %718 = vmatpush1.msra.mxu0 0.0
    %719 = vmatprep.subr.mxu0 0.0
    %720 = vmatpush1.msra.mxu0 0.0
    %721 = vmatprep.subr.mxu0 0.0
    %722 = vmatpush1.msra.mxu0 0.0
    %723 = vmatprep.subr.mxu0 0.0
    %724 = vmatpush1.msra.mxu0 0.0
    %725 = vmatprep.subr.mxu0 0.0
    %726 = vmatpush1.msra.mxu0 0.0
    %727 = vmatprep.subr.mxu0 0.0
    %728 = vmatpush1.msra.mxu0 0.0
    %729 = vmatprep.subr.mxu0 0.0
    %730 = vmatpush1.msra.mxu0 0.0
    %731 = vmatprep.mubr.f32.mxu0 0.0
    %732 = vmatmul.mubr.f32.gmra.mrb[0].mxu0 %v349
    %v733 = vpop.f32.mrb[0].mxu0
    %v734 = vadd.f32 0.0, %v733
    %v735 = vpop.f32.mrb[0].mxu0
    %736 = vdwg.mxu0
    %v737 = vadd.f32 %v664, %v734
    %v739 = vlaneseq
    %v740 = vshrl.u32 %v739, 7
    %v741 = vsub.s32 0, %v740
    %v742 = vrot.slane %v128, %v741
    %v744 = vadd.f32 %v737, %v742
    %745 = vst [vmem:[%s6] sm:$0xff] %v744
    // Predicated region
    $region34: #{branch_3_fun.2} parent=1 // pred_check
      _
    $region35: #{branch_3_fun.2} parent=1 // pred_check_branch
      %747 = sbr.rel (0) target = $region37
    $region36: #{branch_3_fun.2} parent=1 // pred_region
      _
    $region37: #{branch_3_fun.2} parent=1 // pred_fallthru
      _
    // Predicated region
    $region38: #{branch_3_fun.2} parent=1 // pred_check
      _
    $region39: #{branch_3_fun.2} parent=1 // pred_check_branch
      %749 = sbr.rel (0) target = $region41
    $region40: #{branch_3_fun.2} parent=1 // pred_region
      _
    $region41: #{branch_3_fun.2} parent=1 // pred_fallthru
      _
    %750 = vsyncpa [#allocation3], 1
    %751 = vsyncpa [#allocation5], 1

// kernel: branch_1_fun.2
$region0: #{branch_1_fun.2}
  #allocation0 [shape = 'u32[]', space=smem, size = 0x4, offset = 0x4, fixed_abs, tag = 'smem constant byte address 0x4 - core index']
  #allocation1 [shape = 'u32[144,128]{1,0:T(1,128)}', space=vmem, size = 0x12000, scoped, tag = 'internal scratch']
  %s0 = inlined_call_operand.vmem [shape: f32[4,128], index: 0, kind: input, shape index: {}]
  %s1 = inlined_call_operand.hbm [shape: f32[128,768], index: 1, kind: input, shape index: {}]
  %s2 = inlined_call_operand.vmem [shape: f32[1,256], index: 2, kind: input, shape index: {}]
  %s3 = inlined_call_operand.hbm [shape: f32[256,384], index: 3, kind: input, shape index: {}]
  %s4 = inlined_call_operand.vmem [shape: f32[1,128], index: 4, kind: input, shape index: {}]
  %s5 = inlined_call_operand.vmem [shape: f32[2,4,4], index: 5, kind: input, shape index: {}]
  %s6 = inlined_call_operand.vmem [shape: f32[4,128], index: 6, kind: output, shape index: {}]
  %s7 = sld [smem:[#allocation0]]
  $region42: #{branch_1_fun.2} parent=0
    _
  %s9 = ssub.s32 1, %s7
  %s10 = scalar_select 0, %s9, %s7
  $region1: #{branch_1_fun.2} parent=0
    #allocation2 [shape = 'u8[393216]{0}', space=vmem, size = 0x60000, scoped, tag = 'input window, operand 1, single buffered']
    #allocation3 [shape = 's32[1]{0}', space=sflag, size = 0x4, scoped, tag = 'scoped memory for branch_1_fun.2']
    #allocation4 [shape = 'u8[393216]{0}', space=vmem, size = 0x60000, scoped, tag = 'input window, operand 3, single buffered']
    #allocation5 [shape = 's32[1]{0}', space=sflag, size = 0x4, scoped, tag = 'scoped memory for branch_1_fun.2']
    %11 = vsyncpa [#allocation3], 0
    %12 = vsyncpa [#allocation5], 0
    // Predicated region
    $region2: #{branch_1_fun.2} parent=1 // pred_check
      _
    $region3: #{branch_1_fun.2} parent=1 // pred_check_branch
      %14 = sbr.rel (0) target = $region5
    $region4: #{branch_1_fun.2} parent=1 // pred_region
      _
    $region5: #{branch_1_fun.2} parent=1 // pred_fallthru
      _
    // Predicated region
    $region6: #{branch_1_fun.2} parent=1 // pred_check
      _
    $region7: #{branch_1_fun.2} parent=1 // pred_check_branch
      %16 = sbr.rel (0) target = $region9
    $region8: #{branch_1_fun.2} parent=1 // pred_region
      %s18 = ssub.s32 12288, 12288
      %19 = vsyncadd [#allocation3], %s18
      %s20 = sshll.u32 [#allocation2], 4
      %s21 = int_to_ptr.vmem [resolvable:$true] %s20
      %26 = dma.hbm_to_vmem [thread:$0]  %s1, 12288, %s21, [#allocation3], 768, 768, 48
    $region9: #{branch_1_fun.2} parent=1 // pred_fallthru
      _
    // Predicated region
    $region10: #{branch_1_fun.2} parent=1 // pred_check
      _
    $region11: #{branch_1_fun.2} parent=1 // pred_check_branch
      %28 = sbr.rel (0) target = $region13
    $region12: #{branch_1_fun.2} parent=1 // pred_region
      _
    $region13: #{branch_1_fun.2} parent=1 // pred_fallthru
      _
    // Predicated region
    $region14: #{branch_1_fun.2} parent=1 // pred_check
      _
    $region15: #{branch_1_fun.2} parent=1 // pred_check_branch
      %30 = sbr.rel (0) target = $region17
    $region16: #{branch_1_fun.2} parent=1 // pred_region
      %s32 = ssub.s32 12288, 12288
      %33 = vsyncadd [#allocation5], %s32
      %s34 = sshll.u32 [#allocation4], 4
      %s35 = int_to_ptr.vmem [resolvable:$true] %s34
      %40 = dma.hbm_to_vmem [thread:$0]  %s3, 12288, %s35, [#allocation5], 384, 384, 24
    $region17: #{branch_1_fun.2} parent=1 // pred_fallthru
      _
    // Predicated region
    $region18: #{branch_1_fun.2} parent=1 // pred_check
      _
    $region19: #{branch_1_fun.2} parent=1 // pred_check_branch
      %42 = sbr.rel (0) target = $region21
    $region20: #{branch_1_fun.2} parent=1 // pred_region
      _
    $region21: #{branch_1_fun.2} parent=1 // pred_fallthru
      _
    // Predicated region
    $region22: #{branch_1_fun.2} parent=1 // pred_check
      _
    $region23: #{branch_1_fun.2} parent=1 // pred_check_branch
      %44 = sbr.rel (0) target = $region25
    $region24: #{branch_1_fun.2} parent=1 // pred_region
      _
    $region25: #{branch_1_fun.2} parent=1 // pred_fallthru
      _
    // Predicated region
    $region26: #{branch_1_fun.2} parent=1 // pred_check
      _
    $region27: #{branch_1_fun.2} parent=1 // pred_check_branch
      %46 = sbr.rel (0) target = $region29
    $region28: #{branch_1_fun.2} parent=1 // pred_region
      %47 = dma.done [#allocation3], 12288
    $region29: #{branch_1_fun.2} parent=1 // pred_fallthru
      _
    // Predicated region
    $region30: #{branch_1_fun.2} parent=1 // pred_check
      _
    $region31: #{branch_1_fun.2} parent=1 // pred_check_branch
      %49 = sbr.rel (0) target = $region33
    $region32: #{branch_1_fun.2} parent=1 // pred_region
      %50 = dma.done [#allocation5], 12288
    $region33: #{branch_1_fun.2} parent=1 // pred_fallthru
      _
    %v51 = vld [vmem:[%s5] sm:$0xf]
    %s52 = scalar_lea.vmem %s5, 4
    %v53 = vld [vmem:[%s52] sm:$0xf]
    %v54 = vld [vmem:[%s0] sm:$0xf]
    %v55 = vld [vmem:[#allocation2] sm:$0xff]
    %v56 = vld [vmem:[#allocation2 + $0x8] sm:$0xff]
    %v57 = vld [vmem:[#allocation2 + $0x10] sm:$0xff]
    %v58 = vld [vmem:[#allocation2 + $0x18] sm:$0xff]
    %v59 = vld [vmem:[#allocation2 + $0x20] sm:$0xff]
    %v60 = vld [vmem:[#allocation2 + $0x28] sm:$0xff]
    %v61 = vld [vmem:[#allocation2 + $0x30] sm:$0xff]
    %v62 = vld [vmem:[#allocation2 + $0x38] sm:$0xff]
    %v63 = vld [vmem:[#allocation2 + $0x40] sm:$0xff]
    %v64 = vld [vmem:[#allocation2 + $0x48] sm:$0xff]
    %v65 = vld [vmem:[#allocation2 + $0x50] sm:$0xff]
    %v66 = vld [vmem:[#allocation2 + $0x58] sm:$0xff]
    %v67 = vld [vmem:[#allocation2 + $0x60] sm:$0xff]
    %v68 = vld [vmem:[#allocation2 + $0x68] sm:$0xff]
    %v69 = vld [vmem:[#allocation2 + $0x70] sm:$0xff]
    %v70 = vld [vmem:[#allocation2 + $0x78] sm:$0xff]
    %v71 = vld [vmem:[#allocation2 + $0x80] sm:$0xff]
    %v72 = vld [vmem:[#allocation2 + $0x88] sm:$0xff]
    %v73 = vld [vmem:[#allocation2 + $0x90] sm:$0xff]
    %v74 = vld [vmem:[#allocation2 + $0x98] sm:$0xff]
    %v75 = vld [vmem:[#allocation2 + $0xa0] sm:$0xff]
    %v76 = vld [vmem:[#allocation2 + $0xa8] sm:$0xff]
    %v77 = vld [vmem:[#allocation2 + $0xb0] sm:$0xff]
    %v78 = vld [vmem:[#allocation2 + $0xb8] sm:$0xff]
    %v79 = vld [vmem:[#allocation2 + $0xc0] sm:$0xff]
    %v80 = vld [vmem:[#allocation2 + $0xc8] sm:$0xff]
    %v81 = vld [vmem:[#allocation2 + $0xd0] sm:$0xff]
    %v82 = vld [vmem:[#allocation2 + $0xd8] sm:$0xff]
    %v83 = vld [vmem:[#allocation2 + $0xe0] sm:$0xff]
    %v84 = vld [vmem:[#allocation2 + $0xe8] sm:$0xff]
    %v85 = vld [vmem:[#allocation2 + $0xf0] sm:$0xff]
    %v86 = vld [vmem:[#allocation2 + $0xf8] sm:$0xff]
    %v87 = vld [vmem:[#allocation2 + $0x100] sm:$0xff]
    %v88 = vld [vmem:[#allocation2 + $0x108] sm:$0xff]
    %v89 = vld [vmem:[#allocation2 + $0x110] sm:$0xff]
    %v90 = vld [vmem:[#allocation2 + $0x118] sm:$0xff]
    %v91 = vld [vmem:[#allocation2 + $0x120] sm:$0xff]
    %v92 = vld [vmem:[#allocation2 + $0x128] sm:$0xff]
    %v93 = vld [vmem:[#allocation2 + $0x130] sm:$0xff]
    %v94 = vld [vmem:[#allocation2 + $0x138] sm:$0xff]
    %v95 = vld [vmem:[#allocation2 + $0x140] sm:$0xff]
    %v96 = vld [vmem:[#allocation2 + $0x148] sm:$0xff]
    %v97 = vld [vmem:[#allocation2 + $0x150] sm:$0xff]
    %v98 = vld [vmem:[#allocation2 + $0x158] sm:$0xff]
    %v99 = vld [vmem:[#allocation2 + $0x160] sm:$0xff]
    %v100 = vld [vmem:[#allocation2 + $0x168] sm:$0xff]
    %v101 = vld [vmem:[#allocation2 + $0x170] sm:$0xff]
    %v102 = vld [vmem:[#allocation2 + $0x178] sm:$0xff]
    %v103 = vld [vmem:[#allocation2 + $0x180] sm:$0xff]
    %v104 = vld [vmem:[#allocation2 + $0x188] sm:$0xff]
    %v105 = vld [vmem:[#allocation2 + $0x190] sm:$0xff]
    %v106 = vld [vmem:[#allocation2 + $0x198] sm:$0xff]
    %v107 = vld [vmem:[#allocation2 + $0x1a0] sm:$0xff]
    %v108 = vld [vmem:[#allocation2 + $0x1a8] sm:$0xff]
    %v109 = vld [vmem:[#allocation2 + $0x1b0] sm:$0xff]
    %v110 = vld [vmem:[#allocation2 + $0x1b8] sm:$0xff]
    %v111 = vld [vmem:[#allocation2 + $0x1c0] sm:$0xff]
    %v112 = vld [vmem:[#allocation2 + $0x1c8] sm:$0xff]
    %v113 = vld [vmem:[#allocation2 + $0x1d0] sm:$0xff]
    %v114 = vld [vmem:[#allocation2 + $0x1d8] sm:$0xff]
    %v115 = vld [vmem:[#allocation2 + $0x1e0] sm:$0xff]
    %v116 = vld [vmem:[#allocation2 + $0x1e8] sm:$0xff]
    %v117 = vld [vmem:[#allocation2 + $0x1f0] sm:$0xff]
    %v118 = vld [vmem:[#allocation2 + $0x1f8] sm:$0xff]
    %v119 = vld [vmem:[#allocation2 + $0x200] sm:$0xff]
    %v120 = vld [vmem:[#allocation2 + $0x208] sm:$0xff]
    %v121 = vld [vmem:[#allocation2 + $0x210] sm:$0xff]
    %v122 = vld [vmem:[#allocation2 + $0x218] sm:$0xff]
    %v123 = vld [vmem:[#allocation2 + $0x220] sm:$0xff]
    %v124 = vld [vmem:[#allocation2 + $0x228] sm:$0xff]
    %v125 = vld [vmem:[#allocation2 + $0x230] sm:$0xff]
    %v126 = vld [vmem:[#allocation2 + $0x238] sm:$0xff]
    %v127 = vld [vmem:[#allocation2 + $0x240] sm:$0xff]
    %v128 = vld [vmem:[#allocation2 + $0x248] sm:$0xff]
    %v129 = vld [vmem:[#allocation2 + $0x250] sm:$0xff]
    %v130 = vld [vmem:[#allocation2 + $0x258] sm:$0xff]
    %v131 = vld [vmem:[#allocation2 + $0x260] sm:$0xff]
    %v132 = vld [vmem:[#allocation2 + $0x268] sm:$0xff]
    %v133 = vld [vmem:[#allocation2 + $0x270] sm:$0xff]
    %v134 = vld [vmem:[#allocation2 + $0x278] sm:$0xff]
    %v135 = vld [vmem:[#allocation2 + $0x280] sm:$0xff]
    %v136 = vld [vmem:[#allocation2 + $0x288] sm:$0xff]
    %v137 = vld [vmem:[#allocation2 + $0x290] sm:$0xff]
    %v138 = vld [vmem:[#allocation2 + $0x298] sm:$0xff]
    %v139 = vld [vmem:[#allocation2 + $0x2a0] sm:$0xff]
    %v140 = vld [vmem:[#allocation2 + $0x2a8] sm:$0xff]
    %v141 = vld [vmem:[#allocation2 + $0x2b0] sm:$0xff]
    %v142 = vld [vmem:[#allocation2 + $0x2b8] sm:$0xff]
    %v143 = vld [vmem:[#allocation2 + $0x2c0] sm:$0xff]
    %v144 = vld [vmem:[#allocation2 + $0x2c8] sm:$0xff]
    %v145 = vld [vmem:[#allocation2 + $0x2d0] sm:$0xff]
    %v146 = vld [vmem:[#allocation2 + $0x2d8] sm:$0xff]
    %v147 = vld [vmem:[#allocation2 + $0x2e0] sm:$0xff]
    %v148 = vld [vmem:[#allocation2 + $0x2e8] sm:$0xff]
    %v149 = vld [vmem:[#allocation2 + $0x2f0] sm:$0xff]
    %v150 = vld [vmem:[#allocation2 + $0x2f8] sm:$0xff]
    %v151 = vld [vmem:[%s2] sm:$0x3]
    %v152 = vld [vmem:[#allocation4] sm:$0xff]
    %v153 = vld [vmem:[#allocation4 + $0x8] sm:$0xff]
    %v154 = vld [vmem:[#allocation4 + $0x10] sm:$0xff]
    %v155 = vld [vmem:[#allocation4 + $0x18] sm:$0xff]
    %v156 = vld [vmem:[#allocation4 + $0x20] sm:$0xff]
    %v157 = vld [vmem:[#allocation4 + $0x28] sm:$0xff]
    %v158 = vld [vmem:[#allocation4 + $0x30] sm:$0xff]
    %v159 = vld [vmem:[#allocation4 + $0x38] sm:$0xff]
    %v160 = vld [vmem:[#allocation4 + $0x40] sm:$0xff]
    %v161 = vld [vmem:[#allocation4 + $0x48] sm:$0xff]
    %v162 = vld [vmem:[#allocation4 + $0x50] sm:$0xff]
    %v163 = vld [vmem:[#allocation4 + $0x58] sm:$0xff]
    %v164 = vld [vmem:[#allocation4 + $0x60] sm:$0xff]
    %v165 = vld [vmem:[#allocation4 + $0x68] sm:$0xff]
    %v166 = vld [vmem:[#allocation4 + $0x70] sm:$0xff]
    %v167 = vld [vmem:[#allocation4 + $0x78] sm:$0xff]
    %v168 = vld [vmem:[#allocation4 + $0x80] sm:$0xff]
    %v169 = vld [vmem:[#allocation4 + $0x88] sm:$0xff]
    %v170 = vld [vmem:[#allocation4 + $0x90] sm:$0xff]
    %v171 = vld [vmem:[#allocation4 + $0x98] sm:$0xff]
    %v172 = vld [vmem:[#allocation4 + $0xa0] sm:$0xff]
    %v173 = vld [vmem:[#allocation4 + $0xa8] sm:$0xff]
    %v174 = vld [vmem:[#allocation4 + $0xb0] sm:$0xff]
    %v175 = vld [vmem:[#allocation4 + $0xb8] sm:$0xff]
    %v176 = vld [vmem:[#allocation4 + $0xc0] sm:$0xff]
    %v177 = vld [vmem:[#allocation4 + $0xc8] sm:$0xff]
    %v178 = vld [vmem:[#allocation4 + $0xd0] sm:$0xff]
    %v179 = vld [vmem:[#allocation4 + $0xd8] sm:$0xff]
    %v180 = vld [vmem:[#allocation4 + $0xe0] sm:$0xff]
    %v181 = vld [vmem:[#allocation4 + $0xe8] sm:$0xff]
    %v182 = vld [vmem:[#allocation4 + $0xf0] sm:$0xff]
    %v183 = vld [vmem:[#allocation4 + $0xf8] sm:$0xff]
    %v184 = vld [vmem:[#allocation4 + $0x100] sm:$0xff]
    %v185 = vld [vmem:[#allocation4 + $0x108] sm:$0xff]
    %v186 = vld [vmem:[#allocation4 + $0x110] sm:$0xff]
    %v187 = vld [vmem:[#allocation4 + $0x118] sm:$0xff]
    %v188 = vld [vmem:[#allocation4 + $0x120] sm:$0xff]
    %v189 = vld [vmem:[#allocation4 + $0x128] sm:$0xff]
    %v190 = vld [vmem:[#allocation4 + $0x130] sm:$0xff]
    %v191 = vld [vmem:[#allocation4 + $0x138] sm:$0xff]
    %v192 = vld [vmem:[#allocation4 + $0x140] sm:$0xff]
    %v193 = vld [vmem:[#allocation4 + $0x148] sm:$0xff]
    %v194 = vld [vmem:[#allocation4 + $0x150] sm:$0xff]
    %v195 = vld [vmem:[#allocation4 + $0x158] sm:$0xff]
    %v196 = vld [vmem:[#allocation4 + $0x160] sm:$0xff]
    %v197 = vld [vmem:[#allocation4 + $0x168] sm:$0xff]
    %v198 = vld [vmem:[#allocation4 + $0x170] sm:$0xff]
    %v199 = vld [vmem:[#allocation4 + $0x178] sm:$0xff]
    %v200 = vld [vmem:[#allocation4 + $0x180] sm:$0xff]
    %v201 = vld [vmem:[#allocation4 + $0x188] sm:$0xff]
    %v202 = vld [vmem:[#allocation4 + $0x190] sm:$0xff]
    %v203 = vld [vmem:[#allocation4 + $0x198] sm:$0xff]
    %v204 = vld [vmem:[#allocation4 + $0x1a0] sm:$0xff]
    %v205 = vld [vmem:[#allocation4 + $0x1a8] sm:$0xff]
    %v206 = vld [vmem:[#allocation4 + $0x1b0] sm:$0xff]
    %v207 = vld [vmem:[#allocation4 + $0x1b8] sm:$0xff]
    %v208 = vld [vmem:[#allocation4 + $0x1c0] sm:$0xff]
    %v209 = vld [vmem:[#allocation4 + $0x1c8] sm:$0xff]
    %v210 = vld [vmem:[#allocation4 + $0x1d0] sm:$0xff]
    %v211 = vld [vmem:[#allocation4 + $0x1d8] sm:$0xff]
    %v212 = vld [vmem:[#allocation4 + $0x1e0] sm:$0xff]
    %v213 = vld [vmem:[#allocation4 + $0x1e8] sm:$0xff]
    %v214 = vld [vmem:[#allocation4 + $0x1f0] sm:$0xff]
    %v215 = vld [vmem:[#allocation4 + $0x1f8] sm:$0xff]
    %v216 = vld [vmem:[#allocation4 + $0x200] sm:$0xff]
    %v217 = vld [vmem:[#allocation4 + $0x208] sm:$0xff]
    %v218 = vld [vmem:[#allocation4 + $0x210] sm:$0xff]
    %v219 = vld [vmem:[#allocation4 + $0x218] sm:$0xff]
    %v220 = vld [vmem:[#allocation4 + $0x220] sm:$0xff]
    %v221 = vld [vmem:[#allocation4 + $0x228] sm:$0xff]
    %v222 = vld [vmem:[#allocation4 + $0x230] sm:$0xff]
    %v223 = vld [vmem:[#allocation4 + $0x238] sm:$0xff]
    %v224 = vld [vmem:[#allocation4 + $0x240] sm:$0xff]
    %v225 = vld [vmem:[#allocation4 + $0x248] sm:$0xff]
    %v226 = vld [vmem:[#allocation4 + $0x250] sm:$0xff]
    %v227 = vld [vmem:[#allocation4 + $0x258] sm:$0xff]
    %v228 = vld [vmem:[#allocation4 + $0x260] sm:$0xff]
    %v229 = vld [vmem:[#allocation4 + $0x268] sm:$0xff]
    %v230 = vld [vmem:[#allocation4 + $0x270] sm:$0xff]
    %v231 = vld [vmem:[#allocation4 + $0x278] sm:$0xff]
    %v232 = vld [vmem:[#allocation4 + $0x280] sm:$0xff]
    %v233 = vld [vmem:[#allocation4 + $0x288] sm:$0xff]
    %v234 = vld [vmem:[#allocation4 + $0x290] sm:$0xff]
    %v235 = vld [vmem:[#allocation4 + $0x298] sm:$0xff]
    %v236 = vld [vmem:[#allocation4 + $0x2a0] sm:$0xff]
    %v237 = vld [vmem:[#allocation4 + $0x2a8] sm:$0xff]
    %v238 = vld [vmem:[#allocation4 + $0x2b0] sm:$0xff]
    %v239 = vld [vmem:[#allocation4 + $0x2b8] sm:$0xff]
    %v240 = vld [vmem:[#allocation4 + $0x2c0] sm:$0xff]
    %v241 = vld [vmem:[#allocation4 + $0x2c8] sm:$0xff]
    %v242 = vld [vmem:[#allocation4 + $0x2d0] sm:$0xff]
    %v243 = vld [vmem:[#allocation4 + $0x2d8] sm:$0xff]
    %v244 = vld [vmem:[#allocation4 + $0x2e0] sm:$0xff]
    %v245 = vld [vmem:[#allocation4 + $0x2e8] sm:$0xff]
    %v246 = vld [vmem:[#allocation4 + $0x2f0] sm:$0xff]
    %v247 = vld [vmem:[#allocation4 + $0x2f8] sm:$0xff]
    %v248 = vld [vmem:[%s4] sm:$0x1]
    %249 = vmatprep.subr.mxu0 %v56
    %250 = vmatpush1.msra.mxu0 %v55
    %251 = vmatprep.subr.mxu0 %v62
    %252 = vmatpush1.msra.mxu0 %v61
    %253 = vmatprep.subr.mxu0 %v68
    %254 = vmatpush1.msra.mxu0 %v67
    %255 = vmatprep.subr.mxu0 %v74
    %256 = vmatpush1.msra.mxu0 %v73
    %257 = vmatprep.subr.mxu0 %v80
    %258 = vmatpush1.msra.mxu0 %v79
    %259 = vmatprep.subr.mxu0 %v86
    %260 = vmatpush1.msra.mxu0 %v85
    %261 = vmatprep.subr.mxu0 %v92
    %262 = vmatpush1.msra.mxu0 %v91
    %263 = vmatprep.subr.mxu0 %v98
    %264 = vmatpush1.msra.mxu0 %v97
    %265 = vmatprep.subr.mxu0 %v104
    %266 = vmatpush1.msra.mxu0 %v103
    %267 = vmatprep.subr.mxu0 %v110
    %268 = vmatpush1.msra.mxu0 %v109
    %269 = vmatprep.subr.mxu0 %v116
    %270 = vmatpush1.msra.mxu0 %v115
    %271 = vmatprep.subr.mxu0 %v122
    %272 = vmatpush1.msra.mxu0 %v121
    %273 = vmatprep.subr.mxu0 %v128
    %274 = vmatpush1.msra.mxu0 %v127
    %275 = vmatprep.subr.mxu0 %v134
    %276 = vmatpush1.msra.mxu0 %v133
    %277 = vmatprep.subr.mxu0 %v140
    %278 = vmatpush1.msra.mxu0 %v139
    %279 = vmatprep.subr.mxu0 %v146
    %280 = vmatpush1.msra.mxu0 %v145
    %281 = vmatprep.subr.mxu0 0.0
    %282 = vmatpush1.msra.mxu0 0.0
    %283 = vmatprep.subr.mxu0 0.0
    %284 = vmatpush1.msra.mxu0 0.0
    %285 = vmatprep.subr.mxu0 0.0
    %286 = vmatpush1.msra.mxu0 0.0
    %287 = vmatprep.subr.mxu0 0.0
    %288 = vmatpush1.msra.mxu0 0.0
    %289 = vmatprep.subr.mxu0 0.0
    %290 = vmatpush1.msra.mxu0 0.0
    %291 = vmatprep.subr.mxu0 0.0
    %292 = vmatpush1.msra.mxu0 0.0
    %293 = vmatprep.subr.mxu0 0.0
    %294 = vmatpush1.msra.mxu0 0.0
    %295 = vmatprep.subr.mxu0 0.0
    %296 = vmatpush1.msra.mxu0 0.0
    %297 = vmatprep.subr.mxu0 0.0
    %298 = vmatpush1.msra.mxu0 0.0
    %299 = vmatprep.subr.mxu0 0.0
    %300 = vmatpush1.msra.mxu0 0.0
    %301 = vmatprep.subr.mxu0 0.0
    %302 = vmatpush1.msra.mxu0 0.0
    %303 = vmatprep.subr.mxu0 0.0
    %304 = vmatpush1.msra.mxu0 0.0
    %305 = vmatprep.subr.mxu0 0.0
    %306 = vmatpush1.msra.mxu0 0.0
    %307 = vmatprep.subr.mxu0 0.0
    %308 = vmatpush1.msra.mxu0 0.0
    %309 = vmatprep.subr.mxu0 0.0
    %310 = vmatpush1.msra.mxu0 0.0
    %311 = vmatprep.subr.mxu0 0.0
    %312 = vmatpush1.msra.mxu0 0.0
    %313 = vmatprep.mubr.f32.mxu0 0.0
    %314 = vmatmul.mubr.f32.gmra.mrb[0].mxu0 %v54
    %v315 = vpop.f32.mrb[0].mxu0
    %v316 = vadd.f32 0.0, %v315
    %v317 = vpop.f32.mrb[0].mxu0
    %v318 = vadd.f32 0.0, %v317
    %319 = vdwg.mxu0
    %320 = vmatprep.subr.mxu0 %v58
    %321 = vmatpush1.msra.mxu0 %v57
    %322 = vmatprep.subr.mxu0 %v64
    %323 = vmatpush1.msra.mxu0 %v63
    %324 = vmatprep.subr.mxu0 %v70
    %325 = vmatpush1.msra.mxu0 %v69
    %326 = vmatprep.subr.mxu0 %v76
    %327 = vmatpush1.msra.mxu0 %v75
    %328 = vmatprep.subr.mxu0 %v82
    %329 = vmatpush1.msra.mxu0 %v81
    %330 = vmatprep.subr.mxu0 %v88
    %331 = vmatpush1.msra.mxu0 %v87
    %332 = vmatprep.subr.mxu0 %v94
    %333 = vmatpush1.msra.mxu0 %v93
    %334 = vmatprep.subr.mxu0 %v100
    %335 = vmatpush1.msra.mxu0 %v99
    %336 = vmatprep.subr.mxu0 %v106
    %337 = vmatpush1.msra.mxu0 %v105
    %338 = vmatprep.subr.mxu0 %v112
    %339 = vmatpush1.msra.mxu0 %v111
    %340 = vmatprep.subr.mxu0 %v118
    %341 = vmatpush1.msra.mxu0 %v117
    %342 = vmatprep.subr.mxu0 %v124
    %343 = vmatpush1.msra.mxu0 %v123
    %344 = vmatprep.subr.mxu0 %v130
    %345 = vmatpush1.msra.mxu0 %v129
    %346 = vmatprep.subr.mxu0 %v136
    %347 = vmatpush1.msra.mxu0 %v135
    %348 = vmatprep.subr.mxu0 %v142
    %349 = vmatpush1.msra.mxu0 %v141
    %350 = vmatprep.subr.mxu0 %v148
    %351 = vmatpush1.msra.mxu0 %v147
    %352 = vmatprep.subr.mxu0 0.0
    %353 = vmatpush1.msra.mxu0 0.0
    %354 = vmatprep.subr.mxu0 0.0
    %355 = vmatpush1.msra.mxu0 0.0
    %356 = vmatprep.subr.mxu0 0.0
    %357 = vmatpush1.msra.mxu0 0.0
    %358 = vmatprep.subr.mxu0 0.0
    %359 = vmatpush1.msra.mxu0 0.0
    %360 = vmatprep.subr.mxu0 0.0
    %361 = vmatpush1.msra.mxu0 0.0
    %362 = vmatprep.subr.mxu0 0.0
    %363 = vmatpush1.msra.mxu0 0.0
    %364 = vmatprep.subr.mxu0 0.0
    %365 = vmatpush1.msra.mxu0 0.0
    %366 = vmatprep.subr.mxu0 0.0
    %367 = vmatpush1.msra.mxu0 0.0
    %368 = vmatprep.subr.mxu0 0.0
    %369 = vmatpush1.msra.mxu0 0.0
    %370 = vmatprep.subr.mxu0 0.0
    %371 = vmatpush1.msra.mxu0 0.0
    %372 = vmatprep.subr.mxu0 0.0
    %373 = vmatpush1.msra.mxu0 0.0
    %374 = vmatprep.subr.mxu0 0.0
    %375 = vmatpush1.msra.mxu0 0.0
    %376 = vmatprep.subr.mxu0 0.0
    %377 = vmatpush1.msra.mxu0 0.0
    %378 = vmatprep.subr.mxu0 0.0
    %379 = vmatpush1.msra.mxu0 0.0
    %380 = vmatprep.subr.mxu0 0.0
    %381 = vmatpush1.msra.mxu0 0.0
    %382 = vmatprep.subr.mxu0 0.0
    %383 = vmatpush1.msra.mxu0 0.0
    %384 = vmatprep.mubr.f32.mxu0 0.0
    %385 = vmatmul.mubr.f32.gmra.mrb[0].mxu0 %v54
    %v386 = vpop.f32.mrb[0].mxu0
    %v387 = vadd.f32 0.0, %v386
    %v388 = vpop.f32.mrb[0].mxu0
    %v389 = vadd.f32 0.0, %v388
    %390 = vdwg.mxu0
    %391 = vmatprep.subr.mxu0 %v60
    %392 = vmatpush1.msra.mxu0 %v59
    %393 = vmatprep.subr.mxu0 %v66
    %394 = vmatpush1.msra.mxu0 %v65
    %395 = vmatprep.subr.mxu0 %v72
    %396 = vmatpush1.msra.mxu0 %v71
    %397 = vmatprep.subr.mxu0 %v78
    %398 = vmatpush1.msra.mxu0 %v77
    %399 = vmatprep.subr.mxu0 %v84
    %400 = vmatpush1.msra.mxu0 %v83
    %401 = vmatprep.subr.mxu0 %v90
    %402 = vmatpush1.msra.mxu0 %v89
    %403 = vmatprep.subr.mxu0 %v96
    %404 = vmatpush1.msra.mxu0 %v95
    %405 = vmatprep.subr.mxu0 %v102
    %406 = vmatpush1.msra.mxu0 %v101
    %407 = vmatprep.subr.mxu0 %v108
    %408 = vmatpush1.msra.mxu0 %v107
    %409 = vmatprep.subr.mxu0 %v114
    %410 = vmatpush1.msra.mxu0 %v113
    %411 = vmatprep.subr.mxu0 %v120
    %412 = vmatpush1.msra.mxu0 %v119
    %413 = vmatprep.subr.mxu0 %v126
    %414 = vmatpush1.msra.mxu0 %v125
    %415 = vmatprep.subr.mxu0 %v132
    %416 = vmatpush1.msra.mxu0 %v131
    %417 = vmatprep.subr.mxu0 %v138
    %418 = vmatpush1.msra.mxu0 %v137
    %419 = vmatprep.subr.mxu0 %v144
    %420 = vmatpush1.msra.mxu0 %v143
    %421 = vmatprep.subr.mxu0 %v150
    %422 = vmatpush1.msra.mxu0 %v149
    %423 = vmatprep.subr.mxu0 0.0
    %424 = vmatpush1.msra.mxu0 0.0
    %425 = vmatprep.subr.mxu0 0.0
    %426 = vmatpush1.msra.mxu0 0.0
    %427 = vmatprep.subr.mxu0 0.0
    %428 = vmatpush1.msra.mxu0 0.0
    %429 = vmatprep.subr.mxu0 0.0
    %430 = vmatpush1.msra.mxu0 0.0
    %431 = vmatprep.subr.mxu0 0.0
    %432 = vmatpush1.msra.mxu0 0.0
    %433 = vmatprep.subr.mxu0 0.0
    %434 = vmatpush1.msra.mxu0 0.0
    %435 = vmatprep.subr.mxu0 0.0
    %436 = vmatpush1.msra.mxu0 0.0
    %437 = vmatprep.subr.mxu0 0.0
    %438 = vmatpush1.msra.mxu0 0.0
    %439 = vmatprep.subr.mxu0 0.0
    %440 = vmatpush1.msra.mxu0 0.0
    %441 = vmatprep.subr.mxu0 0.0
    %442 = vmatpush1.msra.mxu0 0.0
    %443 = vmatprep.subr.mxu0 0.0
    %444 = vmatpush1.msra.mxu0 0.0
    %445 = vmatprep.subr.mxu0 0.0
    %446 = vmatpush1.msra.mxu0 0.0
    %447 = vmatprep.subr.mxu0 0.0
    %448 = vmatpush1.msra.mxu0 0.0
    %449 = vmatprep.subr.mxu0 0.0
    %450 = vmatpush1.msra.mxu0 0.0
    %451 = vmatprep.subr.mxu0 0.0
    %452 = vmatpush1.msra.mxu0 0.0
    %453 = vmatprep.subr.mxu0 0.0
    %454 = vmatpush1.msra.mxu0 0.0
    %455 = vmatprep.mubr.f32.mxu0 0.0
    %456 = vmatmul.mubr.f32.gmra.mrb[0].mxu0 %v54
    %v457 = vpop.f32.mrb[0].mxu0
    %v458 = vadd.f32 0.0, %v457
    %v459 = vpop.f32.mrb[0].mxu0
    %v460 = vadd.f32 0.0, %v459
    %461 = vdwg.mxu0
    %vm462 = vcmask 31744
    %v464 = vsel %vm462, %v51, 0
    %vm466 = vcmask 1043456
    %v468 = vsel %vm466, %v316, 0
    %v471 = vsel %vm466, %v318, 0
    %473 = vmatprep.subr.mxu0 %v471
    %474 = vmatpush1.msra.mxu0 %v468
    %475 = vmatprep.subr.mxu0 0.0
    %476 = vmatpush1.msra.mxu0 0.0
    %477 = vmatprep.subr.mxu0 0.0
    %478 = vmatpush1.msra.mxu0 0.0
    %479 = vmatprep.subr.mxu0 0.0
    %480 = vmatpush1.msra.mxu0 0.0
    %481 = vmatprep.subr.mxu0 0.0
    %482 = vmatpush1.msra.mxu0 0.0
    %483 = vmatprep.subr.mxu0 0.0
    %484 = vmatpush1.msra.mxu0 0.0
    %485 = vmatprep.subr.mxu0 0.0
    %486 = vmatpush1.msra.mxu0 0.0
    %487 = vmatprep.subr.mxu0 0.0
    %488 = vmatpush1.msra.mxu0 0.0
    %489 = vmatprep.subr.mxu0 0.0
    %490 = vmatpush1.msra.mxu0 0.0
    %491 = vmatprep.subr.mxu0 0.0
    %492 = vmatpush1.msra.mxu0 0.0
    %493 = vmatprep.subr.mxu0 0.0
    %494 = vmatpush1.msra.mxu0 0.0
    %495 = vmatprep.subr.mxu0 0.0
    %496 = vmatpush1.msra.mxu0 0.0
    %497 = vmatprep.subr.mxu0 0.0
    %498 = vmatpush1.msra.mxu0 0.0
    %499 = vmatprep.subr.mxu0 0.0
    %500 = vmatpush1.msra.mxu0 0.0
    %501 = vmatprep.subr.mxu0 0.0
    %502 = vmatpush1.msra.mxu0 0.0
    %503 = vmatprep.subr.mxu0 0.0
    %504 = vmatpush1.msra.mxu0 0.0
    %505 = vmatprep.subr.mxu0 0.0
    %506 = vmatpush1.msra.mxu0 0.0
    %507 = vmatprep.subr.mxu0 0.0
    %508 = vmatpush1.msra.mxu0 0.0
    %509 = vmatprep.subr.mxu0 0.0
    %510 = vmatpush1.msra.mxu0 0.0
    %511 = vmatprep.subr.mxu0 0.0
    %512 = vmatpush1.msra.mxu0 0.0
    %513 = vmatprep.subr.mxu0 0.0
    %514 = vmatpush1.msra.mxu0 0.0
    %515 = vmatprep.subr.mxu0 0.0
    %516 = vmatpush1.msra.mxu0 0.0
    %517 = vmatprep.subr.mxu0 0.0
    %518 = vmatpush1.msra.mxu0 0.0
    %519 = vmatprep.subr.mxu0 0.0
    %520 = vmatpush1.msra.mxu0 0.0
    %521 = vmatprep.subr.mxu0 0.0
    %522 = vmatpush1.msra.mxu0 0.0
    %523 = vmatprep.subr.mxu0 0.0
    %524 = vmatpush1.msra.mxu0 0.0
    %525 = vmatprep.subr.mxu0 0.0
    %526 = vmatpush1.msra.mxu0 0.0
    %527 = vmatprep.subr.mxu0 0.0
    %528 = vmatpush1.msra.mxu0 0.0
    %529 = vmatprep.subr.mxu0 0.0
    %530 = vmatpush1.msra.mxu0 0.0
    %531 = vmatprep.subr.mxu0 0.0
    %532 = vmatpush1.msra.mxu0 0.0
    %533 = vmatprep.subr.mxu0 0.0
    %534 = vmatpush1.msra.mxu0 0.0
    %535 = vmatprep.subr.mxu0 0.0
    %536 = vmatpush1.msra.mxu0 0.0
    %537 = vmatprep.mubr.f32.mxu0 0.0
    %538 = vmatmul.mubr.f32.gmra.mrb[0].mxu0 %v464
    %v539 = vpop.f32.mrb[0].mxu0
    %v540 = vadd.f32 %v387, %v539
    %v541 = vpop.f32.mrb[0].mxu0
    %v542 = vadd.f32 %v389, %v541
    %543 = vdwg.mxu0
    %v545 = vsel %vm462, %v53, 0
    %v548 = vsel %vm466, %v458, 0
    %v551 = vsel %vm466, %v460, 0
    %553 = vmatprep.subr.mxu0 %v551
    %554 = vmatpush1.msra.mxu0 %v548
    %555 = vmatprep.subr.mxu0 0.0
    %556 = vmatpush1.msra.mxu0 0.0
    %557 = vmatprep.subr.mxu0 0.0
    %558 = vmatpush1.msra.mxu0 0.0
    %559 = vmatprep.subr.mxu0 0.0
    %560 = vmatpush1.msra.mxu0 0.0
    %561 = vmatprep.subr.mxu0 0.0
    %562 = vmatpush1.msra.mxu0 0.0
    %563 = vmatprep.subr.mxu0 0.0
    %564 = vmatpush1.msra.mxu0 0.0
    %565 = vmatprep.subr.mxu0 0.0
    %566 = vmatpush1.msra.mxu0 0.0
    %567 = vmatprep.subr.mxu0 0.0
    %568 = vmatpush1.msra.mxu0 0.0
    %569 = vmatprep.subr.mxu0 0.0
    %570 = vmatpush1.msra.mxu0 0.0
    %571 = vmatprep.subr.mxu0 0.0
    %572 = vmatpush1.msra.mxu0 0.0
    %573 = vmatprep.subr.mxu0 0.0
    %574 = vmatpush1.msra.mxu0 0.0
    %575 = vmatprep.subr.mxu0 0.0
    %576 = vmatpush1.msra.mxu0 0.0
    %577 = vmatprep.subr.mxu0 0.0
    %578 = vmatpush1.msra.mxu0 0.0
    %579 = vmatprep.subr.mxu0 0.0
    %580 = vmatpush1.msra.mxu0 0.0
    %581 = vmatprep.subr.mxu0 0.0
    %582 = vmatpush1.msra.mxu0 0.0
    %583 = vmatprep.subr.mxu0 0.0
    %584 = vmatpush1.msra.mxu0 0.0
    %585 = vmatprep.subr.mxu0 0.0
    %586 = vmatpush1.msra.mxu0 0.0
    %587 = vmatprep.subr.mxu0 0.0
    %588 = vmatpush1.msra.mxu0 0.0
    %589 = vmatprep.subr.mxu0 0.0
    %590 = vmatpush1.msra.mxu0 0.0
    %591 = vmatprep.subr.mxu0 0.0
    %592 = vmatpush1.msra.mxu0 0.0
    %593 = vmatprep.subr.mxu0 0.0
    %594 = vmatpush1.msra.mxu0 0.0
    %595 = vmatprep.subr.mxu0 0.0
    %596 = vmatpush1.msra.mxu0 0.0
    %597 = vmatprep.subr.mxu0 0.0
    %598 = vmatpush1.msra.mxu0 0.0
    %599 = vmatprep.subr.mxu0 0.0
    %600 = vmatpush1.msra.mxu0 0.0
    %601 = vmatprep.subr.mxu0 0.0
    %602 = vmatpush1.msra.mxu0 0.0
    %603 = vmatprep.subr.mxu0 0.0
    %604 = vmatpush1.msra.mxu0 0.0
    %605 = vmatprep.subr.mxu0 0.0
    %606 = vmatpush1.msra.mxu0 0.0
    %607 = vmatprep.subr.mxu0 0.0
    %608 = vmatpush1.msra.mxu0 0.0
    %609 = vmatprep.subr.mxu0 0.0
    %610 = vmatpush1.msra.mxu0 0.0
    %611 = vmatprep.subr.mxu0 0.0
    %612 = vmatpush1.msra.mxu0 0.0
    %613 = vmatprep.subr.mxu0 0.0
    %614 = vmatpush1.msra.mxu0 0.0
    %615 = vmatprep.subr.mxu0 0.0
    %616 = vmatpush1.msra.mxu0 0.0
    %617 = vmatprep.mubr.f32.mxu0 0.0
    %618 = vmatmul.mubr.f32.gmra.mrb[0].mxu0 %v545
    %v619 = vpop.f32.mrb[0].mxu0
    %v620 = vadd.f32 0.0, %v619
    %v621 = vpop.f32.mrb[0].mxu0
    %v622 = vadd.f32 0.0, %v621
    %623 = vdwg.mxu0
    %v624 = vadd.f32 %v540, %v620
    %v625 = vadd.f32 %v542, %v622
    %v627 = vlaneseq
    %v628 = vshrl.u32 %v627, 7
    %v629 = vsub.s32 0, %v628
    %v630 = vrot.slane %v151, %v629
    %v631 = vlaneseq
    %v632 = vshrl.u32 %v631, 7
    %v633 = vsub.s32 1, %v632
    %v634 = vrot.slane %v151, %v633
    %v637 = vadd.f32 %v624, %v630
    %v638 = vadd.f32 %v625, %v634
    %v639 = vmul.f32 %v637, 0.5
    %v640 = vmul.f32 %v638, 0.5
    %v641 = vmul.f32 %v637, 0.70710677
    %v642 = vmul.f32 %v638, 0.70710677
    %vm643 = vcmp.ge.f32.partialorder %v641, 0.0
    %vm644 = vcmp.ge.f32.partialorder %v642, 0.0
    %v645 = vsel %vm643, 1.0, -1.0
    %v646 = vsel %vm644, 1.0, -1.0
    %v647 = vand.u32 2147483647, %v641
    %v648 = vand.u32 2147483647, %v642
    %v649 = vmul.f32 %v647, 0.3275911
    %v650 = vmul.f32 %v648, 0.3275911
    %v651 = vadd.f32 %v649, 1.0
    %v652 = vadd.f32 %v650, 1.0
    %v653 = vrcp.pop %v651
    %v654 = vmul.f32 1.0, %v653
    %v655 = vrcp.pop %v652
    %v656 = vmul.f32 1.0, %v655
    %v657 = vmul.f32 %v654, 1.0614054
    %v658 = vmul.f32 %v656, 1.0614054
    %v659 = vadd.f32 %v657, -1.4531521
    %v660 = vadd.f32 %v658, -1.4531521
    %v661 = vmul.f32 %v659, %v654
    %v662 = vmul.f32 %v660, %v656
    %v663 = vadd.f32 %v661, 1.4214138
    %v664 = vadd.f32 %v662, 1.4214138
    %v665 = vmul.f32 %v663, %v654
    %v666 = vmul.f32 %v664, %v656
    %v667 = vadd.f32 %v665, -0.28449672
    %v668 = vadd.f32 %v666, -0.28449672
    %v669 = vmul.f32 %v667, %v654
    %v670 = vmul.f32 %v668, %v656
    %v671 = vadd.f32 %v669, 0.2548296
    %v672 = vadd.f32 %v670, 0.2548296
    %v673 = vmul.f32 %v671, %v654
    %v674 = vmul.f32 %v672, %v656
    %v675 = vmul.f32 %v647, %v647
    %v676 = vmul.f32 %v648, %v648
    %v677 = vsub.f32 0.0, %v675
    %v678 = vsub.f32 0.0, %v676
    %v679 = vmul.f32 %v677, 1.442695
    %v680 = vpow.pop %v679
    %v681 = vmul.f32 %v678, 1.442695
    %v682 = vpow.pop %v681
    %v683 = vmul.f32 %v673, %v680
    %v684 = vmul.f32 %v674, %v682
    %v685 = vsub.f32 1.0, %v683
    %v686 = vsub.f32 1.0, %v684
    %v687 = vmul.f32 %v645, %v685
    %v688 = vmul.f32 %v646, %v686
    %v689 = vadd.f32 %v687, 1.0
    %v690 = vadd.f32 %v688, 1.0
    %v691 = vmul.f32 %v639, %v689
    %v692 = vmul.f32 %v640, %v690
    %693 = vmatprep.subr.mxu0 %v153
    %694 = vmatpush1.msra.mxu0 %v152
    %695 = vmatprep.subr.mxu0 %v156
    %696 = vmatpush1.msra.mxu0 %v155
    %697 = vmatprep.subr.mxu0 %v159
    %698 = vmatpush1.msra.mxu0 %v158
    %699 = vmatprep.subr.mxu0 %v162
    %700 = vmatpush1.msra.mxu0 %v161
    %701 = vmatprep.subr.mxu0 %v165
    %702 = vmatpush1.msra.mxu0 %v164
    %703 = vmatprep.subr.mxu0 %v168
    %704 = vmatpush1.msra.mxu0 %v167
    %705 = vmatprep.subr.mxu0 %v171
    %706 = vmatpush1.msra.mxu0 %v170
    %707 = vmatprep.subr.mxu0 %v174
    %708 = vmatpush1.msra.mxu0 %v173
    %709 = vmatprep.subr.mxu0 %v177
    %710 = vmatpush1.msra.mxu0 %v176
    %711 = vmatprep.subr.mxu0 %v180
    %712 = vmatpush1.msra.mxu0 %v179
    %713 = vmatprep.subr.mxu0 %v183
    %714 = vmatpush1.msra.mxu0 %v182
    %715 = vmatprep.subr.mxu0 %v186
    %716 = vmatpush1.msra.mxu0 %v185
    %717 = vmatprep.subr.mxu0 %v189
    %718 = vmatpush1.msra.mxu0 %v188
    %719 = vmatprep.subr.mxu0 %v192
    %720 = vmatpush1.msra.mxu0 %v191
    %721 = vmatprep.subr.mxu0 %v195
    %722 = vmatpush1.msra.mxu0 %v194
    %723 = vmatprep.subr.mxu0 %v198
    %724 = vmatpush1.msra.mxu0 %v197
    %725 = vmatprep.subr.mxu0 %v201
    %726 = vmatpush1.msra.mxu0 %v200
    %727 = vmatprep.subr.mxu0 %v204
    %728 = vmatpush1.msra.mxu0 %v203
    %729 = vmatprep.subr.mxu0 %v207
    %730 = vmatpush1.msra.mxu0 %v206
    %731 = vmatprep.subr.mxu0 %v210
    %732 = vmatpush1.msra.mxu0 %v209
    %733 = vmatprep.subr.mxu0 %v213
    %734 = vmatpush1.msra.mxu0 %v212
    %735 = vmatprep.subr.mxu0 %v216
    %736 = vmatpush1.msra.mxu0 %v215
    %737 = vmatprep.subr.mxu0 %v219
    %738 = vmatpush1.msra.mxu0 %v218
    %739 = vmatprep.subr.mxu0 %v222
    %740 = vmatpush1.msra.mxu0 %v221
    %741 = vmatprep.subr.mxu0 %v225
    %742 = vmatpush1.msra.mxu0 %v224
    %743 = vmatprep.subr.mxu0 %v228
    %744 = vmatpush1.msra.mxu0 %v227
    %745 = vmatprep.subr.mxu0 %v231
    %746 = vmatpush1.msra.mxu0 %v230
    %747 = vmatprep.subr.mxu0 %v234
    %748 = vmatpush1.msra.mxu0 %v233
    %749 = vmatprep.subr.mxu0 %v237
    %750 = vmatpush1.msra.mxu0 %v236
    %751 = vmatprep.subr.mxu0 %v240
    %752 = vmatpush1.msra.mxu0 %v239
    %753 = vmatprep.subr.mxu0 %v243
    %754 = vmatpush1.msra.mxu0 %v242
    %755 = vmatprep.subr.mxu0 %v246
    %756 = vmatpush1.msra.mxu0 %v245
    %757 = vmatprep.mubr.f32.mxu0 %v692
    %758 = vmatmul.mubr.f32.gmra.mrb[0].mxu0 %v691
    %v759 = vpop.f32.mrb[0].mxu0
    %v760 = vadd.f32 0.0, %v759
    %v761 = vpop.f32.mrb[0].mxu0
    %v762 = vadd.f32 0.0, %v761
    %763 = vdwg.mxu0
    %764 = vmatprep.subr.mxu0 0.0
    %765 = vmatpush1.msra.mxu0 %v154
    %766 = vmatprep.subr.mxu0 0.0
    %767 = vmatpush1.msra.mxu0 %v157
    %768 = vmatprep.subr.mxu0 0.0
    %769 = vmatpush1.msra.mxu0 %v160
    %770 = vmatprep.subr.mxu0 0.0
    %771 = vmatpush1.msra.mxu0 %v163
    %772 = vmatprep.subr.mxu0 0.0
    %773 = vmatpush1.msra.mxu0 %v166
    %774 = vmatprep.subr.mxu0 0.0
    %775 = vmatpush1.msra.mxu0 %v169
    %776 = vmatprep.subr.mxu0 0.0
    %777 = vmatpush1.msra.mxu0 %v172
    %778 = vmatprep.subr.mxu0 0.0
    %779 = vmatpush1.msra.mxu0 %v175
    %780 = vmatprep.subr.mxu0 0.0
    %781 = vmatpush1.msra.mxu0 %v178
    %782 = vmatprep.subr.mxu0 0.0
    %783 = vmatpush1.msra.mxu0 %v181
    %784 = vmatprep.subr.mxu0 0.0
    %785 = vmatpush1.msra.mxu0 %v184
    %786 = vmatprep.subr.mxu0 0.0
    %787 = vmatpush1.msra.mxu0 %v187
    %788 = vmatprep.subr.mxu0 0.0
    %789 = vmatpush1.msra.mxu0 %v190
    %790 = vmatprep.subr.mxu0 0.0
    %791 = vmatpush1.msra.mxu0 %v193
    %792 = vmatprep.subr.mxu0 0.0
    %793 = vmatpush1.msra.mxu0 %v196
    %794 = vmatprep.subr.mxu0 0.0
    %795 = vmatpush1.msra.mxu0 %v199
    %796 = vmatprep.subr.mxu0 0.0
    %797 = vmatpush1.msra.mxu0 %v202
    %798 = vmatprep.subr.mxu0 0.0
    %799 = vmatpush1.msra.mxu0 %v205
    %800 = vmatprep.subr.mxu0 0.0
    %801 = vmatpush1.msra.mxu0 %v208
    %802 = vmatprep.subr.mxu0 0.0
    %803 = vmatpush1.msra.mxu0 %v211
    %804 = vmatprep.subr.mxu0 0.0
    %805 = vmatpush1.msra.mxu0 %v214
    %806 = vmatprep.subr.mxu0 0.0
    %807 = vmatpush1.msra.mxu0 %v217
    %808 = vmatprep.subr.mxu0 0.0
    %809 = vmatpush1.msra.mxu0 %v220
    %810 = vmatprep.subr.mxu0 0.0
    %811 = vmatpush1.msra.mxu0 %v223
    %812 = vmatprep.subr.mxu0 0.0
    %813 = vmatpush1.msra.mxu0 %v226
    %814 = vmatprep.subr.mxu0 0.0
    %815 = vmatpush1.msra.mxu0 %v229
    %816 = vmatprep.subr.mxu0 0.0
    %817 = vmatpush1.msra.mxu0 %v232
    %818 = vmatprep.subr.mxu0 0.0
    %819 = vmatpush1.msra.mxu0 %v235
    %820 = vmatprep.subr.mxu0 0.0
    %821 = vmatpush1.msra.mxu0 %v238
    %822 = vmatprep.subr.mxu0 0.0
    %823 = vmatpush1.msra.mxu0 %v241
    %824 = vmatprep.subr.mxu0 0.0
    %825 = vmatpush1.msra.mxu0 %v244
    %826 = vmatprep.subr.mxu0 0.0
    %827 = vmatpush1.msra.mxu0 %v247
    %828 = vmatprep.mubr.f32.mxu0 %v692
    %829 = vmatmul.mubr.f32.gmra.mrb[0].mxu0 %v691
    %v830 = vpop.f32.mrb[0].mxu0
    %v831 = vadd.f32 0.0, %v830
    %v832 = vpop.f32.mrb[0].mxu0
    %833 = vdwg.mxu0
    %v835 = vsel %vm466, %v760, 0
    %837 = vmatprep.subr.mxu0 0.0
    %838 = vmatpush1.msra.mxu0 %v835
    %839 = vmatprep.subr.mxu0 0.0
    %840 = vmatpush1.msra.mxu0 0.0
    %841 = vmatprep.subr.mxu0 0.0
    %842 = vmatpush1.msra.mxu0 0.0
    %843 = vmatprep.subr.mxu0 0.0
    %844 = vmatpush1.msra.mxu0 0.0
    %845 = vmatprep.subr.mxu0 0.0
    %846 = vmatpush1.msra.mxu0 0.0
    %847 = vmatprep.subr.mxu0 0.0
    %848 = vmatpush1.msra.mxu0 0.0
    %849 = vmatprep.subr.mxu0 0.0
    %850 = vmatpush1.msra.mxu0 0.0
    %851 = vmatprep.subr.mxu0 0.0
    %852 = vmatpush1.msra.mxu0 0.0
    %853 = vmatprep.subr.mxu0 0.0
    %854 = vmatpush1.msra.mxu0 0.0
    %855 = vmatprep.subr.mxu0 0.0
    %856 = vmatpush1.msra.mxu0 0.0
    %857 = vmatprep.subr.mxu0 0.0
    %858 = vmatpush1.msra.mxu0 0.0
    %859 = vmatprep.subr.mxu0 0.0
    %860 = vmatpush1.msra.mxu0 0.0
    %861 = vmatprep.subr.mxu0 0.0
    %862 = vmatpush1.msra.mxu0 0.0
    %863 = vmatprep.subr.mxu0 0.0
    %864 = vmatpush1.msra.mxu0 0.0
    %865 = vmatprep.subr.mxu0 0.0
    %866 = vmatpush1.msra.mxu0 0.0
    %867 = vmatprep.subr.mxu0 0.0
    %868 = vmatpush1.msra.mxu0 0.0
    %869 = vmatprep.subr.mxu0 0.0
    %870 = vmatpush1.msra.mxu0 0.0
    %871 = vmatprep.subr.mxu0 0.0
    %872 = vmatpush1.msra.mxu0 0.0
    %873 = vmatprep.subr.mxu0 0.0
    %874 = vmatpush1.msra.mxu0 0.0
    %875 = vmatprep.subr.mxu0 0.0
    %876 = vmatpush1.msra.mxu0 0.0
    %877 = vmatprep.subr.mxu0 0.0
    %878 = vmatpush1.msra.mxu0 0.0
    %879 = vmatprep.subr.mxu0 0.0
    %880 = vmatpush1.msra.mxu0 0.0
    %881 = vmatprep.subr.mxu0 0.0
    %882 = vmatpush1.msra.mxu0 0.0
    %883 = vmatprep.subr.mxu0 0.0
    %884 = vmatpush1.msra.mxu0 0.0
    %885 = vmatprep.subr.mxu0 0.0
    %886 = vmatpush1.msra.mxu0 0.0
    %887 = vmatprep.subr.mxu0 0.0
    %888 = vmatpush1.msra.mxu0 0.0
    %889 = vmatprep.subr.mxu0 0.0
    %890 = vmatpush1.msra.mxu0 0.0
    %891 = vmatprep.subr.mxu0 0.0
    %892 = vmatpush1.msra.mxu0 0.0
    %893 = vmatprep.subr.mxu0 0.0
    %894 = vmatpush1.msra.mxu0 0.0
    %895 = vmatprep.subr.mxu0 0.0
    %896 = vmatpush1.msra.mxu0 0.0
    %897 = vmatprep.subr.mxu0 0.0
    %898 = vmatpush1.msra.mxu0 0.0
    %899 = vmatprep.subr.mxu0 0.0
    %900 = vmatpush1.msra.mxu0 0.0
    %901 = vmatprep.mubr.f32.mxu0 0.0
    %902 = vmatmul.mubr.f32.gmra.mrb[0].mxu0 %v464
    %v903 = vpop.f32.mrb[0].mxu0
    %v904 = vadd.f32 %v762, %v903
    %v905 = vpop.f32.mrb[0].mxu0
    %906 = vdwg.mxu0
    %v908 = vsel %vm466, %v831, 0
    %910 = vmatprep.subr.mxu0 0.0
    %911 = vmatpush1.msra.mxu0 %v908
    %912 = vmatprep.subr.mxu0 0.0
    %913 = vmatpush1.msra.mxu0 0.0
    %914 = vmatprep.subr.mxu0 0.0
    %915 = vmatpush1.msra.mxu0 0.0
    %916 = vmatprep.subr.mxu0 0.0
    %917 = vmatpush1.msra.mxu0 0.0
    %918 = vmatprep.subr.mxu0 0.0
    %919 = vmatpush1.msra.mxu0 0.0
    %920 = vmatprep.subr.mxu0 0.0
    %921 = vmatpush1.msra.mxu0 0.0
    %922 = vmatprep.subr.mxu0 0.0
    %923 = vmatpush1.msra.mxu0 0.0
    %924 = vmatprep.subr.mxu0 0.0
    %925 = vmatpush1.msra.mxu0 0.0
    %926 = vmatprep.subr.mxu0 0.0
    %927 = vmatpush1.msra.mxu0 0.0
    %928 = vmatprep.subr.mxu0 0.0
    %929 = vmatpush1.msra.mxu0 0.0
    %930 = vmatprep.subr.mxu0 0.0
    %931 = vmatpush1.msra.mxu0 0.0
    %932 = vmatprep.subr.mxu0 0.0
    %933 = vmatpush1.msra.mxu0 0.0
    %934 = vmatprep.subr.mxu0 0.0
    %935 = vmatpush1.msra.mxu0 0.0
    %936 = vmatprep.subr.mxu0 0.0
    %937 = vmatpush1.msra.mxu0 0.0
    %938 = vmatprep.subr.mxu0 0.0
    %939 = vmatpush1.msra.mxu0 0.0
    %940 = vmatprep.subr.mxu0 0.0
    %941 = vmatpush1.msra.mxu0 0.0
    %942 = vmatprep.subr.mxu0 0.0
    %943 = vmatpush1.msra.mxu0 0.0
    %944 = vmatprep.subr.mxu0 0.0
    %945 = vmatpush1.msra.mxu0 0.0
    %946 = vmatprep.subr.mxu0 0.0
    %947 = vmatpush1.msra.mxu0 0.0
    %948 = vmatprep.subr.mxu0 0.0
    %949 = vmatpush1.msra.mxu0 0.0
    %950 = vmatprep.subr.mxu0 0.0
    %951 = vmatpush1.msra.mxu0 0.0
    %952 = vmatprep.subr.mxu0 0.0
    %953 = vmatpush1.msra.mxu0 0.0
    %954 = vmatprep.subr.mxu0 0.0
    %955 = vmatpush1.msra.mxu0 0.0
    %956 = vmatprep.subr.mxu0 0.0
    %957 = vmatpush1.msra.mxu0 0.0
    %958 = vmatprep.subr.mxu0 0.0
    %959 = vmatpush1.msra.mxu0 0.0
    %960 = vmatprep.subr.mxu0 0.0
    %961 = vmatpush1.msra.mxu0 0.0
    %962 = vmatprep.subr.mxu0 0.0
    %963 = vmatpush1.msra.mxu0 0.0
    %964 = vmatprep.subr.mxu0 0.0
    %965 = vmatpush1.msra.mxu0 0.0
    %966 = vmatprep.subr.mxu0 0.0
    %967 = vmatpush1.msra.mxu0 0.0
    %968 = vmatprep.subr.mxu0 0.0
    %969 = vmatpush1.msra.mxu0 0.0
    %970 = vmatprep.subr.mxu0 0.0
    %971 = vmatpush1.msra.mxu0 0.0
    %972 = vmatprep.subr.mxu0 0.0
    %973 = vmatpush1.msra.mxu0 0.0
    %974 = vmatprep.mubr.f32.mxu0 0.0
    %975 = vmatmul.mubr.f32.gmra.mrb[0].mxu0 %v545
    %v976 = vpop.f32.mrb[0].mxu0
    %v977 = vadd.f32 0.0, %v976
    %v978 = vpop.f32.mrb[0].mxu0
    %979 = vdwg.mxu0
    %v980 = vadd.f32 %v904, %v977
    %v982 = vlaneseq
    %v983 = vshrl.u32 %v982, 7
    %v984 = vsub.s32 0, %v983
    %v985 = vrot.slane %v248, %v984
    %v987 = vadd.f32 %v980, %v985
    %988 = vst [vmem:[%s6] sm:$0xf] %v987
    // Predicated region
    $region34: #{branch_1_fun.2} parent=1 // pred_check
      _
    $region35: #{branch_1_fun.2} parent=1 // pred_check_branch
      %990 = sbr.rel (0) target = $region37
    $region36: #{branch_1_fun.2} parent=1 // pred_region
      _
    $region37: #{branch_1_fun.2} parent=1 // pred_fallthru
      _
    // Predicated region
    $region38: #{branch_1_fun.2} parent=1 // pred_check
      _
    $region39: #{branch_1_fun.2} parent=1 // pred_check_branch
      %992 = sbr.rel (0) target = $region41
    $region40: #{branch_1_fun.2} parent=1 // pred_region
      _
    $region41: #{branch_1_fun.2} parent=1 // pred_fallthru
      _
    %993 = vsyncpa [#allocation3], 1
    %994 = vsyncpa [#allocation5], 1

// kernel: branch_4_fun.2
$region0: #{branch_4_fun.2}
  #allocation0 [shape = 'u32[]', space=smem, size = 0x4, offset = 0x4, fixed_abs, tag = 'smem constant byte address 0x4 - core index']
  #allocation1 [shape = 'u32[144,128]{1,0:T(1,128)}', space=vmem, size = 0x12000, scoped, tag = 'internal scratch']
  %s0 = inlined_call_operand.vmem [shape: f32[12,48], index: 0, kind: input, shape index: {}]
  %s1 = inlined_call_operand.vmem [shape: f32[48,384], index: 1, kind: input, shape index: {}]
  %s2 = inlined_call_operand.vmem [shape: f32[1,128], index: 2, kind: input, shape index: {}]
  %s3 = inlined_call_operand.hbm [shape: f32[128,384], index: 3, kind: input, shape index: {}]
  %s4 = inlined_call_operand.vmem [shape: f32[1,128], index: 4, kind: input, shape index: {}]
  %s5 = inlined_call_operand.hbm [shape: f32[2,12,12], index: 5, kind: input, shape index: {}]
  %s6 = inlined_call_operand.vmem [shape: f32[12,128], index: 6, kind: output, shape index: {}]
  %s7 = sld [smem:[#allocation0]]
  $region42: #{branch_4_fun.2} parent=0
    _
  %s9 = ssub.s32 1, %s7
  %s10 = scalar_select 0, %s9, %s7
  $region1: #{branch_4_fun.2} parent=0
    #allocation2 [shape = 'u8[196608]{0}', space=vmem, size = 0x30000, scoped, tag = 'input window, operand 3, single buffered']
    #allocation3 [shape = 's32[1]{0}', space=sflag, size = 0x4, scoped, tag = 'scoped memory for branch_4_fun.2']
    #allocation4 [shape = 'u8[16384]{0}', space=vmem, size = 0x4000, scoped, tag = 'input window, operand 5, single buffered']
    #allocation5 [shape = 's32[1]{0}', space=sflag, size = 0x4, scoped, tag = 'scoped memory for branch_4_fun.2']
    %11 = vsyncpa [#allocation3], 0
    %12 = vsyncpa [#allocation5], 0
    // Predicated region
    $region2: #{branch_4_fun.2} parent=1 // pred_check
      _
    $region3: #{branch_4_fun.2} parent=1 // pred_check_branch
      %14 = sbr.rel (0) target = $region5
    $region4: #{branch_4_fun.2} parent=1 // pred_region
      _
    $region5: #{branch_4_fun.2} parent=1 // pred_fallthru
      _
    // Predicated region
    $region6: #{branch_4_fun.2} parent=1 // pred_check
      _
    $region7: #{branch_4_fun.2} parent=1 // pred_check_branch
      %16 = sbr.rel (0) target = $region9
    $region8: #{branch_4_fun.2} parent=1 // pred_region
      _
    $region9: #{branch_4_fun.2} parent=1 // pred_fallthru
      _
    // Predicated region
    $region10: #{branch_4_fun.2} parent=1 // pred_check
      _
    $region11: #{branch_4_fun.2} parent=1 // pred_check_branch
      %18 = sbr.rel (0) target = $region13
    $region12: #{branch_4_fun.2} parent=1 // pred_region
      _
    $region13: #{branch_4_fun.2} parent=1 // pred_fallthru
      _
    // Predicated region
    $region14: #{branch_4_fun.2} parent=1 // pred_check
      _
    $region15: #{branch_4_fun.2} parent=1 // pred_check_branch
      %20 = sbr.rel (0) target = $region17
    $region16: #{branch_4_fun.2} parent=1 // pred_region
      %s22 = ssub.s32 6144, 6144
      %23 = vsyncadd [#allocation3], %s22
      %s24 = sshll.u32 [#allocation2], 4
      %s25 = int_to_ptr.vmem [resolvable:$true] %s24
      %30 = dma.hbm_to_vmem [thread:$0]  %s3, 6144, %s25, [#allocation3], 384, 384, 24
    $region17: #{branch_4_fun.2} parent=1 // pred_fallthru
      _
    // Predicated region
    $region18: #{branch_4_fun.2} parent=1 // pred_check
      _
    $region19: #{branch_4_fun.2} parent=1 // pred_check_branch
      %32 = sbr.rel (0) target = $region21
    $region20: #{branch_4_fun.2} parent=1 // pred_region
      _
    $region21: #{branch_4_fun.2} parent=1 // pred_fallthru
      _
    // Predicated region
    $region22: #{branch_4_fun.2} parent=1 // pred_check
      _
    $region23: #{branch_4_fun.2} parent=1 // pred_check_branch
      %34 = sbr.rel (0) target = $region25
    $region24: #{branch_4_fun.2} parent=1 // pred_region
      %s36 = ssub.s32 512, 512
      %37 = vsyncadd [#allocation5], %s36
      %s38 = sshll.u32 [#allocation4], 4
      %s39 = int_to_ptr.vmem [resolvable:$true] %s38
      %44 = dma.hbm_to_vmem [thread:$0]  %s5, 512, %s39, [#allocation5], 128, 128, 8
    $region25: #{branch_4_fun.2} parent=1 // pred_fallthru
      _
    // Predicated region
    $region26: #{branch_4_fun.2} parent=1 // pred_check
      _
    $region27: #{branch_4_fun.2} parent=1 // pred_check_branch
      %46 = sbr.rel (0) target = $region29
    $region28: #{branch_4_fun.2} parent=1 // pred_region
      %47 = dma.done [#allocation3], 6144
    $region29: #{branch_4_fun.2} parent=1 // pred_fallthru
      _
    // Predicated region
    $region30: #{branch_4_fun.2} parent=1 // pred_check
      _
    $region31: #{branch_4_fun.2} parent=1 // pred_check_branch
      %49 = sbr.rel (0) target = $region33
    $region32: #{branch_4_fun.2} parent=1 // pred_region
      %50 = dma.done [#allocation5], 512
    $region33: #{branch_4_fun.2} parent=1 // pred_fallthru
      _
    %v51 = vld [vmem:[#allocation4] sm:$0xff]
    %v52 = vld [vmem:[#allocation4 + $0x8] sm:$0xf]
    %s53 = scalar_lea.vmem [#allocation4], 16
    %v54 = vld [vmem:[%s53] sm:$0xff]
    %v55 = vld [vmem:[%s53 + $0x8] sm:$0xf]
    %v56 = vld [vmem:[%s0] sm:$0xff]
    %v57 = vld [vmem:[%s0 + $0x8] sm:$0xf]
    %v58 = vld [vmem:[%s1] sm:$0xff]
    %v59 = vld [vmem:[%s1 + $0x8] sm:$0xff]
    %v60 = vld [vmem:[%s1 + $0x10] sm:$0xff]
    %v61 = vld [vmem:[%s1 + $0x18] sm:$0xff]
    %v62 = vld [vmem:[%s1 + $0x20] sm:$0xff]
    %v63 = vld [vmem:[%s1 + $0x28] sm:$0xff]
    %v64 = vld [vmem:[%s1 + $0x30] sm:$0xff]
    %v65 = vld [vmem:[%s1 + $0x38] sm:$0xff]
    %v66 = vld [vmem:[%s1 + $0x40] sm:$0xff]
    %v67 = vld [vmem:[%s1 + $0x48] sm:$0xff]
    %v68 = vld [vmem:[%s1 + $0x50] sm:$0xff]
    %v69 = vld [vmem:[%s1 + $0x58] sm:$0xff]
    %v70 = vld [vmem:[%s1 + $0x60] sm:$0xff]
    %v71 = vld [vmem:[%s1 + $0x68] sm:$0xff]
    %v72 = vld [vmem:[%s1 + $0x70] sm:$0xff]
    %v73 = vld [vmem:[%s1 + $0x78] sm:$0xff]
    %v74 = vld [vmem:[%s1 + $0x80] sm:$0xff]
    %v75 = vld [vmem:[%s1 + $0x88] sm:$0xff]
    %v76 = vld [vmem:[%s2] sm:$0x1]
    %v77 = vld [vmem:[#allocation2] sm:$0xff]
    %v78 = vld [vmem:[#allocation2 + $0x8] sm:$0xff]
    %v79 = vld [vmem:[#allocation2 + $0x10] sm:$0xff]
    %v80 = vld [vmem:[#allocation2 + $0x18] sm:$0xff]
    %v81 = vld [vmem:[#allocation2 + $0x20] sm:$0xff]
    %v82 = vld [vmem:[#allocation2 + $0x28] sm:$0xff]
    %v83 = vld [vmem:[#allocation2 + $0x30] sm:$0xff]
    %v84 = vld [vmem:[#allocation2 + $0x38] sm:$0xff]
    %v85 = vld [vmem:[#allocation2 + $0x40] sm:$0xff]
    %v86 = vld [vmem:[#allocation2 + $0x48] sm:$0xff]
    %v87 = vld [vmem:[#allocation2 + $0x50] sm:$0xff]
    %v88 = vld [vmem:[#allocation2 + $0x58] sm:$0xff]
    %v89 = vld [vmem:[#allocation2 + $0x60] sm:$0xff]
    %v90 = vld [vmem:[#allocation2 + $0x68] sm:$0xff]
    %v91 = vld [vmem:[#allocation2 + $0x70] sm:$0xff]
    %v92 = vld [vmem:[#allocation2 + $0x78] sm:$0xff]
    %v93 = vld [vmem:[#allocation2 + $0x80] sm:$0xff]
    %v94 = vld [vmem:[#allocation2 + $0x88] sm:$0xff]
    %v95 = vld [vmem:[#allocation2 + $0x90] sm:$0xff]
    %v96 = vld [vmem:[#allocation2 + $0x98] sm:$0xff]
    %v97 = vld [vmem:[#allocation2 + $0xa0] sm:$0xff]
    %v98 = vld [vmem:[#allocation2 + $0xa8] sm:$0xff]
    %v99 = vld [vmem:[#allocation2 + $0xb0] sm:$0xff]
    %v100 = vld [vmem:[#allocation2 + $0xb8] sm:$0xff]
    %v101 = vld [vmem:[#allocation2 + $0xc0] sm:$0xff]
    %v102 = vld [vmem:[#allocation2 + $0xc8] sm:$0xff]
    %v103 = vld [vmem:[#allocation2 + $0xd0] sm:$0xff]
    %v104 = vld [vmem:[#allocation2 + $0xd8] sm:$0xff]
    %v105 = vld [vmem:[#allocation2 + $0xe0] sm:$0xff]
    %v106 = vld [vmem:[#allocation2 + $0xe8] sm:$0xff]
    %v107 = vld [vmem:[#allocation2 + $0xf0] sm:$0xff]
    %v108 = vld [vmem:[#allocation2 + $0xf8] sm:$0xff]
    %v109 = vld [vmem:[#allocation2 + $0x100] sm:$0xff]
    %v110 = vld [vmem:[#allocation2 + $0x108] sm:$0xff]
    %v111 = vld [vmem:[#allocation2 + $0x110] sm:$0xff]
    %v112 = vld [vmem:[#allocation2 + $0x118] sm:$0xff]
    %v113 = vld [vmem:[#allocation2 + $0x120] sm:$0xff]
    %v114 = vld [vmem:[#allocation2 + $0x128] sm:$0xff]
    %v115 = vld [vmem:[#allocation2 + $0x130] sm:$0xff]
    %v116 = vld [vmem:[#allocation2 + $0x138] sm:$0xff]
    %v117 = vld [vmem:[#allocation2 + $0x140] sm:$0xff]
    %v118 = vld [vmem:[#allocation2 + $0x148] sm:$0xff]
    %v119 = vld [vmem:[#allocation2 + $0x150] sm:$0xff]
    %v120 = vld [vmem:[#allocation2 + $0x158] sm:$0xff]
    %v121 = vld [vmem:[#allocation2 + $0x160] sm:$0xff]
    %v122 = vld [vmem:[#allocation2 + $0x168] sm:$0xff]
    %v123 = vld [vmem:[#allocation2 + $0x170] sm:$0xff]
    %v124 = vld [vmem:[#allocation2 + $0x178] sm:$0xff]
    %v125 = vld [vmem:[%s4] sm:$0x1]
    %vm126 = vcmask 392192
    %v128 = vsel %vm126, %v56, 0
    %v131 = vsel %vm126, %v57, 0
    %133 = vmatprep.subr.mxu0 %v59
    %134 = vmatpush1.msra.mxu0 %v58
    %135 = vmatprep.subr.mxu0 %v62
    %136 = vmatpush1.msra.mxu0 %v61
    %137 = vmatprep.subr.mxu0 %v65
    %138 = vmatpush1.msra.mxu0 %v64
    %139 = vmatprep.subr.mxu0 %v68
    %140 = vmatpush1.msra.mxu0 %v67
    %141 = vmatprep.subr.mxu0 %v71
    %142 = vmatpush1.msra.mxu0 %v70
    %143 = vmatprep.subr.mxu0 %v74
    %144 = vmatpush1.msra.mxu0 %v73
    %145 = vmatprep.subr.mxu0 0.0
    %146 = vmatpush1.msra.mxu0 0.0
    %147 = vmatprep.subr.mxu0 0.0
    %148 = vmatpush1.msra.mxu0 0.0
    %149 = vmatprep.subr.mxu0 0.0
    %150 = vmatpush1.msra.mxu0 0.0
    %151 = vmatprep.subr.mxu0 0.0
    %152 = vmatpush1.msra.mxu0 0.0
    %153 = vmatprep.subr.mxu0 0.0
    %154 = vmatpush1.msra.mxu0 0.0
    %155 = vmatprep.subr.mxu0 0.0
    %156 = vmatpush1.msra.mxu0 0.0
    %157 = vmatprep.subr.mxu0 0.0
    %158 = vmatpush1.msra.mxu0 0.0
    %159 = vmatprep.subr.mxu0 0.0
    %160 = vmatpush1.msra.mxu0 0.0
    %161 = vmatprep.subr.mxu0 0.0
    %162 = vmatpush1.msra.mxu0 0.0
    %163 = vmatprep.subr.mxu0 0.0
    %164 = vmatpush1.msra.mxu0 0.0
    %165 = vmatprep.subr.mxu0 0.0
    %166 = vmatpush1.msra.mxu0 0.0
    %167 = vmatprep.subr.mxu0 0.0
    %168 = vmatpush1.msra.mxu0 0.0
    %169 = vmatprep.subr.mxu0 0.0
    %170 = vmatpush1.msra.mxu0 0.0
    %171 = vmatprep.subr.mxu0 0.0
    %172 = vmatpush1.msra.mxu0 0.0
    %173 = vmatprep.subr.mxu0 0.0
    %174 = vmatpush1.msra.mxu0 0.0
    %175 = vmatprep.subr.mxu0 0.0
    %176 = vmatpush1.msra.mxu0 0.0
    %177 = vmatprep.subr.mxu0 0.0
    %178 = vmatpush1.msra.mxu0 0.0
    %179 = vmatprep.subr.mxu0 0.0
    %180 = vmatpush1.msra.mxu0 0.0
    %181 = vmatprep.subr.mxu0 0.0
    %182 = vmatpush1.msra.mxu0 0.0
    %183 = vmatprep.subr.mxu0 0.0
    %184 = vmatpush1.msra.mxu0 0.0
    %185 = vmatprep.subr.mxu0 0.0
    %186 = vmatpush1.msra.mxu0 0.0
    %187 = vmatprep.subr.mxu0 0.0
    %188 = vmatpush1.msra.mxu0 0.0
    %189 = vmatprep.subr.mxu0 0.0
    %190 = vmatpush1.msra.mxu0 0.0
    %191 = vmatprep.subr.mxu0 0.0
    %192 = vmatpush1.msra.mxu0 0.0
    %193 = vmatprep.subr.mxu0 0.0
    %194 = vmatpush1.msra.mxu0 0.0
    %195 = vmatprep.subr.mxu0 0.0
    %196 = vmatpush1.msra.mxu0 0.0
    %197 = vmatprep.mubr.f32.mxu0 0.0
    %198 = vmatmul.mubr.f32.gmra.mrb[0].mxu0 %v128
    %v199 = vpop.f32.mrb[0].mxu0
    %v200 = vadd.f32 0.0, %v199
    %v201 = vpop.f32.mrb[0].mxu0
    %v202 = vadd.f32 0.0, %v201
    %203 = vmatprep.mubr.f32.mxu0 0.0
    %204 = vmatmul.mubr.f32.gmra.mrb[0].mxu0 %v131
    %v205 = vpop.f32.mrb[0].mxu0
    %v206 = vadd.f32 0.0, %v205
    %v207 = vpop.f32.mrb[0].mxu0
    %v208 = vadd.f32 0.0, %v207
    %209 = vdwg.mxu0
    %210 = vmatprep.subr.mxu0 0.0
    %211 = vmatpush1.msra.mxu0 %v60
    %212 = vmatprep.subr.mxu0 0.0
    %213 = vmatpush1.msra.mxu0 %v63
    %214 = vmatprep.subr.mxu0 0.0
    %215 = vmatpush1.msra.mxu0 %v66
    %216 = vmatprep.subr.mxu0 0.0
    %217 = vmatpush1.msra.mxu0 %v69
    %218 = vmatprep.subr.mxu0 0.0
    %219 = vmatpush1.msra.mxu0 %v72
    %220 = vmatprep.subr.mxu0 0.0
    %221 = vmatpush1.msra.mxu0 %v75
    %222 = vmatprep.subr.mxu0 0.0
    %223 = vmatpush1.msra.mxu0 0.0
    %224 = vmatprep.subr.mxu0 0.0
    %225 = vmatpush1.msra.mxu0 0.0
    %226 = vmatprep.subr.mxu0 0.0
    %227 = vmatpush1.msra.mxu0 0.0
    %228 = vmatprep.subr.mxu0 0.0
    %229 = vmatpush1.msra.mxu0 0.0
    %230 = vmatprep.subr.mxu0 0.0
    %231 = vmatpush1.msra.mxu0 0.0
    %232 = vmatprep.subr.mxu0 0.0
    %233 = vmatpush1.msra.mxu0 0.0
    %234 = vmatprep.subr.mxu0 0.0
    %235 = vmatpush1.msra.mxu0 0.0
    %236 = vmatprep.subr.mxu0 0.0
    %237 = vmatpush1.msra.mxu0 0.0
    %238 = vmatprep.subr.mxu0 0.0
    %239 = vmatpush1.msra.mxu0 0.0
    %240 = vmatprep.subr.mxu0 0.0
    %241 = vmatpush1.msra.mxu0 0.0
    %242 = vmatprep.subr.mxu0 0.0
    %243 = vmatpush1.msra.mxu0 0.0
    %244 = vmatprep.subr.mxu0 0.0
    %245 = vmatpush1.msra.mxu0 0.0
    %246 = vmatprep.subr.mxu0 0.0
    %247 = vmatpush1.msra.mxu0 0.0
    %248 = vmatprep.subr.mxu0 0.0
    %249 = vmatpush1.msra.mxu0 0.0
    %250 = vmatprep.subr.mxu0 0.0
    %251 = vmatpush1.msra.mxu0 0.0
    %252 = vmatprep.subr.mxu0 0.0
    %253 = vmatpush1.msra.mxu0 0.0
    %254 = vmatprep.subr.mxu0 0.0
    %255 = vmatpush1.msra.mxu0 0.0
    %256 = vmatprep.subr.mxu0 0.0
    %257 = vmatpush1.msra.mxu0 0.0
    %258 = vmatprep.subr.mxu0 0.0
    %259 = vmatpush1.msra.mxu0 0.0
    %260 = vmatprep.subr.mxu0 0.0
    %261 = vmatpush1.msra.mxu0 0.0
    %262 = vmatprep.subr.mxu0 0.0
    %263 = vmatpush1.msra.mxu0 0.0
    %264 = vmatprep.subr.mxu0 0.0
    %265 = vmatpush1.msra.mxu0 0.0
    %266 = vmatprep.subr.mxu0 0.0
    %267 = vmatpush1.msra.mxu0 0.0
    %268 = vmatprep.subr.mxu0 0.0
    %269 = vmatpush1.msra.mxu0 0.0
    %270 = vmatprep.subr.mxu0 0.0
    %271 = vmatpush1.msra.mxu0 0.0
    %272 = vmatprep.subr.mxu0 0.0
    %273 = vmatpush1.msra.mxu0 0.0
    %274 = vmatprep.mubr.f32.mxu0 0.0
    %275 = vmatmul.mubr.f32.gmra.mrb[0].mxu0 %v128
    %v276 = vpop.f32.mrb[0].mxu0
    %v277 = vadd.f32 0.0, %v276
    %v278 = vpop.f32.mrb[0].mxu0
    %279 = vmatprep.mubr.f32.mxu0 0.0
    %280 = vmatmul.mubr.f32.gmra.mrb[0].mxu0 %v131
    %v281 = vpop.f32.mrb[0].mxu0
    %v282 = vadd.f32 0.0, %v281
    %v283 = vpop.f32.mrb[0].mxu0
    %284 = vdwg.mxu0
    %vm285 = vcmask 97280
    %v287 = vsel %vm285, %v51, 0
    %v290 = vsel %vm285, %v52, 0
    %vm292 = vcmask 1043456
    %v294 = vsel %vm292, %v206, 0
    %296 = vmatprep.subr.mxu0 0.0
    %297 = vmatpush1.msra.mxu0 %v200
    %298 = vmatprep.subr.mxu0 0.0
    %299 = vmatpush1.msra.mxu0 %v294
    %300 = vmatprep.subr.mxu0 0.0
    %301 = vmatpush1.msra.mxu0 0.0
    %302 = vmatprep.subr.mxu0 0.0
    %303 = vmatpush1.msra.mxu0 0.0
    %304 = vmatprep.subr.mxu0 0.0
    %305 = vmatpush1.msra.mxu0 0.0
    %306 = vmatprep.subr.mxu0 0.0
    %307 = vmatpush1.msra.mxu0 0.0
    %308 = vmatprep.subr.mxu0 0.0
    %309 = vmatpush1.msra.mxu0 0.0
    %310 = vmatprep.subr.mxu0 0.0
    %311 = vmatpush1.msra.mxu0 0.0
    %312 = vmatprep.subr.mxu0 0.0
    %313 = vmatpush1.msra.mxu0 0.0
    %314 = vmatprep.subr.mxu0 0.0
    %315 = vmatpush1.msra.mxu0 0.0
    %316 = vmatprep.subr.mxu0 0.0
    %317 = vmatpush1.msra.mxu0 0.0
    %318 = vmatprep.subr.mxu0 0.0
    %319 = vmatpush1.msra.mxu0 0.0
    %320 = vmatprep.subr.mxu0 0.0
    %321 = vmatpush1.msra.mxu0 0.0
    %322 = vmatprep.subr.mxu0 0.0
    %323 = vmatpush1.msra.mxu0 0.0
    %324 = vmatprep.subr.mxu0 0.0
    %325 = vmatpush1.msra.mxu0 0.0
    %326 = vmatprep.subr.mxu0 0.0
    %327 = vmatpush1.msra.mxu0 0.0
    %328 = vmatprep.subr.mxu0 0.0
    %329 = vmatpush1.msra.mxu0 0.0
    %330 = vmatprep.subr.mxu0 0.0
    %331 = vmatpush1.msra.mxu0 0.0
    %332 = vmatprep.subr.mxu0 0.0
    %333 = vmatpush1.msra.mxu0 0.0
    %334 = vmatprep.subr.mxu0 0.0
    %335 = vmatpush1.msra.mxu0 0.0
    %336 = vmatprep.subr.mxu0 0.0
    %337 = vmatpush1.msra.mxu0 0.0
    %338 = vmatprep.subr.mxu0 0.0
    %339 = vmatpush1.msra.mxu0 0.0
    %340 = vmatprep.subr.mxu0 0.0
    %341 = vmatpush1.msra.mxu0 0.0
    %342 = vmatprep.subr.mxu0 0.0
    %343 = vmatpush1.msra.mxu0 0.0
    %344 = vmatprep.subr.mxu0 0.0
    %345 = vmatpush1.msra.mxu0 0.0
    %346 = vmatprep.subr.mxu0 0.0
    %347 = vmatpush1.msra.mxu0 0.0
    %348 = vmatprep.subr.mxu0 0.0
    %349 = vmatpush1.msra.mxu0 0.0
    %350 = vmatprep.subr.mxu0 0.0
    %351 = vmatpush1.msra.mxu0 0.0
    %352 = vmatprep.subr.mxu0 0.0
    %353 = vmatpush1.msra.mxu0 0.0
    %354 = vmatprep.subr.mxu0 0.0
    %355 = vmatpush1.msra.mxu0 0.0
    %356 = vmatprep.subr.mxu0 0.0
    %357 = vmatpush1.msra.mxu0 0.0
    %358 = vmatprep.subr.mxu0 0.0
    %359 = vmatpush1.msra.mxu0 0.0
    %360 = vmatprep.mubr.f32.mxu0 0.0
    %361 = vmatmul.mubr.f32.gmra.mrb[0].mxu0 %v287
    %v362 = vpop.f32.mrb[0].mxu0
    %v363 = vadd.f32 %v202, %v362
    %v364 = vpop.f32.mrb[0].mxu0
    %365 = vmatprep.mubr.f32.mxu0 0.0
    %366 = vmatmul.mubr.f32.gmra.mrb[0].mxu0 %v290
    %v367 = vpop.f32.mrb[0].mxu0
    %v368 = vadd.f32 %v208, %v367
    %v369 = vpop.f32.mrb[0].mxu0
    %370 = vdwg.mxu0
    %v372 = vsel %vm285, %v54, 0
    %v375 = vsel %vm285, %v55, 0
    %v378 = vsel %vm292, %v282, 0
    %380 = vmatprep.subr.mxu0 0.0
    %381 = vmatpush1.msra.mxu0 %v277
    %382 = vmatprep.subr.mxu0 0.0
    %383 = vmatpush1.msra.mxu0 %v378
    %384 = vmatprep.subr.mxu0 0.0
    %385 = vmatpush1.msra.mxu0 0.0
    %386 = vmatprep.subr.mxu0 0.0
    %387 = vmatpush1.msra.mxu0 0.0
    %388 = vmatprep.subr.mxu0 0.0
    %389 = vmatpush1.msra.mxu0 0.0
    %390 = vmatprep.subr.mxu0 0.0
    %391 = vmatpush1.msra.mxu0 0.0
    %392 = vmatprep.subr.mxu0 0.0
    %393 = vmatpush1.msra.mxu0 0.0
    %394 = vmatprep.subr.mxu0 0.0
    %395 = vmatpush1.msra.mxu0 0.0
    %396 = vmatprep.subr.mxu0 0.0
    %397 = vmatpush1.msra.mxu0 0.0
    %398 = vmatprep.subr.mxu0 0.0
    %399 = vmatpush1.msra.mxu0 0.0
    %400 = vmatprep.subr.mxu0 0.0
    %401 = vmatpush1.msra.mxu0 0.0
    %402 = vmatprep.subr.mxu0 0.0
    %403 = vmatpush1.msra.mxu0 0.0
    %404 = vmatprep.subr.mxu0 0.0
    %405 = vmatpush1.msra.mxu0 0.0
    %406 = vmatprep.subr.mxu0 0.0
    %407 = vmatpush1.msra.mxu0 0.0
    %408 = vmatprep.subr.mxu0 0.0
    %409 = vmatpush1.msra.mxu0 0.0
    %410 = vmatprep.subr.mxu0 0.0
    %411 = vmatpush1.msra.mxu0 0.0
    %412 = vmatprep.subr.mxu0 0.0
    %413 = vmatpush1.msra.mxu0 0.0
    %414 = vmatprep.subr.mxu0 0.0
    %415 = vmatpush1.msra.mxu0 0.0
    %416 = vmatprep.subr.mxu0 0.0
    %417 = vmatpush1.msra.mxu0 0.0
    %418 = vmatprep.subr.mxu0 0.0
    %419 = vmatpush1.msra.mxu0 0.0
    %420 = vmatprep.subr.mxu0 0.0
    %421 = vmatpush1.msra.mxu0 0.0
    %422 = vmatprep.subr.mxu0 0.0
    %423 = vmatpush1.msra.mxu0 0.0
    %424 = vmatprep.subr.mxu0 0.0
    %425 = vmatpush1.msra.mxu0 0.0
    %426 = vmatprep.subr.mxu0 0.0
    %427 = vmatpush1.msra.mxu0 0.0
    %428 = vmatprep.subr.mxu0 0.0
    %429 = vmatpush1.msra.mxu0 0.0
    %430 = vmatprep.subr.mxu0 0.0
    %431 = vmatpush1.msra.mxu0 0.0
    %432 = vmatprep.subr.mxu0 0.0
    %433 = vmatpush1.msra.mxu0 0.0
    %434 = vmatprep.subr.mxu0 0.0
    %435 = vmatpush1.msra.mxu0 0.0
    %436 = vmatprep.subr.mxu0 0.0
    %437 = vmatpush1.msra.mxu0 0.0
    %438 = vmatprep.subr.mxu0 0.0
    %439 = vmatpush1.msra.mxu0 0.0
    %440 = vmatprep.subr.mxu0 0.0
    %441 = vmatpush1.msra.mxu0 0.0
    %442 = vmatprep.subr.mxu0 0.0
    %443 = vmatpush1.msra.mxu0 0.0
    %444 = vmatprep.mubr.f32.mxu0 0.0
    %445 = vmatmul.mubr.f32.gmra.mrb[0].mxu0 %v372
    %v446 = vpop.f32.mrb[0].mxu0
    %v447 = vadd.f32 0.0, %v446
    %v448 = vpop.f32.mrb[0].mxu0
    %449 = vmatprep.mubr.f32.mxu0 0.0
    %450 = vmatmul.mubr.f32.gmra.mrb[0].mxu0 %v375
    %v451 = vpop.f32.mrb[0].mxu0
    %v452 = vadd.f32 0.0, %v451
    %v453 = vpop.f32.mrb[0].mxu0
    %454 = vdwg.mxu0
    %v455 = vadd.f32 %v363, %v447
    %v456 = vadd.f32 %v368, %v452
    %v458 = vlaneseq
    %v459 = vshrl.u32 %v458, 7
    %v460 = vsub.s32 0, %v459
    %v461 = vrot.slane %v76, %v460
    %v463 = vadd.f32 %v455, %v461
    %v464 = vadd.f32 %v456, %v461
    %v465 = vmul.f32 %v463, 0.5
    %v466 = vmul.f32 %v464, 0.5
    %v467 = vmul.f32 %v463, 0.70710677
    %v468 = vmul.f32 %v464, 0.70710677
    %vm469 = vcmp.ge.f32.partialorder %v467, 0.0
    %vm470 = vcmp.ge.f32.partialorder %v468, 0.0
    %v471 = vsel %vm469, 1.0, -1.0
    %v472 = vsel %vm470, 1.0, -1.0
    %v473 = vand.u32 2147483647, %v467
    %v474 = vand.u32 2147483647, %v468
    %v475 = vmul.f32 %v473, 0.3275911
    %v476 = vmul.f32 %v474, 0.3275911
    %v477 = vadd.f32 %v475, 1.0
    %v478 = vadd.f32 %v476, 1.0
    %v479 = vrcp.pop %v477
    %v480 = vmul.f32 1.0, %v479
    %v481 = vrcp.pop %v478
    %v482 = vmul.f32 1.0, %v481
    %v483 = vmul.f32 %v480, 1.0614054
    %v484 = vmul.f32 %v482, 1.0614054
    %v485 = vadd.f32 %v483, -1.4531521
    %v486 = vadd.f32 %v484, -1.4531521
    %v487 = vmul.f32 %v485, %v480
    %v488 = vmul.f32 %v486, %v482
    %v489 = vadd.f32 %v487, 1.4214138
    %v490 = vadd.f32 %v488, 1.4214138
    %v491 = vmul.f32 %v489, %v480
    %v492 = vmul.f32 %v490, %v482
    %v493 = vadd.f32 %v491, -0.28449672
    %v494 = vadd.f32 %v492, -0.28449672
    %v495 = vmul.f32 %v493, %v480
    %v496 = vmul.f32 %v494, %v482
    %v497 = vadd.f32 %v495, 0.2548296
    %v498 = vadd.f32 %v496, 0.2548296
    %v499 = vmul.f32 %v497, %v480
    %v500 = vmul.f32 %v498, %v482
    %v501 = vmul.f32 %v473, %v473
    %v502 = vmul.f32 %v474, %v474
    %v503 = vsub.f32 0.0, %v501
    %v504 = vsub.f32 0.0, %v502
    %v505 = vmul.f32 %v503, 1.442695
    %v506 = vpow.pop %v505
    %v507 = vmul.f32 %v504, 1.442695
    %v508 = vpow.pop %v507
    %v509 = vmul.f32 %v499, %v506
    %v510 = vmul.f32 %v500, %v508
    %v511 = vsub.f32 1.0, %v509
    %v512 = vsub.f32 1.0, %v510
    %v513 = vmul.f32 %v471, %v511
    %v514 = vmul.f32 %v472, %v512
    %v515 = vadd.f32 %v513, 1.0
    %v516 = vadd.f32 %v514, 1.0
    %v517 = vmul.f32 %v465, %v515
    %v518 = vmul.f32 %v466, %v516
    %519 = vmatprep.subr.mxu0 %v78
    %520 = vmatpush1.msra.mxu0 %v77
    %521 = vmatprep.subr.mxu0 %v81
    %522 = vmatpush1.msra.mxu0 %v80
    %523 = vmatprep.subr.mxu0 %v84
    %524 = vmatpush1.msra.mxu0 %v83
    %525 = vmatprep.subr.mxu0 %v87
    %526 = vmatpush1.msra.mxu0 %v86
    %527 = vmatprep.subr.mxu0 %v90
    %528 = vmatpush1.msra.mxu0 %v89
    %529 = vmatprep.subr.mxu0 %v93
    %530 = vmatpush1.msra.mxu0 %v92
    %531 = vmatprep.subr.mxu0 %v96
    %532 = vmatpush1.msra.mxu0 %v95
    %533 = vmatprep.subr.mxu0 %v99
    %534 = vmatpush1.msra.mxu0 %v98
    %535 = vmatprep.subr.mxu0 %v102
    %536 = vmatpush1.msra.mxu0 %v101
    %537 = vmatprep.subr.mxu0 %v105
    %538 = vmatpush1.msra.mxu0 %v104
    %539 = vmatprep.subr.mxu0 %v108
    %540 = vmatpush1.msra.mxu0 %v107
    %541 = vmatprep.subr.mxu0 %v111
    %542 = vmatpush1.msra.mxu0 %v110
    %543 = vmatprep.subr.mxu0 %v114
    %544 = vmatpush1.msra.mxu0 %v113
    %545 = vmatprep.subr.mxu0 %v117
    %546 = vmatpush1.msra.mxu0 %v116
    %547 = vmatprep.subr.mxu0 %v120
    %548 = vmatpush1.msra.mxu0 %v119
    %549 = vmatprep.subr.mxu0 %v123
    %550 = vmatpush1.msra.mxu0 %v122
    %551 = vmatprep.subr.mxu0 0.0
    %552 = vmatpush1.msra.mxu0 0.0
    %553 = vmatprep.subr.mxu0 0.0
    %554 = vmatpush1.msra.mxu0 0.0
    %555 = vmatprep.subr.mxu0 0.0
    %556 = vmatpush1.msra.mxu0 0.0
    %557 = vmatprep.subr.mxu0 0.0
    %558 = vmatpush1.msra.mxu0 0.0
    %559 = vmatprep.subr.mxu0 0.0
    %560 = vmatpush1.msra.mxu0 0.0
    %561 = vmatprep.subr.mxu0 0.0
    %562 = vmatpush1.msra.mxu0 0.0
    %563 = vmatprep.subr.mxu0 0.0
    %564 = vmatpush1.msra.mxu0 0.0
    %565 = vmatprep.subr.mxu0 0.0
    %566 = vmatpush1.msra.mxu0 0.0
    %567 = vmatprep.subr.mxu0 0.0
    %568 = vmatpush1.msra.mxu0 0.0
    %569 = vmatprep.subr.mxu0 0.0
    %570 = vmatpush1.msra.mxu0 0.0
    %571 = vmatprep.subr.mxu0 0.0
    %572 = vmatpush1.msra.mxu0 0.0
    %573 = vmatprep.subr.mxu0 0.0
    %574 = vmatpush1.msra.mxu0 0.0
    %575 = vmatprep.subr.mxu0 0.0
    %576 = vmatpush1.msra.mxu0 0.0
    %577 = vmatprep.subr.mxu0 0.0
    %578 = vmatpush1.msra.mxu0 0.0
    %579 = vmatprep.subr.mxu0 0.0
    %580 = vmatpush1.msra.mxu0 0.0
    %581 = vmatprep.subr.mxu0 0.0
    %582 = vmatpush1.msra.mxu0 0.0
    %583 = vmatprep.mubr.f32.mxu0 0.0
    %584 = vmatmul.mubr.f32.gmra.mrb[0].mxu0 %v517
    %v585 = vpop.f32.mrb[0].mxu0
    %v586 = vadd.f32 0.0, %v585
    %v587 = vpop.f32.mrb[0].mxu0
    %v588 = vadd.f32 0.0, %v587
    %589 = vmatprep.mubr.f32.mxu0 0.0
    %590 = vmatmul.mubr.f32.gmra.mrb[0].mxu0 %v518
    %v591 = vpop.f32.mrb[0].mxu0
    %v592 = vadd.f32 0.0, %v591
    %v593 = vpop.f32.mrb[0].mxu0
    %v594 = vadd.f32 0.0, %v593
    %595 = vdwg.mxu0
    %596 = vmatprep.subr.mxu0 0.0
    %597 = vmatpush1.msra.mxu0 %v79
    %598 = vmatprep.subr.mxu0 0.0
    %599 = vmatpush1.msra.mxu0 %v82
    %600 = vmatprep.subr.mxu0 0.0
    %601 = vmatpush1.msra.mxu0 %v85
    %602 = vmatprep.subr.mxu0 0.0
    %603 = vmatpush1.msra.mxu0 %v88
    %604 = vmatprep.subr.mxu0 0.0
    %605 = vmatpush1.msra.mxu0 %v91
    %606 = vmatprep.subr.mxu0 0.0
    %607 = vmatpush1.msra.mxu0 %v94
    %608 = vmatprep.subr.mxu0 0.0
    %609 = vmatpush1.msra.mxu0 %v97
    %610 = vmatprep.subr.mxu0 0.0
    %611 = vmatpush1.msra.mxu0 %v100
    %612 = vmatprep.subr.mxu0 0.0
    %613 = vmatpush1.msra.mxu0 %v103
    %614 = vmatprep.subr.mxu0 0.0
    %615 = vmatpush1.msra.mxu0 %v106
    %616 = vmatprep.subr.mxu0 0.0
    %617 = vmatpush1.msra.mxu0 %v109
    %618 = vmatprep.subr.mxu0 0.0
    %619 = vmatpush1.msra.mxu0 %v112
    %620 = vmatprep.subr.mxu0 0.0
    %621 = vmatpush1.msra.mxu0 %v115
    %622 = vmatprep.subr.mxu0 0.0
    %623 = vmatpush1.msra.mxu0 %v118
    %624 = vmatprep.subr.mxu0 0.0
    %625 = vmatpush1.msra.mxu0 %v121
    %626 = vmatprep.subr.mxu0 0.0
    %627 = vmatpush1.msra.mxu0 %v124
    %628 = vmatprep.subr.mxu0 0.0
    %629 = vmatpush1.msra.mxu0 0.0
    %630 = vmatprep.subr.mxu0 0.0
    %631 = vmatpush1.msra.mxu0 0.0
    %632 = vmatprep.subr.mxu0 0.0
    %633 = vmatpush1.msra.mxu0 0.0
    %634 = vmatprep.subr.mxu0 0.0
    %635 = vmatpush1.msra.mxu0 0.0
    %636 = vmatprep.subr.mxu0 0.0
    %637 = vmatpush1.msra.mxu0 0.0
    %638 = vmatprep.subr.mxu0 0.0
    %639 = vmatpush1.msra.mxu0 0.0
    %640 = vmatprep.subr.mxu0 0.0
    %641 = vmatpush1.msra.mxu0 0.0
    %642 = vmatprep.subr.mxu0 0.0
    %643 = vmatpush1.msra.mxu0 0.0
    %644 = vmatprep.subr.mxu0 0.0
    %645 = vmatpush1.msra.mxu0 0.0
    %646 = vmatprep.subr.mxu0 0.0
    %647 = vmatpush1.msra.mxu0 0.0
    %648 = vmatprep.subr.mxu0 0.0
    %649 = vmatpush1.msra.mxu0 0.0
    %650 = vmatprep.subr.mxu0 0.0
    %651 = vmatpush1.msra.mxu0 0.0
    %652 = vmatprep.subr.mxu0 0.0
    %653 = vmatpush1.msra.mxu0 0.0
    %654 = vmatprep.subr.mxu0 0.0
    %655 = vmatpush1.msra.mxu0 0.0
    %656 = vmatprep.subr.mxu0 0.0
    %657 = vmatpush1.msra.mxu0 0.0
    %658 = vmatprep.subr.mxu0 0.0
    %659 = vmatpush1.msra.mxu0 0.0
    %660 = vmatprep.mubr.f32.mxu0 0.0
    %661 = vmatmul.mubr.f32.gmra.mrb[0].mxu0 %v517
    %v662 = vpop.f32.mrb[0].mxu0
    %v663 = vadd.f32 0.0, %v662
    %v664 = vpop.f32.mrb[0].mxu0
    %665 = vmatprep.mubr.f32.mxu0 0.0
    %666 = vmatmul.mubr.f32.gmra.mrb[0].mxu0 %v518
    %v667 = vpop.f32.mrb[0].mxu0
    %v668 = vadd.f32 0.0, %v667
    %v669 = vpop.f32.mrb[0].mxu0
    %670 = vdwg.mxu0
    %v672 = vsel %vm292, %v592, 0
    %674 = vmatprep.subr.mxu0 0.0
    %675 = vmatpush1.msra.mxu0 %v586
    %676 = vmatprep.subr.mxu0 0.0
    %677 = vmatpush1.msra.mxu0 %v672
    %678 = vmatprep.subr.mxu0 0.0
    %679 = vmatpush1.msra.mxu0 0.0
    %680 = vmatprep.subr.mxu0 0.0
    %681 = vmatpush1.msra.mxu0 0.0
    %682 = vmatprep.subr.mxu0 0.0
    %683 = vmatpush1.msra.mxu0 0.0
    %684 = vmatprep.subr.mxu0 0.0
    %685 = vmatpush1.msra.mxu0 0.0
    %686 = vmatprep.subr.mxu0 0.0
    %687 = vmatpush1.msra.mxu0 0.0
    %688 = vmatprep.subr.mxu0 0.0
    %689 = vmatpush1.msra.mxu0 0.0
    %690 = vmatprep.subr.mxu0 0.0
    %691 = vmatpush1.msra.mxu0 0.0
    %692 = vmatprep.subr.mxu0 0.0
    %693 = vmatpush1.msra.mxu0 0.0
    %694 = vmatprep.subr.mxu0 0.0
    %695 = vmatpush1.msra.mxu0 0.0
    %696 = vmatprep.subr.mxu0 0.0
    %697 = vmatpush1.msra.mxu0 0.0
    %698 = vmatprep.subr.mxu0 0.0
    %699 = vmatpush1.msra.mxu0 0.0
    %700 = vmatprep.subr.mxu0 0.0
    %701 = vmatpush1.msra.mxu0 0.0
    %702 = vmatprep.subr.mxu0 0.0
    %703 = vmatpush1.msra.mxu0 0.0
    %704 = vmatprep.subr.mxu0 0.0
    %705 = vmatpush1.msra.mxu0 0.0
    %706 = vmatprep.subr.mxu0 0.0
    %707 = vmatpush1.msra.mxu0 0.0
    %708 = vmatprep.subr.mxu0 0.0
    %709 = vmatpush1.msra.mxu0 0.0
    %710 = vmatprep.subr.mxu0 0.0
    %711 = vmatpush1.msra.mxu0 0.0
    %712 = vmatprep.subr.mxu0 0.0
    %713 = vmatpush1.msra.mxu0 0.0
    %714 = vmatprep.subr.mxu0 0.0
    %715 = vmatpush1.msra.mxu0 0.0
    %716 = vmatprep.subr.mxu0 0.0
    %717 = vmatpush1.msra.mxu0 0.0
    %718 = vmatprep.subr.mxu0 0.0
    %719 = vmatpush1.msra.mxu0 0.0
    %720 = vmatprep.subr.mxu0 0.0
    %721 = vmatpush1.msra.mxu0 0.0
    %722 = vmatprep.subr.mxu0 0.0
    %723 = vmatpush1.msra.mxu0 0.0
    %724 = vmatprep.subr.mxu0 0.0
    %725 = vmatpush1.msra.mxu0 0.0
    %726 = vmatprep.subr.mxu0 0.0
    %727 = vmatpush1.msra.mxu0 0.0
    %728 = vmatprep.subr.mxu0 0.0
    %729 = vmatpush1.msra.mxu0 0.0
    %730 = vmatprep.subr.mxu0 0.0
    %731 = vmatpush1.msra.mxu0 0.0
    %732 = vmatprep.subr.mxu0 0.0
    %733 = vmatpush1.msra.mxu0 0.0
    %734 = vmatprep.subr.mxu0 0.0
    %735 = vmatpush1.msra.mxu0 0.0
    %736 = vmatprep.subr.mxu0 0.0
    %737 = vmatpush1.msra.mxu0 0.0
    %738 = vmatprep.mubr.f32.mxu0 0.0
    %739 = vmatmul.mubr.f32.gmra.mrb[0].mxu0 %v287
    %v740 = vpop.f32.mrb[0].mxu0
    %v741 = vadd.f32 %v588, %v740
    %v742 = vpop.f32.mrb[0].mxu0
    %743 = vmatprep.mubr.f32.mxu0 0.0
    %744 = vmatmul.mubr.f32.gmra.mrb[0].mxu0 %v290
    %v745 = vpop.f32.mrb[0].mxu0
    %v746 = vadd.f32 %v594, %v745
    %v747 = vpop.f32.mrb[0].mxu0
    %748 = vdwg.mxu0
    %v750 = vsel %vm292, %v668, 0
    %752 = vmatprep.subr.mxu0 0.0
    %753 = vmatpush1.msra.mxu0 %v663
    %754 = vmatprep.subr.mxu0 0.0
    %755 = vmatpush1.msra.mxu0 %v750
    %756 = vmatprep.subr.mxu0 0.0
    %757 = vmatpush1.msra.mxu0 0.0
    %758 = vmatprep.subr.mxu0 0.0
    %759 = vmatpush1.msra.mxu0 0.0
    %760 = vmatprep.subr.mxu0 0.0
    %761 = vmatpush1.msra.mxu0 0.0
    %762 = vmatprep.subr.mxu0 0.0
    %763 = vmatpush1.msra.mxu0 0.0
    %764 = vmatprep.subr.mxu0 0.0
    %765 = vmatpush1.msra.mxu0 0.0
    %766 = vmatprep.subr.mxu0 0.0
    %767 = vmatpush1.msra.mxu0 0.0
    %768 = vmatprep.subr.mxu0 0.0
    %769 = vmatpush1.msra.mxu0 0.0
    %770 = vmatprep.subr.mxu0 0.0
    %771 = vmatpush1.msra.mxu0 0.0
    %772 = vmatprep.subr.mxu0 0.0
    %773 = vmatpush1.msra.mxu0 0.0
    %774 = vmatprep.subr.mxu0 0.0
    %775 = vmatpush1.msra.mxu0 0.0
    %776 = vmatprep.subr.mxu0 0.0
    %777 = vmatpush1.msra.mxu0 0.0
    %778 = vmatprep.subr.mxu0 0.0
    %779 = vmatpush1.msra.mxu0 0.0
    %780 = vmatprep.subr.mxu0 0.0
    %781 = vmatpush1.msra.mxu0 0.0
    %782 = vmatprep.subr.mxu0 0.0
    %783 = vmatpush1.msra.mxu0 0.0
    %784 = vmatprep.subr.mxu0 0.0
    %785 = vmatpush1.msra.mxu0 0.0
    %786 = vmatprep.subr.mxu0 0.0
    %787 = vmatpush1.msra.mxu0 0.0
    %788 = vmatprep.subr.mxu0 0.0
    %789 = vmatpush1.msra.mxu0 0.0
    %790 = vmatprep.subr.mxu0 0.0
    %791 = vmatpush1.msra.mxu0 0.0
    %792 = vmatprep.subr.mxu0 0.0
    %793 = vmatpush1.msra.mxu0 0.0
    %794 = vmatprep.subr.mxu0 0.0
    %795 = vmatpush1.msra.mxu0 0.0
    %796 = vmatprep.subr.mxu0 0.0
    %797 = vmatpush1.msra.mxu0 0.0
    %798 = vmatprep.subr.mxu0 0.0
    %799 = vmatpush1.msra.mxu0 0.0
    %800 = vmatprep.subr.mxu0 0.0
    %801 = vmatpush1.msra.mxu0 0.0
    %802 = vmatprep.subr.mxu0 0.0
    %803 = vmatpush1.msra.mxu0 0.0
    %804 = vmatprep.subr.mxu0 0.0
    %805 = vmatpush1.msra.mxu0 0.0
    %806 = vmatprep.subr.mxu0 0.0
    %807 = vmatpush1.msra.mxu0 0.0
    %808 = vmatprep.subr.mxu0 0.0
    %809 = vmatpush1.msra.mxu0 0.0
    %810 = vmatprep.subr.mxu0 0.0
    %811 = vmatpush1.msra.mxu0 0.0
    %812 = vmatprep.subr.mxu0 0.0
    %813 = vmatpush1.msra.mxu0 0.0
    %814 = vmatprep.subr.mxu0 0.0
    %815 = vmatpush1.msra.mxu0 0.0
    %816 = vmatprep.mubr.f32.mxu0 0.0
    %817 = vmatmul.mubr.f32.gmra.mrb[0].mxu0 %v372
    %v818 = vpop.f32.mrb[0].mxu0
    %v819 = vadd.f32 0.0, %v818
    %v820 = vpop.f32.mrb[0].mxu0
    %821 = vmatprep.mubr.f32.mxu0 0.0
    %822 = vmatmul.mubr.f32.gmra.mrb[0].mxu0 %v375
    %v823 = vpop.f32.mrb[0].mxu0
    %v824 = vadd.f32 0.0, %v823
    %v825 = vpop.f32.mrb[0].mxu0
    %826 = vdwg.mxu0
    %v827 = vadd.f32 %v741, %v819
    %v828 = vadd.f32 %v746, %v824
    %v830 = vlaneseq
    %v831 = vshrl.u32 %v830, 7
    %v832 = vsub.s32 0, %v831
    %v833 = vrot.slane %v125, %v832
    %v835 = vadd.f32 %v827, %v833
    %v836 = vadd.f32 %v828, %v833
    %837 = vst [vmem:[%s6] sm:$0xff] %v835
    %838 = vst [vmem:[%s6 + $0x8] sm:$0xf] %v836
    // Predicated region
    $region34: #{branch_4_fun.2} parent=1 // pred_check
      _
    $region35: #{branch_4_fun.2} parent=1 // pred_check_branch
      %840 = sbr.rel (0) target = $region37
    $region36: #{branch_4_fun.2} parent=1 // pred_region
      _
    $region37: #{branch_4_fun.2} parent=1 // pred_fallthru
      _
    // Predicated region
    $region38: #{branch_4_fun.2} parent=1 // pred_check
      _
    $region39: #{branch_4_fun.2} parent=1 // pred_check_branch
      %842 = sbr.rel (0) target = $region41
    $region40: #{branch_4_fun.2} parent=1 // pred_region
      _
    $region41: #{branch_4_fun.2} parent=1 // pred_fallthru
      _
    %843 = vsyncpa [#allocation3], 1
    %844 = vsyncpa [#allocation5], 1

// kernel: branch_5_fun.2
$region0: #{branch_5_fun.2}
  #allocation0 [shape = 'u32[]', space=smem, size = 0x4, offset = 0x4, fixed_abs, tag = 'smem constant byte address 0x4 - core index']
  #allocation1 [shape = 'u32[144,128]{1,0:T(1,128)}', space=vmem, size = 0x12000, scoped, tag = 'internal scratch']
  %s0 = inlined_call_operand.vmem [shape: f32[16,32], index: 0, kind: input, shape index: {}]
  %s1 = inlined_call_operand.hbm [shape: f32[32,384], index: 1, kind: input, shape index: {}]
  %s2 = inlined_call_operand.vmem [shape: f32[1,128], index: 2, kind: input, shape index: {}]
  %s3 = inlined_call_operand.hbm [shape: f32[128,384], index: 3, kind: input, shape index: {}]
  %s4 = inlined_call_operand.vmem [shape: f32[1,128], index: 4, kind: input, shape index: {}]
  %s5 = inlined_call_operand.vmem [shape: f32[2,16,16], index: 5, kind: input, shape index: {}]
  %s6 = inlined_call_operand.vmem [shape: f32[16,128], index: 6, kind: output, shape index: {}]
  %s7 = sld [smem:[#allocation0]]
  $region42: #{branch_5_fun.2} parent=0
    _
  %s9 = ssub.s32 1, %s7
  %s10 = scalar_select 0, %s9, %s7
  $region1: #{branch_5_fun.2} parent=0
    #allocation2 [shape = 'u8[49152]{0}', space=vmem, size = 0xc000, scoped, tag = 'input window, operand 1, single buffered']
    #allocation3 [shape = 's32[1]{0}', space=sflag, size = 0x4, scoped, tag = 'scoped memory for branch_5_fun.2']
    #allocation4 [shape = 'u8[196608]{0}', space=vmem, size = 0x30000, scoped, tag = 'input window, operand 3, single buffered']
    #allocation5 [shape = 's32[1]{0}', space=sflag, size = 0x4, scoped, tag = 'scoped memory for branch_5_fun.2']
    %11 = vsyncpa [#allocation3], 0
    %12 = vsyncpa [#allocation5], 0
    // Predicated region
    $region2: #{branch_5_fun.2} parent=1 // pred_check
      _
    $region3: #{branch_5_fun.2} parent=1 // pred_check_branch
      %14 = sbr.rel (0) target = $region5
    $region4: #{branch_5_fun.2} parent=1 // pred_region
      _
    $region5: #{branch_5_fun.2} parent=1 // pred_fallthru
      _
    // Predicated region
    $region6: #{branch_5_fun.2} parent=1 // pred_check
      _
    $region7: #{branch_5_fun.2} parent=1 // pred_check_branch
      %16 = sbr.rel (0) target = $region9
    $region8: #{branch_5_fun.2} parent=1 // pred_region
      %s18 = ssub.s32 1536, 1536
      %19 = vsyncadd [#allocation3], %s18
      %s20 = sshll.u32 [#allocation2], 4
      %s21 = int_to_ptr.vmem [resolvable:$true] %s20
      %26 = dma.hbm_to_vmem [thread:$0]  %s1, 1536, %s21, [#allocation3], 384, 384, 24
    $region9: #{branch_5_fun.2} parent=1 // pred_fallthru
      _
    // Predicated region
    $region10: #{branch_5_fun.2} parent=1 // pred_check
      _
    $region11: #{branch_5_fun.2} parent=1 // pred_check_branch
      %28 = sbr.rel (0) target = $region13
    $region12: #{branch_5_fun.2} parent=1 // pred_region
      _
    $region13: #{branch_5_fun.2} parent=1 // pred_fallthru
      _
    // Predicated region
    $region14: #{branch_5_fun.2} parent=1 // pred_check
      _
    $region15: #{branch_5_fun.2} parent=1 // pred_check_branch
      %30 = sbr.rel (0) target = $region17
    $region16: #{branch_5_fun.2} parent=1 // pred_region
      %s32 = ssub.s32 6144, 6144
      %33 = vsyncadd [#allocation5], %s32
      %s34 = sshll.u32 [#allocation4], 4
      %s35 = int_to_ptr.vmem [resolvable:$true] %s34
      %40 = dma.hbm_to_vmem [thread:$0]  %s3, 6144, %s35, [#allocation5], 384, 384, 24
    $region17: #{branch_5_fun.2} parent=1 // pred_fallthru
      _
    // Predicated region
    $region18: #{branch_5_fun.2} parent=1 // pred_check
      _
    $region19: #{branch_5_fun.2} parent=1 // pred_check_branch
      %42 = sbr.rel (0) target = $region21
    $region20: #{branch_5_fun.2} parent=1 // pred_region
      _
    $region21: #{branch_5_fun.2} parent=1 // pred_fallthru
      _
    // Predicated region
    $region22: #{branch_5_fun.2} parent=1 // pred_check
      _
    $region23: #{branch_5_fun.2} parent=1 // pred_check_branch
      %44 = sbr.rel (0) target = $region25
    $region24: #{branch_5_fun.2} parent=1 // pred_region
      _
    $region25: #{branch_5_fun.2} parent=1 // pred_fallthru
      _
    // Predicated region
    $region26: #{branch_5_fun.2} parent=1 // pred_check
      _
    $region27: #{branch_5_fun.2} parent=1 // pred_check_branch
      %46 = sbr.rel (0) target = $region29
    $region28: #{branch_5_fun.2} parent=1 // pred_region
      %47 = dma.done [#allocation3], 1536
    $region29: #{branch_5_fun.2} parent=1 // pred_fallthru
      _
    // Predicated region
    $region30: #{branch_5_fun.2} parent=1 // pred_check
      _
    $region31: #{branch_5_fun.2} parent=1 // pred_check_branch
      %49 = sbr.rel (0) target = $region33
    $region32: #{branch_5_fun.2} parent=1 // pred_region
      %50 = dma.done [#allocation5], 6144
    $region33: #{branch_5_fun.2} parent=1 // pred_fallthru
      _
    %v51 = vld [vmem:[%s5] sm:$0xff]
    %v52 = vld [vmem:[%s5 + $0x8] sm:$0xff]
    %s53 = scalar_lea.vmem %s5, 16
    %v54 = vld [vmem:[%s53] sm:$0xff]
    %v55 = vld [vmem:[%s53 + $0x8] sm:$0xff]
    %v56 = vld [vmem:[%s0] sm:$0xff]
    %v57 = vld [vmem:[%s0 + $0x8] sm:$0xff]
    %v58 = vld [vmem:[#allocation2] sm:$0xff]
    %v59 = vld [vmem:[#allocation2 + $0x8] sm:$0xff]
    %v60 = vld [vmem:[#allocation2 + $0x10] sm:$0xff]
    %v61 = vld [vmem:[#allocation2 + $0x18] sm:$0xff]
    %v62 = vld [vmem:[#allocation2 + $0x20] sm:$0xff]
    %v63 = vld [vmem:[#allocation2 + $0x28] sm:$0xff]
    %v64 = vld [vmem:[#allocation2 + $0x30] sm:$0xff]
    %v65 = vld [vmem:[#allocation2 + $0x38] sm:$0xff]
    %v66 = vld [vmem:[#allocation2 + $0x40] sm:$0xff]
    %v67 = vld [vmem:[#allocation2 + $0x48] sm:$0xff]
    %v68 = vld [vmem:[#allocation2 + $0x50] sm:$0xff]
    %v69 = vld [vmem:[#allocation2 + $0x58] sm:$0xff]
    %v70 = vld [vmem:[%s2] sm:$0x1]
    %v71 = vld [vmem:[#allocation4] sm:$0xff]
    %v72 = vld [vmem:[#allocation4 + $0x8] sm:$0xff]
    %v73 = vld [vmem:[#allocation4 + $0x10] sm:$0xff]
    %v74 = vld [vmem:[#allocation4 + $0x18] sm:$0xff]
    %v75 = vld [vmem:[#allocation4 + $0x20] sm:$0xff]
    %v76 = vld [vmem:[#allocation4 + $0x28] sm:$0xff]
    %v77 = vld [vmem:[#allocation4 + $0x30] sm:$0xff]
    %v78 = vld [vmem:[#allocation4 + $0x38] sm:$0xff]
    %v79 = vld [vmem:[#allocation4 + $0x40] sm:$0xff]
    %v80 = vld [vmem:[#allocation4 + $0x48] sm:$0xff]
    %v81 = vld [vmem:[#allocation4 + $0x50] sm:$0xff]
    %v82 = vld [vmem:[#allocation4 + $0x58] sm:$0xff]
    %v83 = vld [vmem:[#allocation4 + $0x60] sm:$0xff]
    %v84 = vld [vmem:[#allocation4 + $0x68] sm:$0xff]
    %v85 = vld [vmem:[#allocation4 + $0x70] sm:$0xff]
    %v86 = vld [vmem:[#allocation4 + $0x78] sm:$0xff]
    %v87 = vld [vmem:[#allocation4 + $0x80] sm:$0xff]
    %v88 = vld [vmem:[#allocation4 + $0x88] sm:$0xff]
    %v89 = vld [vmem:[#allocation4 + $0x90] sm:$0xff]
    %v90 = vld [vmem:[#allocation4 + $0x98] sm:$0xff]
    %v91 = vld [vmem:[#allocation4 + $0xa0] sm:$0xff]
    %v92 = vld [vmem:[#allocation4 + $0xa8] sm:$0xff]
    %v93 = vld [vmem:[#allocation4 + $0xb0] sm:$0xff]
    %v94 = vld [vmem:[#allocation4 + $0xb8] sm:$0xff]
    %v95 = vld [vmem:[#allocation4 + $0xc0] sm:$0xff]
    %v96 = vld [vmem:[#allocation4 + $0xc8] sm:$0xff]
    %v97 = vld [vmem:[#allocation4 + $0xd0] sm:$0xff]
    %v98 = vld [vmem:[#allocation4 + $0xd8] sm:$0xff]
    %v99 = vld [vmem:[#allocation4 + $0xe0] sm:$0xff]
    %v100 = vld [vmem:[#allocation4 + $0xe8] sm:$0xff]
    %v101 = vld [vmem:[#allocation4 + $0xf0] sm:$0xff]
    %v102 = vld [vmem:[#allocation4 + $0xf8] sm:$0xff]
    %v103 = vld [vmem:[#allocation4 + $0x100] sm:$0xff]
    %v104 = vld [vmem:[#allocation4 + $0x108] sm:$0xff]
    %v105 = vld [vmem:[#allocation4 + $0x110] sm:$0xff]
    %v106 = vld [vmem:[#allocation4 + $0x118] sm:$0xff]
    %v107 = vld [vmem:[#allocation4 + $0x120] sm:$0xff]
    %v108 = vld [vmem:[#allocation4 + $0x128] sm:$0xff]
    %v109 = vld [vmem:[#allocation4 + $0x130] sm:$0xff]
    %v110 = vld [vmem:[#allocation4 + $0x138] sm:$0xff]
    %v111 = vld [vmem:[#allocation4 + $0x140] sm:$0xff]
    %v112 = vld [vmem:[#allocation4 + $0x148] sm:$0xff]
    %v113 = vld [vmem:[#allocation4 + $0x150] sm:$0xff]
    %v114 = vld [vmem:[#allocation4 + $0x158] sm:$0xff]
    %v115 = vld [vmem:[#allocation4 + $0x160] sm:$0xff]
    %v116 = vld [vmem:[#allocation4 + $0x168] sm:$0xff]
    %v117 = vld [vmem:[#allocation4 + $0x170] sm:$0xff]
    %v118 = vld [vmem:[#allocation4 + $0x178] sm:$0xff]
    %v119 = vld [vmem:[%s4] sm:$0x1]
    %vm120 = vcmask 261120
    %v122 = vsel %vm120, %v56, 0
    %v125 = vsel %vm120, %v57, 0
    %127 = vmatprep.subr.mxu0 %v59
    %128 = vmatpush1.msra.mxu0 %v58
    %129 = vmatprep.subr.mxu0 %v62
    %130 = vmatpush1.msra.mxu0 %v61
    %131 = vmatprep.subr.mxu0 %v65
    %132 = vmatpush1.msra.mxu0 %v64
    %133 = vmatprep.subr.mxu0 %v68
    %134 = vmatpush1.msra.mxu0 %v67
    %135 = vmatprep.subr.mxu0 0.0
    %136 = vmatpush1.msra.mxu0 0.0
    %137 = vmatprep.subr.mxu0 0.0
    %138 = vmatpush1.msra.mxu0 0.0
    %139 = vmatprep.subr.mxu0 0.0
    %140 = vmatpush1.msra.mxu0 0.0
    %141 = vmatprep.subr.mxu0 0.0
    %142 = vmatpush1.msra.mxu0 0.0
    %143 = vmatprep.subr.mxu0 0.0
    %144 = vmatpush1.msra.mxu0 0.0
    %145 = vmatprep.subr.mxu0 0.0
    %146 = vmatpush1.msra.mxu0 0.0
    %147 = vmatprep.subr.mxu0 0.0
    %148 = vmatpush1.msra.mxu0 0.0
    %149 = vmatprep.subr.mxu0 0.0
    %150 = vmatpush1.msra.mxu0 0.0
    %151 = vmatprep.subr.mxu0 0.0
    %152 = vmatpush1.msra.mxu0 0.0
    %153 = vmatprep.subr.mxu0 0.0
    %154 = vmatpush1.msra.mxu0 0.0
    %155 = vmatprep.subr.mxu0 0.0
    %156 = vmatpush1.msra.mxu0 0.0
    %157 = vmatprep.subr.mxu0 0.0
    %158 = vmatpush1.msra.mxu0 0.0
    %159 = vmatprep.subr.mxu0 0.0
    %160 = vmatpush1.msra.mxu0 0.0
    %161 = vmatprep.subr.mxu0 0.0
    %162 = vmatpush1.msra.mxu0 0.0
    %163 = vmatprep.subr.mxu0 0.0
    %164 = vmatpush1.msra.mxu0 0.0
    %165 = vmatprep.subr.mxu0 0.0
    %166 = vmatpush1.msra.mxu0 0.0
    %167 = vmatprep.subr.mxu0 0.0
    %168 = vmatpush1.msra.mxu0 0.0
    %169 = vmatprep.subr.mxu0 0.0
    %170 = vmatpush1.msra.mxu0 0.0
    %171 = vmatprep.subr.mxu0 0.0
    %172 = vmatpush1.msra.mxu0 0.0
    %173 = vmatprep.subr.mxu0 0.0
    %174 = vmatpush1.msra.mxu0 0.0
    %175 = vmatprep.subr.mxu0 0.0
    %176 = vmatpush1.msra.mxu0 0.0
    %177 = vmatprep.subr.mxu0 0.0
    %178 = vmatpush1.msra.mxu0 0.0
    %179 = vmatprep.subr.mxu0 0.0
    %180 = vmatpush1.msra.mxu0 0.0
    %181 = vmatprep.subr.mxu0 0.0
    %182 = vmatpush1.msra.mxu0 0.0
    %183 = vmatprep.subr.mxu0 0.0
    %184 = vmatpush1.msra.mxu0 0.0
    %185 = vmatprep.subr.mxu0 0.0
    %186 = vmatpush1.msra.mxu0 0.0
    %187 = vmatprep.subr.mxu0 0.0
    %188 = vmatpush1.msra.mxu0 0.0
    %189 = vmatprep.subr.mxu0 0.0
    %190 = vmatpush1.msra.mxu0 0.0
    %191 = vmatprep.mubr.f32.mxu0 0.0
    %192 = vmatmul.mubr.f32.gmra.mrb[0].mxu0 %v122
    %v193 = vpop.f32.mrb[0].mxu0
    %v194 = vadd.f32 0.0, %v193
    %v195 = vpop.f32.mrb[0].mxu0
    %v196 = vadd.f32 0.0, %v195
    %197 = vmatprep.mubr.f32.mxu0 0.0
    %198 = vmatmul.mubr.f32.gmra.mrb[0].mxu0 %v125
    %v199 = vpop.f32.mrb[0].mxu0
    %v200 = vadd.f32 0.0, %v199
    %v201 = vpop.f32.mrb[0].mxu0
    %v202 = vadd.f32 0.0, %v201
    %203 = vdwg.mxu0
    %204 = vmatprep.subr.mxu0 0.0
    %205 = vmatpush1.msra.mxu0 %v60
    %206 = vmatprep.subr.mxu0 0.0
    %207 = vmatpush1.msra.mxu0 %v63
    %208 = vmatprep.subr.mxu0 0.0
    %209 = vmatpush1.msra.mxu0 %v66
    %210 = vmatprep.subr.mxu0 0.0
    %211 = vmatpush1.msra.mxu0 %v69
    %212 = vmatprep.subr.mxu0 0.0
    %213 = vmatpush1.msra.mxu0 0.0
    %214 = vmatprep.subr.mxu0 0.0
    %215 = vmatpush1.msra.mxu0 0.0
    %216 = vmatprep.subr.mxu0 0.0
    %217 = vmatpush1.msra.mxu0 0.0
    %218 = vmatprep.subr.mxu0 0.0
    %219 = vmatpush1.msra.mxu0 0.0
    %220 = vmatprep.subr.mxu0 0.0
    %221 = vmatpush1.msra.mxu0 0.0
    %222 = vmatprep.subr.mxu0 0.0
    %223 = vmatpush1.msra.mxu0 0.0
    %224 = vmatprep.subr.mxu0 0.0
    %225 = vmatpush1.msra.mxu0 0.0
    %226 = vmatprep.subr.mxu0 0.0
    %227 = vmatpush1.msra.mxu0 0.0
    %228 = vmatprep.subr.mxu0 0.0
    %229 = vmatpush1.msra.mxu0 0.0
    %230 = vmatprep.subr.mxu0 0.0
    %231 = vmatpush1.msra.mxu0 0.0
    %232 = vmatprep.subr.mxu0 0.0
    %233 = vmatpush1.msra.mxu0 0.0
    %234 = vmatprep.subr.mxu0 0.0
    %235 = vmatpush1.msra.mxu0 0.0
    %236 = vmatprep.subr.mxu0 0.0
    %237 = vmatpush1.msra.mxu0 0.0
    %238 = vmatprep.subr.mxu0 0.0
    %239 = vmatpush1.msra.mxu0 0.0
    %240 = vmatprep.subr.mxu0 0.0
    %241 = vmatpush1.msra.mxu0 0.0
    %242 = vmatprep.subr.mxu0 0.0
    %243 = vmatpush1.msra.mxu0 0.0
    %244 = vmatprep.subr.mxu0 0.0
    %245 = vmatpush1.msra.mxu0 0.0
    %246 = vmatprep.subr.mxu0 0.0
    %247 = vmatpush1.msra.mxu0 0.0
    %248 = vmatprep.subr.mxu0 0.0
    %249 = vmatpush1.msra.mxu0 0.0
    %250 = vmatprep.subr.mxu0 0.0
    %251 = vmatpush1.msra.mxu0 0.0
    %252 = vmatprep.subr.mxu0 0.0
    %253 = vmatpush1.msra.mxu0 0.0
    %254 = vmatprep.subr.mxu0 0.0
    %255 = vmatpush1.msra.mxu0 0.0
    %256 = vmatprep.subr.mxu0 0.0
    %257 = vmatpush1.msra.mxu0 0.0
    %258 = vmatprep.subr.mxu0 0.0
    %259 = vmatpush1.msra.mxu0 0.0
    %260 = vmatprep.subr.mxu0 0.0
    %261 = vmatpush1.msra.mxu0 0.0
    %262 = vmatprep.subr.mxu0 0.0
    %263 = vmatpush1.msra.mxu0 0.0
    %264 = vmatprep.subr.mxu0 0.0
    %265 = vmatpush1.msra.mxu0 0.0
    %266 = vmatprep.subr.mxu0 0.0
    %267 = vmatpush1.msra.mxu0 0.0
    %268 = vmatprep.mubr.f32.mxu0 0.0
    %269 = vmatmul.mubr.f32.gmra.mrb[0].mxu0 %v122
    %v270 = vpop.f32.mrb[0].mxu0
    %v271 = vadd.f32 0.0, %v270
    %v272 = vpop.f32.mrb[0].mxu0
    %273 = vmatprep.mubr.f32.mxu0 0.0
    %274 = vmatmul.mubr.f32.gmra.mrb[0].mxu0 %v125
    %v275 = vpop.f32.mrb[0].mxu0
    %v276 = vadd.f32 0.0, %v275
    %v277 = vpop.f32.mrb[0].mxu0
    %278 = vdwg.mxu0
    %vm279 = vcmask 130048
    %v281 = vsel %vm279, %v51, 0
    %v284 = vsel %vm279, %v52, 0
    %286 = vmatprep.subr.mxu0 0.0
    %287 = vmatpush1.msra.mxu0 %v194
    %288 = vmatprep.subr.mxu0 0.0
    %289 = vmatpush1.msra.mxu0 %v200
    %290 = vmatprep.subr.mxu0 0.0
    %291 = vmatpush1.msra.mxu0 0.0
    %292 = vmatprep.subr.mxu0 0.0
    %293 = vmatpush1.msra.mxu0 0.0
    %294 = vmatprep.subr.mxu0 0.0
    %295 = vmatpush1.msra.mxu0 0.0
    %296 = vmatprep.subr.mxu0 0.0
    %297 = vmatpush1.msra.mxu0 0.0
    %298 = vmatprep.subr.mxu0 0.0
    %299 = vmatpush1.msra.mxu0 0.0
    %300 = vmatprep.subr.mxu0 0.0
    %301 = vmatpush1.msra.mxu0 0.0
    %302 = vmatprep.subr.mxu0 0.0
    %303 = vmatpush1.msra.mxu0 0.0
    %304 = vmatprep.subr.mxu0 0.0
    %305 = vmatpush1.msra.mxu0 0.0
    %306 = vmatprep.subr.mxu0 0.0
    %307 = vmatpush1.msra.mxu0 0.0
    %308 = vmatprep.subr.mxu0 0.0
    %309 = vmatpush1.msra.mxu0 0.0
    %310 = vmatprep.subr.mxu0 0.0
    %311 = vmatpush1.msra.mxu0 0.0
    %312 = vmatprep.subr.mxu0 0.0
    %313 = vmatpush1.msra.mxu0 0.0
    %314 = vmatprep.subr.mxu0 0.0
    %315 = vmatpush1.msra.mxu0 0.0
    %316 = vmatprep.subr.mxu0 0.0
    %317 = vmatpush1.msra.mxu0 0.0
    %318 = vmatprep.subr.mxu0 0.0
    %319 = vmatpush1.msra.mxu0 0.0
    %320 = vmatprep.subr.mxu0 0.0
    %321 = vmatpush1.msra.mxu0 0.0
    %322 = vmatprep.subr.mxu0 0.0
    %323 = vmatpush1.msra.mxu0 0.0
    %324 = vmatprep.subr.mxu0 0.0
    %325 = vmatpush1.msra.mxu0 0.0
    %326 = vmatprep.subr.mxu0 0.0
    %327 = vmatpush1.msra.mxu0 0.0
    %328 = vmatprep.subr.mxu0 0.0
    %329 = vmatpush1.msra.mxu0 0.0
    %330 = vmatprep.subr.mxu0 0.0
    %331 = vmatpush1.msra.mxu0 0.0
    %332 = vmatprep.subr.mxu0 0.0
    %333 = vmatpush1.msra.mxu0 0.0
    %334 = vmatprep.subr.mxu0 0.0
    %335 = vmatpush1.msra.mxu0 0.0
    %336 = vmatprep.subr.mxu0 0.0
    %337 = vmatpush1.msra.mxu0 0.0
    %338 = vmatprep.subr.mxu0 0.0
    %339 = vmatpush1.msra.mxu0 0.0
    %340 = vmatprep.subr.mxu0 0.0
    %341 = vmatpush1.msra.mxu0 0.0
    %342 = vmatprep.subr.mxu0 0.0
    %343 = vmatpush1.msra.mxu0 0.0
    %344 = vmatprep.subr.mxu0 0.0
    %345 = vmatpush1.msra.mxu0 0.0
    %346 = vmatprep.subr.mxu0 0.0
    %347 = vmatpush1.msra.mxu0 0.0
    %348 = vmatprep.subr.mxu0 0.0
    %349 = vmatpush1.msra.mxu0 0.0
    %350 = vmatprep.mubr.f32.mxu0 0.0
    %351 = vmatmul.mubr.f32.gmra.mrb[0].mxu0 %v281
    %v352 = vpop.f32.mrb[0].mxu0
    %v353 = vadd.f32 %v196, %v352
    %v354 = vpop.f32.mrb[0].mxu0
    %355 = vmatprep.mubr.f32.mxu0 0.0
    %356 = vmatmul.mubr.f32.gmra.mrb[0].mxu0 %v284
    %v357 = vpop.f32.mrb[0].mxu0
    %v358 = vadd.f32 %v202, %v357
    %v359 = vpop.f32.mrb[0].mxu0
    %360 = vdwg.mxu0
    %v362 = vsel %vm279, %v54, 0
    %v365 = vsel %vm279, %v55, 0
    %367 = vmatprep.subr.mxu0 0.0
    %368 = vmatpush1.msra.mxu0 %v271
    %369 = vmatprep.subr.mxu0 0.0
    %370 = vmatpush1.msra.mxu0 %v276
    %371 = vmatprep.subr.mxu0 0.0
    %372 = vmatpush1.msra.mxu0 0.0
    %373 = vmatprep.subr.mxu0 0.0
    %374 = vmatpush1.msra.mxu0 0.0
    %375 = vmatprep.subr.mxu0 0.0
    %376 = vmatpush1.msra.mxu0 0.0
    %377 = vmatprep.subr.mxu0 0.0
    %378 = vmatpush1.msra.mxu0 0.0
    %379 = vmatprep.subr.mxu0 0.0
    %380 = vmatpush1.msra.mxu0 0.0
    %381 = vmatprep.subr.mxu0 0.0
    %382 = vmatpush1.msra.mxu0 0.0
    %383 = vmatprep.subr.mxu0 0.0
    %384 = vmatpush1.msra.mxu0 0.0
    %385 = vmatprep.subr.mxu0 0.0
    %386 = vmatpush1.msra.mxu0 0.0
    %387 = vmatprep.subr.mxu0 0.0
    %388 = vmatpush1.msra.mxu0 0.0
    %389 = vmatprep.subr.mxu0 0.0
    %390 = vmatpush1.msra.mxu0 0.0
    %391 = vmatprep.subr.mxu0 0.0
    %392 = vmatpush1.msra.mxu0 0.0
    %393 = vmatprep.subr.mxu0 0.0
    %394 = vmatpush1.msra.mxu0 0.0
    %395 = vmatprep.subr.mxu0 0.0
    %396 = vmatpush1.msra.mxu0 0.0
    %397 = vmatprep.subr.mxu0 0.0
    %398 = vmatpush1.msra.mxu0 0.0
    %399 = vmatprep.subr.mxu0 0.0
    %400 = vmatpush1.msra.mxu0 0.0
    %401 = vmatprep.subr.mxu0 0.0
    %402 = vmatpush1.msra.mxu0 0.0
    %403 = vmatprep.subr.mxu0 0.0
    %404 = vmatpush1.msra.mxu0 0.0
    %405 = vmatprep.subr.mxu0 0.0
    %406 = vmatpush1.msra.mxu0 0.0
    %407 = vmatprep.subr.mxu0 0.0
    %408 = vmatpush1.msra.mxu0 0.0
    %409 = vmatprep.subr.mxu0 0.0
    %410 = vmatpush1.msra.mxu0 0.0
    %411 = vmatprep.subr.mxu0 0.0
    %412 = vmatpush1.msra.mxu0 0.0
    %413 = vmatprep.subr.mxu0 0.0
    %414 = vmatpush1.msra.mxu0 0.0
    %415 = vmatprep.subr.mxu0 0.0
    %416 = vmatpush1.msra.mxu0 0.0
    %417 = vmatprep.subr.mxu0 0.0
    %418 = vmatpush1.msra.mxu0 0.0
    %419 = vmatprep.subr.mxu0 0.0
    %420 = vmatpush1.msra.mxu0 0.0
    %421 = vmatprep.subr.mxu0 0.0
    %422 = vmatpush1.msra.mxu0 0.0
    %423 = vmatprep.subr.mxu0 0.0
    %424 = vmatpush1.msra.mxu0 0.0
    %425 = vmatprep.subr.mxu0 0.0
    %426 = vmatpush1.msra.mxu0 0.0
    %427 = vmatprep.subr.mxu0 0.0
    %428 = vmatpush1.msra.mxu0 0.0
    %429 = vmatprep.subr.mxu0 0.0
    %430 = vmatpush1.msra.mxu0 0.0
    %431 = vmatprep.mubr.f32.mxu0 0.0
    %432 = vmatmul.mubr.f32.gmra.mrb[0].mxu0 %v362
    %v433 = vpop.f32.mrb[0].mxu0
    %v434 = vadd.f32 0.0, %v433
    %v435 = vpop.f32.mrb[0].mxu0
    %436 = vmatprep.mubr.f32.mxu0 0.0
    %437 = vmatmul.mubr.f32.gmra.mrb[0].mxu0 %v365
    %v438 = vpop.f32.mrb[0].mxu0
    %v439 = vadd.f32 0.0, %v438
    %v440 = vpop.f32.mrb[0].mxu0
    %441 = vdwg.mxu0
    %v442 = vadd.f32 %v353, %v434
    %v443 = vadd.f32 %v358, %v439
    %v445 = vlaneseq
    %v446 = vshrl.u32 %v445, 7
    %v447 = vsub.s32 0, %v446
    %v448 = vrot.slane %v70, %v447
    %v450 = vadd.f32 %v442, %v448
    %v451 = vadd.f32 %v443, %v448
    %v452 = vmul.f32 %v450, 0.5
    %v453 = vmul.f32 %v451, 0.5
    %v454 = vmul.f32 %v450, 0.70710677
    %v455 = vmul.f32 %v451, 0.70710677
    %vm456 = vcmp.ge.f32.partialorder %v454, 0.0
    %vm457 = vcmp.ge.f32.partialorder %v455, 0.0
    %v458 = vsel %vm456, 1.0, -1.0
    %v459 = vsel %vm457, 1.0, -1.0
    %v460 = vand.u32 2147483647, %v454
    %v461 = vand.u32 2147483647, %v455
    %v462 = vmul.f32 %v460, 0.3275911
    %v463 = vmul.f32 %v461, 0.3275911
    %v464 = vadd.f32 %v462, 1.0
    %v465 = vadd.f32 %v463, 1.0
    %v466 = vrcp.pop %v464
    %v467 = vmul.f32 1.0, %v466
    %v468 = vrcp.pop %v465
    %v469 = vmul.f32 1.0, %v468
    %v470 = vmul.f32 %v467, 1.0614054
    %v471 = vmul.f32 %v469, 1.0614054
    %v472 = vadd.f32 %v470, -1.4531521
    %v473 = vadd.f32 %v471, -1.4531521
    %v474 = vmul.f32 %v472, %v467
    %v475 = vmul.f32 %v473, %v469
    %v476 = vadd.f32 %v474, 1.4214138
    %v477 = vadd.f32 %v475, 1.4214138
    %v478 = vmul.f32 %v476, %v467
    %v479 = vmul.f32 %v477, %v469
    %v480 = vadd.f32 %v478, -0.28449672
    %v481 = vadd.f32 %v479, -0.28449672
    %v482 = vmul.f32 %v480, %v467
    %v483 = vmul.f32 %v481, %v469
    %v484 = vadd.f32 %v482, 0.2548296
    %v485 = vadd.f32 %v483, 0.2548296
    %v486 = vmul.f32 %v484, %v467
    %v487 = vmul.f32 %v485, %v469
    %v488 = vmul.f32 %v460, %v460
    %v489 = vmul.f32 %v461, %v461
    %v490 = vsub.f32 0.0, %v488
    %v491 = vsub.f32 0.0, %v489
    %v492 = vmul.f32 %v490, 1.442695
    %v493 = vpow.pop %v492
    %v494 = vmul.f32 %v491, 1.442695
    %v495 = vpow.pop %v494
    %v496 = vmul.f32 %v486, %v493
    %v497 = vmul.f32 %v487, %v495
    %v498 = vsub.f32 1.0, %v496
    %v499 = vsub.f32 1.0, %v497
    %v500 = vmul.f32 %v458, %v498
    %v501 = vmul.f32 %v459, %v499
    %v502 = vadd.f32 %v500, 1.0
    %v503 = vadd.f32 %v501, 1.0
    %v504 = vmul.f32 %v452, %v502
    %v505 = vmul.f32 %v453, %v503
    %506 = vmatprep.subr.mxu0 %v72
    %507 = vmatpush1.msra.mxu0 %v71
    %508 = vmatprep.subr.mxu0 %v75
    %509 = vmatpush1.msra.mxu0 %v74
    %510 = vmatprep.subr.mxu0 %v78
    %511 = vmatpush1.msra.mxu0 %v77
    %512 = vmatprep.subr.mxu0 %v81
    %513 = vmatpush1.msra.mxu0 %v80
    %514 = vmatprep.subr.mxu0 %v84
    %515 = vmatpush1.msra.mxu0 %v83
    %516 = vmatprep.subr.mxu0 %v87
    %517 = vmatpush1.msra.mxu0 %v86
    %518 = vmatprep.subr.mxu0 %v90
    %519 = vmatpush1.msra.mxu0 %v89
    %520 = vmatprep.subr.mxu0 %v93
    %521 = vmatpush1.msra.mxu0 %v92
    %522 = vmatprep.subr.mxu0 %v96
    %523 = vmatpush1.msra.mxu0 %v95
    %524 = vmatprep.subr.mxu0 %v99
    %525 = vmatpush1.msra.mxu0 %v98
    %526 = vmatprep.subr.mxu0 %v102
    %527 = vmatpush1.msra.mxu0 %v101
    %528 = vmatprep.subr.mxu0 %v105
    %529 = vmatpush1.msra.mxu0 %v104
    %530 = vmatprep.subr.mxu0 %v108
    %531 = vmatpush1.msra.mxu0 %v107
    %532 = vmatprep.subr.mxu0 %v111
    %533 = vmatpush1.msra.mxu0 %v110
    %534 = vmatprep.subr.mxu0 %v114
    %535 = vmatpush1.msra.mxu0 %v113
    %536 = vmatprep.subr.mxu0 %v117
    %537 = vmatpush1.msra.mxu0 %v116
    %538 = vmatprep.subr.mxu0 0.0
    %539 = vmatpush1.msra.mxu0 0.0
    %540 = vmatprep.subr.mxu0 0.0
    %541 = vmatpush1.msra.mxu0 0.0
    %542 = vmatprep.subr.mxu0 0.0
    %543 = vmatpush1.msra.mxu0 0.0
    %544 = vmatprep.subr.mxu0 0.0
    %545 = vmatpush1.msra.mxu0 0.0
    %546 = vmatprep.subr.mxu0 0.0
    %547 = vmatpush1.msra.mxu0 0.0
    %548 = vmatprep.subr.mxu0 0.0
    %549 = vmatpush1.msra.mxu0 0.0
    %550 = vmatprep.subr.mxu0 0.0
    %551 = vmatpush1.msra.mxu0 0.0
    %552 = vmatprep.subr.mxu0 0.0
    %553 = vmatpush1.msra.mxu0 0.0
    %554 = vmatprep.subr.mxu0 0.0
    %555 = vmatpush1.msra.mxu0 0.0
    %556 = vmatprep.subr.mxu0 0.0
    %557 = vmatpush1.msra.mxu0 0.0
    %558 = vmatprep.subr.mxu0 0.0
    %559 = vmatpush1.msra.mxu0 0.0
    %560 = vmatprep.subr.mxu0 0.0
    %561 = vmatpush1.msra.mxu0 0.0
    %562 = vmatprep.subr.mxu0 0.0
    %563 = vmatpush1.msra.mxu0 0.0
    %564 = vmatprep.subr.mxu0 0.0
    %565 = vmatpush1.msra.mxu0 0.0
    %566 = vmatprep.subr.mxu0 0.0
    %567 = vmatpush1.msra.mxu0 0.0
    %568 = vmatprep.subr.mxu0 0.0
    %569 = vmatpush1.msra.mxu0 0.0
    %570 = vmatprep.mubr.f32.mxu0 0.0
    %571 = vmatmul.mubr.f32.gmra.mrb[0].mxu0 %v504
    %v572 = vpop.f32.mrb[0].mxu0
    %v573 = vadd.f32 0.0, %v572
    %v574 = vpop.f32.mrb[0].mxu0
    %v575 = vadd.f32 0.0, %v574
    %576 = vmatprep.mubr.f32.mxu0 0.0
    %577 = vmatmul.mubr.f32.gmra.mrb[0].mxu0 %v505
    %v578 = vpop.f32.mrb[0].mxu0
    %v579 = vadd.f32 0.0, %v578
    %v580 = vpop.f32.mrb[0].mxu0
    %v581 = vadd.f32 0.0, %v580
    %582 = vdwg.mxu0
    %583 = vmatprep.subr.mxu0 0.0
    %584 = vmatpush1.msra.mxu0 %v73
    %585 = vmatprep.subr.mxu0 0.0
    %586 = vmatpush1.msra.mxu0 %v76
    %587 = vmatprep.subr.mxu0 0.0
    %588 = vmatpush1.msra.mxu0 %v79
    %589 = vmatprep.subr.mxu0 0.0
    %590 = vmatpush1.msra.mxu0 %v82
    %591 = vmatprep.subr.mxu0 0.0
    %592 = vmatpush1.msra.mxu0 %v85
    %593 = vmatprep.subr.mxu0 0.0
    %594 = vmatpush1.msra.mxu0 %v88
    %595 = vmatprep.subr.mxu0 0.0
    %596 = vmatpush1.msra.mxu0 %v91
    %597 = vmatprep.subr.mxu0 0.0
    %598 = vmatpush1.msra.mxu0 %v94
    %599 = vmatprep.subr.mxu0 0.0
    %600 = vmatpush1.msra.mxu0 %v97
    %601 = vmatprep.subr.mxu0 0.0
    %602 = vmatpush1.msra.mxu0 %v100
    %603 = vmatprep.subr.mxu0 0.0
    %604 = vmatpush1.msra.mxu0 %v103
    %605 = vmatprep.subr.mxu0 0.0
    %606 = vmatpush1.msra.mxu0 %v106
    %607 = vmatprep.subr.mxu0 0.0
    %608 = vmatpush1.msra.mxu0 %v109
    %609 = vmatprep.subr.mxu0 0.0
    %610 = vmatpush1.msra.mxu0 %v112
    %611 = vmatprep.subr.mxu0 0.0
    %612 = vmatpush1.msra.mxu0 %v115
    %613 = vmatprep.subr.mxu0 0.0
    %614 = vmatpush1.msra.mxu0 %v118
    %615 = vmatprep.subr.mxu0 0.0
    %616 = vmatpush1.msra.mxu0 0.0
    %617 = vmatprep.subr.mxu0 0.0
    %618 = vmatpush1.msra.mxu0 0.0
    %619 = vmatprep.subr.mxu0 0.0
    %620 = vmatpush1.msra.mxu0 0.0
    %621 = vmatprep.subr.mxu0 0.0
    %622 = vmatpush1.msra.mxu0 0.0
    %623 = vmatprep.subr.mxu0 0.0
    %624 = vmatpush1.msra.mxu0 0.0
    %625 = vmatprep.subr.mxu0 0.0
    %626 = vmatpush1.msra.mxu0 0.0
    %627 = vmatprep.subr.mxu0 0.0
    %628 = vmatpush1.msra.mxu0 0.0
    %629 = vmatprep.subr.mxu0 0.0
    %630 = vmatpush1.msra.mxu0 0.0
    %631 = vmatprep.subr.mxu0 0.0
    %632 = vmatpush1.msra.mxu0 0.0
    %633 = vmatprep.subr.mxu0 0.0
    %634 = vmatpush1.msra.mxu0 0.0
    %635 = vmatprep.subr.mxu0 0.0
    %636 = vmatpush1.msra.mxu0 0.0
    %637 = vmatprep.subr.mxu0 0.0
    %638 = vmatpush1.msra.mxu0 0.0
    %639 = vmatprep.subr.mxu0 0.0
    %640 = vmatpush1.msra.mxu0 0.0
    %641 = vmatprep.subr.mxu0 0.0
    %642 = vmatpush1.msra.mxu0 0.0
    %643 = vmatprep.subr.mxu0 0.0
    %644 = vmatpush1.msra.mxu0 0.0
    %645 = vmatprep.subr.mxu0 0.0
    %646 = vmatpush1.msra.mxu0 0.0
    %647 = vmatprep.mubr.f32.mxu0 0.0
    %648 = vmatmul.mubr.f32.gmra.mrb[0].mxu0 %v504
    %v649 = vpop.f32.mrb[0].mxu0
    %v650 = vadd.f32 0.0, %v649
    %v651 = vpop.f32.mrb[0].mxu0
    %652 = vmatprep.mubr.f32.mxu0 0.0
    %653 = vmatmul.mubr.f32.gmra.mrb[0].mxu0 %v505
    %v654 = vpop.f32.mrb[0].mxu0
    %v655 = vadd.f32 0.0, %v654
    %v656 = vpop.f32.mrb[0].mxu0
    %657 = vdwg.mxu0
    %658 = vmatprep.subr.mxu0 0.0
    %659 = vmatpush1.msra.mxu0 %v573
    %660 = vmatprep.subr.mxu0 0.0
    %661 = vmatpush1.msra.mxu0 %v579
    %662 = vmatprep.subr.mxu0 0.0
    %663 = vmatpush1.msra.mxu0 0.0
    %664 = vmatprep.subr.mxu0 0.0
    %665 = vmatpush1.msra.mxu0 0.0
    %666 = vmatprep.subr.mxu0 0.0
    %667 = vmatpush1.msra.mxu0 0.0
    %668 = vmatprep.subr.mxu0 0.0
    %669 = vmatpush1.msra.mxu0 0.0
    %670 = vmatprep.subr.mxu0 0.0
    %671 = vmatpush1.msra.mxu0 0.0
    %672 = vmatprep.subr.mxu0 0.0
    %673 = vmatpush1.msra.mxu0 0.0
    %674 = vmatprep.subr.mxu0 0.0
    %675 = vmatpush1.msra.mxu0 0.0
    %676 = vmatprep.subr.mxu0 0.0
    %677 = vmatpush1.msra.mxu0 0.0
    %678 = vmatprep.subr.mxu0 0.0
    %679 = vmatpush1.msra.mxu0 0.0
    %680 = vmatprep.subr.mxu0 0.0
    %681 = vmatpush1.msra.mxu0 0.0
    %682 = vmatprep.subr.mxu0 0.0
    %683 = vmatpush1.msra.mxu0 0.0
    %684 = vmatprep.subr.mxu0 0.0
    %685 = vmatpush1.msra.mxu0 0.0
    %686 = vmatprep.subr.mxu0 0.0
    %687 = vmatpush1.msra.mxu0 0.0
    %688 = vmatprep.subr.mxu0 0.0
    %689 = vmatpush1.msra.mxu0 0.0
    %690 = vmatprep.subr.mxu0 0.0
    %691 = vmatpush1.msra.mxu0 0.0
    %692 = vmatprep.subr.mxu0 0.0
    %693 = vmatpush1.msra.mxu0 0.0
    %694 = vmatprep.subr.mxu0 0.0
    %695 = vmatpush1.msra.mxu0 0.0
    %696 = vmatprep.subr.mxu0 0.0
    %697 = vmatpush1.msra.mxu0 0.0
    %698 = vmatprep.subr.mxu0 0.0
    %699 = vmatpush1.msra.mxu0 0.0
    %700 = vmatprep.subr.mxu0 0.0
    %701 = vmatpush1.msra.mxu0 0.0
    %702 = vmatprep.subr.mxu0 0.0
    %703 = vmatpush1.msra.mxu0 0.0
    %704 = vmatprep.subr.mxu0 0.0
    %705 = vmatpush1.msra.mxu0 0.0
    %706 = vmatprep.subr.mxu0 0.0
    %707 = vmatpush1.msra.mxu0 0.0
    %708 = vmatprep.subr.mxu0 0.0
    %709 = vmatpush1.msra.mxu0 0.0
    %710 = vmatprep.subr.mxu0 0.0
    %711 = vmatpush1.msra.mxu0 0.0
    %712 = vmatprep.subr.mxu0 0.0
    %713 = vmatpush1.msra.mxu0 0.0
    %714 = vmatprep.subr.mxu0 0.0
    %715 = vmatpush1.msra.mxu0 0.0
    %716 = vmatprep.subr.mxu0 0.0
    %717 = vmatpush1.msra.mxu0 0.0
    %718 = vmatprep.subr.mxu0 0.0
    %719 = vmatpush1.msra.mxu0 0.0
    %720 = vmatprep.subr.mxu0 0.0
    %721 = vmatpush1.msra.mxu0 0.0
    %722 = vmatprep.mubr.f32.mxu0 0.0
    %723 = vmatmul.mubr.f32.gmra.mrb[0].mxu0 %v281
    %v724 = vpop.f32.mrb[0].mxu0
    %v725 = vadd.f32 %v575, %v724
    %v726 = vpop.f32.mrb[0].mxu0
    %727 = vmatprep.mubr.f32.mxu0 0.0
    %728 = vmatmul.mubr.f32.gmra.mrb[0].mxu0 %v284
    %v729 = vpop.f32.mrb[0].mxu0
    %v730 = vadd.f32 %v581, %v729
    %v731 = vpop.f32.mrb[0].mxu0
    %732 = vdwg.mxu0
    %733 = vmatprep.subr.mxu0 0.0
    %734 = vmatpush1.msra.mxu0 %v650
    %735 = vmatprep.subr.mxu0 0.0
    %736 = vmatpush1.msra.mxu0 %v655
    %737 = vmatprep.subr.mxu0 0.0
    %738 = vmatpush1.msra.mxu0 0.0
    %739 = vmatprep.subr.mxu0 0.0
    %740 = vmatpush1.msra.mxu0 0.0
    %741 = vmatprep.subr.mxu0 0.0
    %742 = vmatpush1.msra.mxu0 0.0
    %743 = vmatprep.subr.mxu0 0.0
    %744 = vmatpush1.msra.mxu0 0.0
    %745 = vmatprep.subr.mxu0 0.0
    %746 = vmatpush1.msra.mxu0 0.0
    %747 = vmatprep.subr.mxu0 0.0
    %748 = vmatpush1.msra.mxu0 0.0
    %749 = vmatprep.subr.mxu0 0.0
    %750 = vmatpush1.msra.mxu0 0.0
    %751 = vmatprep.subr.mxu0 0.0
    %752 = vmatpush1.msra.mxu0 0.0
    %753 = vmatprep.subr.mxu0 0.0
    %754 = vmatpush1.msra.mxu0 0.0
    %755 = vmatprep.subr.mxu0 0.0
    %756 = vmatpush1.msra.mxu0 0.0
    %757 = vmatprep.subr.mxu0 0.0
    %758 = vmatpush1.msra.mxu0 0.0
    %759 = vmatprep.subr.mxu0 0.0
    %760 = vmatpush1.msra.mxu0 0.0
    %761 = vmatprep.subr.mxu0 0.0
    %762 = vmatpush1.msra.mxu0 0.0
    %763 = vmatprep.subr.mxu0 0.0
    %764 = vmatpush1.msra.mxu0 0.0
    %765 = vmatprep.subr.mxu0 0.0
    %766 = vmatpush1.msra.mxu0 0.0
    %767 = vmatprep.subr.mxu0 0.0
    %768 = vmatpush1.msra.mxu0 0.0
    %769 = vmatprep.subr.mxu0 0.0
    %770 = vmatpush1.msra.mxu0 0.0
    %771 = vmatprep.subr.mxu0 0.0
    %772 = vmatpush1.msra.mxu0 0.0
    %773 = vmatprep.subr.mxu0 0.0
    %774 = vmatpush1.msra.mxu0 0.0
    %775 = vmatprep.subr.mxu0 0.0
    %776 = vmatpush1.msra.mxu0 0.0
    %777 = vmatprep.subr.mxu0 0.0
    %778 = vmatpush1.msra.mxu0 0.0
    %779 = vmatprep.subr.mxu0 0.0
    %780 = vmatpush1.msra.mxu0 0.0
    %781 = vmatprep.subr.mxu0 0.0
    %782 = vmatpush1.msra.mxu0 0.0
    %783 = vmatprep.subr.mxu0 0.0
    %784 = vmatpush1.msra.mxu0 0.0
    %785 = vmatprep.subr.mxu0 0.0
    %786 = vmatpush1.msra.mxu0 0.0
    %787 = vmatprep.subr.mxu0 0.0
    %788 = vmatpush1.msra.mxu0 0.0
    %789 = vmatprep.subr.mxu0 0.0
    %790 = vmatpush1.msra.mxu0 0.0
    %791 = vmatprep.subr.mxu0 0.0
    %792 = vmatpush1.msra.mxu0 0.0
    %793 = vmatprep.subr.mxu0 0.0
    %794 = vmatpush1.msra.mxu0 0.0
    %795 = vmatprep.subr.mxu0 0.0
    %796 = vmatpush1.msra.mxu0 0.0
    %797 = vmatprep.mubr.f32.mxu0 0.0
    %798 = vmatmul.mubr.f32.gmra.mrb[0].mxu0 %v362
    %v799 = vpop.f32.mrb[0].mxu0
    %v800 = vadd.f32 0.0, %v799
    %v801 = vpop.f32.mrb[0].mxu0
    %802 = vmatprep.mubr.f32.mxu0 0.0
    %803 = vmatmul.mubr.f32.gmra.mrb[0].mxu0 %v365
    %v804 = vpop.f32.mrb[0].mxu0
    %v805 = vadd.f32 0.0, %v804
    %v806 = vpop.f32.mrb[0].mxu0
    %807 = vdwg.mxu0
    %v808 = vadd.f32 %v725, %v800
    %v809 = vadd.f32 %v730, %v805
    %v811 = vlaneseq
    %v812 = vshrl.u32 %v811, 7
    %v813 = vsub.s32 0, %v812
    %v814 = vrot.slane %v119, %v813
    %v816 = vadd.f32 %v808, %v814
    %v817 = vadd.f32 %v809, %v814
    %818 = vst [vmem:[%s6] sm:$0xff] %v816
    %819 = vst [vmem:[%s6 + $0x8] sm:$0xff] %v817
    // Predicated region
    $region34: #{branch_5_fun.2} parent=1 // pred_check
      _
    $region35: #{branch_5_fun.2} parent=1 // pred_check_branch
      %821 = sbr.rel (0) target = $region37
    $region36: #{branch_5_fun.2} parent=1 // pred_region
      _
    $region37: #{branch_5_fun.2} parent=1 // pred_fallthru
      _
    // Predicated region
    $region38: #{branch_5_fun.2} parent=1 // pred_check
      _
    $region39: #{branch_5_fun.2} parent=1 // pred_check_branch
      %823 = sbr.rel (0) target = $region41
    $region40: #{branch_5_fun.2} parent=1 // pred_region
      _
    $region41: #{branch_5_fun.2} parent=1 // pred_fallthru
      _
    %824 = vsyncpa [#allocation3], 1
    %825 = vsyncpa [#allocation5], 1

// kernel: _forward_impl.1
$region0: #{_forward_impl.1}
  #allocation0 [shape = 'u32[]', space=smem, size = 0x4, offset = 0x4, fixed_abs, tag = 'smem constant byte address 0x4 - core index']
  #allocation1 [shape = 'u32[144,128]{1,0:T(1,128)}', space=vmem, size = 0x12000, scoped, tag = 'internal scratch']
  %s0 = inlined_call_operand.vmem [shape: f32[2,2,1], index: 0, kind: input, shape index: {}]
  %s1 = inlined_call_operand.vmem [shape: f32[2,2,256], index: 1, kind: input, shape index: {}]
  %s2 = inlined_call_operand.vmem [shape: f32[2,256], index: 2, kind: input, shape index: {}]
  %s3 = inlined_call_operand.vmem [shape: f32[2,256], index: 3, kind: output, shape index: {}]
  %s4 = sld [smem:[#allocation0]]
  $region22: #{_forward_impl.1} parent=0
    _
  %s6 = ssub.s32 1, %s4
  %s7 = scalar_select 0, %s6, %s4
  // Predicated region
  $region2: #{_forward_impl.1} parent=0 // pred_check
    _
  $region3: #{_forward_impl.1} parent=0 // pred_check_branch
    %9 = sbr.rel (0) target = $region5
  $region4: #{_forward_impl.1} parent=0 // pred_region
    _
  $region5: #{_forward_impl.1} parent=0 // pred_fallthru
    _
  // Predicated region
  $region6: #{_forward_impl.1} parent=0 // pred_check
    _
  $region7: #{_forward_impl.1} parent=0 // pred_check_branch
    %11 = sbr.rel (0) target = $region9
  $region8: #{_forward_impl.1} parent=0 // pred_region
    _
  $region9: #{_forward_impl.1} parent=0 // pred_fallthru
    _
  // Predicated region
  $region10: #{_forward_impl.1} parent=0 // pred_check
    _
  $region11: #{_forward_impl.1} parent=0 // pred_check_branch
    %13 = sbr.rel (0) target = $region13
  $region12: #{_forward_impl.1} parent=0 // pred_region
    _
  $region13: #{_forward_impl.1} parent=0 // pred_fallthru
    _
  %v14 = vld [vmem:[%s2] sm:$0xf]
  %v15 = vld [vmem:[%s0] sm:$0x3]
  %v16 = vld [vmem:[%s1] sm:$0xf]
  %18 = vset.pattern.permute.xlu0 0
  %19 = vperm.xlu0 %18, %v15
  %v20 = vpop.permute.xlu0 %19
  %v24 = vunpack.c.l.s4 1983009808
  %v25 = vunpack.c.0.s8 %v24
  %v26 = vlaneseq
  %v27 = vshrl.u32 %v26, 7
  %v28 = vsub.s32 %v25, %v27
  %v29 = vrot.slane %v16, %v28
  %v30 = vcombine.high %v29, %v29
  %v33 = vmul.f32 %v20, %v29
  %v34 = vmul.f32 %v20, %v30
  %v37 = vcombine.low %v33, %v34
  %v39 = vunpack.c.l.s4 1983009808
  %v40 = vunpack.c.0.s8 %v39
  %v41 = vlaneseq
  %v42 = vshrl.u32 %v41, 7
  %v43 = vsub.s32 %v40, %v42
  %v44 = vrot.slane %v37, %v43
  %v46 = vadd.f32 %v14, %v44
  %s47 = scalar_lea.vmem %s0, 2
  %v48 = vld [vmem:[%s47] sm:$0x3]
  %s49 = scalar_lea.vmem %s1, 4
  %v50 = vld [vmem:[%s49] sm:$0xf]
  %52 = vset.pattern.permute.xlu0 0
  %53 = vperm.xlu0 %52, %v48
  %v54 = vpop.permute.xlu0 %53
  %v58 = vunpack.c.l.s4 1983009808
  %v59 = vunpack.c.0.s8 %v58
  %v60 = vlaneseq
  %v61 = vshrl.u32 %v60, 7
  %v62 = vsub.s32 %v59, %v61
  %v63 = vrot.slane %v50, %v62
  %v64 = vcombine.high %v63, %v63
  %v67 = vmul.f32 %v54, %v63
  %v68 = vmul.f32 %v54, %v64
  %v71 = vcombine.low %v67, %v68
  %v73 = vunpack.c.l.s4 1983009808
  %v74 = vunpack.c.0.s8 %v73
  %v75 = vlaneseq
  %v76 = vshrl.u32 %v75, 7
  %v77 = vsub.s32 %v74, %v76
  %v78 = vrot.slane %v71, %v77
  %v80 = vadd.f32 %v46, %v78
  %81 = vst [vmem:[%s3] sm:$0xf] %v80
  // Predicated region
  $region14: #{_forward_impl.1} parent=0 // pred_check
    _
  $region15: #{_forward_impl.1} parent=0 // pred_check_branch
    %83 = sbr.rel (0) target = $region17
  $region16: #{_forward_impl.1} parent=0 // pred_region
    _
  $region17: #{_forward_impl.1} parent=0 // pred_fallthru
    _
  // Predicated region
  $region18: #{_forward_impl.1} parent=0 // pred_check
    _
  $region19: #{_forward_impl.1} parent=0 // pred_check_branch
    %85 = sbr.rel (0) target = $region21
  $region20: #{_forward_impl.1} parent=0 // pred_region
    _
  $region21: #{_forward_impl.1} parent=0 // pred_fallthru
    _

// kernel: branch_2_fun.3
$region0: #{branch_2_fun.3}
  #allocation0 [shape = 'u32[]', space=smem, size = 0x4, offset = 0x4, fixed_abs, tag = 'smem constant byte address 0x4 - core index']
  #allocation1 [shape = 'u32[144,128]{1,0:T(1,128)}', space=vmem, size = 0x12000, scoped, tag = 'internal scratch']
  %s0 = inlined_call_operand.vmem [shape: f32[8,80], index: 0, kind: input, shape index: {}]
  %s1 = inlined_call_operand.hbm [shape: f32[80,768], index: 1, kind: input, shape index: {}]
  %s2 = inlined_call_operand.vmem [shape: f32[1,256], index: 2, kind: input, shape index: {}]
  %s3 = inlined_call_operand.hbm [shape: f32[256,384], index: 3, kind: input, shape index: {}]
  %s4 = inlined_call_operand.vmem [shape: f32[1,128], index: 4, kind: input, shape index: {}]
  %s5 = inlined_call_operand.vmem [shape: f32[2,8,8], index: 5, kind: input, shape index: {}]
  %s6 = inlined_call_operand.vmem [shape: f32[8,128], index: 6, kind: output, shape index: {}]
  %s7 = sld [smem:[#allocation0]]
  $region42: #{branch_2_fun.3} parent=0
    _
  %s9 = ssub.s32 1, %s7
  %s10 = scalar_select 0, %s9, %s7
  $region1: #{branch_2_fun.3} parent=0
    #allocation2 [shape = 'u8[245760]{0}', space=vmem, size = 0x3c000, scoped, tag = 'input window, operand 1, single buffered']
    #allocation3 [shape = 's32[1]{0}', space=sflag, size = 0x4, scoped, tag = 'scoped memory for branch_2_fun.3']
    #allocation4 [shape = 'u8[393216]{0}', space=vmem, size = 0x60000, scoped, tag = 'input window, operand 3, single buffered']
    #allocation5 [shape = 's32[1]{0}', space=sflag, size = 0x4, scoped, tag = 'scoped memory for branch_2_fun.3']
    %11 = vsyncpa [#allocation3], 0
    %12 = vsyncpa [#allocation5], 0
    // Predicated region
    $region2: #{branch_2_fun.3} parent=1 // pred_check
      _
    $region3: #{branch_2_fun.3} parent=1 // pred_check_branch
      %14 = sbr.rel (0) target = $region5
    $region4: #{branch_2_fun.3} parent=1 // pred_region
      _
    $region5: #{branch_2_fun.3} parent=1 // pred_fallthru
      _
    // Predicated region
    $region6: #{branch_2_fun.3} parent=1 // pred_check
      _
    $region7: #{branch_2_fun.3} parent=1 // pred_check_branch
      %16 = sbr.rel (0) target = $region9
    $region8: #{branch_2_fun.3} parent=1 // pred_region
      %s18 = ssub.s32 7680, 7680
      %19 = vsyncadd [#allocation3], %s18
      %s20 = sshll.u32 [#allocation2], 4
      %s21 = int_to_ptr.vmem [resolvable:$true] %s20
      %26 = dma.hbm_to_vmem [thread:$0]  %s1, 7680, %s21, [#allocation3], 768, 768, 48
    $region9: #{branch_2_fun.3} parent=1 // pred_fallthru
      _
    // Predicated region
    $region10: #{branch_2_fun.3} parent=1 // pred_check
      _
    $region11: #{branch_2_fun.3} parent=1 // pred_check_branch
      %28 = sbr.rel (0) target = $region13
    $region12: #{branch_2_fun.3} parent=1 // pred_region
      _
    $region13: #{branch_2_fun.3} parent=1 // pred_fallthru
      _
    // Predicated region
    $region14: #{branch_2_fun.3} parent=1 // pred_check
      _
    $region15: #{branch_2_fun.3} parent=1 // pred_check_branch
      %30 = sbr.rel (0) target = $region17
    $region16: #{branch_2_fun.3} parent=1 // pred_region
      %s32 = ssub.s32 12288, 12288
      %33 = vsyncadd [#allocation5], %s32
      %s34 = sshll.u32 [#allocation4], 4
      %s35 = int_to_ptr.vmem [resolvable:$true] %s34
      %40 = dma.hbm_to_vmem [thread:$0]  %s3, 12288, %s35, [#allocation5], 384, 384, 24
    $region17: #{branch_2_fun.3} parent=1 // pred_fallthru
      _
    // Predicated region
    $region18: #{branch_2_fun.3} parent=1 // pred_check
      _
    $region19: #{branch_2_fun.3} parent=1 // pred_check_branch
      %42 = sbr.rel (0) target = $region21
    $region20: #{branch_2_fun.3} parent=1 // pred_region
      _
    $region21: #{branch_2_fun.3} parent=1 // pred_fallthru
      _
    // Predicated region
    $region22: #{branch_2_fun.3} parent=1 // pred_check
      _
    $region23: #{branch_2_fun.3} parent=1 // pred_check_branch
      %44 = sbr.rel (0) target = $region25
    $region24: #{branch_2_fun.3} parent=1 // pred_region
      _
    $region25: #{branch_2_fun.3} parent=1 // pred_fallthru
      _
    // Predicated region
    $region26: #{branch_2_fun.3} parent=1 // pred_check
      _
    $region27: #{branch_2_fun.3} parent=1 // pred_check_branch
      %46 = sbr.rel (0) target = $region29
    $region28: #{branch_2_fun.3} parent=1 // pred_region
      %47 = dma.done [#allocation3], 7680
    $region29: #{branch_2_fun.3} parent=1 // pred_fallthru
      _
    // Predicated region
    $region30: #{branch_2_fun.3} parent=1 // pred_check
      _
    $region31: #{branch_2_fun.3} parent=1 // pred_check_branch
      %49 = sbr.rel (0) target = $region33
    $region32: #{branch_2_fun.3} parent=1 // pred_region
      %50 = dma.done [#allocation5], 12288
    $region33: #{branch_2_fun.3} parent=1 // pred_fallthru
      _
    %v51 = vld [vmem:[%s5] sm:$0xff]
    %s52 = scalar_lea.vmem %s5, 8
    %v53 = vld [vmem:[%s52] sm:$0xff]
    %v54 = vld [vmem:[%s0] sm:$0xff]
    %v55 = vld [vmem:[#allocation2] sm:$0xff]
    %v56 = vld [vmem:[#allocation2 + $0x8] sm:$0xff]
    %v57 = vld [vmem:[#allocation2 + $0x10] sm:$0xff]
    %v58 = vld [vmem:[#allocation2 + $0x18] sm:$0xff]
    %v59 = vld [vmem:[#allocation2 + $0x20] sm:$0xff]
    %v60 = vld [vmem:[#allocation2 + $0x28] sm:$0xff]
    %v61 = vld [vmem:[#allocation2 + $0x30] sm:$0xff]
    %v62 = vld [vmem:[#allocation2 + $0x38] sm:$0xff]
    %v63 = vld [vmem:[#allocation2 + $0x40] sm:$0xff]
    %v64 = vld [vmem:[#allocation2 + $0x48] sm:$0xff]
    %v65 = vld [vmem:[#allocation2 + $0x50] sm:$0xff]
    %v66 = vld [vmem:[#allocation2 + $0x58] sm:$0xff]
    %v67 = vld [vmem:[#allocation2 + $0x60] sm:$0xff]
    %v68 = vld [vmem:[#allocation2 + $0x68] sm:$0xff]
    %v69 = vld [vmem:[#allocation2 + $0x70] sm:$0xff]
    %v70 = vld [vmem:[#allocation2 + $0x78] sm:$0xff]
    %v71 = vld [vmem:[#allocation2 + $0x80] sm:$0xff]
    %v72 = vld [vmem:[#allocation2 + $0x88] sm:$0xff]
    %v73 = vld [vmem:[#allocation2 + $0x90] sm:$0xff]
    %v74 = vld [vmem:[#allocation2 + $0x98] sm:$0xff]
    %v75 = vld [vmem:[#allocation2 + $0xa0] sm:$0xff]
    %v76 = vld [vmem:[#allocation2 + $0xa8] sm:$0xff]
    %v77 = vld [vmem:[#allocation2 + $0xb0] sm:$0xff]
    %v78 = vld [vmem:[#allocation2 + $0xb8] sm:$0xff]
    %v79 = vld [vmem:[#allocation2 + $0xc0] sm:$0xff]
    %v80 = vld [vmem:[#allocation2 + $0xc8] sm:$0xff]
    %v81 = vld [vmem:[#allocation2 + $0xd0] sm:$0xff]
    %v82 = vld [vmem:[#allocation2 + $0xd8] sm:$0xff]
    %v83 = vld [vmem:[#allocation2 + $0xe0] sm:$0xff]
    %v84 = vld [vmem:[#allocation2 + $0xe8] sm:$0xff]
    %v85 = vld [vmem:[#allocation2 + $0xf0] sm:$0xff]
    %v86 = vld [vmem:[#allocation2 + $0xf8] sm:$0xff]
    %v87 = vld [vmem:[#allocation2 + $0x100] sm:$0xff]
    %v88 = vld [vmem:[#allocation2 + $0x108] sm:$0xff]
    %v89 = vld [vmem:[#allocation2 + $0x110] sm:$0xff]
    %v90 = vld [vmem:[#allocation2 + $0x118] sm:$0xff]
    %v91 = vld [vmem:[#allocation2 + $0x120] sm:$0xff]
    %v92 = vld [vmem:[#allocation2 + $0x128] sm:$0xff]
    %v93 = vld [vmem:[#allocation2 + $0x130] sm:$0xff]
    %v94 = vld [vmem:[#allocation2 + $0x138] sm:$0xff]
    %v95 = vld [vmem:[#allocation2 + $0x140] sm:$0xff]
    %v96 = vld [vmem:[#allocation2 + $0x148] sm:$0xff]
    %v97 = vld [vmem:[#allocation2 + $0x150] sm:$0xff]
    %v98 = vld [vmem:[#allocation2 + $0x158] sm:$0xff]
    %v99 = vld [vmem:[#allocation2 + $0x160] sm:$0xff]
    %v100 = vld [vmem:[#allocation2 + $0x168] sm:$0xff]
    %v101 = vld [vmem:[#allocation2 + $0x170] sm:$0xff]
    %v102 = vld [vmem:[#allocation2 + $0x178] sm:$0xff]
    %v103 = vld [vmem:[#allocation2 + $0x180] sm:$0xff]
    %v104 = vld [vmem:[#allocation2 + $0x188] sm:$0xff]
    %v105 = vld [vmem:[#allocation2 + $0x190] sm:$0xff]
    %v106 = vld [vmem:[#allocation2 + $0x198] sm:$0xff]
    %v107 = vld [vmem:[#allocation2 + $0x1a0] sm:$0xff]
    %v108 = vld [vmem:[#allocation2 + $0x1a8] sm:$0xff]
    %v109 = vld [vmem:[#allocation2 + $0x1b0] sm:$0xff]
    %v110 = vld [vmem:[#allocation2 + $0x1b8] sm:$0xff]
    %v111 = vld [vmem:[#allocation2 + $0x1c0] sm:$0xff]
    %v112 = vld [vmem:[#allocation2 + $0x1c8] sm:$0xff]
    %v113 = vld [vmem:[#allocation2 + $0x1d0] sm:$0xff]
    %v114 = vld [vmem:[#allocation2 + $0x1d8] sm:$0xff]
    %v115 = vld [vmem:[%s2] sm:$0x3]
    %v116 = vld [vmem:[#allocation4] sm:$0xff]
    %v117 = vld [vmem:[#allocation4 + $0x8] sm:$0xff]
    %v118 = vld [vmem:[#allocation4 + $0x10] sm:$0xff]
    %v119 = vld [vmem:[#allocation4 + $0x18] sm:$0xff]
    %v120 = vld [vmem:[#allocation4 + $0x20] sm:$0xff]
    %v121 = vld [vmem:[#allocation4 + $0x28] sm:$0xff]
    %v122 = vld [vmem:[#allocation4 + $0x30] sm:$0xff]
    %v123 = vld [vmem:[#allocation4 + $0x38] sm:$0xff]
    %v124 = vld [vmem:[#allocation4 + $0x40] sm:$0xff]
    %v125 = vld [vmem:[#allocation4 + $0x48] sm:$0xff]
    %v126 = vld [vmem:[#allocation4 + $0x50] sm:$0xff]
    %v127 = vld [vmem:[#allocation4 + $0x58] sm:$0xff]
    %v128 = vld [vmem:[#allocation4 + $0x60] sm:$0xff]
    %v129 = vld [vmem:[#allocation4 + $0x68] sm:$0xff]
    %v130 = vld [vmem:[#allocation4 + $0x70] sm:$0xff]
    %v131 = vld [vmem:[#allocation4 + $0x78] sm:$0xff]
    %v132 = vld [vmem:[#allocation4 + $0x80] sm:$0xff]
    %v133 = vld [vmem:[#allocation4 + $0x88] sm:$0xff]
    %v134 = vld [vmem:[#allocation4 + $0x90] sm:$0xff]
    %v135 = vld [vmem:[#allocation4 + $0x98] sm:$0xff]
    %v136 = vld [vmem:[#allocation4 + $0xa0] sm:$0xff]
    %v137 = vld [vmem:[#allocation4 + $0xa8] sm:$0xff]
    %v138 = vld [vmem:[#allocation4 + $0xb0] sm:$0xff]
    %v139 = vld [vmem:[#allocation4 + $0xb8] sm:$0xff]
    %v140 = vld [vmem:[#allocation4 + $0xc0] sm:$0xff]
    %v141 = vld [vmem:[#allocation4 + $0xc8] sm:$0xff]
    %v142 = vld [vmem:[#allocation4 + $0xd0] sm:$0xff]
    %v143 = vld [vmem:[#allocation4 + $0xd8] sm:$0xff]
    %v144 = vld [vmem:[#allocation4 + $0xe0] sm:$0xff]
    %v145 = vld [vmem:[#allocation4 + $0xe8] sm:$0xff]
    %v146 = vld [vmem:[#allocation4 + $0xf0] sm:$0xff]
    %v147 = vld [vmem:[#allocation4 + $0xf8] sm:$0xff]
    %v148 = vld [vmem:[#allocation4 + $0x100] sm:$0xff]
    %v149 = vld [vmem:[#allocation4 + $0x108] sm:$0xff]
    %v150 = vld [vmem:[#allocation4 + $0x110] sm:$0xff]
    %v151 = vld [vmem:[#allocation4 + $0x118] sm:$0xff]
    %v152 = vld [vmem:[#allocation4 + $0x120] sm:$0xff]
    %v153 = vld [vmem:[#allocation4 + $0x128] sm:$0xff]
    %v154 = vld [vmem:[#allocation4 + $0x130] sm:$0xff]
    %v155 = vld [vmem:[#allocation4 + $0x138] sm:$0xff]
    %v156 = vld [vmem:[#allocation4 + $0x140] sm:$0xff]
    %v157 = vld [vmem:[#allocation4 + $0x148] sm:$0xff]
    %v158 = vld [vmem:[#allocation4 + $0x150] sm:$0xff]
    %v159 = vld [vmem:[#allocation4 + $0x158] sm:$0xff]
    %v160 = vld [vmem:[#allocation4 + $0x160] sm:$0xff]
    %v161 = vld [vmem:[#allocation4 + $0x168] sm:$0xff]
    %v162 = vld [vmem:[#allocation4 + $0x170] sm:$0xff]
    %v163 = vld [vmem:[#allocation4 + $0x178] sm:$0xff]
    %v164 = vld [vmem:[#allocation4 + $0x180] sm:$0xff]
    %v165 = vld [vmem:[#allocation4 + $0x188] sm:$0xff]
    %v166 = vld [vmem:[#allocation4 + $0x190] sm:$0xff]
    %v167 = vld [vmem:[#allocation4 + $0x198] sm:$0xff]
    %v168 = vld [vmem:[#allocation4 + $0x1a0] sm:$0xff]
    %v169 = vld [vmem:[#allocation4 + $0x1a8] sm:$0xff]
    %v170 = vld [vmem:[#allocation4 + $0x1b0] sm:$0xff]
    %v171 = vld [vmem:[#allocation4 + $0x1b8] sm:$0xff]
    %v172 = vld [vmem:[#allocation4 + $0x1c0] sm:$0xff]
    %v173 = vld [vmem:[#allocation4 + $0x1c8] sm:$0xff]
    %v174 = vld [vmem:[#allocation4 + $0x1d0] sm:$0xff]
    %v175 = vld [vmem:[#allocation4 + $0x1d8] sm:$0xff]
    %v176 = vld [vmem:[#allocation4 + $0x1e0] sm:$0xff]
    %v177 = vld [vmem:[#allocation4 + $0x1e8] sm:$0xff]
    %v178 = vld [vmem:[#allocation4 + $0x1f0] sm:$0xff]
    %v179 = vld [vmem:[#allocation4 + $0x1f8] sm:$0xff]
    %v180 = vld [vmem:[#allocation4 + $0x200] sm:$0xff]
    %v181 = vld [vmem:[#allocation4 + $0x208] sm:$0xff]
    %v182 = vld [vmem:[#allocation4 + $0x210] sm:$0xff]
    %v183 = vld [vmem:[#allocation4 + $0x218] sm:$0xff]
    %v184 = vld [vmem:[#allocation4 + $0x220] sm:$0xff]
    %v185 = vld [vmem:[#allocation4 + $0x228] sm:$0xff]
    %v186 = vld [vmem:[#allocation4 + $0x230] sm:$0xff]
    %v187 = vld [vmem:[#allocation4 + $0x238] sm:$0xff]
    %v188 = vld [vmem:[#allocation4 + $0x240] sm:$0xff]
    %v189 = vld [vmem:[#allocation4 + $0x248] sm:$0xff]
    %v190 = vld [vmem:[#allocation4 + $0x250] sm:$0xff]
    %v191 = vld [vmem:[#allocation4 + $0x258] sm:$0xff]
    %v192 = vld [vmem:[#allocation4 + $0x260] sm:$0xff]
    %v193 = vld [vmem:[#allocation4 + $0x268] sm:$0xff]
    %v194 = vld [vmem:[#allocation4 + $0x270] sm:$0xff]
    %v195 = vld [vmem:[#allocation4 + $0x278] sm:$0xff]
    %v196 = vld [vmem:[#allocation4 + $0x280] sm:$0xff]
    %v197 = vld [vmem:[#allocation4 + $0x288] sm:$0xff]
    %v198 = vld [vmem:[#allocation4 + $0x290] sm:$0xff]
    %v199 = vld [vmem:[#allocation4 + $0x298] sm:$0xff]
    %v200 = vld [vmem:[#allocation4 + $0x2a0] sm:$0xff]
    %v201 = vld [vmem:[#allocation4 + $0x2a8] sm:$0xff]
    %v202 = vld [vmem:[#allocation4 + $0x2b0] sm:$0xff]
    %v203 = vld [vmem:[#allocation4 + $0x2b8] sm:$0xff]
    %v204 = vld [vmem:[#allocation4 + $0x2c0] sm:$0xff]
    %v205 = vld [vmem:[#allocation4 + $0x2c8] sm:$0xff]
    %v206 = vld [vmem:[#allocation4 + $0x2d0] sm:$0xff]
    %v207 = vld [vmem:[#allocation4 + $0x2d8] sm:$0xff]
    %v208 = vld [vmem:[#allocation4 + $0x2e0] sm:$0xff]
    %v209 = vld [vmem:[#allocation4 + $0x2e8] sm:$0xff]
    %v210 = vld [vmem:[#allocation4 + $0x2f0] sm:$0xff]
    %v211 = vld [vmem:[#allocation4 + $0x2f8] sm:$0xff]
    %v212 = vld [vmem:[%s4] sm:$0x1]
    %vm213 = vcmask 654336
    %v215 = vsel %vm213, %v54, 0
    %217 = vmatprep.subr.mxu0 %v56
    %218 = vmatpush1.msra.mxu0 %v55
    %219 = vmatprep.subr.mxu0 %v62
    %220 = vmatpush1.msra.mxu0 %v61
    %221 = vmatprep.subr.mxu0 %v68
    %222 = vmatpush1.msra.mxu0 %v67
    %223 = vmatprep.subr.mxu0 %v74
    %224 = vmatpush1.msra.mxu0 %v73
    %225 = vmatprep.subr.mxu0 %v80
    %226 = vmatpush1.msra.mxu0 %v79
    %227 = vmatprep.subr.mxu0 %v86
    %228 = vmatpush1.msra.mxu0 %v85
    %229 = vmatprep.subr.mxu0 %v92
    %230 = vmatpush1.msra.mxu0 %v91
    %231 = vmatprep.subr.mxu0 %v98
    %232 = vmatpush1.msra.mxu0 %v97
    %233 = vmatprep.subr.mxu0 %v104
    %234 = vmatpush1.msra.mxu0 %v103
    %235 = vmatprep.subr.mxu0 %v110
    %236 = vmatpush1.msra.mxu0 %v109
    %237 = vmatprep.subr.mxu0 0.0
    %238 = vmatpush1.msra.mxu0 0.0
    %239 = vmatprep.subr.mxu0 0.0
    %240 = vmatpush1.msra.mxu0 0.0
    %241 = vmatprep.subr.mxu0 0.0
    %242 = vmatpush1.msra.mxu0 0.0
    %243 = vmatprep.subr.mxu0 0.0
    %244 = vmatpush1.msra.mxu0 0.0
    %245 = vmatprep.subr.mxu0 0.0
    %246 = vmatpush1.msra.mxu0 0.0
    %247 = vmatprep.subr.mxu0 0.0
    %248 = vmatpush1.msra.mxu0 0.0
    %249 = vmatprep.subr.mxu0 0.0
    %250 = vmatpush1.msra.mxu0 0.0
    %251 = vmatprep.subr.mxu0 0.0
    %252 = vmatpush1.msra.mxu0 0.0
    %253 = vmatprep.subr.mxu0 0.0
    %254 = vmatpush1.msra.mxu0 0.0
    %255 = vmatprep.subr.mxu0 0.0
    %256 = vmatpush1.msra.mxu0 0.0
    %257 = vmatprep.subr.mxu0 0.0
    %258 = vmatpush1.msra.mxu0 0.0
    %259 = vmatprep.subr.mxu0 0.0
    %260 = vmatpush1.msra.mxu0 0.0
    %261 = vmatprep.subr.mxu0 0.0
    %262 = vmatpush1.msra.mxu0 0.0
    %263 = vmatprep.subr.mxu0 0.0
    %264 = vmatpush1.msra.mxu0 0.0
    %265 = vmatprep.subr.mxu0 0.0
    %266 = vmatpush1.msra.mxu0 0.0
    %267 = vmatprep.subr.mxu0 0.0
    %268 = vmatpush1.msra.mxu0 0.0
    %269 = vmatprep.subr.mxu0 0.0
    %270 = vmatpush1.msra.mxu0 0.0
    %271 = vmatprep.subr.mxu0 0.0
    %272 = vmatpush1.msra.mxu0 0.0
    %273 = vmatprep.subr.mxu0 0.0
    %274 = vmatpush1.msra.mxu0 0.0
    %275 = vmatprep.subr.mxu0 0.0
    %276 = vmatpush1.msra.mxu0 0.0
    %277 = vmatprep.subr.mxu0 0.0
    %278 = vmatpush1.msra.mxu0 0.0
    %279 = vmatprep.subr.mxu0 0.0
    %280 = vmatpush1.msra.mxu0 0.0
    %281 = vmatprep.mubr.f32.mxu0 0.0
    %282 = vmatmul.mubr.f32.gmra.mrb[0].mxu0 %v215
    %v283 = vpop.f32.mrb[0].mxu0
    %v284 = vadd.f32 0.0, %v283
    %v285 = vpop.f32.mrb[0].mxu0
    %v286 = vadd.f32 0.0, %v285
    %287 = vdwg.mxu0
    %288 = vmatprep.subr.mxu0 %v58
    %289 = vmatpush1.msra.mxu0 %v57
    %290 = vmatprep.subr.mxu0 %v64
    %291 = vmatpush1.msra.mxu0 %v63
    %292 = vmatprep.subr.mxu0 %v70
    %293 = vmatpush1.msra.mxu0 %v69
    %294 = vmatprep.subr.mxu0 %v76
    %295 = vmatpush1.msra.mxu0 %v75
    %296 = vmatprep.subr.mxu0 %v82
    %297 = vmatpush1.msra.mxu0 %v81
    %298 = vmatprep.subr.mxu0 %v88
    %299 = vmatpush1.msra.mxu0 %v87
    %300 = vmatprep.subr.mxu0 %v94
    %301 = vmatpush1.msra.mxu0 %v93
    %302 = vmatprep.subr.mxu0 %v100
    %303 = vmatpush1.msra.mxu0 %v99
    %304 = vmatprep.subr.mxu0 %v106
    %305 = vmatpush1.msra.mxu0 %v105
    %306 = vmatprep.subr.mxu0 %v112
    %307 = vmatpush1.msra.mxu0 %v111
    %308 = vmatprep.subr.mxu0 0.0
    %309 = vmatpush1.msra.mxu0 0.0
    %310 = vmatprep.subr.mxu0 0.0
    %311 = vmatpush1.msra.mxu0 0.0
    %312 = vmatprep.subr.mxu0 0.0
    %313 = vmatpush1.msra.mxu0 0.0
    %314 = vmatprep.subr.mxu0 0.0
    %315 = vmatpush1.msra.mxu0 0.0
    %316 = vmatprep.subr.mxu0 0.0
    %317 = vmatpush1.msra.mxu0 0.0
    %318 = vmatprep.subr.mxu0 0.0
    %319 = vmatpush1.msra.mxu0 0.0
    %320 = vmatprep.subr.mxu0 0.0
    %321 = vmatpush1.msra.mxu0 0.0
    %322 = vmatprep.subr.mxu0 0.0
    %323 = vmatpush1.msra.mxu0 0.0
    %324 = vmatprep.subr.mxu0 0.0
    %325 = vmatpush1.msra.mxu0 0.0
    %326 = vmatprep.subr.mxu0 0.0
    %327 = vmatpush1.msra.mxu0 0.0
    %328 = vmatprep.subr.mxu0 0.0
    %329 = vmatpush1.msra.mxu0 0.0
    %330 = vmatprep.subr.mxu0 0.0
    %331 = vmatpush1.msra.mxu0 0.0
    %332 = vmatprep.subr.mxu0 0.0
    %333 = vmatpush1.msra.mxu0 0.0
    %334 = vmatprep.subr.mxu0 0.0
    %335 = vmatpush1.msra.mxu0 0.0
    %336 = vmatprep.subr.mxu0 0.0
    %337 = vmatpush1.msra.mxu0 0.0
    %338 = vmatprep.subr.mxu0 0.0
    %339 = vmatpush1.msra.mxu0 0.0
    %340 = vmatprep.subr.mxu0 0.0
    %341 = vmatpush1.msra.mxu0 0.0
    %342 = vmatprep.subr.mxu0 0.0
    %343 = vmatpush1.msra.mxu0 0.0
    %344 = vmatprep.subr.mxu0 0.0
    %345 = vmatpush1.msra.mxu0 0.0
    %346 = vmatprep.subr.mxu0 0.0
    %347 = vmatpush1.msra.mxu0 0.0
    %348 = vmatprep.subr.mxu0 0.0
    %349 = vmatpush1.msra.mxu0 0.0
    %350 = vmatprep.subr.mxu0 0.0
    %351 = vmatpush1.msra.mxu0 0.0
    %352 = vmatprep.mubr.f32.mxu0 0.0
    %353 = vmatmul.mubr.f32.gmra.mrb[0].mxu0 %v215
    %v354 = vpop.f32.mrb[0].mxu0
    %v355 = vadd.f32 0.0, %v354
    %v356 = vpop.f32.mrb[0].mxu0
    %v357 = vadd.f32 0.0, %v356
    %358 = vdwg.mxu0
    %359 = vmatprep.subr.mxu0 %v60
    %360 = vmatpush1.msra.mxu0 %v59
    %361 = vmatprep.subr.mxu0 %v66
    %362 = vmatpush1.msra.mxu0 %v65
    %363 = vmatprep.subr.mxu0 %v72
    %364 = vmatpush1.msra.mxu0 %v71
    %365 = vmatprep.subr.mxu0 %v78
    %366 = vmatpush1.msra.mxu0 %v77
    %367 = vmatprep.subr.mxu0 %v84
    %368 = vmatpush1.msra.mxu0 %v83
    %369 = vmatprep.subr.mxu0 %v90
    %370 = vmatpush1.msra.mxu0 %v89
    %371 = vmatprep.subr.mxu0 %v96
    %372 = vmatpush1.msra.mxu0 %v95
    %373 = vmatprep.subr.mxu0 %v102
    %374 = vmatpush1.msra.mxu0 %v101
    %375 = vmatprep.subr.mxu0 %v108
    %376 = vmatpush1.msra.mxu0 %v107
    %377 = vmatprep.subr.mxu0 %v114
    %378 = vmatpush1.msra.mxu0 %v113
    %379 = vmatprep.subr.mxu0 0.0
    %380 = vmatpush1.msra.mxu0 0.0
    %381 = vmatprep.subr.mxu0 0.0
    %382 = vmatpush1.msra.mxu0 0.0
    %383 = vmatprep.subr.mxu0 0.0
    %384 = vmatpush1.msra.mxu0 0.0
    %385 = vmatprep.subr.mxu0 0.0
    %386 = vmatpush1.msra.mxu0 0.0
    %387 = vmatprep.subr.mxu0 0.0
    %388 = vmatpush1.msra.mxu0 0.0
    %389 = vmatprep.subr.mxu0 0.0
    %390 = vmatpush1.msra.mxu0 0.0
    %391 = vmatprep.subr.mxu0 0.0
    %392 = vmatpush1.msra.mxu0 0.0
    %393 = vmatprep.subr.mxu0 0.0
    %394 = vmatpush1.msra.mxu0 0.0
    %395 = vmatprep.subr.mxu0 0.0
    %396 = vmatpush1.msra.mxu0 0.0
    %397 = vmatprep.subr.mxu0 0.0
    %398 = vmatpush1.msra.mxu0 0.0
    %399 = vmatprep.subr.mxu0 0.0
    %400 = vmatpush1.msra.mxu0 0.0
    %401 = vmatprep.subr.mxu0 0.0
    %402 = vmatpush1.msra.mxu0 0.0
    %403 = vmatprep.subr.mxu0 0.0
    %404 = vmatpush1.msra.mxu0 0.0
    %405 = vmatprep.subr.mxu0 0.0
    %406 = vmatpush1.msra.mxu0 0.0
    %407 = vmatprep.subr.mxu0 0.0
    %408 = vmatpush1.msra.mxu0 0.0
    %409 = vmatprep.subr.mxu0 0.0
    %410 = vmatpush1.msra.mxu0 0.0
    %411 = vmatprep.subr.mxu0 0.0
    %412 = vmatpush1.msra.mxu0 0.0
    %413 = vmatprep.subr.mxu0 0.0
    %414 = vmatpush1.msra.mxu0 0.0
    %415 = vmatprep.subr.mxu0 0.0
    %416 = vmatpush1.msra.mxu0 0.0
    %417 = vmatprep.subr.mxu0 0.0
    %418 = vmatpush1.msra.mxu0 0.0
    %419 = vmatprep.subr.mxu0 0.0
    %420 = vmatpush1.msra.mxu0 0.0
    %421 = vmatprep.subr.mxu0 0.0
    %422 = vmatpush1.msra.mxu0 0.0
    %423 = vmatprep.mubr.f32.mxu0 0.0
    %424 = vmatmul.mubr.f32.gmra.mrb[0].mxu0 %v215
    %v425 = vpop.f32.mrb[0].mxu0
    %v426 = vadd.f32 0.0, %v425
    %v427 = vpop.f32.mrb[0].mxu0
    %v428 = vadd.f32 0.0, %v427
    %429 = vdwg.mxu0
    %vm430 = vcmask 64512
    %v432 = vsel %vm430, %v51, 0
    %434 = vmatprep.subr.mxu0 %v286
    %435 = vmatpush1.msra.mxu0 %v284
    %436 = vmatprep.subr.mxu0 0.0
    %437 = vmatpush1.msra.mxu0 0.0
    %438 = vmatprep.subr.mxu0 0.0
    %439 = vmatpush1.msra.mxu0 0.0
    %440 = vmatprep.subr.mxu0 0.0
    %441 = vmatpush1.msra.mxu0 0.0
    %442 = vmatprep.subr.mxu0 0.0
    %443 = vmatpush1.msra.mxu0 0.0
    %444 = vmatprep.subr.mxu0 0.0
    %445 = vmatpush1.msra.mxu0 0.0
    %446 = vmatprep.subr.mxu0 0.0
    %447 = vmatpush1.msra.mxu0 0.0
    %448 = vmatprep.subr.mxu0 0.0
    %449 = vmatpush1.msra.mxu0 0.0
    %450 = vmatprep.subr.mxu0 0.0
    %451 = vmatpush1.msra.mxu0 0.0
    %452 = vmatprep.subr.mxu0 0.0
    %453 = vmatpush1.msra.mxu0 0.0
    %454 = vmatprep.subr.mxu0 0.0
    %455 = vmatpush1.msra.mxu0 0.0
    %456 = vmatprep.subr.mxu0 0.0
    %457 = vmatpush1.msra.mxu0 0.0
    %458 = vmatprep.subr.mxu0 0.0
    %459 = vmatpush1.msra.mxu0 0.0
    %460 = vmatprep.subr.mxu0 0.0
    %461 = vmatpush1.msra.mxu0 0.0
    %462 = vmatprep.subr.mxu0 0.0
    %463 = vmatpush1.msra.mxu0 0.0
    %464 = vmatprep.subr.mxu0 0.0
    %465 = vmatpush1.msra.mxu0 0.0
    %466 = vmatprep.subr.mxu0 0.0
    %467 = vmatpush1.msra.mxu0 0.0
    %468 = vmatprep.subr.mxu0 0.0
    %469 = vmatpush1.msra.mxu0 0.0
    %470 = vmatprep.subr.mxu0 0.0
    %471 = vmatpush1.msra.mxu0 0.0
    %472 = vmatprep.subr.mxu0 0.0
    %473 = vmatpush1.msra.mxu0 0.0
    %474 = vmatprep.subr.mxu0 0.0
    %475 = vmatpush1.msra.mxu0 0.0
    %476 = vmatprep.subr.mxu0 0.0
    %477 = vmatpush1.msra.mxu0 0.0
    %478 = vmatprep.subr.mxu0 0.0
    %479 = vmatpush1.msra.mxu0 0.0
    %480 = vmatprep.subr.mxu0 0.0
    %481 = vmatpush1.msra.mxu0 0.0
    %482 = vmatprep.subr.mxu0 0.0
    %483 = vmatpush1.msra.mxu0 0.0
    %484 = vmatprep.subr.mxu0 0.0
    %485 = vmatpush1.msra.mxu0 0.0
    %486 = vmatprep.subr.mxu0 0.0
    %487 = vmatpush1.msra.mxu0 0.0
    %488 = vmatprep.subr.mxu0 0.0
    %489 = vmatpush1.msra.mxu0 0.0
    %490 = vmatprep.subr.mxu0 0.0
    %491 = vmatpush1.msra.mxu0 0.0
    %492 = vmatprep.subr.mxu0 0.0
    %493 = vmatpush1.msra.mxu0 0.0
    %494 = vmatprep.subr.mxu0 0.0
    %495 = vmatpush1.msra.mxu0 0.0
    %496 = vmatprep.subr.mxu0 0.0
    %497 = vmatpush1.msra.mxu0 0.0
    %498 = vmatprep.mubr.f32.mxu0 0.0
    %499 = vmatmul.mubr.f32.gmra.mrb[0].mxu0 %v432
    %v500 = vpop.f32.mrb[0].mxu0
    %v501 = vadd.f32 %v355, %v500
    %v502 = vpop.f32.mrb[0].mxu0
    %v503 = vadd.f32 %v357, %v502
    %504 = vdwg.mxu0
    %v506 = vsel %vm430, %v53, 0
    %508 = vmatprep.subr.mxu0 %v428
    %509 = vmatpush1.msra.mxu0 %v426
    %510 = vmatprep.subr.mxu0 0.0
    %511 = vmatpush1.msra.mxu0 0.0
    %512 = vmatprep.subr.mxu0 0.0
    %513 = vmatpush1.msra.mxu0 0.0
    %514 = vmatprep.subr.mxu0 0.0
    %515 = vmatpush1.msra.mxu0 0.0
    %516 = vmatprep.subr.mxu0 0.0
    %517 = vmatpush1.msra.mxu0 0.0
    %518 = vmatprep.subr.mxu0 0.0
    %519 = vmatpush1.msra.mxu0 0.0
    %520 = vmatprep.subr.mxu0 0.0
    %521 = vmatpush1.msra.mxu0 0.0
    %522 = vmatprep.subr.mxu0 0.0
    %523 = vmatpush1.msra.mxu0 0.0
    %524 = vmatprep.subr.mxu0 0.0
    %525 = vmatpush1.msra.mxu0 0.0
    %526 = vmatprep.subr.mxu0 0.0
    %527 = vmatpush1.msra.mxu0 0.0
    %528 = vmatprep.subr.mxu0 0.0
    %529 = vmatpush1.msra.mxu0 0.0
    %530 = vmatprep.subr.mxu0 0.0
    %531 = vmatpush1.msra.mxu0 0.0
    %532 = vmatprep.subr.mxu0 0.0
    %533 = vmatpush1.msra.mxu0 0.0
    %534 = vmatprep.subr.mxu0 0.0
    %535 = vmatpush1.msra.mxu0 0.0
    %536 = vmatprep.subr.mxu0 0.0
    %537 = vmatpush1.msra.mxu0 0.0
    %538 = vmatprep.subr.mxu0 0.0
    %539 = vmatpush1.msra.mxu0 0.0
    %540 = vmatprep.subr.mxu0 0.0
    %541 = vmatpush1.msra.mxu0 0.0
    %542 = vmatprep.subr.mxu0 0.0
    %543 = vmatpush1.msra.mxu0 0.0
    %544 = vmatprep.subr.mxu0 0.0
    %545 = vmatpush1.msra.mxu0 0.0
    %546 = vmatprep.subr.mxu0 0.0
    %547 = vmatpush1.msra.mxu0 0.0
    %548 = vmatprep.subr.mxu0 0.0
    %549 = vmatpush1.msra.mxu0 0.0
    %550 = vmatprep.subr.mxu0 0.0
    %551 = vmatpush1.msra.mxu0 0.0
    %552 = vmatprep.subr.mxu0 0.0
    %553 = vmatpush1.msra.mxu0 0.0
    %554 = vmatprep.subr.mxu0 0.0
    %555 = vmatpush1.msra.mxu0 0.0
    %556 = vmatprep.subr.mxu0 0.0
    %557 = vmatpush1.msra.mxu0 0.0
    %558 = vmatprep.subr.mxu0 0.0
    %559 = vmatpush1.msra.mxu0 0.0
    %560 = vmatprep.subr.mxu0 0.0
    %561 = vmatpush1.msra.mxu0 0.0
    %562 = vmatprep.subr.mxu0 0.0
    %563 = vmatpush1.msra.mxu0 0.0
    %564 = vmatprep.subr.mxu0 0.0
    %565 = vmatpush1.msra.mxu0 0.0
    %566 = vmatprep.subr.mxu0 0.0
    %567 = vmatpush1.msra.mxu0 0.0
    %568 = vmatprep.subr.mxu0 0.0
    %569 = vmatpush1.msra.mxu0 0.0
    %570 = vmatprep.subr.mxu0 0.0
    %571 = vmatpush1.msra.mxu0 0.0
    %572 = vmatprep.mubr.f32.mxu0 0.0
    %573 = vmatmul.mubr.f32.gmra.mrb[0].mxu0 %v506
    %v574 = vpop.f32.mrb[0].mxu0
    %v575 = vadd.f32 0.0, %v574
    %v576 = vpop.f32.mrb[0].mxu0
    %v577 = vadd.f32 0.0, %v576
    %578 = vdwg.mxu0
    %v579 = vadd.f32 %v501, %v575
    %v580 = vadd.f32 %v503, %v577
    %v582 = vlaneseq
    %v583 = vshrl.u32 %v582, 7
    %v584 = vsub.s32 0, %v583
    %v585 = vrot.slane %v115, %v584
    %v586 = vlaneseq
    %v587 = vshrl.u32 %v586, 7
    %v588 = vsub.s32 1, %v587
    %v589 = vrot.slane %v115, %v588
    %v592 = vadd.f32 %v579, %v585
    %v593 = vadd.f32 %v580, %v589
    %v594 = vmul.f32 %v592, 0.5
    %v595 = vmul.f32 %v593, 0.5
    %v596 = vmul.f32 %v592, 0.70710677
    %v597 = vmul.f32 %v593, 0.70710677
    %vm598 = vcmp.ge.f32.partialorder %v596, 0.0
    %vm599 = vcmp.ge.f32.partialorder %v597, 0.0
    %v600 = vsel %vm598, 1.0, -1.0
    %v601 = vsel %vm599, 1.0, -1.0
    %v602 = vand.u32 2147483647, %v596
    %v603 = vand.u32 2147483647, %v597
    %v604 = vmul.f32 %v602, 0.3275911
    %v605 = vmul.f32 %v603, 0.3275911
    %v606 = vadd.f32 %v604, 1.0
    %v607 = vadd.f32 %v605, 1.0
    %v608 = vrcp.pop %v606
    %v609 = vmul.f32 1.0, %v608
    %v610 = vrcp.pop %v607
    %v611 = vmul.f32 1.0, %v610
    %v612 = vmul.f32 %v609, 1.0614054
    %v613 = vmul.f32 %v611, 1.0614054
    %v614 = vadd.f32 %v612, -1.4531521
    %v615 = vadd.f32 %v613, -1.4531521
    %v616 = vmul.f32 %v614, %v609
    %v617 = vmul.f32 %v615, %v611
    %v618 = vadd.f32 %v616, 1.4214138
    %v619 = vadd.f32 %v617, 1.4214138
    %v620 = vmul.f32 %v618, %v609
    %v621 = vmul.f32 %v619, %v611
    %v622 = vadd.f32 %v620, -0.28449672
    %v623 = vadd.f32 %v621, -0.28449672
    %v624 = vmul.f32 %v622, %v609
    %v625 = vmul.f32 %v623, %v611
    %v626 = vadd.f32 %v624, 0.2548296
    %v627 = vadd.f32 %v625, 0.2548296
    %v628 = vmul.f32 %v626, %v609
    %v629 = vmul.f32 %v627, %v611
    %v630 = vmul.f32 %v602, %v602
    %v631 = vmul.f32 %v603, %v603
    %v632 = vsub.f32 0.0, %v630
    %v633 = vsub.f32 0.0, %v631
    %v634 = vmul.f32 %v632, 1.442695
    %v635 = vpow.pop %v634
    %v636 = vmul.f32 %v633, 1.442695
    %v637 = vpow.pop %v636
    %v638 = vmul.f32 %v628, %v635
    %v639 = vmul.f32 %v629, %v637
    %v640 = vsub.f32 1.0, %v638
    %v641 = vsub.f32 1.0, %v639
    %v642 = vmul.f32 %v600, %v640
    %v643 = vmul.f32 %v601, %v641
    %v644 = vadd.f32 %v642, 1.0
    %v645 = vadd.f32 %v643, 1.0
    %v646 = vmul.f32 %v594, %v644
    %v647 = vmul.f32 %v595, %v645
    %648 = vmatprep.subr.mxu0 %v117
    %649 = vmatpush1.msra.mxu0 %v116
    %650 = vmatprep.subr.mxu0 %v120
    %651 = vmatpush1.msra.mxu0 %v119
    %652 = vmatprep.subr.mxu0 %v123
    %653 = vmatpush1.msra.mxu0 %v122
    %654 = vmatprep.subr.mxu0 %v126
    %655 = vmatpush1.msra.mxu0 %v125
    %656 = vmatprep.subr.mxu0 %v129
    %657 = vmatpush1.msra.mxu0 %v128
    %658 = vmatprep.subr.mxu0 %v132
    %659 = vmatpush1.msra.mxu0 %v131
    %660 = vmatprep.subr.mxu0 %v135
    %661 = vmatpush1.msra.mxu0 %v134
    %662 = vmatprep.subr.mxu0 %v138
    %663 = vmatpush1.msra.mxu0 %v137
    %664 = vmatprep.subr.mxu0 %v141
    %665 = vmatpush1.msra.mxu0 %v140
    %666 = vmatprep.subr.mxu0 %v144
    %667 = vmatpush1.msra.mxu0 %v143
    %668 = vmatprep.subr.mxu0 %v147
    %669 = vmatpush1.msra.mxu0 %v146
    %670 = vmatprep.subr.mxu0 %v150
    %671 = vmatpush1.msra.mxu0 %v149
    %672 = vmatprep.subr.mxu0 %v153
    %673 = vmatpush1.msra.mxu0 %v152
    %674 = vmatprep.subr.mxu0 %v156
    %675 = vmatpush1.msra.mxu0 %v155
    %676 = vmatprep.subr.mxu0 %v159
    %677 = vmatpush1.msra.mxu0 %v158
    %678 = vmatprep.subr.mxu0 %v162
    %679 = vmatpush1.msra.mxu0 %v161
    %680 = vmatprep.subr.mxu0 %v165
    %681 = vmatpush1.msra.mxu0 %v164
    %682 = vmatprep.subr.mxu0 %v168
    %683 = vmatpush1.msra.mxu0 %v167
    %684 = vmatprep.subr.mxu0 %v171
    %685 = vmatpush1.msra.mxu0 %v170
    %686 = vmatprep.subr.mxu0 %v174
    %687 = vmatpush1.msra.mxu0 %v173
    %688 = vmatprep.subr.mxu0 %v177
    %689 = vmatpush1.msra.mxu0 %v176
    %690 = vmatprep.subr.mxu0 %v180
    %691 = vmatpush1.msra.mxu0 %v179
    %692 = vmatprep.subr.mxu0 %v183
    %693 = vmatpush1.msra.mxu0 %v182
    %694 = vmatprep.subr.mxu0 %v186
    %695 = vmatpush1.msra.mxu0 %v185
    %696 = vmatprep.subr.mxu0 %v189
    %697 = vmatpush1.msra.mxu0 %v188
    %698 = vmatprep.subr.mxu0 %v192
    %699 = vmatpush1.msra.mxu0 %v191
    %700 = vmatprep.subr.mxu0 %v195
    %701 = vmatpush1.msra.mxu0 %v194
    %702 = vmatprep.subr.mxu0 %v198
    %703 = vmatpush1.msra.mxu0 %v197
    %704 = vmatprep.subr.mxu0 %v201
    %705 = vmatpush1.msra.mxu0 %v200
    %706 = vmatprep.subr.mxu0 %v204
    %707 = vmatpush1.msra.mxu0 %v203
    %708 = vmatprep.subr.mxu0 %v207
    %709 = vmatpush1.msra.mxu0 %v206
    %710 = vmatprep.subr.mxu0 %v210
    %711 = vmatpush1.msra.mxu0 %v209
    %712 = vmatprep.mubr.f32.mxu0 %v647
    %713 = vmatmul.mubr.f32.gmra.mrb[0].mxu0 %v646
    %v714 = vpop.f32.mrb[0].mxu0
    %v715 = vadd.f32 0.0, %v714
    %v716 = vpop.f32.mrb[0].mxu0
    %v717 = vadd.f32 0.0, %v716
    %718 = vdwg.mxu0
    %719 = vmatprep.subr.mxu0 0.0
    %720 = vmatpush1.msra.mxu0 %v118
    %721 = vmatprep.subr.mxu0 0.0
    %722 = vmatpush1.msra.mxu0 %v121
    %723 = vmatprep.subr.mxu0 0.0
    %724 = vmatpush1.msra.mxu0 %v124
    %725 = vmatprep.subr.mxu0 0.0
    %726 = vmatpush1.msra.mxu0 %v127
    %727 = vmatprep.subr.mxu0 0.0
    %728 = vmatpush1.msra.mxu0 %v130
    %729 = vmatprep.subr.mxu0 0.0
    %730 = vmatpush1.msra.mxu0 %v133
    %731 = vmatprep.subr.mxu0 0.0
    %732 = vmatpush1.msra.mxu0 %v136
    %733 = vmatprep.subr.mxu0 0.0
    %734 = vmatpush1.msra.mxu0 %v139
    %735 = vmatprep.subr.mxu0 0.0
    %736 = vmatpush1.msra.mxu0 %v142
    %737 = vmatprep.subr.mxu0 0.0
    %738 = vmatpush1.msra.mxu0 %v145
    %739 = vmatprep.subr.mxu0 0.0
    %740 = vmatpush1.msra.mxu0 %v148
    %741 = vmatprep.subr.mxu0 0.0
    %742 = vmatpush1.msra.mxu0 %v151
    %743 = vmatprep.subr.mxu0 0.0
    %744 = vmatpush1.msra.mxu0 %v154
    %745 = vmatprep.subr.mxu0 0.0
    %746 = vmatpush1.msra.mxu0 %v157
    %747 = vmatprep.subr.mxu0 0.0
    %748 = vmatpush1.msra.mxu0 %v160
    %749 = vmatprep.subr.mxu0 0.0
    %750 = vmatpush1.msra.mxu0 %v163
    %751 = vmatprep.subr.mxu0 0.0
    %752 = vmatpush1.msra.mxu0 %v166
    %753 = vmatprep.subr.mxu0 0.0
    %754 = vmatpush1.msra.mxu0 %v169
    %755 = vmatprep.subr.mxu0 0.0
    %756 = vmatpush1.msra.mxu0 %v172
    %757 = vmatprep.subr.mxu0 0.0
    %758 = vmatpush1.msra.mxu0 %v175
    %759 = vmatprep.subr.mxu0 0.0
    %760 = vmatpush1.msra.mxu0 %v178
    %761 = vmatprep.subr.mxu0 0.0
    %762 = vmatpush1.msra.mxu0 %v181
    %763 = vmatprep.subr.mxu0 0.0
    %764 = vmatpush1.msra.mxu0 %v184
    %765 = vmatprep.subr.mxu0 0.0
    %766 = vmatpush1.msra.mxu0 %v187
    %767 = vmatprep.subr.mxu0 0.0
    %768 = vmatpush1.msra.mxu0 %v190
    %769 = vmatprep.subr.mxu0 0.0
    %770 = vmatpush1.msra.mxu0 %v193
    %771 = vmatprep.subr.mxu0 0.0
    %772 = vmatpush1.msra.mxu0 %v196
    %773 = vmatprep.subr.mxu0 0.0
    %774 = vmatpush1.msra.mxu0 %v199
    %775 = vmatprep.subr.mxu0 0.0
    %776 = vmatpush1.msra.mxu0 %v202
    %777 = vmatprep.subr.mxu0 0.0
    %778 = vmatpush1.msra.mxu0 %v205
    %779 = vmatprep.subr.mxu0 0.0
    %780 = vmatpush1.msra.mxu0 %v208
    %781 = vmatprep.subr.mxu0 0.0
    %782 = vmatpush1.msra.mxu0 %v211
    %783 = vmatprep.mubr.f32.mxu0 %v647
    %784 = vmatmul.mubr.f32.gmra.mrb[0].mxu0 %v646
    %v785 = vpop.f32.mrb[0].mxu0
    %v786 = vadd.f32 0.0, %v785
    %v787 = vpop.f32.mrb[0].mxu0
    %788 = vdwg.mxu0
    %789 = vmatprep.subr.mxu0 0.0
    %790 = vmatpush1.msra.mxu0 %v715
    %791 = vmatprep.subr.mxu0 0.0
    %792 = vmatpush1.msra.mxu0 0.0
    %793 = vmatprep.subr.mxu0 0.0
    %794 = vmatpush1.msra.mxu0 0.0
    %795 = vmatprep.subr.mxu0 0.0
    %796 = vmatpush1.msra.mxu0 0.0
    %797 = vmatprep.subr.mxu0 0.0
    %798 = vmatpush1.msra.mxu0 0.0
    %799 = vmatprep.subr.mxu0 0.0
    %800 = vmatpush1.msra.mxu0 0.0
    %801 = vmatprep.subr.mxu0 0.0
    %802 = vmatpush1.msra.mxu0 0.0
    %803 = vmatprep.subr.mxu0 0.0
    %804 = vmatpush1.msra.mxu0 0.0
    %805 = vmatprep.subr.mxu0 0.0
    %806 = vmatpush1.msra.mxu0 0.0
    %807 = vmatprep.subr.mxu0 0.0
    %808 = vmatpush1.msra.mxu0 0.0
    %809 = vmatprep.subr.mxu0 0.0
    %810 = vmatpush1.msra.mxu0 0.0
    %811 = vmatprep.subr.mxu0 0.0
    %812 = vmatpush1.msra.mxu0 0.0
    %813 = vmatprep.subr.mxu0 0.0
    %814 = vmatpush1.msra.mxu0 0.0
    %815 = vmatprep.subr.mxu0 0.0
    %816 = vmatpush1.msra.mxu0 0.0
    %817 = vmatprep.subr.mxu0 0.0
    %818 = vmatpush1.msra.mxu0 0.0
    %819 = vmatprep.subr.mxu0 0.0
    %820 = vmatpush1.msra.mxu0 0.0
    %821 = vmatprep.subr.mxu0 0.0
    %822 = vmatpush1.msra.mxu0 0.0
    %823 = vmatprep.subr.mxu0 0.0
    %824 = vmatpush1.msra.mxu0 0.0
    %825 = vmatprep.subr.mxu0 0.0
    %826 = vmatpush1.msra.mxu0 0.0
    %827 = vmatprep.subr.mxu0 0.0
    %828 = vmatpush1.msra.mxu0 0.0
    %829 = vmatprep.subr.mxu0 0.0
    %830 = vmatpush1.msra.mxu0 0.0
    %831 = vmatprep.subr.mxu0 0.0
    %832 = vmatpush1.msra.mxu0 0.0
    %833 = vmatprep.subr.mxu0 0.0
    %834 = vmatpush1.msra.mxu0 0.0
    %835 = vmatprep.subr.mxu0 0.0
    %836 = vmatpush1.msra.mxu0 0.0
    %837 = vmatprep.subr.mxu0 0.0
    %838 = vmatpush1.msra.mxu0 0.0
    %839 = vmatprep.subr.mxu0 0.0
    %840 = vmatpush1.msra.mxu0 0.0
    %841 = vmatprep.subr.mxu0 0.0
    %842 = vmatpush1.msra.mxu0 0.0
    %843 = vmatprep.subr.mxu0 0.0
    %844 = vmatpush1.msra.mxu0 0.0
    %845 = vmatprep.subr.mxu0 0.0
    %846 = vmatpush1.msra.mxu0 0.0
    %847 = vmatprep.subr.mxu0 0.0
    %848 = vmatpush1.msra.mxu0 0.0
    %849 = vmatprep.subr.mxu0 0.0
    %850 = vmatpush1.msra.mxu0 0.0
    %851 = vmatprep.subr.mxu0 0.0
    %852 = vmatpush1.msra.mxu0 0.0
    %853 = vmatprep.mubr.f32.mxu0 0.0
    %854 = vmatmul.mubr.f32.gmra.mrb[0].mxu0 %v432
    %v855 = vpop.f32.mrb[0].mxu0
    %v856 = vadd.f32 %v717, %v855
    %v857 = vpop.f32.mrb[0].mxu0
    %858 = vdwg.mxu0
    %859 = vmatprep.subr.mxu0 0.0
    %860 = vmatpush1.msra.mxu0 %v786
    %861 = vmatprep.subr.mxu0 0.0
    %862 = vmatpush1.msra.mxu0 0.0
    %863 = vmatprep.subr.mxu0 0.0
    %864 = vmatpush1.msra.mxu0 0.0
    %865 = vmatprep.subr.mxu0 0.0
    %866 = vmatpush1.msra.mxu0 0.0
    %867 = vmatprep.subr.mxu0 0.0
    %868 = vmatpush1.msra.mxu0 0.0
    %869 = vmatprep.subr.mxu0 0.0
    %870 = vmatpush1.msra.mxu0 0.0
    %871 = vmatprep.subr.mxu0 0.0
    %872 = vmatpush1.msra.mxu0 0.0
    %873 = vmatprep.subr.mxu0 0.0
    %874 = vmatpush1.msra.mxu0 0.0
    %875 = vmatprep.subr.mxu0 0.0
    %876 = vmatpush1.msra.mxu0 0.0
    %877 = vmatprep.subr.mxu0 0.0
    %878 = vmatpush1.msra.mxu0 0.0
    %879 = vmatprep.subr.mxu0 0.0
    %880 = vmatpush1.msra.mxu0 0.0
    %881 = vmatprep.subr.mxu0 0.0
    %882 = vmatpush1.msra.mxu0 0.0
    %883 = vmatprep.subr.mxu0 0.0
    %884 = vmatpush1.msra.mxu0 0.0
    %885 = vmatprep.subr.mxu0 0.0
    %886 = vmatpush1.msra.mxu0 0.0
    %887 = vmatprep.subr.mxu0 0.0
    %888 = vmatpush1.msra.mxu0 0.0
    %889 = vmatprep.subr.mxu0 0.0
    %890 = vmatpush1.msra.mxu0 0.0
    %891 = vmatprep.subr.mxu0 0.0
    %892 = vmatpush1.msra.mxu0 0.0
    %893 = vmatprep.subr.mxu0 0.0
    %894 = vmatpush1.msra.mxu0 0.0
    %895 = vmatprep.subr.mxu0 0.0
    %896 = vmatpush1.msra.mxu0 0.0
    %897 = vmatprep.subr.mxu0 0.0
    %898 = vmatpush1.msra.mxu0 0.0
    %899 = vmatprep.subr.mxu0 0.0
    %900 = vmatpush1.msra.mxu0 0.0
    %901 = vmatprep.subr.mxu0 0.0
    %902 = vmatpush1.msra.mxu0 0.0
    %903 = vmatprep.subr.mxu0 0.0
    %904 = vmatpush1.msra.mxu0 0.0
    %905 = vmatprep.subr.mxu0 0.0
    %906 = vmatpush1.msra.mxu0 0.0
    %907 = vmatprep.subr.mxu0 0.0
    %908 = vmatpush1.msra.mxu0 0.0
    %909 = vmatprep.subr.mxu0 0.0
    %910 = vmatpush1.msra.mxu0 0.0
    %911 = vmatprep.subr.mxu0 0.0
    %912 = vmatpush1.msra.mxu0 0.0
    %913 = vmatprep.subr.mxu0 0.0
    %914 = vmatpush1.msra.mxu0 0.0
    %915 = vmatprep.subr.mxu0 0.0
    %916 = vmatpush1.msra.mxu0 0.0
    %917 = vmatprep.subr.mxu0 0.0
    %918 = vmatpush1.msra.mxu0 0.0
    %919 = vmatprep.subr.mxu0 0.0
    %920 = vmatpush1.msra.mxu0 0.0
    %921 = vmatprep.subr.mxu0 0.0
    %922 = vmatpush1.msra.mxu0 0.0
    %923 = vmatprep.mubr.f32.mxu0 0.0
    %924 = vmatmul.mubr.f32.gmra.mrb[0].mxu0 %v506
    %v925 = vpop.f32.mrb[0].mxu0
    %v926 = vadd.f32 0.0, %v925
    %v927 = vpop.f32.mrb[0].mxu0
    %928 = vdwg.mxu0
    %v929 = vadd.f32 %v856, %v926
    %v931 = vlaneseq
    %v932 = vshrl.u32 %v931, 7
    %v933 = vsub.s32 0, %v932
    %v934 = vrot.slane %v212, %v933
    %v936 = vadd.f32 %v929, %v934
    %937 = vst [vmem:[%s6] sm:$0xff] %v936
    // Predicated region
    $region34: #{branch_2_fun.3} parent=1 // pred_check
      _
    $region35: #{branch_2_fun.3} parent=1 // pred_check_branch
      %939 = sbr.rel (0) target = $region37
    $region36: #{branch_2_fun.3} parent=1 // pred_region
      _
    $region37: #{branch_2_fun.3} parent=1 // pred_fallthru
      _
    // Predicated region
    $region38: #{branch_2_fun.3} parent=1 // pred_check
      _
    $region39: #{branch_2_fun.3} parent=1 // pred_check_branch
      %941 = sbr.rel (0) target = $region41
    $region40: #{branch_2_fun.3} parent=1 // pred_region
      _
    $region41: #{branch_2_fun.3} parent=1 // pred_fallthru
      _
    %942 = vsyncpa [#allocation3], 1
    %943 = vsyncpa [#allocation5], 1

</llo_original>
